<compile_context>
chip_gen: v5e
topology: v5e:2x2
jax: 0.10.0
libtpu: 0.0.40
codegen_flags: <defaults>
</compile_context>

<pallas_src>
import functools
import itertools
import math

import jax
import jax.numpy as jnp
from jax.experimental import pallas as pl
from jax.experimental.pallas import tpu as pltpu

# ----------------------------- configuration (scaled-down) -------------------
DIM = 128          # reference: 768
HEADS = 4          # reference: 8/16
LAYERS = 2
FF_MULT = 4
SEQ = 16           # query / context sequence length
BATCH = 2
DTYPE = jnp.float32


# ============================ in-kernel helpers ===============================

def _ln_f32(t, g, b):
    """LayerNorm with f32 statistics (PyTorch eps=1e-5). t:(R,D), g/b:(1,D)."""
    mu = jnp.mean(t, axis=-1, keepdims=True)
    var = jnp.mean(jnp.square(t - mu), axis=-1, keepdims=True)
    return (t - mu) * jax.lax.rsqrt(var + 1e-5) * g + b


def _gelu(x):
    # TODO(synk): PyTorch nn.GELU() defaults to the exact erf form; tanh approx used.
    return 0.5 * x * (1.0 + jnp.tanh(0.7978845608028654 * (x + 0.044715 * x * x * x)))


# ============================ fused whole-model kernel ========================

def _transformer_kernel(x_ref, ctx_ref, alibi_ref,
                        sa_g, sa_b, sa_wqkv, sa_wo, sa_bo,
                        ca_g, ca_b, ca_wq, ca_wk, ca_wv, ca_wo, ca_bo,
                        ff_g, ff_b, ff_w1, ff_b1, ff_w2, ff_b2,
                        on_g, on_b,
                        o_ref, *, layers, heads, scale, batch, n_q, n_kv):
    D = x_ref.shape[-1]
    dh = D // heads
    bf16 = jnp.bfloat16
    f32 = jnp.float32

    x = x_ref[...]            # (B*N, D) f32 residual stream
    ctx = ctx_ref[...]        # (B*M, D) f32
    alibi = alibi_ref[...]    # (1 or B, H, N_max, N_max) f32

    def mha(q, k, v, nq, nk):
        """q:(B*nq,D) bf16, k/v:(B*nk,D) bf16 -> (B*nq,D) f32.

        Per-batch / per-head scores on the MXU with f32 softmax; head outputs are
        concatenated lane-dense so the caller can do ONE K=D output projection.
        """
        outs = []
        for b in range(batch):
            qb = q[b * nq:(b + 1) * nq]
            kb = k[b * nk:(b + 1) * nk]
            vb = v[b * nk:(b + 1) * nk]
            ab = b if alibi.shape[0] > 1 else 0
            head_outs = []
            for hh in range(heads):
                sl = slice(hh * dh, (hh + 1) * dh)
                s = jax.lax.dot_general(
                    qb[:, sl], kb[:, sl], (((1,), (1,)), ((), ())),
                    preferred_element_type=f32) * scale
                s = s + alibi[ab, hh, :nq, :nk]       # reference slices alibi to scores
                m = jnp.max(s, axis=-1, keepdims=True)
                p = jnp.exp(s - m)
                p = p * pl.reciprocal(jnp.sum(p, axis=-1, keepdims=True), approx=True)
                head_outs.append(jnp.dot(p.astype(bf16), vb[:, sl],
                                         preferred_element_type=f32))
            outs.append(jnp.concatenate(head_outs, axis=-1))     # (nq, D)
        return jnp.concatenate(outs, axis=0)                     # (B*nq, D)

    for l in range(layers):
        # ---------------- self-attention + residual ------------------------
        h = _ln_f32(x, sa_g[l:l + 1, :], sa_b[l:l + 1, :])
        qkv = jnp.dot(h.astype(bf16), sa_wqkv[l].astype(bf16),
                      preferred_element_type=f32).astype(bf16)       # (B*N, 3D)
        ao = mha(qkv[:, :D], qkv[:, D:2 * D], qkv[:, 2 * D:], n_q, n_q)
        ao = jnp.dot(ao.astype(bf16), sa_wo[l].astype(bf16),
                     preferred_element_type=f32) + sa_bo[l:l + 1, :]
        x = x + ao

        # ---------------- cross-attention + residual -----------------------
        # reference CrossAttention applies the SAME input_norm to x and context
        hx = _ln_f32(x, ca_g[l:l + 1, :], ca_b[l:l + 1, :]).astype(bf16)
        hc = _ln_f32(ctx, ca_g[l:l + 1, :], ca_b[l:l + 1, :]).astype(bf16)
        q = jnp.dot(hx, ca_wq[l].astype(bf16), preferred_element_type=f32).astype(bf16)
        k = jnp.dot(hc, ca_wk[l].astype(bf16), preferred_element_type=f32).astype(bf16)
        v = jnp.dot(hc, ca_wv[l].astype(bf16), preferred_element_type=f32).astype(bf16)
        ao = mha(q, k, v, n_q, n_kv)
        ao = jnp.dot(ao.astype(bf16), ca_wo[l].astype(bf16),
                     preferred_element_type=f32) + ca_bo[l:l + 1, :]
        x = x + ao
        # TODO(synk): CrossAttention.forward contains debug prints (one references
        # `v.shpae`, a typo that would raise in PyTorch); omitted here.

        # ---------------- FFN + residual ------------------------------------
        h = _ln_f32(x, ff_g[l:l + 1, :], ff_b[l:l + 1, :])
        h1 = jnp.dot(h.astype(bf16), ff_w1[l].astype(bf16),
                     preferred_element_type=f32) + ff_b1[l:l + 1, :]
        h1 = _gelu(h1)
        h2 = jnp.dot(h1.astype(bf16), ff_w2[l].astype(bf16),
                     preferred_element_type=f32) + ff_b2[l:l + 1, :]
        x = x + h2

    # ---------------- final LayerNorm ---------------------------------------
    o_ref[...] = _ln_f32(x, on_g[0:1, :], on_b[0:1, :]).astype(o_ref.dtype)


# ============================ wrapper =========================================

def _full_spec(shape):
    n = len(shape)
    return pl.BlockSpec(shape, lambda i, _n=n: (0,) * _n)


def base_transformer_cross_attn(params, x, context, alibi):
    """Mirrors BaseTransformerCrossAttn.forward(x, context, alibi)."""
    B, N, D = x.shape
    M = context.shape[1]
    L = params["sa_wqkv"].shape[0]
    H = HEADS
    scale = (D // H) ** -0.5

    x2 = x.reshape(B * N, D)            # flatten batch into tokens (free XLA reshape)
    c2 = context.reshape(B * M, D)

    inputs = (
        x2, c2, alibi,
        params["sa_g"], params["sa_b"], params["sa_wqkv"], params["sa_wo"], params["sa_bo"],
        params["ca_g"], params["ca_b"], params["ca_wq"], params["ca_wk"],
        params["ca_wv"], params["ca_wo"], params["ca_bo"],
        params["ff_g"], params["ff_b"], params["ff_w1"], params["ff_b1"],
        params["ff_w2"], params["ff_b2"],
        params["on_g"], params["on_b"],
    )

    out = pl.pallas_call(
        functools.partial(_transformer_kernel, layers=L, heads=H, scale=scale,
                          batch=B, n_q=N, n_kv=M),
        grid=(1,),
        in_specs=[_full_spec(a.shape) for a in inputs],
        out_specs=pl.BlockSpec((B * N, D), lambda i: (0, 0)),
        out_shape=jax.ShapeDtypeStruct((B * N, D), x.dtype),
        compiler_params=pltpu.CompilerParams(dimension_semantics=("arbitrary",)),
    )(*inputs)
    return out.reshape(B, N, D)


# ============================ parameter init ==================================

def _w(key, shape, scale=0.02):
    return jax.random.normal(key, shape, jnp.float32) * scale


def init_model(key, dim=DIM, layers=LAYERS, mult=FF_MULT):
    inner = dim * mult
    keys = iter(jax.random.split(key, layers * 12))
    acc = {name: [] for name in
           ("sa_wqkv", "sa_wo", "sa_bo", "ca_wq", "ca_wk", "ca_wv", "ca_wo", "ca_bo",
            "ff_w1", "ff_b1", "ff_w2", "ff_b2")}
    for _ in range(layers):
        acc["sa_wqkv"].append(_w(next(keys), (dim, 3 * dim)))   # bias=False in reference
        acc["sa_wo"].append(_w(next(keys), (dim, dim)))
        acc["sa_bo"].append(_w(next(keys), (dim,)))
        acc["ca_wq"].append(_w(next(keys), (dim, dim)))
        acc["ca_wk"].append(_w(next(keys), (dim, dim)))
        acc["ca_wv"].append(_w(next(keys), (dim, dim)))
        acc["ca_wo"].append(_w(next(keys), (dim, dim)))
        acc["ca_bo"].append(_w(next(keys), (dim,)))
        acc["ff_w1"].append(_w(next(keys), (dim, inner)))
        acc["ff_b1"].append(_w(next(keys), (inner,)))
        acc["ff_w2"].append(_w(next(keys), (inner, dim)))
        acc["ff_b2"].append(_w(next(keys), (dim,)))
    params = {k: jnp.stack(v, axis=0) for k, v in acc.items()}
    ones = jnp.ones((layers, dim), jnp.float32)
    zeros = jnp.zeros((layers, dim), jnp.float32)
    params.update(sa_g=ones, sa_b=zeros, ca_g=ones, ca_b=zeros, ff_g=ones, ff_b=zeros,
                  on_g=jnp.ones((1, dim), jnp.float32),
                  on_b=jnp.zeros((1, dim), jnp.float32))
    return params


# ============================ alibi construction (example input) =============

def _get_slopes(n):
    def p2(m):
        start = 2 ** (-2 ** (-(math.log2(m) - 3)))
        return [start * start ** i for i in range(m)]
    if math.log2(n).is_integer():
        return p2(n)
    cp2 = 2 ** math.floor(math.log2(n))
    return p2(cp2) + _get_slopes(2 * cp2)[0::2][: n - cp2]


def get_alibi(heads, seq_len):
    side = int(math.sqrt(seq_len))
    points = list(itertools.product(range(side), range(side)))
    slopes = jnp.array(_get_slopes(heads), DTYPE).reshape(heads, 1)
    cols = []
    for p1 in points:
        for p2 in points:
            d = math.sqrt((p1[0] - p2[0]) ** 2 + (p1[1] - p2[1]) ** 2)
            cols.append(d * slopes * -1.0)
    all_bias = jnp.concatenate(cols, axis=1)
    return all_bias.reshape(1, heads, seq_len, seq_len)


# ============================ main ===========================================

if __name__ == "__main__":
    root = jax.random.PRNGKey(0)
    k_params, k_x, k_ctx = jax.random.split(root, 3)

    params = init_model(k_params)
    x = jax.random.normal(k_x, (BATCH, SEQ, DIM), DTYPE)
    context = jax.random.normal(k_ctx, (BATCH, SEQ, DIM), DTYPE)
    alibi = get_alibi(HEADS, SEQ)                      # (1, HEADS, SEQ, SEQ)

    fwd = jax.jit(base_transformer_cross_attn)
    out = jax.block_until_ready(fwd(params, x, context, alibi))

    assert out.shape == (BATCH, SEQ, DIM), out.shape
    assert bool(jnp.all(jnp.isfinite(out)))
    print("KERNEL_OK")
</pallas_src>

<mosaic_0001>
module attributes {stable_mosaic.version = 11 : i64} {
  func.func @_transformer_kernel(%arg0: i32, %arg1: memref<32x128xf32, #tpu.memory_space<vmem>>, %arg2: memref<32x128xf32, #tpu.memory_space<vmem>>, %arg3: memref<1x4x16x16xf32, #tpu.memory_space<vmem>>, %arg4: memref<2x128xf32, #tpu.memory_space<vmem>>, %arg5: memref<2x128xf32, #tpu.memory_space<vmem>>, %arg6: memref<2x128x384xf32, #tpu.memory_space<vmem>>, %arg7: memref<2x128x128xf32, #tpu.memory_space<vmem>>, %arg8: memref<2x128xf32, #tpu.memory_space<vmem>>, %arg9: memref<2x128xf32, #tpu.memory_space<vmem>>, %arg10: memref<2x128xf32, #tpu.memory_space<vmem>>, %arg11: memref<2x128x128xf32, #tpu.memory_space<vmem>>, %arg12: memref<2x128x128xf32, #tpu.memory_space<vmem>>, %arg13: memref<2x128x128xf32, #tpu.memory_space<vmem>>, %arg14: memref<2x128x128xf32, #tpu.memory_space<vmem>>, %arg15: memref<2x128xf32, #tpu.memory_space<vmem>>, %arg16: memref<2x128xf32, #tpu.memory_space<vmem>>, %arg17: memref<2x128xf32, #tpu.memory_space<vmem>>, %arg18: memref<2x128x512xf32, #tpu.memory_space<vmem>>, %arg19: memref<2x512xf32, #tpu.memory_space<vmem>>, %arg20: memref<2x512x128xf32, #tpu.memory_space<vmem>>, %arg21: memref<2x128xf32, #tpu.memory_space<vmem>>, %arg22: memref<1x128xf32, #tpu.memory_space<vmem>>, %arg23: memref<1x128xf32, #tpu.memory_space<vmem>>, %arg24: memref<32x128xf32, #tpu.memory_space<vmem>>) attributes {dimension_semantics = [#tpu.dimension_semantics<arbitrary>], iteration_bounds = array<i64: 1>, scalar_prefetch = 0 : i64, scratch_operands = 0 : i64, tpu.core_type = #tpu.core_type<tc>, window_params = [{pipeline_mode = #tpu.pipeline_mode<synchronous>, transform_indices = @transform_0, window_bounds = array<i64: 32, 128>}, {pipeline_mode = #tpu.pipeline_mode<synchronous>, transform_indices = @transform_1, window_bounds = array<i64: 32, 128>}, {pipeline_mode = #tpu.pipeline_mode<synchronous>, transform_indices = @transform_2, window_bounds = array<i64: 1, 4, 16, 16>}, {pipeline_mode = #tpu.pipeline_mode<synchronous>, transform_indices = @transform_3, window_bounds = array<i64: 2, 128>}, {pipeline_mode = #tpu.pipeline_mode<synchronous>, transform_indices = @transform_4, window_bounds = array<i64: 2, 128>}, {pipeline_mode = #tpu.pipeline_mode<synchronous>, transform_indices = @transform_5, window_bounds = array<i64: 2, 128, 384>}, {pipeline_mode = #tpu.pipeline_mode<synchronous>, transform_indices = @transform_6, window_bounds = array<i64: 2, 128, 128>}, {pipeline_mode = #tpu.pipeline_mode<synchronous>, transform_indices = @transform_7, window_bounds = array<i64: 2, 128>}, {pipeline_mode = #tpu.pipeline_mode<synchronous>, transform_indices = @transform_8, window_bounds = array<i64: 2, 128>}, {pipeline_mode = #tpu.pipeline_mode<synchronous>, transform_indices = @transform_9, window_bounds = array<i64: 2, 128>}, {pipeline_mode = #tpu.pipeline_mode<synchronous>, transform_indices = @transform_10, window_bounds = array<i64: 2, 128, 128>}, {pipeline_mode = #tpu.pipeline_mode<synchronous>, transform_indices = @transform_11, window_bounds = array<i64: 2, 128, 128>}, {pipeline_mode = #tpu.pipeline_mode<synchronous>, transform_indices = @transform_12, window_bounds = array<i64: 2, 128, 128>}, {pipeline_mode = #tpu.pipeline_mode<synchronous>, transform_indices = @transform_13, window_bounds = array<i64: 2, 128, 128>}, {pipeline_mode = #tpu.pipeline_mode<synchronous>, transform_indices = @transform_14, window_bounds = array<i64: 2, 128>}, {pipeline_mode = #tpu.pipeline_mode<synchronous>, transform_indices = @transform_15, window_bounds = array<i64: 2, 128>}, {pipeline_mode = #tpu.pipeline_mode<synchronous>, transform_indices = @transform_16, window_bounds = array<i64: 2, 128>}, {pipeline_mode = #tpu.pipeline_mode<synchronous>, transform_indices = @transform_17, window_bounds = array<i64: 2, 128, 512>}, {pipeline_mode = #tpu.pipeline_mode<synchronous>, transform_indices = @transform_18, window_bounds = array<i64: 2, 512>}, {pipeline_mode = #tpu.pipeline_mode<synchronous>, transform_indices = @transform_19, window_bounds = array<i64: 2, 512, 128>}, {pipeline_mode = #tpu.pipeline_mode<synchronous>, transform_indices = @transform_20, window_bounds = array<i64: 2, 128>}, {pipeline_mode = #tpu.pipeline_mode<synchronous>, transform_indices = @transform_21, window_bounds = array<i64: 1, 128>}, {pipeline_mode = #tpu.pipeline_mode<synchronous>, transform_indices = @transform_22, window_bounds = array<i64: 1, 128>}, {pipeline_mode = #tpu.pipeline_mode<synchronous>, transform_indices = @transform_23, window_bounds = array<i64: 32, 128>}]} {
    %c0 = arith.constant 0 : index
    %c0_0 = arith.constant 0 : index
    %0 = vector.load %arg1[%c0, %c0_0] : memref<32x128xf32, #tpu.memory_space<vmem>>, vector<32x128xf32>
    %c0_1 = arith.constant 0 : index
    %c0_2 = arith.constant 0 : index
    %1 = vector.load %arg2[%c0_1, %c0_2] : memref<32x128xf32, #tpu.memory_space<vmem>>, vector<32x128xf32>
    %c0_3 = arith.constant 0 : index
    %c0_4 = arith.constant 0 : index
    %c0_5 = arith.constant 0 : index
    %c0_6 = arith.constant 0 : index
    %2 = vector.load %arg3[%c0_3, %c0_4, %c0_5, %c0_6] : memref<1x4x16x16xf32, #tpu.memory_space<vmem>>, vector<1x4x16x16xf32>
    %c0_7 = arith.constant 0 : index
    %c0_8 = arith.constant 0 : index
    %3 = vector.load %arg4[%c0_7, %c0_8] : memref<2x128xf32, #tpu.memory_space<vmem>>, vector<1x128xf32>
    %c0_9 = arith.constant 0 : index
    %c0_10 = arith.constant 0 : index
    %4 = vector.load %arg5[%c0_9, %c0_10] : memref<2x128xf32, #tpu.memory_space<vmem>>, vector<1x128xf32>
    %cst = arith.constant dense<0.000000e+00> : vector<32xf32>
    %5 = vector.multi_reduction <add>, %0, %cst [1] : vector<32x128xf32> to vector<32xf32>
    %6 = vector.shape_cast %5 : vector<32xf32> to vector<32x1xf32>
    %cst_11 = arith.constant 1.280000e+02 : f32
    %7 = vector.broadcast %cst_11 : f32 to vector<32x1xf32>
    %8 = arith.divf %6, %7 : vector<32x1xf32>
    %9 = vector.broadcast %8 : vector<32x1xf32> to vector<32x128xf32>
    %10 = arith.subf %0, %9 : vector<32x128xf32>
    %11 = arith.mulf %10, %10 : vector<32x128xf32>
    %cst_12 = arith.constant dense<0.000000e+00> : vector<32xf32>
    %12 = vector.multi_reduction <add>, %11, %cst_12 [1] : vector<32x128xf32> to vector<32xf32>
    %13 = vector.shape_cast %12 : vector<32xf32> to vector<32x1xf32>
    %cst_13 = arith.constant 1.280000e+02 : f32
    %14 = vector.broadcast %cst_13 : f32 to vector<32x1xf32>
    %15 = arith.divf %13, %14 : vector<32x1xf32>
    %16 = vector.broadcast %8 : vector<32x1xf32> to vector<32x128xf32>
    %17 = arith.subf %0, %16 : vector<32x128xf32>
    %cst_14 = arith.constant 9.99999974E-6 : f32
    %18 = vector.broadcast %cst_14 : f32 to vector<32x1xf32>
    %19 = arith.addf %15, %18 : vector<32x1xf32>
    %20 = math.rsqrt %19 : vector<32x1xf32>
    %21 = vector.broadcast %20 : vector<32x1xf32> to vector<32x128xf32>
    %22 = arith.mulf %17, %21 : vector<32x128xf32>
    %23 = vector.broadcast %3 : vector<1x128xf32> to vector<32x128xf32>
    %24 = arith.mulf %22, %23 : vector<32x128xf32>
    %25 = vector.broadcast %4 : vector<1x128xf32> to vector<32x128xf32>
    %26 = arith.addf %24, %25 : vector<32x128xf32>
    %27 = arith.truncf %26 : vector<32x128xf32> to vector<32x128xbf16>
    %c0_15 = arith.constant 0 : index
    %c0_16 = arith.constant 0 : index
    %c0_17 = arith.constant 0 : index
    %28 = vector.load %arg6[%c0_15, %c0_16, %c0_17] : memref<2x128x384xf32, #tpu.memory_space<vmem>>, vector<1x128x384xf32>
    %29 = vector.shape_cast %28 : vector<1x128x384xf32> to vector<128x384xf32>
    %30 = arith.truncf %29 : vector<128x384xf32> to vector<128x384xbf16>
    %cst_18 = arith.constant dense<0.000000e+00> : vector<32x384xf32>
    %31 = tpu.matmul %27, %30, %cst_18 {dimension_numbers = #tpu.dot_dimension_numbers<[1], [0], [0], [1], [0, 0, 1, 1], [], []>} : vector<32x128xbf16>, vector<128x384xbf16>, vector<32x384xf32> -> vector<32x384xf32>
    %32 = arith.truncf %31 : vector<32x384xf32> to vector<32x384xbf16>
    %33 = vector.extract_strided_slice %32 {offsets = [0, 0], sizes = [32, 128], strides = [1, 1]} : vector<32x384xbf16> to vector<32x128xbf16>
    %34 = vector.extract_strided_slice %32 {offsets = [0, 128], sizes = [32, 128], strides = [1, 1]} : vector<32x384xbf16> to vector<32x128xbf16>
    %35 = vector.extract_strided_slice %32 {offsets = [0, 256], sizes = [32, 128], strides = [1, 1]} : vector<32x384xbf16> to vector<32x128xbf16>
    %36 = vector.extract_strided_slice %33 {offsets = [0, 0], sizes = [16, 128], strides = [1, 1]} : vector<32x128xbf16> to vector<16x128xbf16>
    %37 = vector.extract_strided_slice %34 {offsets = [0, 0], sizes = [16, 128], strides = [1, 1]} : vector<32x128xbf16> to vector<16x128xbf16>
    %38 = vector.extract_strided_slice %35 {offsets = [0, 0], sizes = [16, 128], strides = [1, 1]} : vector<32x128xbf16> to vector<16x128xbf16>
    %39 = vector.extract_strided_slice %36 {offsets = [0, 0], sizes = [16, 32], strides = [1, 1]} : vector<16x128xbf16> to vector<16x32xbf16>
    %40 = vector.extract_strided_slice %37 {offsets = [0, 0], sizes = [16, 32], strides = [1, 1]} : vector<16x128xbf16> to vector<16x32xbf16>
    %cst_19 = arith.constant dense<0.000000e+00> : vector<16x16xf32>
    %41 = tpu.matmul %39, %40, %cst_19 {dimension_numbers = #tpu.dot_dimension_numbers<[1], [1], [0], [0], [0, 0, 1, 0], [], []>} : vector<16x32xbf16>, vector<16x32xbf16>, vector<16x16xf32> -> vector<16x16xf32>
    %cst_20 = arith.constant 0.176776692 : f32
    %42 = vector.broadcast %cst_20 : f32 to vector<16x16xf32>
    %43 = arith.mulf %41, %42 : vector<16x16xf32>
    %44 = vector.extract_strided_slice %2 {offsets = [0, 0, 0, 0], sizes = [1, 1, 16, 16], strides = [1, 1, 1, 1]} : vector<1x4x16x16xf32> to vector<1x1x16x16xf32>
    %45 = vector.shape_cast %44 : vector<1x1x16x16xf32> to vector<16x16xf32>
    %46 = arith.addf %43, %45 : vector<16x16xf32>
    %cst_21 = arith.constant dense<0xFF800000> : vector<16xf32>
    %47 = vector.multi_reduction <maximumf>, %46, %cst_21 [1] : vector<16x16xf32> to vector<16xf32>
    %48 = vector.shape_cast %47 : vector<16xf32> to vector<16x1xf32>
    %49 = vector.broadcast %48 : vector<16x1xf32> to vector<16x16xf32>
    %50 = arith.subf %46, %49 : vector<16x16xf32>
    %51 = math.exp %50 : vector<16x16xf32>
    %cst_22 = arith.constant dense<0.000000e+00> : vector<16xf32>
    %52 = vector.multi_reduction <add>, %51, %cst_22 [1] : vector<16x16xf32> to vector<16xf32>
    %53 = vector.shape_cast %52 : vector<16xf32> to vector<16x1xf32>
    %54 = tpu.reciprocal %53 {approx = true} : vector<16x1xf32> -> vector<16x1xf32>
    %55 = vector.broadcast %54 : vector<16x1xf32> to vector<16x16xf32>
    %56 = arith.mulf %51, %55 : vector<16x16xf32>
    %57 = arith.truncf %56 : vector<16x16xf32> to vector<16x16xbf16>
    %58 = vector.extract_strided_slice %38 {offsets = [0, 0], sizes = [16, 32], strides = [1, 1]} : vector<16x128xbf16> to vector<16x32xbf16>
    %cst_23 = arith.constant dense<0.000000e+00> : vector<16x32xf32>
    %59 = tpu.matmul %57, %58, %cst_23 {dimension_numbers = #tpu.dot_dimension_numbers<[1], [0], [0], [1], [0, 0, 1, 1], [], []>} : vector<16x16xbf16>, vector<16x32xbf16>, vector<16x32xf32> -> vector<16x32xf32>
    %60 = vector.extract_strided_slice %36 {offsets = [0, 32], sizes = [16, 32], strides = [1, 1]} : vector<16x128xbf16> to vector<16x32xbf16>
    %61 = vector.extract_strided_slice %37 {offsets = [0, 32], sizes = [16, 32], strides = [1, 1]} : vector<16x128xbf16> to vector<16x32xbf16>
    %cst_24 = arith.constant dense<0.000000e+00> : vector<16x16xf32>
    %62 = tpu.matmul %60, %61, %cst_24 {dimension_numbers = #tpu.dot_dimension_numbers<[1], [1], [0], [0], [0, 0, 1, 0], [], []>} : vector<16x32xbf16>, vector<16x32xbf16>, vector<16x16xf32> -> vector<16x16xf32>
    %cst_25 = arith.constant 0.176776692 : f32
    %63 = vector.broadcast %cst_25 : f32 to vector<16x16xf32>
    %64 = arith.mulf %62, %63 : vector<16x16xf32>
    %65 = vector.extract_strided_slice %2 {offsets = [0, 1, 0, 0], sizes = [1, 1, 16, 16], strides = [1, 1, 1, 1]} : vector<1x4x16x16xf32> to vector<1x1x16x16xf32>
    %66 = vector.shape_cast %65 : vector<1x1x16x16xf32> to vector<16x16xf32>
    %67 = arith.addf %64, %66 : vector<16x16xf32>
    %cst_26 = arith.constant dense<0xFF800000> : vector<16xf32>
    %68 = vector.multi_reduction <maximumf>, %67, %cst_26 [1] : vector<16x16xf32> to vector<16xf32>
    %69 = vector.shape_cast %68 : vector<16xf32> to vector<16x1xf32>
    %70 = vector.broadcast %69 : vector<16x1xf32> to vector<16x16xf32>
    %71 = arith.subf %67, %70 : vector<16x16xf32>
    %72 = math.exp %71 : vector<16x16xf32>
    %cst_27 = arith.constant dense<0.000000e+00> : vector<16xf32>
    %73 = vector.multi_reduction <add>, %72, %cst_27 [1] : vector<16x16xf32> to vector<16xf32>
    %74 = vector.shape_cast %73 : vector<16xf32> to vector<16x1xf32>
    %75 = tpu.reciprocal %74 {approx = true} : vector<16x1xf32> -> vector<16x1xf32>
    %76 = vector.broadcast %75 : vector<16x1xf32> to vector<16x16xf32>
    %77 = arith.mulf %72, %76 : vector<16x16xf32>
    %78 = arith.truncf %77 : vector<16x16xf32> to vector<16x16xbf16>
    %79 = vector.extract_strided_slice %38 {offsets = [0, 32], sizes = [16, 32], strides = [1, 1]} : vector<16x128xbf16> to vector<16x32xbf16>
    %cst_28 = arith.constant dense<0.000000e+00> : vector<16x32xf32>
    %80 = tpu.matmul %78, %79, %cst_28 {dimension_numbers = #tpu.dot_dimension_numbers<[1], [0], [0], [1], [0, 0, 1, 1], [], []>} : vector<16x16xbf16>, vector<16x32xbf16>, vector<16x32xf32> -> vector<16x32xf32>
    %81 = vector.extract_strided_slice %36 {offsets = [0, 64], sizes = [16, 32], strides = [1, 1]} : vector<16x128xbf16> to vector<16x32xbf16>
    %82 = vector.extract_strided_slice %37 {offsets = [0, 64], sizes = [16, 32], strides = [1, 1]} : vector<16x128xbf16> to vector<16x32xbf16>
    %cst_29 = arith.constant dense<0.000000e+00> : vector<16x16xf32>
    %83 = tpu.matmul %81, %82, %cst_29 {dimension_numbers = #tpu.dot_dimension_numbers<[1], [1], [0], [0], [0, 0, 1, 0], [], []>} : vector<16x32xbf16>, vector<16x32xbf16>, vector<16x16xf32> -> vector<16x16xf32>
    %cst_30 = arith.constant 0.176776692 : f32
    %84 = vector.broadcast %cst_30 : f32 to vector<16x16xf32>
    %85 = arith.mulf %83, %84 : vector<16x16xf32>
    %86 = vector.extract_strided_slice %2 {offsets = [0, 2, 0, 0], sizes = [1, 1, 16, 16], strides = [1, 1, 1, 1]} : vector<1x4x16x16xf32> to vector<1x1x16x16xf32>
    %87 = vector.shape_cast %86 : vector<1x1x16x16xf32> to vector<16x16xf32>
    %88 = arith.addf %85, %87 : vector<16x16xf32>
    %cst_31 = arith.constant dense<0xFF800000> : vector<16xf32>
    %89 = vector.multi_reduction <maximumf>, %88, %cst_31 [1] : vector<16x16xf32> to vector<16xf32>
    %90 = vector.shape_cast %89 : vector<16xf32> to vector<16x1xf32>
    %91 = vector.broadcast %90 : vector<16x1xf32> to vector<16x16xf32>
    %92 = arith.subf %88, %91 : vector<16x16xf32>
    %93 = math.exp %92 : vector<16x16xf32>
    %cst_32 = arith.constant dense<0.000000e+00> : vector<16xf32>
    %94 = vector.multi_reduction <add>, %93, %cst_32 [1] : vector<16x16xf32> to vector<16xf32>
    %95 = vector.shape_cast %94 : vector<16xf32> to vector<16x1xf32>
    %96 = tpu.reciprocal %95 {approx = true} : vector<16x1xf32> -> vector<16x1xf32>
    %97 = vector.broadcast %96 : vector<16x1xf32> to vector<16x16xf32>
    %98 = arith.mulf %93, %97 : vector<16x16xf32>
    %99 = arith.truncf %98 : vector<16x16xf32> to vector<16x16xbf16>
    %100 = vector.extract_strided_slice %38 {offsets = [0, 64], sizes = [16, 32], strides = [1, 1]} : vector<16x128xbf16> to vector<16x32xbf16>
    %cst_33 = arith.constant dense<0.000000e+00> : vector<16x32xf32>
    %101 = tpu.matmul %99, %100, %cst_33 {dimension_numbers = #tpu.dot_dimension_numbers<[1], [0], [0], [1], [0, 0, 1, 1], [], []>} : vector<16x16xbf16>, vector<16x32xbf16>, vector<16x32xf32> -> vector<16x32xf32>
    %102 = vector.extract_strided_slice %36 {offsets = [0, 96], sizes = [16, 32], strides = [1, 1]} : vector<16x128xbf16> to vector<16x32xbf16>
    %103 = vector.extract_strided_slice %37 {offsets = [0, 96], sizes = [16, 32], strides = [1, 1]} : vector<16x128xbf16> to vector<16x32xbf16>
    %cst_34 = arith.constant dense<0.000000e+00> : vector<16x16xf32>
    %104 = tpu.matmul %102, %103, %cst_34 {dimension_numbers = #tpu.dot_dimension_numbers<[1], [1], [0], [0], [0, 0, 1, 0], [], []>} : vector<16x32xbf16>, vector<16x32xbf16>, vector<16x16xf32> -> vector<16x16xf32>
    %cst_35 = arith.constant 0.176776692 : f32
    %105 = vector.broadcast %cst_35 : f32 to vector<16x16xf32>
    %106 = arith.mulf %104, %105 : vector<16x16xf32>
    %107 = vector.extract_strided_slice %2 {offsets = [0, 3, 0, 0], sizes = [1, 1, 16, 16], strides = [1, 1, 1, 1]} : vector<1x4x16x16xf32> to vector<1x1x16x16xf32>
    %108 = vector.shape_cast %107 : vector<1x1x16x16xf32> to vector<16x16xf32>
    %109 = arith.addf %106, %108 : vector<16x16xf32>
    %cst_36 = arith.constant dense<0xFF800000> : vector<16xf32>
    %110 = vector.multi_reduction <maximumf>, %109, %cst_36 [1] : vector<16x16xf32> to vector<16xf32>
    %111 = vector.shape_cast %110 : vector<16xf32> to vector<16x1xf32>
    %112 = vector.broadcast %111 : vector<16x1xf32> to vector<16x16xf32>
    %113 = arith.subf %109, %112 : vector<16x16xf32>
    %114 = math.exp %113 : vector<16x16xf32>
    %cst_37 = arith.constant dense<0.000000e+00> : vector<16xf32>
    %115 = vector.multi_reduction <add>, %114, %cst_37 [1] : vector<16x16xf32> to vector<16xf32>
    %116 = vector.shape_cast %115 : vector<16xf32> to vector<16x1xf32>
    %117 = tpu.reciprocal %116 {approx = true} : vector<16x1xf32> -> vector<16x1xf32>
    %118 = vector.broadcast %117 : vector<16x1xf32> to vector<16x16xf32>
    %119 = arith.mulf %114, %118 : vector<16x16xf32>
    %120 = arith.truncf %119 : vector<16x16xf32> to vector<16x16xbf16>
    %121 = vector.extract_strided_slice %38 {offsets = [0, 96], sizes = [16, 32], strides = [1, 1]} : vector<16x128xbf16> to vector<16x32xbf16>
    %cst_38 = arith.constant dense<0.000000e+00> : vector<16x32xf32>
    %122 = tpu.matmul %120, %121, %cst_38 {dimension_numbers = #tpu.dot_dimension_numbers<[1], [0], [0], [1], [0, 0, 1, 1], [], []>} : vector<16x16xbf16>, vector<16x32xbf16>, vector<16x32xf32> -> vector<16x32xf32>
    %123 = tpu.concatenate %59, %80, %101, %122 in 1 : vector<16x32xf32>, vector<16x32xf32>, vector<16x32xf32>, vector<16x32xf32> -> vector<16x128xf32>
    %124 = vector.extract_strided_slice %33 {offsets = [16, 0], sizes = [16, 128], strides = [1, 1]} : vector<32x128xbf16> to vector<16x128xbf16>
    %125 = vector.extract_strided_slice %34 {offsets = [16, 0], sizes = [16, 128], strides = [1, 1]} : vector<32x128xbf16> to vector<16x128xbf16>
    %126 = vector.extract_strided_slice %35 {offsets = [16, 0], sizes = [16, 128], strides = [1, 1]} : vector<32x128xbf16> to vector<16x128xbf16>
    %127 = vector.extract_strided_slice %124 {offsets = [0, 0], sizes = [16, 32], strides = [1, 1]} : vector<16x128xbf16> to vector<16x32xbf16>
    %128 = vector.extract_strided_slice %125 {offsets = [0, 0], sizes = [16, 32], strides = [1, 1]} : vector<16x128xbf16> to vector<16x32xbf16>
    %cst_39 = arith.constant dense<0.000000e+00> : vector<16x16xf32>
    %129 = tpu.matmul %127, %128, %cst_39 {dimension_numbers = #tpu.dot_dimension_numbers<[1], [1], [0], [0], [0, 0, 1, 0], [], []>} : vector<16x32xbf16>, vector<16x32xbf16>, vector<16x16xf32> -> vector<16x16xf32>
    %cst_40 = arith.constant 0.176776692 : f32
    %130 = vector.broadcast %cst_40 : f32 to vector<16x16xf32>
    %131 = arith.mulf %129, %130 : vector<16x16xf32>
    %132 = vector.extract_strided_slice %2 {offsets = [0, 0, 0, 0], sizes = [1, 1, 16, 16], strides = [1, 1, 1, 1]} : vector<1x4x16x16xf32> to vector<1x1x16x16xf32>
    %133 = vector.shape_cast %132 : vector<1x1x16x16xf32> to vector<16x16xf32>
    %134 = arith.addf %131, %133 : vector<16x16xf32>
    %cst_41 = arith.constant dense<0xFF800000> : vector<16xf32>
    %135 = vector.multi_reduction <maximumf>, %134, %cst_41 [1] : vector<16x16xf32> to vector<16xf32>
    %136 = vector.shape_cast %135 : vector<16xf32> to vector<16x1xf32>
    %137 = vector.broadcast %136 : vector<16x1xf32> to vector<16x16xf32>
    %138 = arith.subf %134, %137 : vector<16x16xf32>
    %139 = math.exp %138 : vector<16x16xf32>
    %cst_42 = arith.constant dense<0.000000e+00> : vector<16xf32>
    %140 = vector.multi_reduction <add>, %139, %cst_42 [1] : vector<16x16xf32> to vector<16xf32>
    %141 = vector.shape_cast %140 : vector<16xf32> to vector<16x1xf32>
    %142 = tpu.reciprocal %141 {approx = true} : vector<16x1xf32> -> vector<16x1xf32>
    %143 = vector.broadcast %142 : vector<16x1xf32> to vector<16x16xf32>
    %144 = arith.mulf %139, %143 : vector<16x16xf32>
    %145 = arith.truncf %144 : vector<16x16xf32> to vector<16x16xbf16>
    %146 = vector.extract_strided_slice %126 {offsets = [0, 0], sizes = [16, 32], strides = [1, 1]} : vector<16x128xbf16> to vector<16x32xbf16>
    %cst_43 = arith.constant dense<0.000000e+00> : vector<16x32xf32>
    %147 = tpu.matmul %145, %146, %cst_43 {dimension_numbers = #tpu.dot_dimension_numbers<[1], [0], [0], [1], [0, 0, 1, 1], [], []>} : vector<16x16xbf16>, vector<16x32xbf16>, vector<16x32xf32> -> vector<16x32xf32>
    %148 = vector.extract_strided_slice %124 {offsets = [0, 32], sizes = [16, 32], strides = [1, 1]} : vector<16x128xbf16> to vector<16x32xbf16>
    %149 = vector.extract_strided_slice %125 {offsets = [0, 32], sizes = [16, 32], strides = [1, 1]} : vector<16x128xbf16> to vector<16x32xbf16>
    %cst_44 = arith.constant dense<0.000000e+00> : vector<16x16xf32>
    %150 = tpu.matmul %148, %149, %cst_44 {dimension_numbers = #tpu.dot_dimension_numbers<[1], [1], [0], [0], [0, 0, 1, 0], [], []>} : vector<16x32xbf16>, vector<16x32xbf16>, vector<16x16xf32> -> vector<16x16xf32>
    %cst_45 = arith.constant 0.176776692 : f32
    %151 = vector.broadcast %cst_45 : f32 to vector<16x16xf32>
    %152 = arith.mulf %150, %151 : vector<16x16xf32>
    %153 = vector.extract_strided_slice %2 {offsets = [0, 1, 0, 0], sizes = [1, 1, 16, 16], strides = [1, 1, 1, 1]} : vector<1x4x16x16xf32> to vector<1x1x16x16xf32>
    %154 = vector.shape_cast %153 : vector<1x1x16x16xf32> to vector<16x16xf32>
    %155 = arith.addf %152, %154 : vector<16x16xf32>
    %cst_46 = arith.constant dense<0xFF800000> : vector<16xf32>
    %156 = vector.multi_reduction <maximumf>, %155, %cst_46 [1] : vector<16x16xf32> to vector<16xf32>
    %157 = vector.shape_cast %156 : vector<16xf32> to vector<16x1xf32>
    %158 = vector.broadcast %157 : vector<16x1xf32> to vector<16x16xf32>
    %159 = arith.subf %155, %158 : vector<16x16xf32>
    %160 = math.exp %159 : vector<16x16xf32>
    %cst_47 = arith.constant dense<0.000000e+00> : vector<16xf32>
    %161 = vector.multi_reduction <add>, %160, %cst_47 [1] : vector<16x16xf32> to vector<16xf32>
    %162 = vector.shape_cast %161 : vector<16xf32> to vector<16x1xf32>
    %163 = tpu.reciprocal %162 {approx = true} : vector<16x1xf32> -> vector<16x1xf32>
    %164 = vector.broadcast %163 : vector<16x1xf32> to vector<16x16xf32>
    %165 = arith.mulf %160, %164 : vector<16x16xf32>
    %166 = arith.truncf %165 : vector<16x16xf32> to vector<16x16xbf16>
    %167 = vector.extract_strided_slice %126 {offsets = [0, 32], sizes = [16, 32], strides = [1, 1]} : vector<16x128xbf16> to vector<16x32xbf16>
    %cst_48 = arith.constant dense<0.000000e+00> : vector<16x32xf32>
    %168 = tpu.matmul %166, %167, %cst_48 {dimension_numbers = #tpu.dot_dimension_numbers<[1], [0], [0], [1], [0, 0, 1, 1], [], []>} : vector<16x16xbf16>, vector<16x32xbf16>, vector<16x32xf32> -> vector<16x32xf32>
    %169 = vector.extract_strided_slice %124 {offsets = [0, 64], sizes = [16, 32], strides = [1, 1]} : vector<16x128xbf16> to vector<16x32xbf16>
    %170 = vector.extract_strided_slice %125 {offsets = [0, 64], sizes = [16, 32], strides = [1, 1]} : vector<16x128xbf16> to vector<16x32xbf16>
    %cst_49 = arith.constant dense<0.000000e+00> : vector<16x16xf32>
    %171 = tpu.matmul %169, %170, %cst_49 {dimension_numbers = #tpu.dot_dimension_numbers<[1], [1], [0], [0], [0, 0, 1, 0], [], []>} : vector<16x32xbf16>, vector<16x32xbf16>, vector<16x16xf32> -> vector<16x16xf32>
    %cst_50 = arith.constant 0.176776692 : f32
    %172 = vector.broadcast %cst_50 : f32 to vector<16x16xf32>
    %173 = arith.mulf %171, %172 : vector<16x16xf32>
    %174 = vector.extract_strided_slice %2 {offsets = [0, 2, 0, 0], sizes = [1, 1, 16, 16], strides = [1, 1, 1, 1]} : vector<1x4x16x16xf32> to vector<1x1x16x16xf32>
    %175 = vector.shape_cast %174 : vector<1x1x16x16xf32> to vector<16x16xf32>
    %176 = arith.addf %173, %175 : vector<16x16xf32>
    %cst_51 = arith.constant dense<0xFF800000> : vector<16xf32>
    %177 = vector.multi_reduction <maximumf>, %176, %cst_51 [1] : vector<16x16xf32> to vector<16xf32>
    %178 = vector.shape_cast %177 : vector<16xf32> to vector<16x1xf32>
    %179 = vector.broadcast %178 : vector<16x1xf32> to vector<16x16xf32>
    %180 = arith.subf %176, %179 : vector<16x16xf32>
    %181 = math.exp %180 : vector<16x16xf32>
    %cst_52 = arith.constant dense<0.000000e+00> : vector<16xf32>
    %182 = vector.multi_reduction <add>, %181, %cst_52 [1] : vector<16x16xf32> to vector<16xf32>
    %183 = vector.shape_cast %182 : vector<16xf32> to vector<16x1xf32>
    %184 = tpu.reciprocal %183 {approx = true} : vector<16x1xf32> -> vector<16x1xf32>
    %185 = vector.broadcast %184 : vector<16x1xf32> to vector<16x16xf32>
    %186 = arith.mulf %181, %185 : vector<16x16xf32>
    %187 = arith.truncf %186 : vector<16x16xf32> to vector<16x16xbf16>
    %188 = vector.extract_strided_slice %126 {offsets = [0, 64], sizes = [16, 32], strides = [1, 1]} : vector<16x128xbf16> to vector<16x32xbf16>
    %cst_53 = arith.constant dense<0.000000e+00> : vector<16x32xf32>
    %189 = tpu.matmul %187, %188, %cst_53 {dimension_numbers = #tpu.dot_dimension_numbers<[1], [0], [0], [1], [0, 0, 1, 1], [], []>} : vector<16x16xbf16>, vector<16x32xbf16>, vector<16x32xf32> -> vector<16x32xf32>
    %190 = vector.extract_strided_slice %124 {offsets = [0, 96], sizes = [16, 32], strides = [1, 1]} : vector<16x128xbf16> to vector<16x32xbf16>
    %191 = vector.extract_strided_slice %125 {offsets = [0, 96], sizes = [16, 32], strides = [1, 1]} : vector<16x128xbf16> to vector<16x32xbf16>
    %cst_54 = arith.constant dense<0.000000e+00> : vector<16x16xf32>
    %192 = tpu.matmul %190, %191, %cst_54 {dimension_numbers = #tpu.dot_dimension_numbers<[1], [1], [0], [0], [0, 0, 1, 0], [], []>} : vector<16x32xbf16>, vector<16x32xbf16>, vector<16x16xf32> -> vector<16x16xf32>
    %cst_55 = arith.constant 0.176776692 : f32
    %193 = vector.broadcast %cst_55 : f32 to vector<16x16xf32>
    %194 = arith.mulf %192, %193 : vector<16x16xf32>
    %195 = vector.extract_strided_slice %2 {offsets = [0, 3, 0, 0], sizes = [1, 1, 16, 16], strides = [1, 1, 1, 1]} : vector<1x4x16x16xf32> to vector<1x1x16x16xf32>
    %196 = vector.shape_cast %195 : vector<1x1x16x16xf32> to vector<16x16xf32>
    %197 = arith.addf %194, %196 : vector<16x16xf32>
    %cst_56 = arith.constant dense<0xFF800000> : vector<16xf32>
    %198 = vector.multi_reduction <maximumf>, %197, %cst_56 [1] : vector<16x16xf32> to vector<16xf32>
    %199 = vector.shape_cast %198 : vector<16xf32> to vector<16x1xf32>
    %200 = vector.broadcast %199 : vector<16x1xf32> to vector<16x16xf32>
    %201 = arith.subf %197, %200 : vector<16x16xf32>
    %202 = math.exp %201 : vector<16x16xf32>
    %cst_57 = arith.constant dense<0.000000e+00> : vector<16xf32>
    %203 = vector.multi_reduction <add>, %202, %cst_57 [1] : vector<16x16xf32> to vector<16xf32>
    %204 = vector.shape_cast %203 : vector<16xf32> to vector<16x1xf32>
    %205 = tpu.reciprocal %204 {approx = true} : vector<16x1xf32> -> vector<16x1xf32>
    %206 = vector.broadcast %205 : vector<16x1xf32> to vector<16x16xf32>
    %207 = arith.mulf %202, %206 : vector<16x16xf32>
    %208 = arith.truncf %207 : vector<16x16xf32> to vector<16x16xbf16>
    %209 = vector.extract_strided_slice %126 {offsets = [0, 96], sizes = [16, 32], strides = [1, 1]} : vector<16x128xbf16> to vector<16x32xbf16>
    %cst_58 = arith.constant dense<0.000000e+00> : vector<16x32xf32>
    %210 = tpu.matmul %208, %209, %cst_58 {dimension_numbers = #tpu.dot_dimension_numbers<[1], [0], [0], [1], [0, 0, 1, 1], [], []>} : vector<16x16xbf16>, vector<16x32xbf16>, vector<16x32xf32> -> vector<16x32xf32>
    %211 = tpu.concatenate %147, %168, %189, %210 in 1 : vector<16x32xf32>, vector<16x32xf32>, vector<16x32xf32>, vector<16x32xf32> -> vector<16x128xf32>
    %212 = tpu.concatenate %123, %211 in 0 : vector<16x128xf32>, vector<16x128xf32> -> vector<32x128xf32>
    %213 = arith.truncf %212 : vector<32x128xf32> to vector<32x128xbf16>
    %c0_59 = arith.constant 0 : index
    %c0_60 = arith.constant 0 : index
    %c0_61 = arith.constant 0 : index
    %214 = vector.load %arg7[%c0_59, %c0_60, %c0_61] : memref<2x128x128xf32, #tpu.memory_space<vmem>>, vector<1x128x128xf32>
    %215 = vector.shape_cast %214 : vector<1x128x128xf32> to vector<128x128xf32>
    %216 = arith.truncf %215 : vector<128x128xf32> to vector<128x128xbf16>
    %cst_62 = arith.constant dense<0.000000e+00> : vector<32x128xf32>
    %217 = tpu.matmul %213, %216, %cst_62 {dimension_numbers = #tpu.dot_dimension_numbers<[1], [0], [0], [1], [0, 0, 1, 1], [], []>} : vector<32x128xbf16>, vector<128x128xbf16>, vector<32x128xf32> -> vector<32x128xf32>
    %c0_63 = arith.constant 0 : index
    %c0_64 = arith.constant 0 : index
    %218 = vector.load %arg8[%c0_63, %c0_64] : memref<2x128xf32, #tpu.memory_space<vmem>>, vector<1x128xf32>
    %219 = vector.broadcast %218 : vector<1x128xf32> to vector<32x128xf32>
    %220 = arith.addf %217, %219 : vector<32x128xf32>
    %221 = arith.addf %0, %220 : vector<32x128xf32>
    %c0_65 = arith.constant 0 : index
    %c0_66 = arith.constant 0 : index
    %222 = vector.load %arg9[%c0_65, %c0_66] : memref<2x128xf32, #tpu.memory_space<vmem>>, vector<1x128xf32>
    %c0_67 = arith.constant 0 : index
    %c0_68 = arith.constant 0 : index
    %223 = vector.load %arg10[%c0_67, %c0_68] : memref<2x128xf32, #tpu.memory_space<vmem>>, vector<1x128xf32>
    %cst_69 = arith.constant dense<0.000000e+00> : vector<32xf32>
    %224 = vector.multi_reduction <add>, %221, %cst_69 [1] : vector<32x128xf32> to vector<32xf32>
    %225 = vector.shape_cast %224 : vector<32xf32> to vector<32x1xf32>
    %cst_70 = arith.constant 1.280000e+02 : f32
    %226 = vector.broadcast %cst_70 : f32 to vector<32x1xf32>
    %227 = arith.divf %225, %226 : vector<32x1xf32>
    %228 = vector.broadcast %227 : vector<32x1xf32> to vector<32x128xf32>
    %229 = arith.subf %221, %228 : vector<32x128xf32>
    %230 = arith.mulf %229, %229 : vector<32x128xf32>
    %cst_71 = arith.constant dense<0.000000e+00> : vector<32xf32>
    %231 = vector.multi_reduction <add>, %230, %cst_71 [1] : vector<32x128xf32> to vector<32xf32>
    %232 = vector.shape_cast %231 : vector<32xf32> to vector<32x1xf32>
    %cst_72 = arith.constant 1.280000e+02 : f32
    %233 = vector.broadcast %cst_72 : f32 to vector<32x1xf32>
    %234 = arith.divf %232, %233 : vector<32x1xf32>
    %235 = vector.broadcast %227 : vector<32x1xf32> to vector<32x128xf32>
    %236 = arith.subf %221, %235 : vector<32x128xf32>
    %cst_73 = arith.constant 9.99999974E-6 : f32
    %237 = vector.broadcast %cst_73 : f32 to vector<32x1xf32>
    %238 = arith.addf %234, %237 : vector<32x1xf32>
    %239 = math.rsqrt %238 : vector<32x1xf32>
    %240 = vector.broadcast %239 : vector<32x1xf32> to vector<32x128xf32>
    %241 = arith.mulf %236, %240 : vector<32x128xf32>
    %242 = vector.broadcast %222 : vector<1x128xf32> to vector<32x128xf32>
    %243 = arith.mulf %241, %242 : vector<32x128xf32>
    %244 = vector.broadcast %223 : vector<1x128xf32> to vector<32x128xf32>
    %245 = arith.addf %243, %244 : vector<32x128xf32>
    %246 = arith.truncf %245 : vector<32x128xf32> to vector<32x128xbf16>
    %c0_74 = arith.constant 0 : index
    %c0_75 = arith.constant 0 : index
    %247 = vector.load %arg9[%c0_74, %c0_75] : memref<2x128xf32, #tpu.memory_space<vmem>>, vector<1x128xf32>
    %c0_76 = arith.constant 0 : index
    %c0_77 = arith.constant 0 : index
    %248 = vector.load %arg10[%c0_76, %c0_77] : memref<2x128xf32, #tpu.memory_space<vmem>>, vector<1x128xf32>
    %cst_78 = arith.constant dense<0.000000e+00> : vector<32xf32>
    %249 = vector.multi_reduction <add>, %1, %cst_78 [1] : vector<32x128xf32> to vector<32xf32>
    %250 = vector.shape_cast %249 : vector<32xf32> to vector<32x1xf32>
    %cst_79 = arith.constant 1.280000e+02 : f32
    %251 = vector.broadcast %cst_79 : f32 to vector<32x1xf32>
    %252 = arith.divf %250, %251 : vector<32x1xf32>
    %253 = vector.broadcast %252 : vector<32x1xf32> to vector<32x128xf32>
    %254 = arith.subf %1, %253 : vector<32x128xf32>
    %255 = arith.mulf %254, %254 : vector<32x128xf32>
    %cst_80 = arith.constant dense<0.000000e+00> : vector<32xf32>
    %256 = vector.multi_reduction <add>, %255, %cst_80 [1] : vector<32x128xf32> to vector<32xf32>
    %257 = vector.shape_cast %256 : vector<32xf32> to vector<32x1xf32>
    %cst_81 = arith.constant 1.280000e+02 : f32
    %258 = vector.broadcast %cst_81 : f32 to vector<32x1xf32>
    %259 = arith.divf %257, %258 : vector<32x1xf32>
    %260 = vector.broadcast %252 : vector<32x1xf32> to vector<32x128xf32>
    %261 = arith.subf %1, %260 : vector<32x128xf32>
    %cst_82 = arith.constant 9.99999974E-6 : f32
    %262 = vector.broadcast %cst_82 : f32 to vector<32x1xf32>
    %263 = arith.addf %259, %262 : vector<32x1xf32>
    %264 = math.rsqrt %263 : vector<32x1xf32>
    %265 = vector.broadcast %264 : vector<32x1xf32> to vector<32x128xf32>
    %266 = arith.mulf %261, %265 : vector<32x128xf32>
    %267 = vector.broadcast %247 : vector<1x128xf32> to vector<32x128xf32>
    %268 = arith.mulf %266, %267 : vector<32x128xf32>
    %269 = vector.broadcast %248 : vector<1x128xf32> to vector<32x128xf32>
    %270 = arith.addf %268, %269 : vector<32x128xf32>
    %271 = arith.truncf %270 : vector<32x128xf32> to vector<32x128xbf16>
    %c0_83 = arith.constant 0 : index
    %c0_84 = arith.constant 0 : index
    %c0_85 = arith.constant 0 : index
    %272 = vector.load %arg11[%c0_83, %c0_84, %c0_85] : memref<2x128x128xf32, #tpu.memory_space<vmem>>, vector<1x128x128xf32>
    %273 = vector.shape_cast %272 : vector<1x128x128xf32> to vector<128x128xf32>
    %274 = arith.truncf %273 : vector<128x128xf32> to vector<128x128xbf16>
    %cst_86 = arith.constant dense<0.000000e+00> : vector<32x128xf32>
    %275 = tpu.matmul %246, %274, %cst_86 {dimension_numbers = #tpu.dot_dimension_numbers<[1], [0], [0], [1], [0, 0, 1, 1], [], []>} : vector<32x128xbf16>, vector<128x128xbf16>, vector<32x128xf32> -> vector<32x128xf32>
    %276 = arith.truncf %275 : vector<32x128xf32> to vector<32x128xbf16>
    %c0_87 = arith.constant 0 : index
    %c0_88 = arith.constant 0 : index
    %c0_89 = arith.constant 0 : index
    %277 = vector.load %arg12[%c0_87, %c0_88, %c0_89] : memref<2x128x128xf32, #tpu.memory_space<vmem>>, vector<1x128x128xf32>
    %278 = vector.shape_cast %277 : vector<1x128x128xf32> to vector<128x128xf32>
    %279 = arith.truncf %278 : vector<128x128xf32> to vector<128x128xbf16>
    %cst_90 = arith.constant dense<0.000000e+00> : vector<32x128xf32>
    %280 = tpu.matmul %271, %279, %cst_90 {dimension_numbers = #tpu.dot_dimension_numbers<[1], [0], [0], [1], [0, 0, 1, 1], [], []>} : vector<32x128xbf16>, vector<128x128xbf16>, vector<32x128xf32> -> vector<32x128xf32>
    %281 = arith.truncf %280 : vector<32x128xf32> to vector<32x128xbf16>
    %c0_91 = arith.constant 0 : index
    %c0_92 = arith.constant 0 : index
    %c0_93 = arith.constant 0 : index
    %282 = vector.load %arg13[%c0_91, %c0_92, %c0_93] : memref<2x128x128xf32, #tpu.memory_space<vmem>>, vector<1x128x128xf32>
    %283 = vector.shape_cast %282 : vector<1x128x128xf32> to vector<128x128xf32>
    %284 = arith.truncf %283 : vector<128x128xf32> to vector<128x128xbf16>
    %cst_94 = arith.constant dense<0.000000e+00> : vector<32x128xf32>
    %285 = tpu.matmul %271, %284, %cst_94 {dimension_numbers = #tpu.dot_dimension_numbers<[1], [0], [0], [1], [0, 0, 1, 1], [], []>} : vector<32x128xbf16>, vector<128x128xbf16>, vector<32x128xf32> -> vector<32x128xf32>
    %286 = arith.truncf %285 : vector<32x128xf32> to vector<32x128xbf16>
    %287 = vector.extract_strided_slice %276 {offsets = [0, 0], sizes = [16, 128], strides = [1, 1]} : vector<32x128xbf16> to vector<16x128xbf16>
    %288 = vector.extract_strided_slice %281 {offsets = [0, 0], sizes = [16, 128], strides = [1, 1]} : vector<32x128xbf16> to vector<16x128xbf16>
    %289 = vector.extract_strided_slice %286 {offsets = [0, 0], sizes = [16, 128], strides = [1, 1]} : vector<32x128xbf16> to vector<16x128xbf16>
    %290 = vector.extract_strided_slice %287 {offsets = [0, 0], sizes = [16, 32], strides = [1, 1]} : vector<16x128xbf16> to vector<16x32xbf16>
    %291 = vector.extract_strided_slice %288 {offsets = [0, 0], sizes = [16, 32], strides = [1, 1]} : vector<16x128xbf16> to vector<16x32xbf16>
    %cst_95 = arith.constant dense<0.000000e+00> : vector<16x16xf32>
    %292 = tpu.matmul %290, %291, %cst_95 {dimension_numbers = #tpu.dot_dimension_numbers<[1], [1], [0], [0], [0, 0, 1, 0], [], []>} : vector<16x32xbf16>, vector<16x32xbf16>, vector<16x16xf32> -> vector<16x16xf32>
    %cst_96 = arith.constant 0.176776692 : f32
    %293 = vector.broadcast %cst_96 : f32 to vector<16x16xf32>
    %294 = arith.mulf %292, %293 : vector<16x16xf32>
    %295 = vector.extract_strided_slice %2 {offsets = [0, 0, 0, 0], sizes = [1, 1, 16, 16], strides = [1, 1, 1, 1]} : vector<1x4x16x16xf32> to vector<1x1x16x16xf32>
    %296 = vector.shape_cast %295 : vector<1x1x16x16xf32> to vector<16x16xf32>
    %297 = arith.addf %294, %296 : vector<16x16xf32>
    %cst_97 = arith.constant dense<0xFF800000> : vector<16xf32>
    %298 = vector.multi_reduction <maximumf>, %297, %cst_97 [1] : vector<16x16xf32> to vector<16xf32>
    %299 = vector.shape_cast %298 : vector<16xf32> to vector<16x1xf32>
    %300 = vector.broadcast %299 : vector<16x1xf32> to vector<16x16xf32>
    %301 = arith.subf %297, %300 : vector<16x16xf32>
    %302 = math.exp %301 : vector<16x16xf32>
    %cst_98 = arith.constant dense<0.000000e+00> : vector<16xf32>
    %303 = vector.multi_reduction <add>, %302, %cst_98 [1] : vector<16x16xf32> to vector<16xf32>
    %304 = vector.shape_cast %303 : vector<16xf32> to vector<16x1xf32>
    %305 = tpu.reciprocal %304 {approx = true} : vector<16x1xf32> -> vector<16x1xf32>
    %306 = vector.broadcast %305 : vector<16x1xf32> to vector<16x16xf32>
    %307 = arith.mulf %302, %306 : vector<16x16xf32>
    %308 = arith.truncf %307 : vector<16x16xf32> to vector<16x16xbf16>
    %309 = vector.extract_strided_slice %289 {offsets = [0, 0], sizes = [16, 32], strides = [1, 1]} : vector<16x128xbf16> to vector<16x32xbf16>
    %cst_99 = arith.constant dense<0.000000e+00> : vector<16x32xf32>
    %310 = tpu.matmul %308, %309, %cst_99 {dimension_numbers = #tpu.dot_dimension_numbers<[1], [0], [0], [1], [0, 0, 1, 1], [], []>} : vector<16x16xbf16>, vector<16x32xbf16>, vector<16x32xf32> -> vector<16x32xf32>
    %311 = vector.extract_strided_slice %287 {offsets = [0, 32], sizes = [16, 32], strides = [1, 1]} : vector<16x128xbf16> to vector<16x32xbf16>
    %312 = vector.extract_strided_slice %288 {offsets = [0, 32], sizes = [16, 32], strides = [1, 1]} : vector<16x128xbf16> to vector<16x32xbf16>
    %cst_100 = arith.constant dense<0.000000e+00> : vector<16x16xf32>
    %313 = tpu.matmul %311, %312, %cst_100 {dimension_numbers = #tpu.dot_dimension_numbers<[1], [1], [0], [0], [0, 0, 1, 0], [], []>} : vector<16x32xbf16>, vector<16x32xbf16>, vector<16x16xf32> -> vector<16x16xf32>
    %cst_101 = arith.constant 0.176776692 : f32
    %314 = vector.broadcast %cst_101 : f32 to vector<16x16xf32>
    %315 = arith.mulf %313, %314 : vector<16x16xf32>
    %316 = vector.extract_strided_slice %2 {offsets = [0, 1, 0, 0], sizes = [1, 1, 16, 16], strides = [1, 1, 1, 1]} : vector<1x4x16x16xf32> to vector<1x1x16x16xf32>
    %317 = vector.shape_cast %316 : vector<1x1x16x16xf32> to vector<16x16xf32>
    %318 = arith.addf %315, %317 : vector<16x16xf32>
    %cst_102 = arith.constant dense<0xFF800000> : vector<16xf32>
    %319 = vector.multi_reduction <maximumf>, %318, %cst_102 [1] : vector<16x16xf32> to vector<16xf32>
    %320 = vector.shape_cast %319 : vector<16xf32> to vector<16x1xf32>
    %321 = vector.broadcast %320 : vector<16x1xf32> to vector<16x16xf32>
    %322 = arith.subf %318, %321 : vector<16x16xf32>
    %323 = math.exp %322 : vector<16x16xf32>
    %cst_103 = arith.constant dense<0.000000e+00> : vector<16xf32>
    %324 = vector.multi_reduction <add>, %323, %cst_103 [1] : vector<16x16xf32> to vector<16xf32>
    %325 = vector.shape_cast %324 : vector<16xf32> to vector<16x1xf32>
    %326 = tpu.reciprocal %325 {approx = true} : vector<16x1xf32> -> vector<16x1xf32>
    %327 = vector.broadcast %326 : vector<16x1xf32> to vector<16x16xf32>
    %328 = arith.mulf %323, %327 : vector<16x16xf32>
    %329 = arith.truncf %328 : vector<16x16xf32> to vector<16x16xbf16>
    %330 = vector.extract_strided_slice %289 {offsets = [0, 32], sizes = [16, 32], strides = [1, 1]} : vector<16x128xbf16> to vector<16x32xbf16>
    %cst_104 = arith.constant dense<0.000000e+00> : vector<16x32xf32>
    %331 = tpu.matmul %329, %330, %cst_104 {dimension_numbers = #tpu.dot_dimension_numbers<[1], [0], [0], [1], [0, 0, 1, 1], [], []>} : vector<16x16xbf16>, vector<16x32xbf16>, vector<16x32xf32> -> vector<16x32xf32>
    %332 = vector.extract_strided_slice %287 {offsets = [0, 64], sizes = [16, 32], strides = [1, 1]} : vector<16x128xbf16> to vector<16x32xbf16>
    %333 = vector.extract_strided_slice %288 {offsets = [0, 64], sizes = [16, 32], strides = [1, 1]} : vector<16x128xbf16> to vector<16x32xbf16>
    %cst_105 = arith.constant dense<0.000000e+00> : vector<16x16xf32>
    %334 = tpu.matmul %332, %333, %cst_105 {dimension_numbers = #tpu.dot_dimension_numbers<[1], [1], [0], [0], [0, 0, 1, 0], [], []>} : vector<16x32xbf16>, vector<16x32xbf16>, vector<16x16xf32> -> vector<16x16xf32>
    %cst_106 = arith.constant 0.176776692 : f32
    %335 = vector.broadcast %cst_106 : f32 to vector<16x16xf32>
    %336 = arith.mulf %334, %335 : vector<16x16xf32>
    %337 = vector.extract_strided_slice %2 {offsets = [0, 2, 0, 0], sizes = [1, 1, 16, 16], strides = [1, 1, 1, 1]} : vector<1x4x16x16xf32> to vector<1x1x16x16xf32>
    %338 = vector.shape_cast %337 : vector<1x1x16x16xf32> to vector<16x16xf32>
    %339 = arith.addf %336, %338 : vector<16x16xf32>
    %cst_107 = arith.constant dense<0xFF800000> : vector<16xf32>
    %340 = vector.multi_reduction <maximumf>, %339, %cst_107 [1] : vector<16x16xf32> to vector<16xf32>
    %341 = vector.shape_cast %340 : vector<16xf32> to vector<16x1xf32>
    %342 = vector.broadcast %341 : vector<16x1xf32> to vector<16x16xf32>
    %343 = arith.subf %339, %342 : vector<16x16xf32>
    %344 = math.exp %343 : vector<16x16xf32>
    %cst_108 = arith.constant dense<0.000000e+00> : vector<16xf32>
    %345 = vector.multi_reduction <add>, %344, %cst_108 [1] : vector<16x16xf32> to vector<16xf32>
    %346 = vector.shape_cast %345 : vector<16xf32> to vector<16x1xf32>
    %347 = tpu.reciprocal %346 {approx = true} : vector<16x1xf32> -> vector<16x1xf32>
    %348 = vector.broadcast %347 : vector<16x1xf32> to vector<16x16xf32>
    %349 = arith.mulf %344, %348 : vector<16x16xf32>
    %350 = arith.truncf %349 : vector<16x16xf32> to vector<16x16xbf16>
    %351 = vector.extract_strided_slice %289 {offsets = [0, 64], sizes = [16, 32], strides = [1, 1]} : vector<16x128xbf16> to vector<16x32xbf16>
    %cst_109 = arith.constant dense<0.000000e+00> : vector<16x32xf32>
    %352 = tpu.matmul %350, %351, %cst_109 {dimension_numbers = #tpu.dot_dimension_numbers<[1], [0], [0], [1], [0, 0, 1, 1], [], []>} : vector<16x16xbf16>, vector<16x32xbf16>, vector<16x32xf32> -> vector<16x32xf32>
    %353 = vector.extract_strided_slice %287 {offsets = [0, 96], sizes = [16, 32], strides = [1, 1]} : vector<16x128xbf16> to vector<16x32xbf16>
    %354 = vector.extract_strided_slice %288 {offsets = [0, 96], sizes = [16, 32], strides = [1, 1]} : vector<16x128xbf16> to vector<16x32xbf16>
    %cst_110 = arith.constant dense<0.000000e+00> : vector<16x16xf32>
    %355 = tpu.matmul %353, %354, %cst_110 {dimension_numbers = #tpu.dot_dimension_numbers<[1], [1], [0], [0], [0, 0, 1, 0], [], []>} : vector<16x32xbf16>, vector<16x32xbf16>, vector<16x16xf32> -> vector<16x16xf32>
    %cst_111 = arith.constant 0.176776692 : f32
    %356 = vector.broadcast %cst_111 : f32 to vector<16x16xf32>
    %357 = arith.mulf %355, %356 : vector<16x16xf32>
    %358 = vector.extract_strided_slice %2 {offsets = [0, 3, 0, 0], sizes = [1, 1, 16, 16], strides = [1, 1, 1, 1]} : vector<1x4x16x16xf32> to vector<1x1x16x16xf32>
    %359 = vector.shape_cast %358 : vector<1x1x16x16xf32> to vector<16x16xf32>
    %360 = arith.addf %357, %359 : vector<16x16xf32>
    %cst_112 = arith.constant dense<0xFF800000> : vector<16xf32>
    %361 = vector.multi_reduction <maximumf>, %360, %cst_112 [1] : vector<16x16xf32> to vector<16xf32>
    %362 = vector.shape_cast %361 : vector<16xf32> to vector<16x1xf32>
    %363 = vector.broadcast %362 : vector<16x1xf32> to vector<16x16xf32>
    %364 = arith.subf %360, %363 : vector<16x16xf32>
    %365 = math.exp %364 : vector<16x16xf32>
    %cst_113 = arith.constant dense<0.000000e+00> : vector<16xf32>
    %366 = vector.multi_reduction <add>, %365, %cst_113 [1] : vector<16x16xf32> to vector<16xf32>
    %367 = vector.shape_cast %366 : vector<16xf32> to vector<16x1xf32>
    %368 = tpu.reciprocal %367 {approx = true} : vector<16x1xf32> -> vector<16x1xf32>
    %369 = vector.broadcast %368 : vector<16x1xf32> to vector<16x16xf32>
    %370 = arith.mulf %365, %369 : vector<16x16xf32>
    %371 = arith.truncf %370 : vector<16x16xf32> to vector<16x16xbf16>
    %372 = vector.extract_strided_slice %289 {offsets = [0, 96], sizes = [16, 32], strides = [1, 1]} : vector<16x128xbf16> to vector<16x32xbf16>
    %cst_114 = arith.constant dense<0.000000e+00> : vector<16x32xf32>
    %373 = tpu.matmul %371, %372, %cst_114 {dimension_numbers = #tpu.dot_dimension_numbers<[1], [0], [0], [1], [0, 0, 1, 1], [], []>} : vector<16x16xbf16>, vector<16x32xbf16>, vector<16x32xf32> -> vector<16x32xf32>
    %374 = tpu.concatenate %310, %331, %352, %373 in 1 : vector<16x32xf32>, vector<16x32xf32>, vector<16x32xf32>, vector<16x32xf32> -> vector<16x128xf32>
    %375 = vector.extract_strided_slice %276 {offsets = [16, 0], sizes = [16, 128], strides = [1, 1]} : vector<32x128xbf16> to vector<16x128xbf16>
    %376 = vector.extract_strided_slice %281 {offsets = [16, 0], sizes = [16, 128], strides = [1, 1]} : vector<32x128xbf16> to vector<16x128xbf16>
    %377 = vector.extract_strided_slice %286 {offsets = [16, 0], sizes = [16, 128], strides = [1, 1]} : vector<32x128xbf16> to vector<16x128xbf16>
    %378 = vector.extract_strided_slice %375 {offsets = [0, 0], sizes = [16, 32], strides = [1, 1]} : vector<16x128xbf16> to vector<16x32xbf16>
    %379 = vector.extract_strided_slice %376 {offsets = [0, 0], sizes = [16, 32], strides = [1, 1]} : vector<16x128xbf16> to vector<16x32xbf16>
    %cst_115 = arith.constant dense<0.000000e+00> : vector<16x16xf32>
    %380 = tpu.matmul %378, %379, %cst_115 {dimension_numbers = #tpu.dot_dimension_numbers<[1], [1], [0], [0], [0, 0, 1, 0], [], []>} : vector<16x32xbf16>, vector<16x32xbf16>, vector<16x16xf32> -> vector<16x16xf32>
    %cst_116 = arith.constant 0.176776692 : f32
    %381 = vector.broadcast %cst_116 : f32 to vector<16x16xf32>
    %382 = arith.mulf %380, %381 : vector<16x16xf32>
    %383 = vector.extract_strided_slice %2 {offsets = [0, 0, 0, 0], sizes = [1, 1, 16, 16], strides = [1, 1, 1, 1]} : vector<1x4x16x16xf32> to vector<1x1x16x16xf32>
    %384 = vector.shape_cast %383 : vector<1x1x16x16xf32> to vector<16x16xf32>
    %385 = arith.addf %382, %384 : vector<16x16xf32>
    %cst_117 = arith.constant dense<0xFF800000> : vector<16xf32>
    %386 = vector.multi_reduction <maximumf>, %385, %cst_117 [1] : vector<16x16xf32> to vector<16xf32>
    %387 = vector.shape_cast %386 : vector<16xf32> to vector<16x1xf32>
    %388 = vector.broadcast %387 : vector<16x1xf32> to vector<16x16xf32>
    %389 = arith.subf %385, %388 : vector<16x16xf32>
    %390 = math.exp %389 : vector<16x16xf32>
    %cst_118 = arith.constant dense<0.000000e+00> : vector<16xf32>
    %391 = vector.multi_reduction <add>, %390, %cst_118 [1] : vector<16x16xf32> to vector<16xf32>
    %392 = vector.shape_cast %391 : vector<16xf32> to vector<16x1xf32>
    %393 = tpu.reciprocal %392 {approx = true} : vector<16x1xf32> -> vector<16x1xf32>
    %394 = vector.broadcast %393 : vector<16x1xf32> to vector<16x16xf32>
    %395 = arith.mulf %390, %394 : vector<16x16xf32>
    %396 = arith.truncf %395 : vector<16x16xf32> to vector<16x16xbf16>
    %397 = vector.extract_strided_slice %377 {offsets = [0, 0], sizes = [16, 32], strides = [1, 1]} : vector<16x128xbf16> to vector<16x32xbf16>
    %cst_119 = arith.constant dense<0.000000e+00> : vector<16x32xf32>
    %398 = tpu.matmul %396, %397, %cst_119 {dimension_numbers = #tpu.dot_dimension_numbers<[1], [0], [0], [1], [0, 0, 1, 1], [], []>} : vector<16x16xbf16>, vector<16x32xbf16>, vector<16x32xf32> -> vector<16x32xf32>
    %399 = vector.extract_strided_slice %375 {offsets = [0, 32], sizes = [16, 32], strides = [1, 1]} : vector<16x128xbf16> to vector<16x32xbf16>
    %400 = vector.extract_strided_slice %376 {offsets = [0, 32], sizes = [16, 32], strides = [1, 1]} : vector<16x128xbf16> to vector<16x32xbf16>
    %cst_120 = arith.constant dense<0.000000e+00> : vector<16x16xf32>
    %401 = tpu.matmul %399, %400, %cst_120 {dimension_numbers = #tpu.dot_dimension_numbers<[1], [1], [0], [0], [0, 0, 1, 0], [], []>} : vector<16x32xbf16>, vector<16x32xbf16>, vector<16x16xf32> -> vector<16x16xf32>
    %cst_121 = arith.constant 0.176776692 : f32
    %402 = vector.broadcast %cst_121 : f32 to vector<16x16xf32>
    %403 = arith.mulf %401, %402 : vector<16x16xf32>
    %404 = vector.extract_strided_slice %2 {offsets = [0, 1, 0, 0], sizes = [1, 1, 16, 16], strides = [1, 1, 1, 1]} : vector<1x4x16x16xf32> to vector<1x1x16x16xf32>
    %405 = vector.shape_cast %404 : vector<1x1x16x16xf32> to vector<16x16xf32>
    %406 = arith.addf %403, %405 : vector<16x16xf32>
    %cst_122 = arith.constant dense<0xFF800000> : vector<16xf32>
    %407 = vector.multi_reduction <maximumf>, %406, %cst_122 [1] : vector<16x16xf32> to vector<16xf32>
    %408 = vector.shape_cast %407 : vector<16xf32> to vector<16x1xf32>
    %409 = vector.broadcast %408 : vector<16x1xf32> to vector<16x16xf32>
    %410 = arith.subf %406, %409 : vector<16x16xf32>
    %411 = math.exp %410 : vector<16x16xf32>
    %cst_123 = arith.constant dense<0.000000e+00> : vector<16xf32>
    %412 = vector.multi_reduction <add>, %411, %cst_123 [1] : vector<16x16xf32> to vector<16xf32>
    %413 = vector.shape_cast %412 : vector<16xf32> to vector<16x1xf32>
    %414 = tpu.reciprocal %413 {approx = true} : vector<16x1xf32> -> vector<16x1xf32>
    %415 = vector.broadcast %414 : vector<16x1xf32> to vector<16x16xf32>
    %416 = arith.mulf %411, %415 : vector<16x16xf32>
    %417 = arith.truncf %416 : vector<16x16xf32> to vector<16x16xbf16>
    %418 = vector.extract_strided_slice %377 {offsets = [0, 32], sizes = [16, 32], strides = [1, 1]} : vector<16x128xbf16> to vector<16x32xbf16>
    %cst_124 = arith.constant dense<0.000000e+00> : vector<16x32xf32>
    %419 = tpu.matmul %417, %418, %cst_124 {dimension_numbers = #tpu.dot_dimension_numbers<[1], [0], [0], [1], [0, 0, 1, 1], [], []>} : vector<16x16xbf16>, vector<16x32xbf16>, vector<16x32xf32> -> vector<16x32xf32>
    %420 = vector.extract_strided_slice %375 {offsets = [0, 64], sizes = [16, 32], strides = [1, 1]} : vector<16x128xbf16> to vector<16x32xbf16>
    %421 = vector.extract_strided_slice %376 {offsets = [0, 64], sizes = [16, 32], strides = [1, 1]} : vector<16x128xbf16> to vector<16x32xbf16>
    %cst_125 = arith.constant dense<0.000000e+00> : vector<16x16xf32>
    %422 = tpu.matmul %420, %421, %cst_125 {dimension_numbers = #tpu.dot_dimension_numbers<[1], [1], [0], [0], [0, 0, 1, 0], [], []>} : vector<16x32xbf16>, vector<16x32xbf16>, vector<16x16xf32> -> vector<16x16xf32>
    %cst_126 = arith.constant 0.176776692 : f32
    %423 = vector.broadcast %cst_126 : f32 to vector<16x16xf32>
    %424 = arith.mulf %422, %423 : vector<16x16xf32>
    %425 = vector.extract_strided_slice %2 {offsets = [0, 2, 0, 0], sizes = [1, 1, 16, 16], strides = [1, 1, 1, 1]} : vector<1x4x16x16xf32> to vector<1x1x16x16xf32>
    %426 = vector.shape_cast %425 : vector<1x1x16x16xf32> to vector<16x16xf32>
    %427 = arith.addf %424, %426 : vector<16x16xf32>
    %cst_127 = arith.constant dense<0xFF800000> : vector<16xf32>
    %428 = vector.multi_reduction <maximumf>, %427, %cst_127 [1] : vector<16x16xf32> to vector<16xf32>
    %429 = vector.shape_cast %428 : vector<16xf32> to vector<16x1xf32>
    %430 = vector.broadcast %429 : vector<16x1xf32> to vector<16x16xf32>
    %431 = arith.subf %427, %430 : vector<16x16xf32>
    %432 = math.exp %431 : vector<16x16xf32>
    %cst_128 = arith.constant dense<0.000000e+00> : vector<16xf32>
    %433 = vector.multi_reduction <add>, %432, %cst_128 [1] : vector<16x16xf32> to vector<16xf32>
    %434 = vector.shape_cast %433 : vector<16xf32> to vector<16x1xf32>
    %435 = tpu.reciprocal %434 {approx = true} : vector<16x1xf32> -> vector<16x1xf32>
    %436 = vector.broadcast %435 : vector<16x1xf32> to vector<16x16xf32>
    %437 = arith.mulf %432, %436 : vector<16x16xf32>
    %438 = arith.truncf %437 : vector<16x16xf32> to vector<16x16xbf16>
    %439 = vector.extract_strided_slice %377 {offsets = [0, 64], sizes = [16, 32], strides = [1, 1]} : vector<16x128xbf16> to vector<16x32xbf16>
    %cst_129 = arith.constant dense<0.000000e+00> : vector<16x32xf32>
    %440 = tpu.matmul %438, %439, %cst_129 {dimension_numbers = #tpu.dot_dimension_numbers<[1], [0], [0], [1], [0, 0, 1, 1], [], []>} : vector<16x16xbf16>, vector<16x32xbf16>, vector<16x32xf32> -> vector<16x32xf32>
    %441 = vector.extract_strided_slice %375 {offsets = [0, 96], sizes = [16, 32], strides = [1, 1]} : vector<16x128xbf16> to vector<16x32xbf16>
    %442 = vector.extract_strided_slice %376 {offsets = [0, 96], sizes = [16, 32], strides = [1, 1]} : vector<16x128xbf16> to vector<16x32xbf16>
    %cst_130 = arith.constant dense<0.000000e+00> : vector<16x16xf32>
    %443 = tpu.matmul %441, %442, %cst_130 {dimension_numbers = #tpu.dot_dimension_numbers<[1], [1], [0], [0], [0, 0, 1, 0], [], []>} : vector<16x32xbf16>, vector<16x32xbf16>, vector<16x16xf32> -> vector<16x16xf32>
    %cst_131 = arith.constant 0.176776692 : f32
    %444 = vector.broadcast %cst_131 : f32 to vector<16x16xf32>
    %445 = arith.mulf %443, %444 : vector<16x16xf32>
    %446 = vector.extract_strided_slice %2 {offsets = [0, 3, 0, 0], sizes = [1, 1, 16, 16], strides = [1, 1, 1, 1]} : vector<1x4x16x16xf32> to vector<1x1x16x16xf32>
    %447 = vector.shape_cast %446 : vector<1x1x16x16xf32> to vector<16x16xf32>
    %448 = arith.addf %445, %447 : vector<16x16xf32>
    %cst_132 = arith.constant dense<0xFF800000> : vector<16xf32>
    %449 = vector.multi_reduction <maximumf>, %448, %cst_132 [1] : vector<16x16xf32> to vector<16xf32>
    %450 = vector.shape_cast %449 : vector<16xf32> to vector<16x1xf32>
    %451 = vector.broadcast %450 : vector<16x1xf32> to vector<16x16xf32>
    %452 = arith.subf %448, %451 : vector<16x16xf32>
    %453 = math.exp %452 : vector<16x16xf32>
    %cst_133 = arith.constant dense<0.000000e+00> : vector<16xf32>
    %454 = vector.multi_reduction <add>, %453, %cst_133 [1] : vector<16x16xf32> to vector<16xf32>
    %455 = vector.shape_cast %454 : vector<16xf32> to vector<16x1xf32>
    %456 = tpu.reciprocal %455 {approx = true} : vector<16x1xf32> -> vector<16x1xf32>
    %457 = vector.broadcast %456 : vector<16x1xf32> to vector<16x16xf32>
    %458 = arith.mulf %453, %457 : vector<16x16xf32>
    %459 = arith.truncf %458 : vector<16x16xf32> to vector<16x16xbf16>
    %460 = vector.extract_strided_slice %377 {offsets = [0, 96], sizes = [16, 32], strides = [1, 1]} : vector<16x128xbf16> to vector<16x32xbf16>
    %cst_134 = arith.constant dense<0.000000e+00> : vector<16x32xf32>
    %461 = tpu.matmul %459, %460, %cst_134 {dimension_numbers = #tpu.dot_dimension_numbers<[1], [0], [0], [1], [0, 0, 1, 1], [], []>} : vector<16x16xbf16>, vector<16x32xbf16>, vector<16x32xf32> -> vector<16x32xf32>
    %462 = tpu.concatenate %398, %419, %440, %461 in 1 : vector<16x32xf32>, vector<16x32xf32>, vector<16x32xf32>, vector<16x32xf32> -> vector<16x128xf32>
    %463 = tpu.concatenate %374, %462 in 0 : vector<16x128xf32>, vector<16x128xf32> -> vector<32x128xf32>
    %464 = arith.truncf %463 : vector<32x128xf32> to vector<32x128xbf16>
    %c0_135 = arith.constant 0 : index
    %c0_136 = arith.constant 0 : index
    %c0_137 = arith.constant 0 : index
    %465 = vector.load %arg14[%c0_135, %c0_136, %c0_137] : memref<2x128x128xf32, #tpu.memory_space<vmem>>, vector<1x128x128xf32>
    %466 = vector.shape_cast %465 : vector<1x128x128xf32> to vector<128x128xf32>
    %467 = arith.truncf %466 : vector<128x128xf32> to vector<128x128xbf16>
    %cst_138 = arith.constant dense<0.000000e+00> : vector<32x128xf32>
    %468 = tpu.matmul %464, %467, %cst_138 {dimension_numbers = #tpu.dot_dimension_numbers<[1], [0], [0], [1], [0, 0, 1, 1], [], []>} : vector<32x128xbf16>, vector<128x128xbf16>, vector<32x128xf32> -> vector<32x128xf32>
    %c0_139 = arith.constant 0 : index
    %c0_140 = arith.constant 0 : index
    %469 = vector.load %arg15[%c0_139, %c0_140] : memref<2x128xf32, #tpu.memory_space<vmem>>, vector<1x128xf32>
    %470 = vector.broadcast %469 : vector<1x128xf32> to vector<32x128xf32>
    %471 = arith.addf %468, %470 : vector<32x128xf32>
    %472 = arith.addf %221, %471 : vector<32x128xf32>
    %c0_141 = arith.constant 0 : index
    %c0_142 = arith.constant 0 : index
    %473 = vector.load %arg16[%c0_141, %c0_142] : memref<2x128xf32, #tpu.memory_space<vmem>>, vector<1x128xf32>
    %c0_143 = arith.constant 0 : index
    %c0_144 = arith.constant 0 : index
    %474 = vector.load %arg17[%c0_143, %c0_144] : memref<2x128xf32, #tpu.memory_space<vmem>>, vector<1x128xf32>
    %cst_145 = arith.constant dense<0.000000e+00> : vector<32xf32>
    %475 = vector.multi_reduction <add>, %472, %cst_145 [1] : vector<32x128xf32> to vector<32xf32>
    %476 = vector.shape_cast %475 : vector<32xf32> to vector<32x1xf32>
    %cst_146 = arith.constant 1.280000e+02 : f32
    %477 = vector.broadcast %cst_146 : f32 to vector<32x1xf32>
    %478 = arith.divf %476, %477 : vector<32x1xf32>
    %479 = vector.broadcast %478 : vector<32x1xf32> to vector<32x128xf32>
    %480 = arith.subf %472, %479 : vector<32x128xf32>
    %481 = arith.mulf %480, %480 : vector<32x128xf32>
    %cst_147 = arith.constant dense<0.000000e+00> : vector<32xf32>
    %482 = vector.multi_reduction <add>, %481, %cst_147 [1] : vector<32x128xf32> to vector<32xf32>
    %483 = vector.shape_cast %482 : vector<32xf32> to vector<32x1xf32>
    %cst_148 = arith.constant 1.280000e+02 : f32
    %484 = vector.broadcast %cst_148 : f32 to vector<32x1xf32>
    %485 = arith.divf %483, %484 : vector<32x1xf32>
    %486 = vector.broadcast %478 : vector<32x1xf32> to vector<32x128xf32>
    %487 = arith.subf %472, %486 : vector<32x128xf32>
    %cst_149 = arith.constant 9.99999974E-6 : f32
    %488 = vector.broadcast %cst_149 : f32 to vector<32x1xf32>
    %489 = arith.addf %485, %488 : vector<32x1xf32>
    %490 = math.rsqrt %489 : vector<32x1xf32>
    %491 = vector.broadcast %490 : vector<32x1xf32> to vector<32x128xf32>
    %492 = arith.mulf %487, %491 : vector<32x128xf32>
    %493 = vector.broadcast %473 : vector<1x128xf32> to vector<32x128xf32>
    %494 = arith.mulf %492, %493 : vector<32x128xf32>
    %495 = vector.broadcast %474 : vector<1x128xf32> to vector<32x128xf32>
    %496 = arith.addf %494, %495 : vector<32x128xf32>
    %497 = arith.truncf %496 : vector<32x128xf32> to vector<32x128xbf16>
    %c0_150 = arith.constant 0 : index
    %c0_151 = arith.constant 0 : index
    %c0_152 = arith.constant 0 : index
    %498 = vector.load %arg18[%c0_150, %c0_151, %c0_152] : memref<2x128x512xf32, #tpu.memory_space<vmem>>, vector<1x128x512xf32>
    %499 = vector.shape_cast %498 : vector<1x128x512xf32> to vector<128x512xf32>
    %500 = arith.truncf %499 : vector<128x512xf32> to vector<128x512xbf16>
    %cst_153 = arith.constant dense<0.000000e+00> : vector<32x512xf32>
    %501 = tpu.matmul %497, %500, %cst_153 {dimension_numbers = #tpu.dot_dimension_numbers<[1], [0], [0], [1], [0, 0, 1, 1], [], []>} : vector<32x128xbf16>, vector<128x512xbf16>, vector<32x512xf32> -> vector<32x512xf32>
    %c0_154 = arith.constant 0 : index
    %c0_155 = arith.constant 0 : index
    %502 = vector.load %arg19[%c0_154, %c0_155] : memref<2x512xf32, #tpu.memory_space<vmem>>, vector<1x512xf32>
    %503 = vector.broadcast %502 : vector<1x512xf32> to vector<32x512xf32>
    %504 = arith.addf %501, %503 : vector<32x512xf32>
    %cst_156 = arith.constant 5.000000e-01 : f32
    %505 = vector.broadcast %cst_156 : f32 to vector<32x512xf32>
    %506 = arith.mulf %505, %504 : vector<32x512xf32>
    %cst_157 = arith.constant 4.471500e-02 : f32
    %507 = vector.broadcast %cst_157 : f32 to vector<32x512xf32>
    %508 = arith.mulf %507, %504 : vector<32x512xf32>
    %509 = arith.mulf %508, %504 : vector<32x512xf32>
    %510 = arith.mulf %509, %504 : vector<32x512xf32>
    %511 = arith.addf %504, %510 : vector<32x512xf32>
    %cst_158 = arith.constant 0.797884583 : f32
    %512 = vector.broadcast %cst_158 : f32 to vector<32x512xf32>
    %513 = arith.mulf %512, %511 : vector<32x512xf32>
    %514 = math.tanh %513 : vector<32x512xf32>
    %cst_159 = arith.constant 1.000000e+00 : f32
    %515 = vector.broadcast %cst_159 : f32 to vector<32x512xf32>
    %516 = arith.addf %515, %514 : vector<32x512xf32>
    %517 = arith.mulf %506, %516 : vector<32x512xf32>
    %518 = arith.truncf %517 : vector<32x512xf32> to vector<32x512xbf16>
    %c0_160 = arith.constant 0 : index
    %c0_161 = arith.constant 0 : index
    %c0_162 = arith.constant 0 : index
    %519 = vector.load %arg20[%c0_160, %c0_161, %c0_162] : memref<2x512x128xf32, #tpu.memory_space<vmem>>, vector<1x512x128xf32>
    %520 = vector.shape_cast %519 : vector<1x512x128xf32> to vector<512x128xf32>
    %521 = arith.truncf %520 : vector<512x128xf32> to vector<512x128xbf16>
    %cst_163 = arith.constant dense<0.000000e+00> : vector<32x128xf32>
    %522 = tpu.matmul %518, %521, %cst_163 {dimension_numbers = #tpu.dot_dimension_numbers<[1], [0], [0], [1], [0, 0, 1, 1], [], []>} : vector<32x512xbf16>, vector<512x128xbf16>, vector<32x128xf32> -> vector<32x128xf32>
    %c0_164 = arith.constant 0 : index
    %c0_165 = arith.constant 0 : index
    %523 = vector.load %arg21[%c0_164, %c0_165] : memref<2x128xf32, #tpu.memory_space<vmem>>, vector<1x128xf32>
    %524 = vector.broadcast %523 : vector<1x128xf32> to vector<32x128xf32>
    %525 = arith.addf %522, %524 : vector<32x128xf32>
    %526 = arith.addf %472, %525 : vector<32x128xf32>
    %c1 = arith.constant 1 : index
    %c0_166 = arith.constant 0 : index
    %527 = vector.load %arg4[%c1, %c0_166] : memref<2x128xf32, #tpu.memory_space<vmem>>, vector<1x128xf32>
    %c1_167 = arith.constant 1 : index
    %c0_168 = arith.constant 0 : index
    %528 = vector.load %arg5[%c1_167, %c0_168] : memref<2x128xf32, #tpu.memory_space<vmem>>, vector<1x128xf32>
    %cst_169 = arith.constant dense<0.000000e+00> : vector<32xf32>
    %529 = vector.multi_reduction <add>, %526, %cst_169 [1] : vector<32x128xf32> to vector<32xf32>
    %530 = vector.shape_cast %529 : vector<32xf32> to vector<32x1xf32>
    %cst_170 = arith.constant 1.280000e+02 : f32
    %531 = vector.broadcast %cst_170 : f32 to vector<32x1xf32>
    %532 = arith.divf %530, %531 : vector<32x1xf32>
    %533 = vector.broadcast %532 : vector<32x1xf32> to vector<32x128xf32>
    %534 = arith.subf %526, %533 : vector<32x128xf32>
    %535 = arith.mulf %534, %534 : vector<32x128xf32>
    %cst_171 = arith.constant dense<0.000000e+00> : vector<32xf32>
    %536 = vector.multi_reduction <add>, %535, %cst_171 [1] : vector<32x128xf32> to vector<32xf32>
    %537 = vector.shape_cast %536 : vector<32xf32> to vector<32x1xf32>
    %cst_172 = arith.constant 1.280000e+02 : f32
    %538 = vector.broadcast %cst_172 : f32 to vector<32x1xf32>
    %539 = arith.divf %537, %538 : vector<32x1xf32>
    %540 = vector.broadcast %532 : vector<32x1xf32> to vector<32x128xf32>
    %541 = arith.subf %526, %540 : vector<32x128xf32>
    %cst_173 = arith.constant 9.99999974E-6 : f32
    %542 = vector.broadcast %cst_173 : f32 to vector<32x1xf32>
    %543 = arith.addf %539, %542 : vector<32x1xf32>
    %544 = math.rsqrt %543 : vector<32x1xf32>
    %545 = vector.broadcast %544 : vector<32x1xf32> to vector<32x128xf32>
    %546 = arith.mulf %541, %545 : vector<32x128xf32>
    %547 = vector.broadcast %527 : vector<1x128xf32> to vector<32x128xf32>
    %548 = arith.mulf %546, %547 : vector<32x128xf32>
    %549 = vector.broadcast %528 : vector<1x128xf32> to vector<32x128xf32>
    %550 = arith.addf %548, %549 : vector<32x128xf32>
    %551 = arith.truncf %550 : vector<32x128xf32> to vector<32x128xbf16>
    %c1_174 = arith.constant 1 : index
    %c0_175 = arith.constant 0 : index
    %c0_176 = arith.constant 0 : index
    %552 = vector.load %arg6[%c1_174, %c0_175, %c0_176] : memref<2x128x384xf32, #tpu.memory_space<vmem>>, vector<1x128x384xf32>
    %553 = vector.shape_cast %552 : vector<1x128x384xf32> to vector<128x384xf32>
    %554 = arith.truncf %553 : vector<128x384xf32> to vector<128x384xbf16>
    %cst_177 = arith.constant dense<0.000000e+00> : vector<32x384xf32>
    %555 = tpu.matmul %551, %554, %cst_177 {dimension_numbers = #tpu.dot_dimension_numbers<[1], [0], [0], [1], [0, 0, 1, 1], [], []>} : vector<32x128xbf16>, vector<128x384xbf16>, vector<32x384xf32> -> vector<32x384xf32>
    %556 = arith.truncf %555 : vector<32x384xf32> to vector<32x384xbf16>
    %557 = vector.extract_strided_slice %556 {offsets = [0, 0], sizes = [32, 128], strides = [1, 1]} : vector<32x384xbf16> to vector<32x128xbf16>
    %558 = vector.extract_strided_slice %556 {offsets = [0, 128], sizes = [32, 128], strides = [1, 1]} : vector<32x384xbf16> to vector<32x128xbf16>
    %559 = vector.extract_strided_slice %556 {offsets = [0, 256], sizes = [32, 128], strides = [1, 1]} : vector<32x384xbf16> to vector<32x128xbf16>
    %560 = vector.extract_strided_slice %557 {offsets = [0, 0], sizes = [16, 128], strides = [1, 1]} : vector<32x128xbf16> to vector<16x128xbf16>
    %561 = vector.extract_strided_slice %558 {offsets = [0, 0], sizes = [16, 128], strides = [1, 1]} : vector<32x128xbf16> to vector<16x128xbf16>
    %562 = vector.extract_strided_slice %559 {offsets = [0, 0], sizes = [16, 128], strides = [1, 1]} : vector<32x128xbf16> to vector<16x128xbf16>
    %563 = vector.extract_strided_slice %560 {offsets = [0, 0], sizes = [16, 32], strides = [1, 1]} : vector<16x128xbf16> to vector<16x32xbf16>
    %564 = vector.extract_strided_slice %561 {offsets = [0, 0], sizes = [16, 32], strides = [1, 1]} : vector<16x128xbf16> to vector<16x32xbf16>
    %cst_178 = arith.constant dense<0.000000e+00> : vector<16x16xf32>
    %565 = tpu.matmul %563, %564, %cst_178 {dimension_numbers = #tpu.dot_dimension_numbers<[1], [1], [0], [0], [0, 0, 1, 0], [], []>} : vector<16x32xbf16>, vector<16x32xbf16>, vector<16x16xf32> -> vector<16x16xf32>
    %cst_179 = arith.constant 0.176776692 : f32
    %566 = vector.broadcast %cst_179 : f32 to vector<16x16xf32>
    %567 = arith.mulf %565, %566 : vector<16x16xf32>
    %568 = vector.extract_strided_slice %2 {offsets = [0, 0, 0, 0], sizes = [1, 1, 16, 16], strides = [1, 1, 1, 1]} : vector<1x4x16x16xf32> to vector<1x1x16x16xf32>
    %569 = vector.shape_cast %568 : vector<1x1x16x16xf32> to vector<16x16xf32>
    %570 = arith.addf %567, %569 : vector<16x16xf32>
    %cst_180 = arith.constant dense<0xFF800000> : vector<16xf32>
    %571 = vector.multi_reduction <maximumf>, %570, %cst_180 [1] : vector<16x16xf32> to vector<16xf32>
    %572 = vector.shape_cast %571 : vector<16xf32> to vector<16x1xf32>
    %573 = vector.broadcast %572 : vector<16x1xf32> to vector<16x16xf32>
    %574 = arith.subf %570, %573 : vector<16x16xf32>
    %575 = math.exp %574 : vector<16x16xf32>
    %cst_181 = arith.constant dense<0.000000e+00> : vector<16xf32>
    %576 = vector.multi_reduction <add>, %575, %cst_181 [1] : vector<16x16xf32> to vector<16xf32>
    %577 = vector.shape_cast %576 : vector<16xf32> to vector<16x1xf32>
    %578 = tpu.reciprocal %577 {approx = true} : vector<16x1xf32> -> vector<16x1xf32>
    %579 = vector.broadcast %578 : vector<16x1xf32> to vector<16x16xf32>
    %580 = arith.mulf %575, %579 : vector<16x16xf32>
    %581 = arith.truncf %580 : vector<16x16xf32> to vector<16x16xbf16>
    %582 = vector.extract_strided_slice %562 {offsets = [0, 0], sizes = [16, 32], strides = [1, 1]} : vector<16x128xbf16> to vector<16x32xbf16>
    %cst_182 = arith.constant dense<0.000000e+00> : vector<16x32xf32>
    %583 = tpu.matmul %581, %582, %cst_182 {dimension_numbers = #tpu.dot_dimension_numbers<[1], [0], [0], [1], [0, 0, 1, 1], [], []>} : vector<16x16xbf16>, vector<16x32xbf16>, vector<16x32xf32> -> vector<16x32xf32>
    %584 = vector.extract_strided_slice %560 {offsets = [0, 32], sizes = [16, 32], strides = [1, 1]} : vector<16x128xbf16> to vector<16x32xbf16>
    %585 = vector.extract_strided_slice %561 {offsets = [0, 32], sizes = [16, 32], strides = [1, 1]} : vector<16x128xbf16> to vector<16x32xbf16>
    %cst_183 = arith.constant dense<0.000000e+00> : vector<16x16xf32>
    %586 = tpu.matmul %584, %585, %cst_183 {dimension_numbers = #tpu.dot_dimension_numbers<[1], [1], [0], [0], [0, 0, 1, 0], [], []>} : vector<16x32xbf16>, vector<16x32xbf16>, vector<16x16xf32> -> vector<16x16xf32>
    %cst_184 = arith.constant 0.176776692 : f32
    %587 = vector.broadcast %cst_184 : f32 to vector<16x16xf32>
    %588 = arith.mulf %586, %587 : vector<16x16xf32>
    %589 = vector.extract_strided_slice %2 {offsets = [0, 1, 0, 0], sizes = [1, 1, 16, 16], strides = [1, 1, 1, 1]} : vector<1x4x16x16xf32> to vector<1x1x16x16xf32>
    %590 = vector.shape_cast %589 : vector<1x1x16x16xf32> to vector<16x16xf32>
    %591 = arith.addf %588, %590 : vector<16x16xf32>
    %cst_185 = arith.constant dense<0xFF800000> : vector<16xf32>
    %592 = vector.multi_reduction <maximumf>, %591, %cst_185 [1] : vector<16x16xf32> to vector<16xf32>
    %593 = vector.shape_cast %592 : vector<16xf32> to vector<16x1xf32>
    %594 = vector.broadcast %593 : vector<16x1xf32> to vector<16x16xf32>
    %595 = arith.subf %591, %594 : vector<16x16xf32>
    %596 = math.exp %595 : vector<16x16xf32>
    %cst_186 = arith.constant dense<0.000000e+00> : vector<16xf32>
    %597 = vector.multi_reduction <add>, %596, %cst_186 [1] : vector<16x16xf32> to vector<16xf32>
    %598 = vector.shape_cast %597 : vector<16xf32> to vector<16x1xf32>
    %599 = tpu.reciprocal %598 {approx = true} : vector<16x1xf32> -> vector<16x1xf32>
    %600 = vector.broadcast %599 : vector<16x1xf32> to vector<16x16xf32>
    %601 = arith.mulf %596, %600 : vector<16x16xf32>
    %602 = arith.truncf %601 : vector<16x16xf32> to vector<16x16xbf16>
    %603 = vector.extract_strided_slice %562 {offsets = [0, 32], sizes = [16, 32], strides = [1, 1]} : vector<16x128xbf16> to vector<16x32xbf16>
    %cst_187 = arith.constant dense<0.000000e+00> : vector<16x32xf32>
    %604 = tpu.matmul %602, %603, %cst_187 {dimension_numbers = #tpu.dot_dimension_numbers<[1], [0], [0], [1], [0, 0, 1, 1], [], []>} : vector<16x16xbf16>, vector<16x32xbf16>, vector<16x32xf32> -> vector<16x32xf32>
    %605 = vector.extract_strided_slice %560 {offsets = [0, 64], sizes = [16, 32], strides = [1, 1]} : vector<16x128xbf16> to vector<16x32xbf16>
    %606 = vector.extract_strided_slice %561 {offsets = [0, 64], sizes = [16, 32], strides = [1, 1]} : vector<16x128xbf16> to vector<16x32xbf16>
    %cst_188 = arith.constant dense<0.000000e+00> : vector<16x16xf32>
    %607 = tpu.matmul %605, %606, %cst_188 {dimension_numbers = #tpu.dot_dimension_numbers<[1], [1], [0], [0], [0, 0, 1, 0], [], []>} : vector<16x32xbf16>, vector<16x32xbf16>, vector<16x16xf32> -> vector<16x16xf32>
    %cst_189 = arith.constant 0.176776692 : f32
    %608 = vector.broadcast %cst_189 : f32 to vector<16x16xf32>
    %609 = arith.mulf %607, %608 : vector<16x16xf32>
    %610 = vector.extract_strided_slice %2 {offsets = [0, 2, 0, 0], sizes = [1, 1, 16, 16], strides = [1, 1, 1, 1]} : vector<1x4x16x16xf32> to vector<1x1x16x16xf32>
    %611 = vector.shape_cast %610 : vector<1x1x16x16xf32> to vector<16x16xf32>
    %612 = arith.addf %609, %611 : vector<16x16xf32>
    %cst_190 = arith.constant dense<0xFF800000> : vector<16xf32>
    %613 = vector.multi_reduction <maximumf>, %612, %cst_190 [1] : vector<16x16xf32> to vector<16xf32>
    %614 = vector.shape_cast %613 : vector<16xf32> to vector<16x1xf32>
    %615 = vector.broadcast %614 : vector<16x1xf32> to vector<16x16xf32>
    %616 = arith.subf %612, %615 : vector<16x16xf32>
    %617 = math.exp %616 : vector<16x16xf32>
    %cst_191 = arith.constant dense<0.000000e+00> : vector<16xf32>
    %618 = vector.multi_reduction <add>, %617, %cst_191 [1] : vector<16x16xf32> to vector<16xf32>
    %619 = vector.shape_cast %618 : vector<16xf32> to vector<16x1xf32>
    %620 = tpu.reciprocal %619 {approx = true} : vector<16x1xf32> -> vector<16x1xf32>
    %621 = vector.broadcast %620 : vector<16x1xf32> to vector<16x16xf32>
    %622 = arith.mulf %617, %621 : vector<16x16xf32>
    %623 = arith.truncf %622 : vector<16x16xf32> to vector<16x16xbf16>
    %624 = vector.extract_strided_slice %562 {offsets = [0, 64], sizes = [16, 32], strides = [1, 1]} : vector<16x128xbf16> to vector<16x32xbf16>
    %cst_192 = arith.constant dense<0.000000e+00> : vector<16x32xf32>
    %625 = tpu.matmul %623, %624, %cst_192 {dimension_numbers = #tpu.dot_dimension_numbers<[1], [0], [0], [1], [0, 0, 1, 1], [], []>} : vector<16x16xbf16>, vector<16x32xbf16>, vector<16x32xf32> -> vector<16x32xf32>
    %626 = vector.extract_strided_slice %560 {offsets = [0, 96], sizes = [16, 32], strides = [1, 1]} : vector<16x128xbf16> to vector<16x32xbf16>
    %627 = vector.extract_strided_slice %561 {offsets = [0, 96], sizes = [16, 32], strides = [1, 1]} : vector<16x128xbf16> to vector<16x32xbf16>
    %cst_193 = arith.constant dense<0.000000e+00> : vector<16x16xf32>
    %628 = tpu.matmul %626, %627, %cst_193 {dimension_numbers = #tpu.dot_dimension_numbers<[1], [1], [0], [0], [0, 0, 1, 0], [], []>} : vector<16x32xbf16>, vector<16x32xbf16>, vector<16x16xf32> -> vector<16x16xf32>
    %cst_194 = arith.constant 0.176776692 : f32
    %629 = vector.broadcast %cst_194 : f32 to vector<16x16xf32>
    %630 = arith.mulf %628, %629 : vector<16x16xf32>
    %631 = vector.extract_strided_slice %2 {offsets = [0, 3, 0, 0], sizes = [1, 1, 16, 16], strides = [1, 1, 1, 1]} : vector<1x4x16x16xf32> to vector<1x1x16x16xf32>
    %632 = vector.shape_cast %631 : vector<1x1x16x16xf32> to vector<16x16xf32>
    %633 = arith.addf %630, %632 : vector<16x16xf32>
    %cst_195 = arith.constant dense<0xFF800000> : vector<16xf32>
    %634 = vector.multi_reduction <maximumf>, %633, %cst_195 [1] : vector<16x16xf32> to vector<16xf32>
    %635 = vector.shape_cast %634 : vector<16xf32> to vector<16x1xf32>
    %636 = vector.broadcast %635 : vector<16x1xf32> to vector<16x16xf32>
    %637 = arith.subf %633, %636 : vector<16x16xf32>
    %638 = math.exp %637 : vector<16x16xf32>
    %cst_196 = arith.constant dense<0.000000e+00> : vector<16xf32>
    %639 = vector.multi_reduction <add>, %638, %cst_196 [1] : vector<16x16xf32> to vector<16xf32>
    %640 = vector.shape_cast %639 : vector<16xf32> to vector<16x1xf32>
    %641 = tpu.reciprocal %640 {approx = true} : vector<16x1xf32> -> vector<16x1xf32>
    %642 = vector.broadcast %641 : vector<16x1xf32> to vector<16x16xf32>
    %643 = arith.mulf %638, %642 : vector<16x16xf32>
    %644 = arith.truncf %643 : vector<16x16xf32> to vector<16x16xbf16>
    %645 = vector.extract_strided_slice %562 {offsets = [0, 96], sizes = [16, 32], strides = [1, 1]} : vector<16x128xbf16> to vector<16x32xbf16>
    %cst_197 = arith.constant dense<0.000000e+00> : vector<16x32xf32>
    %646 = tpu.matmul %644, %645, %cst_197 {dimension_numbers = #tpu.dot_dimension_numbers<[1], [0], [0], [1], [0, 0, 1, 1], [], []>} : vector<16x16xbf16>, vector<16x32xbf16>, vector<16x32xf32> -> vector<16x32xf32>
    %647 = tpu.concatenate %583, %604, %625, %646 in 1 : vector<16x32xf32>, vector<16x32xf32>, vector<16x32xf32>, vector<16x32xf32> -> vector<16x128xf32>
    %648 = vector.extract_strided_slice %557 {offsets = [16, 0], sizes = [16, 128], strides = [1, 1]} : vector<32x128xbf16> to vector<16x128xbf16>
    %649 = vector.extract_strided_slice %558 {offsets = [16, 0], sizes = [16, 128], strides = [1, 1]} : vector<32x128xbf16> to vector<16x128xbf16>
    %650 = vector.extract_strided_slice %559 {offsets = [16, 0], sizes = [16, 128], strides = [1, 1]} : vector<32x128xbf16> to vector<16x128xbf16>
    %651 = vector.extract_strided_slice %648 {offsets = [0, 0], sizes = [16, 32], strides = [1, 1]} : vector<16x128xbf16> to vector<16x32xbf16>
    %652 = vector.extract_strided_slice %649 {offsets = [0, 0], sizes = [16, 32], strides = [1, 1]} : vector<16x128xbf16> to vector<16x32xbf16>
    %cst_198 = arith.constant dense<0.000000e+00> : vector<16x16xf32>
    %653 = tpu.matmul %651, %652, %cst_198 {dimension_numbers = #tpu.dot_dimension_numbers<[1], [1], [0], [0], [0, 0, 1, 0], [], []>} : vector<16x32xbf16>, vector<16x32xbf16>, vector<16x16xf32> -> vector<16x16xf32>
    %cst_199 = arith.constant 0.176776692 : f32
    %654 = vector.broadcast %cst_199 : f32 to vector<16x16xf32>
    %655 = arith.mulf %653, %654 : vector<16x16xf32>
    %656 = vector.extract_strided_slice %2 {offsets = [0, 0, 0, 0], sizes = [1, 1, 16, 16], strides = [1, 1, 1, 1]} : vector<1x4x16x16xf32> to vector<1x1x16x16xf32>
    %657 = vector.shape_cast %656 : vector<1x1x16x16xf32> to vector<16x16xf32>
    %658 = arith.addf %655, %657 : vector<16x16xf32>
    %cst_200 = arith.constant dense<0xFF800000> : vector<16xf32>
    %659 = vector.multi_reduction <maximumf>, %658, %cst_200 [1] : vector<16x16xf32> to vector<16xf32>
    %660 = vector.shape_cast %659 : vector<16xf32> to vector<16x1xf32>
    %661 = vector.broadcast %660 : vector<16x1xf32> to vector<16x16xf32>
    %662 = arith.subf %658, %661 : vector<16x16xf32>
    %663 = math.exp %662 : vector<16x16xf32>
    %cst_201 = arith.constant dense<0.000000e+00> : vector<16xf32>
    %664 = vector.multi_reduction <add>, %663, %cst_201 [1] : vector<16x16xf32> to vector<16xf32>
    %665 = vector.shape_cast %664 : vector<16xf32> to vector<16x1xf32>
    %666 = tpu.reciprocal %665 {approx = true} : vector<16x1xf32> -> vector<16x1xf32>
    %667 = vector.broadcast %666 : vector<16x1xf32> to vector<16x16xf32>
    %668 = arith.mulf %663, %667 : vector<16x16xf32>
    %669 = arith.truncf %668 : vector<16x16xf32> to vector<16x16xbf16>
    %670 = vector.extract_strided_slice %650 {offsets = [0, 0], sizes = [16, 32], strides = [1, 1]} : vector<16x128xbf16> to vector<16x32xbf16>
    %cst_202 = arith.constant dense<0.000000e+00> : vector<16x32xf32>
    %671 = tpu.matmul %669, %670, %cst_202 {dimension_numbers = #tpu.dot_dimension_numbers<[1], [0], [0], [1], [0, 0, 1, 1], [], []>} : vector<16x16xbf16>, vector<16x32xbf16>, vector<16x32xf32> -> vector<16x32xf32>
    %672 = vector.extract_strided_slice %648 {offsets = [0, 32], sizes = [16, 32], strides = [1, 1]} : vector<16x128xbf16> to vector<16x32xbf16>
    %673 = vector.extract_strided_slice %649 {offsets = [0, 32], sizes = [16, 32], strides = [1, 1]} : vector<16x128xbf16> to vector<16x32xbf16>
    %cst_203 = arith.constant dense<0.000000e+00> : vector<16x16xf32>
    %674 = tpu.matmul %672, %673, %cst_203 {dimension_numbers = #tpu.dot_dimension_numbers<[1], [1], [0], [0], [0, 0, 1, 0], [], []>} : vector<16x32xbf16>, vector<16x32xbf16>, vector<16x16xf32> -> vector<16x16xf32>
    %cst_204 = arith.constant 0.176776692 : f32
    %675 = vector.broadcast %cst_204 : f32 to vector<16x16xf32>
    %676 = arith.mulf %674, %675 : vector<16x16xf32>
    %677 = vector.extract_strided_slice %2 {offsets = [0, 1, 0, 0], sizes = [1, 1, 16, 16], strides = [1, 1, 1, 1]} : vector<1x4x16x16xf32> to vector<1x1x16x16xf32>
    %678 = vector.shape_cast %677 : vector<1x1x16x16xf32> to vector<16x16xf32>
    %679 = arith.addf %676, %678 : vector<16x16xf32>
    %cst_205 = arith.constant dense<0xFF800000> : vector<16xf32>
    %680 = vector.multi_reduction <maximumf>, %679, %cst_205 [1] : vector<16x16xf32> to vector<16xf32>
    %681 = vector.shape_cast %680 : vector<16xf32> to vector<16x1xf32>
    %682 = vector.broadcast %681 : vector<16x1xf32> to vector<16x16xf32>
    %683 = arith.subf %679, %682 : vector<16x16xf32>
    %684 = math.exp %683 : vector<16x16xf32>
    %cst_206 = arith.constant dense<0.000000e+00> : vector<16xf32>
    %685 = vector.multi_reduction <add>, %684, %cst_206 [1] : vector<16x16xf32> to vector<16xf32>
    %686 = vector.shape_cast %685 : vector<16xf32> to vector<16x1xf32>
    %687 = tpu.reciprocal %686 {approx = true} : vector<16x1xf32> -> vector<16x1xf32>
    %688 = vector.broadcast %687 : vector<16x1xf32> to vector<16x16xf32>
    %689 = arith.mulf %684, %688 : vector<16x16xf32>
    %690 = arith.truncf %689 : vector<16x16xf32> to vector<16x16xbf16>
    %691 = vector.extract_strided_slice %650 {offsets = [0, 32], sizes = [16, 32], strides = [1, 1]} : vector<16x128xbf16> to vector<16x32xbf16>
    %cst_207 = arith.constant dense<0.000000e+00> : vector<16x32xf32>
    %692 = tpu.matmul %690, %691, %cst_207 {dimension_numbers = #tpu.dot_dimension_numbers<[1], [0], [0], [1], [0, 0, 1, 1], [], []>} : vector<16x16xbf16>, vector<16x32xbf16>, vector<16x32xf32> -> vector<16x32xf32>
    %693 = vector.extract_strided_slice %648 {offsets = [0, 64], sizes = [16, 32], strides = [1, 1]} : vector<16x128xbf16> to vector<16x32xbf16>
    %694 = vector.extract_strided_slice %649 {offsets = [0, 64], sizes = [16, 32], strides = [1, 1]} : vector<16x128xbf16> to vector<16x32xbf16>
    %cst_208 = arith.constant dense<0.000000e+00> : vector<16x16xf32>
    %695 = tpu.matmul %693, %694, %cst_208 {dimension_numbers = #tpu.dot_dimension_numbers<[1], [1], [0], [0], [0, 0, 1, 0], [], []>} : vector<16x32xbf16>, vector<16x32xbf16>, vector<16x16xf32> -> vector<16x16xf32>
    %cst_209 = arith.constant 0.176776692 : f32
    %696 = vector.broadcast %cst_209 : f32 to vector<16x16xf32>
    %697 = arith.mulf %695, %696 : vector<16x16xf32>
    %698 = vector.extract_strided_slice %2 {offsets = [0, 2, 0, 0], sizes = [1, 1, 16, 16], strides = [1, 1, 1, 1]} : vector<1x4x16x16xf32> to vector<1x1x16x16xf32>
    %699 = vector.shape_cast %698 : vector<1x1x16x16xf32> to vector<16x16xf32>
    %700 = arith.addf %697, %699 : vector<16x16xf32>
    %cst_210 = arith.constant dense<0xFF800000> : vector<16xf32>
    %701 = vector.multi_reduction <maximumf>, %700, %cst_210 [1] : vector<16x16xf32> to vector<16xf32>
    %702 = vector.shape_cast %701 : vector<16xf32> to vector<16x1xf32>
    %703 = vector.broadcast %702 : vector<16x1xf32> to vector<16x16xf32>
    %704 = arith.subf %700, %703 : vector<16x16xf32>
    %705 = math.exp %704 : vector<16x16xf32>
    %cst_211 = arith.constant dense<0.000000e+00> : vector<16xf32>
    %706 = vector.multi_reduction <add>, %705, %cst_211 [1] : vector<16x16xf32> to vector<16xf32>
    %707 = vector.shape_cast %706 : vector<16xf32> to vector<16x1xf32>
    %708 = tpu.reciprocal %707 {approx = true} : vector<16x1xf32> -> vector<16x1xf32>
    %709 = vector.broadcast %708 : vector<16x1xf32> to vector<16x16xf32>
    %710 = arith.mulf %705, %709 : vector<16x16xf32>
    %711 = arith.truncf %710 : vector<16x16xf32> to vector<16x16xbf16>
    %712 = vector.extract_strided_slice %650 {offsets = [0, 64], sizes = [16, 32], strides = [1, 1]} : vector<16x128xbf16> to vector<16x32xbf16>
    %cst_212 = arith.constant dense<0.000000e+00> : vector<16x32xf32>
    %713 = tpu.matmul %711, %712, %cst_212 {dimension_numbers = #tpu.dot_dimension_numbers<[1], [0], [0], [1], [0, 0, 1, 1], [], []>} : vector<16x16xbf16>, vector<16x32xbf16>, vector<16x32xf32> -> vector<16x32xf32>
    %714 = vector.extract_strided_slice %648 {offsets = [0, 96], sizes = [16, 32], strides = [1, 1]} : vector<16x128xbf16> to vector<16x32xbf16>
    %715 = vector.extract_strided_slice %649 {offsets = [0, 96], sizes = [16, 32], strides = [1, 1]} : vector<16x128xbf16> to vector<16x32xbf16>
    %cst_213 = arith.constant dense<0.000000e+00> : vector<16x16xf32>
    %716 = tpu.matmul %714, %715, %cst_213 {dimension_numbers = #tpu.dot_dimension_numbers<[1], [1], [0], [0], [0, 0, 1, 0], [], []>} : vector<16x32xbf16>, vector<16x32xbf16>, vector<16x16xf32> -> vector<16x16xf32>
    %cst_214 = arith.constant 0.176776692 : f32
    %717 = vector.broadcast %cst_214 : f32 to vector<16x16xf32>
    %718 = arith.mulf %716, %717 : vector<16x16xf32>
    %719 = vector.extract_strided_slice %2 {offsets = [0, 3, 0, 0], sizes = [1, 1, 16, 16], strides = [1, 1, 1, 1]} : vector<1x4x16x16xf32> to vector<1x1x16x16xf32>
    %720 = vector.shape_cast %719 : vector<1x1x16x16xf32> to vector<16x16xf32>
    %721 = arith.addf %718, %720 : vector<16x16xf32>
    %cst_215 = arith.constant dense<0xFF800000> : vector<16xf32>
    %722 = vector.multi_reduction <maximumf>, %721, %cst_215 [1] : vector<16x16xf32> to vector<16xf32>
    %723 = vector.shape_cast %722 : vector<16xf32> to vector<16x1xf32>
    %724 = vector.broadcast %723 : vector<16x1xf32> to vector<16x16xf32>
    %725 = arith.subf %721, %724 : vector<16x16xf32>
    %726 = math.exp %725 : vector<16x16xf32>
    %cst_216 = arith.constant dense<0.000000e+00> : vector<16xf32>
    %727 = vector.multi_reduction <add>, %726, %cst_216 [1] : vector<16x16xf32> to vector<16xf32>
    %728 = vector.shape_cast %727 : vector<16xf32> to vector<16x1xf32>
    %729 = tpu.reciprocal %728 {approx = true} : vector<16x1xf32> -> vector<16x1xf32>
    %730 = vector.broadcast %729 : vector<16x1xf32> to vector<16x16xf32>
    %731 = arith.mulf %726, %730 : vector<16x16xf32>
    %732 = arith.truncf %731 : vector<16x16xf32> to vector<16x16xbf16>
    %733 = vector.extract_strided_slice %650 {offsets = [0, 96], sizes = [16, 32], strides = [1, 1]} : vector<16x128xbf16> to vector<16x32xbf16>
    %cst_217 = arith.constant dense<0.000000e+00> : vector<16x32xf32>
    %734 = tpu.matmul %732, %733, %cst_217 {dimension_numbers = #tpu.dot_dimension_numbers<[1], [0], [0], [1], [0, 0, 1, 1], [], []>} : vector<16x16xbf16>, vector<16x32xbf16>, vector<16x32xf32> -> vector<16x32xf32>
    %735 = tpu.concatenate %671, %692, %713, %734 in 1 : vector<16x32xf32>, vector<16x32xf32>, vector<16x32xf32>, vector<16x32xf32> -> vector<16x128xf32>
    %736 = tpu.concatenate %647, %735 in 0 : vector<16x128xf32>, vector<16x128xf32> -> vector<32x128xf32>
    %737 = arith.truncf %736 : vector<32x128xf32> to vector<32x128xbf16>
    %c1_218 = arith.constant 1 : index
    %c0_219 = arith.constant 0 : index
    %c0_220 = arith.constant 0 : index
    %738 = vector.load %arg7[%c1_218, %c0_219, %c0_220] : memref<2x128x128xf32, #tpu.memory_space<vmem>>, vector<1x128x128xf32>
    %739 = vector.shape_cast %738 : vector<1x128x128xf32> to vector<128x128xf32>
    %740 = arith.truncf %739 : vector<128x128xf32> to vector<128x128xbf16>
    %cst_221 = arith.constant dense<0.000000e+00> : vector<32x128xf32>
    %741 = tpu.matmul %737, %740, %cst_221 {dimension_numbers = #tpu.dot_dimension_numbers<[1], [0], [0], [1], [0, 0, 1, 1], [], []>} : vector<32x128xbf16>, vector<128x128xbf16>, vector<32x128xf32> -> vector<32x128xf32>
    %c1_222 = arith.constant 1 : index
    %c0_223 = arith.constant 0 : index
    %742 = vector.load %arg8[%c1_222, %c0_223] : memref<2x128xf32, #tpu.memory_space<vmem>>, vector<1x128xf32>
    %743 = vector.broadcast %742 : vector<1x128xf32> to vector<32x128xf32>
    %744 = arith.addf %741, %743 : vector<32x128xf32>
    %745 = arith.addf %526, %744 : vector<32x128xf32>
    %c1_224 = arith.constant 1 : index
    %c0_225 = arith.constant 0 : index
    %746 = vector.load %arg9[%c1_224, %c0_225] : memref<2x128xf32, #tpu.memory_space<vmem>>, vector<1x128xf32>
    %c1_226 = arith.constant 1 : index
    %c0_227 = arith.constant 0 : index
    %747 = vector.load %arg10[%c1_226, %c0_227] : memref<2x128xf32, #tpu.memory_space<vmem>>, vector<1x128xf32>
    %cst_228 = arith.constant dense<0.000000e+00> : vector<32xf32>
    %748 = vector.multi_reduction <add>, %745, %cst_228 [1] : vector<32x128xf32> to vector<32xf32>
    %749 = vector.shape_cast %748 : vector<32xf32> to vector<32x1xf32>
    %cst_229 = arith.constant 1.280000e+02 : f32
    %750 = vector.broadcast %cst_229 : f32 to vector<32x1xf32>
    %751 = arith.divf %749, %750 : vector<32x1xf32>
    %752 = vector.broadcast %751 : vector<32x1xf32> to vector<32x128xf32>
    %753 = arith.subf %745, %752 : vector<32x128xf32>
    %754 = arith.mulf %753, %753 : vector<32x128xf32>
    %cst_230 = arith.constant dense<0.000000e+00> : vector<32xf32>
    %755 = vector.multi_reduction <add>, %754, %cst_230 [1] : vector<32x128xf32> to vector<32xf32>
    %756 = vector.shape_cast %755 : vector<32xf32> to vector<32x1xf32>
    %cst_231 = arith.constant 1.280000e+02 : f32
    %757 = vector.broadcast %cst_231 : f32 to vector<32x1xf32>
    %758 = arith.divf %756, %757 : vector<32x1xf32>
    %759 = vector.broadcast %751 : vector<32x1xf32> to vector<32x128xf32>
    %760 = arith.subf %745, %759 : vector<32x128xf32>
    %cst_232 = arith.constant 9.99999974E-6 : f32
    %761 = vector.broadcast %cst_232 : f32 to vector<32x1xf32>
    %762 = arith.addf %758, %761 : vector<32x1xf32>
    %763 = math.rsqrt %762 : vector<32x1xf32>
    %764 = vector.broadcast %763 : vector<32x1xf32> to vector<32x128xf32>
    %765 = arith.mulf %760, %764 : vector<32x128xf32>
    %766 = vector.broadcast %746 : vector<1x128xf32> to vector<32x128xf32>
    %767 = arith.mulf %765, %766 : vector<32x128xf32>
    %768 = vector.broadcast %747 : vector<1x128xf32> to vector<32x128xf32>
    %769 = arith.addf %767, %768 : vector<32x128xf32>
    %770 = arith.truncf %769 : vector<32x128xf32> to vector<32x128xbf16>
    %c1_233 = arith.constant 1 : index
    %c0_234 = arith.constant 0 : index
    %771 = vector.load %arg9[%c1_233, %c0_234] : memref<2x128xf32, #tpu.memory_space<vmem>>, vector<1x128xf32>
    %c1_235 = arith.constant 1 : index
    %c0_236 = arith.constant 0 : index
    %772 = vector.load %arg10[%c1_235, %c0_236] : memref<2x128xf32, #tpu.memory_space<vmem>>, vector<1x128xf32>
    %cst_237 = arith.constant dense<0.000000e+00> : vector<32xf32>
    %773 = vector.multi_reduction <add>, %1, %cst_237 [1] : vector<32x128xf32> to vector<32xf32>
    %774 = vector.shape_cast %773 : vector<32xf32> to vector<32x1xf32>
    %cst_238 = arith.constant 1.280000e+02 : f32
    %775 = vector.broadcast %cst_238 : f32 to vector<32x1xf32>
    %776 = arith.divf %774, %775 : vector<32x1xf32>
    %777 = vector.broadcast %776 : vector<32x1xf32> to vector<32x128xf32>
    %778 = arith.subf %1, %777 : vector<32x128xf32>
    %779 = arith.mulf %778, %778 : vector<32x128xf32>
    %cst_239 = arith.constant dense<0.000000e+00> : vector<32xf32>
    %780 = vector.multi_reduction <add>, %779, %cst_239 [1] : vector<32x128xf32> to vector<32xf32>
    %781 = vector.shape_cast %780 : vector<32xf32> to vector<32x1xf32>
    %cst_240 = arith.constant 1.280000e+02 : f32
    %782 = vector.broadcast %cst_240 : f32 to vector<32x1xf32>
    %783 = arith.divf %781, %782 : vector<32x1xf32>
    %784 = vector.broadcast %776 : vector<32x1xf32> to vector<32x128xf32>
    %785 = arith.subf %1, %784 : vector<32x128xf32>
    %cst_241 = arith.constant 9.99999974E-6 : f32
    %786 = vector.broadcast %cst_241 : f32 to vector<32x1xf32>
    %787 = arith.addf %783, %786 : vector<32x1xf32>
    %788 = math.rsqrt %787 : vector<32x1xf32>
    %789 = vector.broadcast %788 : vector<32x1xf32> to vector<32x128xf32>
    %790 = arith.mulf %785, %789 : vector<32x128xf32>
    %791 = vector.broadcast %771 : vector<1x128xf32> to vector<32x128xf32>
    %792 = arith.mulf %790, %791 : vector<32x128xf32>
    %793 = vector.broadcast %772 : vector<1x128xf32> to vector<32x128xf32>
    %794 = arith.addf %792, %793 : vector<32x128xf32>
    %795 = arith.truncf %794 : vector<32x128xf32> to vector<32x128xbf16>
    %c1_242 = arith.constant 1 : index
    %c0_243 = arith.constant 0 : index
    %c0_244 = arith.constant 0 : index
    %796 = vector.load %arg11[%c1_242, %c0_243, %c0_244] : memref<2x128x128xf32, #tpu.memory_space<vmem>>, vector<1x128x128xf32>
    %797 = vector.shape_cast %796 : vector<1x128x128xf32> to vector<128x128xf32>
    %798 = arith.truncf %797 : vector<128x128xf32> to vector<128x128xbf16>
    %cst_245 = arith.constant dense<0.000000e+00> : vector<32x128xf32>
    %799 = tpu.matmul %770, %798, %cst_245 {dimension_numbers = #tpu.dot_dimension_numbers<[1], [0], [0], [1], [0, 0, 1, 1], [], []>} : vector<32x128xbf16>, vector<128x128xbf16>, vector<32x128xf32> -> vector<32x128xf32>
    %800 = arith.truncf %799 : vector<32x128xf32> to vector<32x128xbf16>
    %c1_246 = arith.constant 1 : index
    %c0_247 = arith.constant 0 : index
    %c0_248 = arith.constant 0 : index
    %801 = vector.load %arg12[%c1_246, %c0_247, %c0_248] : memref<2x128x128xf32, #tpu.memory_space<vmem>>, vector<1x128x128xf32>
    %802 = vector.shape_cast %801 : vector<1x128x128xf32> to vector<128x128xf32>
    %803 = arith.truncf %802 : vector<128x128xf32> to vector<128x128xbf16>
    %cst_249 = arith.constant dense<0.000000e+00> : vector<32x128xf32>
    %804 = tpu.matmul %795, %803, %cst_249 {dimension_numbers = #tpu.dot_dimension_numbers<[1], [0], [0], [1], [0, 0, 1, 1], [], []>} : vector<32x128xbf16>, vector<128x128xbf16>, vector<32x128xf32> -> vector<32x128xf32>
    %805 = arith.truncf %804 : vector<32x128xf32> to vector<32x128xbf16>
    %c1_250 = arith.constant 1 : index
    %c0_251 = arith.constant 0 : index
    %c0_252 = arith.constant 0 : index
    %806 = vector.load %arg13[%c1_250, %c0_251, %c0_252] : memref<2x128x128xf32, #tpu.memory_space<vmem>>, vector<1x128x128xf32>
    %807 = vector.shape_cast %806 : vector<1x128x128xf32> to vector<128x128xf32>
    %808 = arith.truncf %807 : vector<128x128xf32> to vector<128x128xbf16>
    %cst_253 = arith.constant dense<0.000000e+00> : vector<32x128xf32>
    %809 = tpu.matmul %795, %808, %cst_253 {dimension_numbers = #tpu.dot_dimension_numbers<[1], [0], [0], [1], [0, 0, 1, 1], [], []>} : vector<32x128xbf16>, vector<128x128xbf16>, vector<32x128xf32> -> vector<32x128xf32>
    %810 = arith.truncf %809 : vector<32x128xf32> to vector<32x128xbf16>
    %811 = vector.extract_strided_slice %800 {offsets = [0, 0], sizes = [16, 128], strides = [1, 1]} : vector<32x128xbf16> to vector<16x128xbf16>
    %812 = vector.extract_strided_slice %805 {offsets = [0, 0], sizes = [16, 128], strides = [1, 1]} : vector<32x128xbf16> to vector<16x128xbf16>
    %813 = vector.extract_strided_slice %810 {offsets = [0, 0], sizes = [16, 128], strides = [1, 1]} : vector<32x128xbf16> to vector<16x128xbf16>
    %814 = vector.extract_strided_slice %811 {offsets = [0, 0], sizes = [16, 32], strides = [1, 1]} : vector<16x128xbf16> to vector<16x32xbf16>
    %815 = vector.extract_strided_slice %812 {offsets = [0, 0], sizes = [16, 32], strides = [1, 1]} : vector<16x128xbf16> to vector<16x32xbf16>
    %cst_254 = arith.constant dense<0.000000e+00> : vector<16x16xf32>
    %816 = tpu.matmul %814, %815, %cst_254 {dimension_numbers = #tpu.dot_dimension_numbers<[1], [1], [0], [0], [0, 0, 1, 0], [], []>} : vector<16x32xbf16>, vector<16x32xbf16>, vector<16x16xf32> -> vector<16x16xf32>
    %cst_255 = arith.constant 0.176776692 : f32
    %817 = vector.broadcast %cst_255 : f32 to vector<16x16xf32>
    %818 = arith.mulf %816, %817 : vector<16x16xf32>
    %819 = vector.extract_strided_slice %2 {offsets = [0, 0, 0, 0], sizes = [1, 1, 16, 16], strides = [1, 1, 1, 1]} : vector<1x4x16x16xf32> to vector<1x1x16x16xf32>
    %820 = vector.shape_cast %819 : vector<1x1x16x16xf32> to vector<16x16xf32>
    %821 = arith.addf %818, %820 : vector<16x16xf32>
    %cst_256 = arith.constant dense<0xFF800000> : vector<16xf32>
    %822 = vector.multi_reduction <maximumf>, %821, %cst_256 [1] : vector<16x16xf32> to vector<16xf32>
    %823 = vector.shape_cast %822 : vector<16xf32> to vector<16x1xf32>
    %824 = vector.broadcast %823 : vector<16x1xf32> to vector<16x16xf32>
    %825 = arith.subf %821, %824 : vector<16x16xf32>
    %826 = math.exp %825 : vector<16x16xf32>
    %cst_257 = arith.constant dense<0.000000e+00> : vector<16xf32>
    %827 = vector.multi_reduction <add>, %826, %cst_257 [1] : vector<16x16xf32> to vector<16xf32>
    %828 = vector.shape_cast %827 : vector<16xf32> to vector<16x1xf32>
    %829 = tpu.reciprocal %828 {approx = true} : vector<16x1xf32> -> vector<16x1xf32>
    %830 = vector.broadcast %829 : vector<16x1xf32> to vector<16x16xf32>
    %831 = arith.mulf %826, %830 : vector<16x16xf32>
    %832 = arith.truncf %831 : vector<16x16xf32> to vector<16x16xbf16>
    %833 = vector.extract_strided_slice %813 {offsets = [0, 0], sizes = [16, 32], strides = [1, 1]} : vector<16x128xbf16> to vector<16x32xbf16>
    %cst_258 = arith.constant dense<0.000000e+00> : vector<16x32xf32>
    %834 = tpu.matmul %832, %833, %cst_258 {dimension_numbers = #tpu.dot_dimension_numbers<[1], [0], [0], [1], [0, 0, 1, 1], [], []>} : vector<16x16xbf16>, vector<16x32xbf16>, vector<16x32xf32> -> vector<16x32xf32>
    %835 = vector.extract_strided_slice %811 {offsets = [0, 32], sizes = [16, 32], strides = [1, 1]} : vector<16x128xbf16> to vector<16x32xbf16>
    %836 = vector.extract_strided_slice %812 {offsets = [0, 32], sizes = [16, 32], strides = [1, 1]} : vector<16x128xbf16> to vector<16x32xbf16>
    %cst_259 = arith.constant dense<0.000000e+00> : vector<16x16xf32>
    %837 = tpu.matmul %835, %836, %cst_259 {dimension_numbers = #tpu.dot_dimension_numbers<[1], [1], [0], [0], [0, 0, 1, 0], [], []>} : vector<16x32xbf16>, vector<16x32xbf16>, vector<16x16xf32> -> vector<16x16xf32>
    %cst_260 = arith.constant 0.176776692 : f32
    %838 = vector.broadcast %cst_260 : f32 to vector<16x16xf32>
    %839 = arith.mulf %837, %838 : vector<16x16xf32>
    %840 = vector.extract_strided_slice %2 {offsets = [0, 1, 0, 0], sizes = [1, 1, 16, 16], strides = [1, 1, 1, 1]} : vector<1x4x16x16xf32> to vector<1x1x16x16xf32>
    %841 = vector.shape_cast %840 : vector<1x1x16x16xf32> to vector<16x16xf32>
    %842 = arith.addf %839, %841 : vector<16x16xf32>
    %cst_261 = arith.constant dense<0xFF800000> : vector<16xf32>
    %843 = vector.multi_reduction <maximumf>, %842, %cst_261 [1] : vector<16x16xf32> to vector<16xf32>
    %844 = vector.shape_cast %843 : vector<16xf32> to vector<16x1xf32>
    %845 = vector.broadcast %844 : vector<16x1xf32> to vector<16x16xf32>
    %846 = arith.subf %842, %845 : vector<16x16xf32>
    %847 = math.exp %846 : vector<16x16xf32>
    %cst_262 = arith.constant dense<0.000000e+00> : vector<16xf32>
    %848 = vector.multi_reduction <add>, %847, %cst_262 [1] : vector<16x16xf32> to vector<16xf32>
    %849 = vector.shape_cast %848 : vector<16xf32> to vector<16x1xf32>
    %850 = tpu.reciprocal %849 {approx = true} : vector<16x1xf32> -> vector<16x1xf32>
    %851 = vector.broadcast %850 : vector<16x1xf32> to vector<16x16xf32>
    %852 = arith.mulf %847, %851 : vector<16x16xf32>
    %853 = arith.truncf %852 : vector<16x16xf32> to vector<16x16xbf16>
    %854 = vector.extract_strided_slice %813 {offsets = [0, 32], sizes = [16, 32], strides = [1, 1]} : vector<16x128xbf16> to vector<16x32xbf16>
    %cst_263 = arith.constant dense<0.000000e+00> : vector<16x32xf32>
    %855 = tpu.matmul %853, %854, %cst_263 {dimension_numbers = #tpu.dot_dimension_numbers<[1], [0], [0], [1], [0, 0, 1, 1], [], []>} : vector<16x16xbf16>, vector<16x32xbf16>, vector<16x32xf32> -> vector<16x32xf32>
    %856 = vector.extract_strided_slice %811 {offsets = [0, 64], sizes = [16, 32], strides = [1, 1]} : vector<16x128xbf16> to vector<16x32xbf16>
    %857 = vector.extract_strided_slice %812 {offsets = [0, 64], sizes = [16, 32], strides = [1, 1]} : vector<16x128xbf16> to vector<16x32xbf16>
    %cst_264 = arith.constant dense<0.000000e+00> : vector<16x16xf32>
    %858 = tpu.matmul %856, %857, %cst_264 {dimension_numbers = #tpu.dot_dimension_numbers<[1], [1], [0], [0], [0, 0, 1, 0], [], []>} : vector<16x32xbf16>, vector<16x32xbf16>, vector<16x16xf32> -> vector<16x16xf32>
    %cst_265 = arith.constant 0.176776692 : f32
    %859 = vector.broadcast %cst_265 : f32 to vector<16x16xf32>
    %860 = arith.mulf %858, %859 : vector<16x16xf32>
    %861 = vector.extract_strided_slice %2 {offsets = [0, 2, 0, 0], sizes = [1, 1, 16, 16], strides = [1, 1, 1, 1]} : vector<1x4x16x16xf32> to vector<1x1x16x16xf32>
    %862 = vector.shape_cast %861 : vector<1x1x16x16xf32> to vector<16x16xf32>
    %863 = arith.addf %860, %862 : vector<16x16xf32>
    %cst_266 = arith.constant dense<0xFF800000> : vector<16xf32>
    %864 = vector.multi_reduction <maximumf>, %863, %cst_266 [1] : vector<16x16xf32> to vector<16xf32>
    %865 = vector.shape_cast %864 : vector<16xf32> to vector<16x1xf32>
    %866 = vector.broadcast %865 : vector<16x1xf32> to vector<16x16xf32>
    %867 = arith.subf %863, %866 : vector<16x16xf32>
    %868 = math.exp %867 : vector<16x16xf32>
    %cst_267 = arith.constant dense<0.000000e+00> : vector<16xf32>
    %869 = vector.multi_reduction <add>, %868, %cst_267 [1] : vector<16x16xf32> to vector<16xf32>
    %870 = vector.shape_cast %869 : vector<16xf32> to vector<16x1xf32>
    %871 = tpu.reciprocal %870 {approx = true} : vector<16x1xf32> -> vector<16x1xf32>
    %872 = vector.broadcast %871 : vector<16x1xf32> to vector<16x16xf32>
    %873 = arith.mulf %868, %872 : vector<16x16xf32>
    %874 = arith.truncf %873 : vector<16x16xf32> to vector<16x16xbf16>
    %875 = vector.extract_strided_slice %813 {offsets = [0, 64], sizes = [16, 32], strides = [1, 1]} : vector<16x128xbf16> to vector<16x32xbf16>
    %cst_268 = arith.constant dense<0.000000e+00> : vector<16x32xf32>
    %876 = tpu.matmul %874, %875, %cst_268 {dimension_numbers = #tpu.dot_dimension_numbers<[1], [0], [0], [1], [0, 0, 1, 1], [], []>} : vector<16x16xbf16>, vector<16x32xbf16>, vector<16x32xf32> -> vector<16x32xf32>
    %877 = vector.extract_strided_slice %811 {offsets = [0, 96], sizes = [16, 32], strides = [1, 1]} : vector<16x128xbf16> to vector<16x32xbf16>
    %878 = vector.extract_strided_slice %812 {offsets = [0, 96], sizes = [16, 32], strides = [1, 1]} : vector<16x128xbf16> to vector<16x32xbf16>
    %cst_269 = arith.constant dense<0.000000e+00> : vector<16x16xf32>
    %879 = tpu.matmul %877, %878, %cst_269 {dimension_numbers = #tpu.dot_dimension_numbers<[1], [1], [0], [0], [0, 0, 1, 0], [], []>} : vector<16x32xbf16>, vector<16x32xbf16>, vector<16x16xf32> -> vector<16x16xf32>
    %cst_270 = arith.constant 0.176776692 : f32
    %880 = vector.broadcast %cst_270 : f32 to vector<16x16xf32>
    %881 = arith.mulf %879, %880 : vector<16x16xf32>
    %882 = vector.extract_strided_slice %2 {offsets = [0, 3, 0, 0], sizes = [1, 1, 16, 16], strides = [1, 1, 1, 1]} : vector<1x4x16x16xf32> to vector<1x1x16x16xf32>
    %883 = vector.shape_cast %882 : vector<1x1x16x16xf32> to vector<16x16xf32>
    %884 = arith.addf %881, %883 : vector<16x16xf32>
    %cst_271 = arith.constant dense<0xFF800000> : vector<16xf32>
    %885 = vector.multi_reduction <maximumf>, %884, %cst_271 [1] : vector<16x16xf32> to vector<16xf32>
    %886 = vector.shape_cast %885 : vector<16xf32> to vector<16x1xf32>
    %887 = vector.broadcast %886 : vector<16x1xf32> to vector<16x16xf32>
    %888 = arith.subf %884, %887 : vector<16x16xf32>
    %889 = math.exp %888 : vector<16x16xf32>
    %cst_272 = arith.constant dense<0.000000e+00> : vector<16xf32>
    %890 = vector.multi_reduction <add>, %889, %cst_272 [1] : vector<16x16xf32> to vector<16xf32>
    %891 = vector.shape_cast %890 : vector<16xf32> to vector<16x1xf32>
    %892 = tpu.reciprocal %891 {approx = true} : vector<16x1xf32> -> vector<16x1xf32>
    %893 = vector.broadcast %892 : vector<16x1xf32> to vector<16x16xf32>
    %894 = arith.mulf %889, %893 : vector<16x16xf32>
    %895 = arith.truncf %894 : vector<16x16xf32> to vector<16x16xbf16>
    %896 = vector.extract_strided_slice %813 {offsets = [0, 96], sizes = [16, 32], strides = [1, 1]} : vector<16x128xbf16> to vector<16x32xbf16>
    %cst_273 = arith.constant dense<0.000000e+00> : vector<16x32xf32>
    %897 = tpu.matmul %895, %896, %cst_273 {dimension_numbers = #tpu.dot_dimension_numbers<[1], [0], [0], [1], [0, 0, 1, 1], [], []>} : vector<16x16xbf16>, vector<16x32xbf16>, vector<16x32xf32> -> vector<16x32xf32>
    %898 = tpu.concatenate %834, %855, %876, %897 in 1 : vector<16x32xf32>, vector<16x32xf32>, vector<16x32xf32>, vector<16x32xf32> -> vector<16x128xf32>
    %899 = vector.extract_strided_slice %800 {offsets = [16, 0], sizes = [16, 128], strides = [1, 1]} : vector<32x128xbf16> to vector<16x128xbf16>
    %900 = vector.extract_strided_slice %805 {offsets = [16, 0], sizes = [16, 128], strides = [1, 1]} : vector<32x128xbf16> to vector<16x128xbf16>
    %901 = vector.extract_strided_slice %810 {offsets = [16, 0], sizes = [16, 128], strides = [1, 1]} : vector<32x128xbf16> to vector<16x128xbf16>
    %902 = vector.extract_strided_slice %899 {offsets = [0, 0], sizes = [16, 32], strides = [1, 1]} : vector<16x128xbf16> to vector<16x32xbf16>
    %903 = vector.extract_strided_slice %900 {offsets = [0, 0], sizes = [16, 32], strides = [1, 1]} : vector<16x128xbf16> to vector<16x32xbf16>
    %cst_274 = arith.constant dense<0.000000e+00> : vector<16x16xf32>
    %904 = tpu.matmul %902, %903, %cst_274 {dimension_numbers = #tpu.dot_dimension_numbers<[1], [1], [0], [0], [0, 0, 1, 0], [], []>} : vector<16x32xbf16>, vector<16x32xbf16>, vector<16x16xf32> -> vector<16x16xf32>
    %cst_275 = arith.constant 0.176776692 : f32
    %905 = vector.broadcast %cst_275 : f32 to vector<16x16xf32>
    %906 = arith.mulf %904, %905 : vector<16x16xf32>
    %907 = vector.extract_strided_slice %2 {offsets = [0, 0, 0, 0], sizes = [1, 1, 16, 16], strides = [1, 1, 1, 1]} : vector<1x4x16x16xf32> to vector<1x1x16x16xf32>
    %908 = vector.shape_cast %907 : vector<1x1x16x16xf32> to vector<16x16xf32>
    %909 = arith.addf %906, %908 : vector<16x16xf32>
    %cst_276 = arith.constant dense<0xFF800000> : vector<16xf32>
    %910 = vector.multi_reduction <maximumf>, %909, %cst_276 [1] : vector<16x16xf32> to vector<16xf32>
    %911 = vector.shape_cast %910 : vector<16xf32> to vector<16x1xf32>
    %912 = vector.broadcast %911 : vector<16x1xf32> to vector<16x16xf32>
    %913 = arith.subf %909, %912 : vector<16x16xf32>
    %914 = math.exp %913 : vector<16x16xf32>
    %cst_277 = arith.constant dense<0.000000e+00> : vector<16xf32>
    %915 = vector.multi_reduction <add>, %914, %cst_277 [1] : vector<16x16xf32> to vector<16xf32>
    %916 = vector.shape_cast %915 : vector<16xf32> to vector<16x1xf32>
    %917 = tpu.reciprocal %916 {approx = true} : vector<16x1xf32> -> vector<16x1xf32>
    %918 = vector.broadcast %917 : vector<16x1xf32> to vector<16x16xf32>
    %919 = arith.mulf %914, %918 : vector<16x16xf32>
    %920 = arith.truncf %919 : vector<16x16xf32> to vector<16x16xbf16>
    %921 = vector.extract_strided_slice %901 {offsets = [0, 0], sizes = [16, 32], strides = [1, 1]} : vector<16x128xbf16> to vector<16x32xbf16>
    %cst_278 = arith.constant dense<0.000000e+00> : vector<16x32xf32>
    %922 = tpu.matmul %920, %921, %cst_278 {dimension_numbers = #tpu.dot_dimension_numbers<[1], [0], [0], [1], [0, 0, 1, 1], [], []>} : vector<16x16xbf16>, vector<16x32xbf16>, vector<16x32xf32> -> vector<16x32xf32>
    %923 = vector.extract_strided_slice %899 {offsets = [0, 32], sizes = [16, 32], strides = [1, 1]} : vector<16x128xbf16> to vector<16x32xbf16>
    %924 = vector.extract_strided_slice %900 {offsets = [0, 32], sizes = [16, 32], strides = [1, 1]} : vector<16x128xbf16> to vector<16x32xbf16>
    %cst_279 = arith.constant dense<0.000000e+00> : vector<16x16xf32>
    %925 = tpu.matmul %923, %924, %cst_279 {dimension_numbers = #tpu.dot_dimension_numbers<[1], [1], [0], [0], [0, 0, 1, 0], [], []>} : vector<16x32xbf16>, vector<16x32xbf16>, vector<16x16xf32> -> vector<16x16xf32>
    %cst_280 = arith.constant 0.176776692 : f32
    %926 = vector.broadcast %cst_280 : f32 to vector<16x16xf32>
    %927 = arith.mulf %925, %926 : vector<16x16xf32>
    %928 = vector.extract_strided_slice %2 {offsets = [0, 1, 0, 0], sizes = [1, 1, 16, 16], strides = [1, 1, 1, 1]} : vector<1x4x16x16xf32> to vector<1x1x16x16xf32>
    %929 = vector.shape_cast %928 : vector<1x1x16x16xf32> to vector<16x16xf32>
    %930 = arith.addf %927, %929 : vector<16x16xf32>
    %cst_281 = arith.constant dense<0xFF800000> : vector<16xf32>
    %931 = vector.multi_reduction <maximumf>, %930, %cst_281 [1] : vector<16x16xf32> to vector<16xf32>
    %932 = vector.shape_cast %931 : vector<16xf32> to vector<16x1xf32>
    %933 = vector.broadcast %932 : vector<16x1xf32> to vector<16x16xf32>
    %934 = arith.subf %930, %933 : vector<16x16xf32>
    %935 = math.exp %934 : vector<16x16xf32>
    %cst_282 = arith.constant dense<0.000000e+00> : vector<16xf32>
    %936 = vector.multi_reduction <add>, %935, %cst_282 [1] : vector<16x16xf32> to vector<16xf32>
    %937 = vector.shape_cast %936 : vector<16xf32> to vector<16x1xf32>
    %938 = tpu.reciprocal %937 {approx = true} : vector<16x1xf32> -> vector<16x1xf32>
    %939 = vector.broadcast %938 : vector<16x1xf32> to vector<16x16xf32>
    %940 = arith.mulf %935, %939 : vector<16x16xf32>
    %941 = arith.truncf %940 : vector<16x16xf32> to vector<16x16xbf16>
    %942 = vector.extract_strided_slice %901 {offsets = [0, 32], sizes = [16, 32], strides = [1, 1]} : vector<16x128xbf16> to vector<16x32xbf16>
    %cst_283 = arith.constant dense<0.000000e+00> : vector<16x32xf32>
    %943 = tpu.matmul %941, %942, %cst_283 {dimension_numbers = #tpu.dot_dimension_numbers<[1], [0], [0], [1], [0, 0, 1, 1], [], []>} : vector<16x16xbf16>, vector<16x32xbf16>, vector<16x32xf32> -> vector<16x32xf32>
    %944 = vector.extract_strided_slice %899 {offsets = [0, 64], sizes = [16, 32], strides = [1, 1]} : vector<16x128xbf16> to vector<16x32xbf16>
    %945 = vector.extract_strided_slice %900 {offsets = [0, 64], sizes = [16, 32], strides = [1, 1]} : vector<16x128xbf16> to vector<16x32xbf16>
    %cst_284 = arith.constant dense<0.000000e+00> : vector<16x16xf32>
    %946 = tpu.matmul %944, %945, %cst_284 {dimension_numbers = #tpu.dot_dimension_numbers<[1], [1], [0], [0], [0, 0, 1, 0], [], []>} : vector<16x32xbf16>, vector<16x32xbf16>, vector<16x16xf32> -> vector<16x16xf32>
    %cst_285 = arith.constant 0.176776692 : f32
    %947 = vector.broadcast %cst_285 : f32 to vector<16x16xf32>
    %948 = arith.mulf %946, %947 : vector<16x16xf32>
    %949 = vector.extract_strided_slice %2 {offsets = [0, 2, 0, 0], sizes = [1, 1, 16, 16], strides = [1, 1, 1, 1]} : vector<1x4x16x16xf32> to vector<1x1x16x16xf32>
    %950 = vector.shape_cast %949 : vector<1x1x16x16xf32> to vector<16x16xf32>
    %951 = arith.addf %948, %950 : vector<16x16xf32>
    %cst_286 = arith.constant dense<0xFF800000> : vector<16xf32>
    %952 = vector.multi_reduction <maximumf>, %951, %cst_286 [1] : vector<16x16xf32> to vector<16xf32>
    %953 = vector.shape_cast %952 : vector<16xf32> to vector<16x1xf32>
    %954 = vector.broadcast %953 : vector<16x1xf32> to vector<16x16xf32>
    %955 = arith.subf %951, %954 : vector<16x16xf32>
    %956 = math.exp %955 : vector<16x16xf32>
    %cst_287 = arith.constant dense<0.000000e+00> : vector<16xf32>
    %957 = vector.multi_reduction <add>, %956, %cst_287 [1] : vector<16x16xf32> to vector<16xf32>
    %958 = vector.shape_cast %957 : vector<16xf32> to vector<16x1xf32>
    %959 = tpu.reciprocal %958 {approx = true} : vector<16x1xf32> -> vector<16x1xf32>
    %960 = vector.broadcast %959 : vector<16x1xf32> to vector<16x16xf32>
    %961 = arith.mulf %956, %960 : vector<16x16xf32>
    %962 = arith.truncf %961 : vector<16x16xf32> to vector<16x16xbf16>
    %963 = vector.extract_strided_slice %901 {offsets = [0, 64], sizes = [16, 32], strides = [1, 1]} : vector<16x128xbf16> to vector<16x32xbf16>
    %cst_288 = arith.constant dense<0.000000e+00> : vector<16x32xf32>
    %964 = tpu.matmul %962, %963, %cst_288 {dimension_numbers = #tpu.dot_dimension_numbers<[1], [0], [0], [1], [0, 0, 1, 1], [], []>} : vector<16x16xbf16>, vector<16x32xbf16>, vector<16x32xf32> -> vector<16x32xf32>
    %965 = vector.extract_strided_slice %899 {offsets = [0, 96], sizes = [16, 32], strides = [1, 1]} : vector<16x128xbf16> to vector<16x32xbf16>
    %966 = vector.extract_strided_slice %900 {offsets = [0, 96], sizes = [16, 32], strides = [1, 1]} : vector<16x128xbf16> to vector<16x32xbf16>
    %cst_289 = arith.constant dense<0.000000e+00> : vector<16x16xf32>
    %967 = tpu.matmul %965, %966, %cst_289 {dimension_numbers = #tpu.dot_dimension_numbers<[1], [1], [0], [0], [0, 0, 1, 0], [], []>} : vector<16x32xbf16>, vector<16x32xbf16>, vector<16x16xf32> -> vector<16x16xf32>
    %cst_290 = arith.constant 0.176776692 : f32
    %968 = vector.broadcast %cst_290 : f32 to vector<16x16xf32>
    %969 = arith.mulf %967, %968 : vector<16x16xf32>
    %970 = vector.extract_strided_slice %2 {offsets = [0, 3, 0, 0], sizes = [1, 1, 16, 16], strides = [1, 1, 1, 1]} : vector<1x4x16x16xf32> to vector<1x1x16x16xf32>
    %971 = vector.shape_cast %970 : vector<1x1x16x16xf32> to vector<16x16xf32>
    %972 = arith.addf %969, %971 : vector<16x16xf32>
    %cst_291 = arith.constant dense<0xFF800000> : vector<16xf32>
    %973 = vector.multi_reduction <maximumf>, %972, %cst_291 [1] : vector<16x16xf32> to vector<16xf32>
    %974 = vector.shape_cast %973 : vector<16xf32> to vector<16x1xf32>
    %975 = vector.broadcast %974 : vector<16x1xf32> to vector<16x16xf32>
    %976 = arith.subf %972, %975 : vector<16x16xf32>
    %977 = math.exp %976 : vector<16x16xf32>
    %cst_292 = arith.constant dense<0.000000e+00> : vector<16xf32>
    %978 = vector.multi_reduction <add>, %977, %cst_292 [1] : vector<16x16xf32> to vector<16xf32>
    %979 = vector.shape_cast %978 : vector<16xf32> to vector<16x1xf32>
    %980 = tpu.reciprocal %979 {approx = true} : vector<16x1xf32> -> vector<16x1xf32>
    %981 = vector.broadcast %980 : vector<16x1xf32> to vector<16x16xf32>
    %982 = arith.mulf %977, %981 : vector<16x16xf32>
    %983 = arith.truncf %982 : vector<16x16xf32> to vector<16x16xbf16>
    %984 = vector.extract_strided_slice %901 {offsets = [0, 96], sizes = [16, 32], strides = [1, 1]} : vector<16x128xbf16> to vector<16x32xbf16>
    %cst_293 = arith.constant dense<0.000000e+00> : vector<16x32xf32>
    %985 = tpu.matmul %983, %984, %cst_293 {dimension_numbers = #tpu.dot_dimension_numbers<[1], [0], [0], [1], [0, 0, 1, 1], [], []>} : vector<16x16xbf16>, vector<16x32xbf16>, vector<16x32xf32> -> vector<16x32xf32>
    %986 = tpu.concatenate %922, %943, %964, %985 in 1 : vector<16x32xf32>, vector<16x32xf32>, vector<16x32xf32>, vector<16x32xf32> -> vector<16x128xf32>
    %987 = tpu.concatenate %898, %986 in 0 : vector<16x128xf32>, vector<16x128xf32> -> vector<32x128xf32>
    %988 = arith.truncf %987 : vector<32x128xf32> to vector<32x128xbf16>
    %c1_294 = arith.constant 1 : index
    %c0_295 = arith.constant 0 : index
    %c0_296 = arith.constant 0 : index
    %989 = vector.load %arg14[%c1_294, %c0_295, %c0_296] : memref<2x128x128xf32, #tpu.memory_space<vmem>>, vector<1x128x128xf32>
    %990 = vector.shape_cast %989 : vector<1x128x128xf32> to vector<128x128xf32>
    %991 = arith.truncf %990 : vector<128x128xf32> to vector<128x128xbf16>
    %cst_297 = arith.constant dense<0.000000e+00> : vector<32x128xf32>
    %992 = tpu.matmul %988, %991, %cst_297 {dimension_numbers = #tpu.dot_dimension_numbers<[1], [0], [0], [1], [0, 0, 1, 1], [], []>} : vector<32x128xbf16>, vector<128x128xbf16>, vector<32x128xf32> -> vector<32x128xf32>
    %c1_298 = arith.constant 1 : index
    %c0_299 = arith.constant 0 : index
    %993 = vector.load %arg15[%c1_298, %c0_299] : memref<2x128xf32, #tpu.memory_space<vmem>>, vector<1x128xf32>
    %994 = vector.broadcast %993 : vector<1x128xf32> to vector<32x128xf32>
    %995 = arith.addf %992, %994 : vector<32x128xf32>
    %996 = arith.addf %745, %995 : vector<32x128xf32>
    %c1_300 = arith.constant 1 : index
    %c0_301 = arith.constant 0 : index
    %997 = vector.load %arg16[%c1_300, %c0_301] : memref<2x128xf32, #tpu.memory_space<vmem>>, vector<1x128xf32>
    %c1_302 = arith.constant 1 : index
    %c0_303 = arith.constant 0 : index
    %998 = vector.load %arg17[%c1_302, %c0_303] : memref<2x128xf32, #tpu.memory_space<vmem>>, vector<1x128xf32>
    %cst_304 = arith.constant dense<0.000000e+00> : vector<32xf32>
    %999 = vector.multi_reduction <add>, %996, %cst_304 [1] : vector<32x128xf32> to vector<32xf32>
    %1000 = vector.shape_cast %999 : vector<32xf32> to vector<32x1xf32>
    %cst_305 = arith.constant 1.280000e+02 : f32
    %1001 = vector.broadcast %cst_305 : f32 to vector<32x1xf32>
    %1002 = arith.divf %1000, %1001 : vector<32x1xf32>
    %1003 = vector.broadcast %1002 : vector<32x1xf32> to vector<32x128xf32>
    %1004 = arith.subf %996, %1003 : vector<32x128xf32>
    %1005 = arith.mulf %1004, %1004 : vector<32x128xf32>
    %cst_306 = arith.constant dense<0.000000e+00> : vector<32xf32>
    %1006 = vector.multi_reduction <add>, %1005, %cst_306 [1] : vector<32x128xf32> to vector<32xf32>
    %1007 = vector.shape_cast %1006 : vector<32xf32> to vector<32x1xf32>
    %cst_307 = arith.constant 1.280000e+02 : f32
    %1008 = vector.broadcast %cst_307 : f32 to vector<32x1xf32>
    %1009 = arith.divf %1007, %1008 : vector<32x1xf32>
    %1010 = vector.broadcast %1002 : vector<32x1xf32> to vector<32x128xf32>
    %1011 = arith.subf %996, %1010 : vector<32x128xf32>
    %cst_308 = arith.constant 9.99999974E-6 : f32
    %1012 = vector.broadcast %cst_308 : f32 to vector<32x1xf32>
    %1013 = arith.addf %1009, %1012 : vector<32x1xf32>
    %1014 = math.rsqrt %1013 : vector<32x1xf32>
    %1015 = vector.broadcast %1014 : vector<32x1xf32> to vector<32x128xf32>
    %1016 = arith.mulf %1011, %1015 : vector<32x128xf32>
    %1017 = vector.broadcast %997 : vector<1x128xf32> to vector<32x128xf32>
    %1018 = arith.mulf %1016, %1017 : vector<32x128xf32>
    %1019 = vector.broadcast %998 : vector<1x128xf32> to vector<32x128xf32>
    %1020 = arith.addf %1018, %1019 : vector<32x128xf32>
    %1021 = arith.truncf %1020 : vector<32x128xf32> to vector<32x128xbf16>
    %c1_309 = arith.constant 1 : index
    %c0_310 = arith.constant 0 : index
    %c0_311 = arith.constant 0 : index
    %1022 = vector.load %arg18[%c1_309, %c0_310, %c0_311] : memref<2x128x512xf32, #tpu.memory_space<vmem>>, vector<1x128x512xf32>
    %1023 = vector.shape_cast %1022 : vector<1x128x512xf32> to vector<128x512xf32>
    %1024 = arith.truncf %1023 : vector<128x512xf32> to vector<128x512xbf16>
    %cst_312 = arith.constant dense<0.000000e+00> : vector<32x512xf32>
    %1025 = tpu.matmul %1021, %1024, %cst_312 {dimension_numbers = #tpu.dot_dimension_numbers<[1], [0], [0], [1], [0, 0, 1, 1], [], []>} : vector<32x128xbf16>, vector<128x512xbf16>, vector<32x512xf32> -> vector<32x512xf32>
    %c1_313 = arith.constant 1 : index
    %c0_314 = arith.constant 0 : index
    %1026 = vector.load %arg19[%c1_313, %c0_314] : memref<2x512xf32, #tpu.memory_space<vmem>>, vector<1x512xf32>
    %1027 = vector.broadcast %1026 : vector<1x512xf32> to vector<32x512xf32>
    %1028 = arith.addf %1025, %1027 : vector<32x512xf32>
    %cst_315 = arith.constant 5.000000e-01 : f32
    %1029 = vector.broadcast %cst_315 : f32 to vector<32x512xf32>
    %1030 = arith.mulf %1029, %1028 : vector<32x512xf32>
    %cst_316 = arith.constant 4.471500e-02 : f32
    %1031 = vector.broadcast %cst_316 : f32 to vector<32x512xf32>
    %1032 = arith.mulf %1031, %1028 : vector<32x512xf32>
    %1033 = arith.mulf %1032, %1028 : vector<32x512xf32>
    %1034 = arith.mulf %1033, %1028 : vector<32x512xf32>
    %1035 = arith.addf %1028, %1034 : vector<32x512xf32>
    %cst_317 = arith.constant 0.797884583 : f32
    %1036 = vector.broadcast %cst_317 : f32 to vector<32x512xf32>
    %1037 = arith.mulf %1036, %1035 : vector<32x512xf32>
    %1038 = math.tanh %1037 : vector<32x512xf32>
    %cst_318 = arith.constant 1.000000e+00 : f32
    %1039 = vector.broadcast %cst_318 : f32 to vector<32x512xf32>
    %1040 = arith.addf %1039, %1038 : vector<32x512xf32>
    %1041 = arith.mulf %1030, %1040 : vector<32x512xf32>
    %1042 = arith.truncf %1041 : vector<32x512xf32> to vector<32x512xbf16>
    %c1_319 = arith.constant 1 : index
    %c0_320 = arith.constant 0 : index
    %c0_321 = arith.constant 0 : index
    %1043 = vector.load %arg20[%c1_319, %c0_320, %c0_321] : memref<2x512x128xf32, #tpu.memory_space<vmem>>, vector<1x512x128xf32>
    %1044 = vector.shape_cast %1043 : vector<1x512x128xf32> to vector<512x128xf32>
    %1045 = arith.truncf %1044 : vector<512x128xf32> to vector<512x128xbf16>
    %cst_322 = arith.constant dense<0.000000e+00> : vector<32x128xf32>
    %1046 = tpu.matmul %1042, %1045, %cst_322 {dimension_numbers = #tpu.dot_dimension_numbers<[1], [0], [0], [1], [0, 0, 1, 1], [], []>} : vector<32x512xbf16>, vector<512x128xbf16>, vector<32x128xf32> -> vector<32x128xf32>
    %c1_323 = arith.constant 1 : index
    %c0_324 = arith.constant 0 : index
    %1047 = vector.load %arg21[%c1_323, %c0_324] : memref<2x128xf32, #tpu.memory_space<vmem>>, vector<1x128xf32>
    %1048 = vector.broadcast %1047 : vector<1x128xf32> to vector<32x128xf32>
    %1049 = arith.addf %1046, %1048 : vector<32x128xf32>
    %1050 = arith.addf %996, %1049 : vector<32x128xf32>
    %c0_325 = arith.constant 0 : index
    %c0_326 = arith.constant 0 : index
    %1051 = vector.load %arg22[%c0_325, %c0_326] : memref<1x128xf32, #tpu.memory_space<vmem>>, vector<1x128xf32>
    %c0_327 = arith.constant 0 : index
    %c0_328 = arith.constant 0 : index
    %1052 = vector.load %arg23[%c0_327, %c0_328] : memref<1x128xf32, #tpu.memory_space<vmem>>, vector<1x128xf32>
    %cst_329 = arith.constant dense<0.000000e+00> : vector<32xf32>
    %1053 = vector.multi_reduction <add>, %1050, %cst_329 [1] : vector<32x128xf32> to vector<32xf32>
    %1054 = vector.shape_cast %1053 : vector<32xf32> to vector<32x1xf32>
    %cst_330 = arith.constant 1.280000e+02 : f32
    %1055 = vector.broadcast %cst_330 : f32 to vector<32x1xf32>
    %1056 = arith.divf %1054, %1055 : vector<32x1xf32>
    %1057 = vector.broadcast %1056 : vector<32x1xf32> to vector<32x128xf32>
    %1058 = arith.subf %1050, %1057 : vector<32x128xf32>
    %1059 = arith.mulf %1058, %1058 : vector<32x128xf32>
    %cst_331 = arith.constant dense<0.000000e+00> : vector<32xf32>
    %1060 = vector.multi_reduction <add>, %1059, %cst_331 [1] : vector<32x128xf32> to vector<32xf32>
    %1061 = vector.shape_cast %1060 : vector<32xf32> to vector<32x1xf32>
    %cst_332 = arith.constant 1.280000e+02 : f32
    %1062 = vector.broadcast %cst_332 : f32 to vector<32x1xf32>
    %1063 = arith.divf %1061, %1062 : vector<32x1xf32>
    %1064 = vector.broadcast %1056 : vector<32x1xf32> to vector<32x128xf32>
    %1065 = arith.subf %1050, %1064 : vector<32x128xf32>
    %cst_333 = arith.constant 9.99999974E-6 : f32
    %1066 = vector.broadcast %cst_333 : f32 to vector<32x1xf32>
    %1067 = arith.addf %1063, %1066 : vector<32x1xf32>
    %1068 = math.rsqrt %1067 : vector<32x1xf32>
    %1069 = vector.broadcast %1068 : vector<32x1xf32> to vector<32x128xf32>
    %1070 = arith.mulf %1065, %1069 : vector<32x128xf32>
    %1071 = vector.broadcast %1051 : vector<1x128xf32> to vector<32x128xf32>
    %1072 = arith.mulf %1070, %1071 : vector<32x128xf32>
    %1073 = vector.broadcast %1052 : vector<1x128xf32> to vector<32x128xf32>
    %1074 = arith.addf %1072, %1073 : vector<32x128xf32>
    %c0_334 = arith.constant 0 : index
    %c0_335 = arith.constant 0 : index
    %1075 = vector.load %arg24[%c0_334, %c0_335] : memref<32x128xf32, #tpu.memory_space<vmem>>, vector<32x128xf32>
    tpu.vector_store %arg24[%c0_334, %c0_335], %1074 {strides = array<i32>} : memref<32x128xf32, #tpu.memory_space<vmem>>, vector<32x128xf32>,
    return
  }
  func.func @transform_0(%arg0: i32) -> (i32, i32) {
    %c0_i32 = arith.constant 0 : i32
    %c0_i32_0 = arith.constant 0 : i32
    %c0_i32_1 = arith.constant 0 : i32
    return %c0_i32, %c0_i32_0 : i32, i32
  }
  func.func @transform_1(%arg0: i32) -> (i32, i32) {
    %c0_i32 = arith.constant 0 : i32
    %c0_i32_0 = arith.constant 0 : i32
    %c0_i32_1 = arith.constant 0 : i32
    return %c0_i32, %c0_i32_0 : i32, i32
  }
  func.func @transform_2(%arg0: i32) -> (i32, i32, i32, i32) {
    %c0_i32 = arith.constant 0 : i32
    %c0_i32_0 = arith.constant 0 : i32
    %c0_i32_1 = arith.constant 0 : i32
    %c0_i32_2 = arith.constant 0 : i32
    %c0_i32_3 = arith.constant 0 : i32
    return %c0_i32, %c0_i32_0, %c0_i32_1, %c0_i32_2 : i32, i32, i32, i32
  }
  func.func @transform_3(%arg0: i32) -> (i32, i32) {
    %c0_i32 = arith.constant 0 : i32
    %c0_i32_0 = arith.constant 0 : i32
    %c0_i32_1 = arith.constant 0 : i32
    return %c0_i32, %c0_i32_0 : i32, i32
  }
  func.func @transform_4(%arg0: i32) -> (i32, i32) {
    %c0_i32 = arith.constant 0 : i32
    %c0_i32_0 = arith.constant 0 : i32
    %c0_i32_1 = arith.constant 0 : i32
    return %c0_i32, %c0_i32_0 : i32, i32
  }
  func.func @transform_5(%arg0: i32) -> (i32, i32, i32) {
    %c0_i32 = arith.constant 0 : i32
    %c0_i32_0 = arith.constant 0 : i32
    %c0_i32_1 = arith.constant 0 : i32
    %c0_i32_2 = arith.constant 0 : i32
    return %c0_i32, %c0_i32_0, %c0_i32_1 : i32, i32, i32
  }
  func.func @transform_6(%arg0: i32) -> (i32, i32, i32) {
    %c0_i32 = arith.constant 0 : i32
    %c0_i32_0 = arith.constant 0 : i32
    %c0_i32_1 = arith.constant 0 : i32
    %c0_i32_2 = arith.constant 0 : i32
    return %c0_i32, %c0_i32_0, %c0_i32_1 : i32, i32, i32
  }
  func.func @transform_7(%arg0: i32) -> (i32, i32) {
    %c0_i32 = arith.constant 0 : i32
    %c0_i32_0 = arith.constant 0 : i32
    %c0_i32_1 = arith.constant 0 : i32
    return %c0_i32, %c0_i32_0 : i32, i32
  }
  func.func @transform_8(%arg0: i32) -> (i32, i32) {
    %c0_i32 = arith.constant 0 : i32
    %c0_i32_0 = arith.constant 0 : i32
    %c0_i32_1 = arith.constant 0 : i32
    return %c0_i32, %c0_i32_0 : i32, i32
  }
  func.func @transform_9(%arg0: i32) -> (i32, i32) {
    %c0_i32 = arith.constant 0 : i32
    %c0_i32_0 = arith.constant 0 : i32
    %c0_i32_1 = arith.constant 0 : i32
    return %c0_i32, %c0_i32_0 : i32, i32
  }
  func.func @transform_10(%arg0: i32) -> (i32, i32, i32) {
    %c0_i32 = arith.constant 0 : i32
    %c0_i32_0 = arith.constant 0 : i32
    %c0_i32_1 = arith.constant 0 : i32
    %c0_i32_2 = arith.constant 0 : i32
    return %c0_i32, %c0_i32_0, %c0_i32_1 : i32, i32, i32
  }
  func.func @transform_11(%arg0: i32) -> (i32, i32, i32) {
    %c0_i32 = arith.constant 0 : i32
    %c0_i32_0 = arith.constant 0 : i32
    %c0_i32_1 = arith.constant 0 : i32
    %c0_i32_2 = arith.constant 0 : i32
    return %c0_i32, %c0_i32_0, %c0_i32_1 : i32, i32, i32
  }
  func.func @transform_12(%arg0: i32) -> (i32, i32, i32) {
    %c0_i32 = arith.constant 0 : i32
    %c0_i32_0 = arith.constant 0 : i32
    %c0_i32_1 = arith.constant 0 : i32
    %c0_i32_2 = arith.constant 0 : i32
    return %c0_i32, %c0_i32_0, %c0_i32_1 : i32, i32, i32
  }
  func.func @transform_13(%arg0: i32) -> (i32, i32, i32) {
    %c0_i32 = arith.constant 0 : i32
    %c0_i32_0 = arith.constant 0 : i32
    %c0_i32_1 = arith.constant 0 : i32
    %c0_i32_2 = arith.constant 0 : i32
    return %c0_i32, %c0_i32_0, %c0_i32_1 : i32, i32, i32
  }
  func.func @transform_14(%arg0: i32) -> (i32, i32) {
    %c0_i32 = arith.constant 0 : i32
    %c0_i32_0 = arith.constant 0 : i32
    %c0_i32_1 = arith.constant 0 : i32
    return %c0_i32, %c0_i32_0 : i32, i32
  }
  func.func @transform_15(%arg0: i32) -> (i32, i32) {
    %c0_i32 = arith.constant 0 : i32
    %c0_i32_0 = arith.constant 0 : i32
    %c0_i32_1 = arith.constant 0 : i32
    return %c0_i32, %c0_i32_0 : i32, i32
  }
  func.func @transform_16(%arg0: i32) -> (i32, i32) {
    %c0_i32 = arith.constant 0 : i32
    %c0_i32_0 = arith.constant 0 : i32
    %c0_i32_1 = arith.constant 0 : i32
    return %c0_i32, %c0_i32_0 : i32, i32
  }
  func.func @transform_17(%arg0: i32) -> (i32, i32, i32) {
    %c0_i32 = arith.constant 0 : i32
    %c0_i32_0 = arith.constant 0 : i32
    %c0_i32_1 = arith.constant 0 : i32
    %c0_i32_2 = arith.constant 0 : i32
    return %c0_i32, %c0_i32_0, %c0_i32_1 : i32, i32, i32
  }
  func.func @transform_18(%arg0: i32) -> (i32, i32) {
    %c0_i32 = arith.constant 0 : i32
    %c0_i32_0 = arith.constant 0 : i32
    %c0_i32_1 = arith.constant 0 : i32
    return %c0_i32, %c0_i32_0 : i32, i32
  }
  func.func @transform_19(%arg0: i32) -> (i32, i32, i32) {
    %c0_i32 = arith.constant 0 : i32
    %c0_i32_0 = arith.constant 0 : i32
    %c0_i32_1 = arith.constant 0 : i32
    %c0_i32_2 = arith.constant 0 : i32
    return %c0_i32, %c0_i32_0, %c0_i32_1 : i32, i32, i32
  }
  func.func @transform_20(%arg0: i32) -> (i32, i32) {
    %c0_i32 = arith.constant 0 : i32
    %c0_i32_0 = arith.constant 0 : i32
    %c0_i32_1 = arith.constant 0 : i32
    return %c0_i32, %c0_i32_0 : i32, i32
  }
  func.func @transform_21(%arg0: i32) -> (i32, i32) {
    %c0_i32 = arith.constant 0 : i32
    %c0_i32_0 = arith.constant 0 : i32
    %c0_i32_1 = arith.constant 0 : i32
    return %c0_i32, %c0_i32_0 : i32, i32
  }
  func.func @transform_22(%arg0: i32) -> (i32, i32) {
    %c0_i32 = arith.constant 0 : i32
    %c0_i32_0 = arith.constant 0 : i32
    %c0_i32_1 = arith.constant 0 : i32
    return %c0_i32, %c0_i32_0 : i32, i32
  }
  func.func @transform_23(%arg0: i32) -> (i32, i32) {
    %c0_i32 = arith.constant 0 : i32
    %c0_i32_0 = arith.constant 0 : i32
    %c0_i32_1 = arith.constant 0 : i32
    return %c0_i32, %c0_i32_0 : i32, i32
  }
}

</mosaic_0001>

<llo_original>
// kernel: base_transformer_cross_attn.1
$region0: #{base_transformer_cross_attn.1}
  #allocation0 [shape = 'u32[]', space=smem, size = 0x4, offset = 0x4, fixed_abs, tag = 'smem constant byte address 0x4 - core index']
  #allocation1 [shape = 'u32[72,128]{1,0:T(1,128)}', space=vmem, size = 0x9000, scoped, tag = 'internal scratch']
  %s0 = inlined_call_operand.hbm [shape: f32[32,128], index: 0, kind: input, shape index: {}]
  %s1 = inlined_call_operand.hbm [shape: f32[32,128], index: 1, kind: input, shape index: {}]
  %s2 = inlined_call_operand.hbm [shape: f32[1,4,16,16], index: 2, kind: input, shape index: {}]
  %s3 = inlined_call_operand.vmem [shape: f32[2,128], index: 3, kind: input, shape index: {}]
  %s4 = inlined_call_operand.vmem [shape: f32[2,128], index: 4, kind: input, shape index: {}]
  %s5 = inlined_call_operand.hbm [shape: f32[2,128,384], index: 5, kind: input, shape index: {}]
  %s6 = inlined_call_operand.hbm [shape: f32[2,128,128], index: 6, kind: input, shape index: {}]
  %s7 = inlined_call_operand.vmem [shape: f32[2,128], index: 7, kind: input, shape index: {}]
  %s8 = inlined_call_operand.hbm [shape: f32[2,128], index: 8, kind: input, shape index: {}]
  %s9 = inlined_call_operand.hbm [shape: f32[2,128], index: 9, kind: input, shape index: {}]
  %s10 = inlined_call_operand.hbm [shape: f32[2,128,128], index: 10, kind: input, shape index: {}]
  %s11 = inlined_call_operand.hbm [shape: f32[2,128,128], index: 11, kind: input, shape index: {}]
  %s12 = inlined_call_operand.hbm [shape: f32[2,128,128], index: 12, kind: input, shape index: {}]
  %s13 = inlined_call_operand.hbm [shape: f32[2,128,128], index: 13, kind: input, shape index: {}]
  %s14 = inlined_call_operand.hbm [shape: f32[2,128], index: 14, kind: input, shape index: {}]
  %s15 = inlined_call_operand.hbm [shape: f32[2,128], index: 15, kind: input, shape index: {}]
  %s16 = inlined_call_operand.hbm [shape: f32[2,128], index: 16, kind: input, shape index: {}]
  %s17 = inlined_call_operand.hbm [shape: f32[2,128,512], index: 17, kind: input, shape index: {}]
  %s18 = inlined_call_operand.vmem [shape: f32[2,512], index: 18, kind: input, shape index: {}]
  %s19 = inlined_call_operand.hbm [shape: f32[2,512,128], index: 19, kind: input, shape index: {}]
  %s20 = inlined_call_operand.hbm [shape: f32[2,128], index: 20, kind: input, shape index: {}]
  %s21 = inlined_call_operand.vmem [shape: f32[1,128], index: 21, kind: input, shape index: {}]
  %s22 = inlined_call_operand.hbm [shape: f32[1,128], index: 22, kind: input, shape index: {}]
  %s23 = inlined_call_operand.hbm [shape: f32[32,128], index: 23, kind: output, shape index: {}]
  %s24 = sld [smem:[#allocation0]]
  $region174: #{base_transformer_cross_attn.1} parent=0
    _
  %s26 = ssub.s32 1, %s24
  %s27 = scalar_select 0, %s26, %s24
  $region1: #{base_transformer_cross_attn.1} parent=0
    #allocation2 [shape = 'u8[16384]{0}', space=vmem, size = 0x4000, scoped, tag = 'input window, operand 0, single buffered']
    #allocation3 [shape = 's32[1]{0}', space=sflag, size = 0x4, scoped, tag = 'scoped memory for base_transformer_cross_attn.1']
    #allocation4 [shape = 's32[1]{0}', space=sflag, size = 0x4, scoped, tag = 'scoped memory for base_transformer_cross_attn.1']
    #allocation5 [shape = 'u8[16384]{0}', space=vmem, size = 0x4000, scoped, tag = 'input window, operand 1, single buffered']
    #allocation6 [shape = 's32[1]{0}', space=sflag, size = 0x4, scoped, tag = 'scoped memory for base_transformer_cross_attn.1']
    #allocation7 [shape = 'u8[32768]{0}', space=vmem, size = 0x8000, scoped, tag = 'input window, operand 2, single buffered']
    #allocation8 [shape = 'u8[393216]{0}', space=vmem, size = 0x60000, scoped, tag = 'input window, operand 5, single buffered']
    #allocation9 [shape = 's32[1]{0}', space=sflag, size = 0x4, scoped, tag = 'scoped memory for base_transformer_cross_attn.1']
    #allocation10 [shape = 'u8[131072]{0}', space=vmem, size = 0x20000, scoped, tag = 'input window, operand 6, single buffered']
    #allocation11 [shape = 'u8[1024]{0}', space=vmem, size = 0x400, scoped, tag = 'input window, operand 8, single buffered']
    #allocation12 [shape = 's32[1]{0}', space=sflag, size = 0x4, scoped, tag = 'scoped memory for base_transformer_cross_attn.1']
    #allocation13 [shape = 'u8[1024]{0}', space=vmem, size = 0x400, scoped, tag = 'input window, operand 9, single buffered']
    #allocation14 [shape = 'u8[131072]{0}', space=vmem, size = 0x20000, scoped, tag = 'input window, operand 10, single buffered']
    #allocation15 [shape = 's32[1]{0}', space=sflag, size = 0x4, scoped, tag = 'scoped memory for base_transformer_cross_attn.1']
    #allocation16 [shape = 'u8[131072]{0}', space=vmem, size = 0x20000, scoped, tag = 'input window, operand 11, single buffered']
    #allocation17 [shape = 'u8[131072]{0}', space=vmem, size = 0x20000, scoped, tag = 'input window, operand 12, single buffered']
    #allocation18 [shape = 's32[1]{0}', space=sflag, size = 0x4, scoped, tag = 'scoped memory for base_transformer_cross_attn.1']
    #allocation19 [shape = 'u8[131072]{0}', space=vmem, size = 0x20000, scoped, tag = 'input window, operand 13, single buffered']
    #allocation20 [shape = 'u8[1024]{0}', space=vmem, size = 0x400, scoped, tag = 'input window, operand 14, single buffered']
    #allocation21 [shape = 's32[1]{0}', space=sflag, size = 0x4, scoped, tag = 'scoped memory for base_transformer_cross_attn.1']
    #allocation22 [shape = 'u8[1024]{0}', space=vmem, size = 0x400, scoped, tag = 'input window, operand 15, single buffered']
    #allocation23 [shape = 'u8[1024]{0}', space=vmem, size = 0x400, scoped, tag = 'input window, operand 16, single buffered']
    #allocation24 [shape = 's32[1]{0}', space=sflag, size = 0x4, scoped, tag = 'scoped memory for base_transformer_cross_attn.1']
    #allocation25 [shape = 'u8[524288]{0}', space=vmem, size = 0x80000, scoped, tag = 'input window, operand 17, single buffered']
    #allocation26 [shape = 'u8[524288]{0}', space=vmem, size = 0x80000, scoped, tag = 'input window, operand 19, single buffered']
    #allocation27 [shape = 's32[1]{0}', space=sflag, size = 0x4, scoped, tag = 'scoped memory for base_transformer_cross_attn.1']
    #allocation28 [shape = 'u8[1024]{0}', space=vmem, size = 0x400, scoped, tag = 'input window, operand 20, single buffered']
    #allocation29 [shape = 'u8[512]{0}', space=vmem, size = 0x400, scoped, tag = 'input window, operand 22, single buffered']
    #allocation30 [shape = 's32[1]{0}', space=sflag, size = 0x4, scoped, tag = 'scoped memory for base_transformer_cross_attn.1']
    #allocation31 [shape = 'u8[16384]{0}', space=vmem, size = 0x4000, scoped, tag = 'output window, operand 0, single buffered']
    %28 = vsyncpa [#allocation3], 0
    %29 = vsyncpa [#allocation6], 0
    %30 = vsyncpa [#allocation9], 0
    %31 = vsyncpa [#allocation12], 0
    %32 = vsyncpa [#allocation15], 0
    %33 = vsyncpa [#allocation18], 0
    %34 = vsyncpa [#allocation21], 0
    %35 = vsyncpa [#allocation24], 0
    %36 = vsyncpa [#allocation27], 0
    %37 = vsyncpa [#allocation30], 0
    %38 = vsyncpa [#allocation4], 0
    // Predicated region
    $region2: #{base_transformer_cross_attn.1} parent=1 // pred_check
      _
    $region3: #{base_transformer_cross_attn.1} parent=1 // pred_check_branch
      %40 = sbr.rel (0) target = $region5
    $region4: #{base_transformer_cross_attn.1} parent=1 // pred_region
      %42 = vsyncadd [#allocation3], 0
      %s43 = sshll.u32 %s0, 4
      %s44 = int_to_ptr.hbm [resolvable:$true] %s43
      %s45 = sshll.u32 [#allocation2], 4
      %s46 = int_to_ptr.vmem [resolvable:$true] %s45
      %51 = dma.hbm_to_vmem [thread:$0]  %s44, 512, %s46, [#allocation3], 128, 128, 8
    $region5: #{base_transformer_cross_attn.1} parent=1 // pred_fallthru
      _
    // Predicated region
    $region6: #{base_transformer_cross_attn.1} parent=1 // pred_check
      _
    $region7: #{base_transformer_cross_attn.1} parent=1 // pred_check_branch
      %53 = sbr.rel (0) target = $region9
    $region8: #{base_transformer_cross_attn.1} parent=1 // pred_region
      %55 = vsyncadd [#allocation6], 0
      %s56 = sshll.u32 %s1, 4
      %s57 = int_to_ptr.hbm [resolvable:$true] %s56
      %s58 = sshll.u32 [#allocation5], 4
      %s59 = int_to_ptr.vmem [resolvable:$true] %s58
      %64 = dma.hbm_to_vmem [thread:$0]  %s57, 512, %s59, [#allocation6], 128, 128, 8
    $region9: #{base_transformer_cross_attn.1} parent=1 // pred_fallthru
      _
    // Predicated region
    $region10: #{base_transformer_cross_attn.1} parent=1 // pred_check
      _
    $region11: #{base_transformer_cross_attn.1} parent=1 // pred_check_branch
      %66 = sbr.rel (0) target = $region13
    $region12: #{base_transformer_cross_attn.1} parent=1 // pred_region
      %68 = vsyncadd [#allocation6], 0
      %s69 = sshll.u32 %s2, 4
      %s70 = int_to_ptr.hbm [resolvable:$true] %s69
      %s71 = sshll.u32 [#allocation7], 4
      %s72 = int_to_ptr.vmem [resolvable:$true] %s71
      %77 = dma.hbm_to_vmem [thread:$0]  %s70, 1024, %s72, [#allocation6], 128, 128, 8
    $region13: #{base_transformer_cross_attn.1} parent=1 // pred_fallthru
      _
    // Predicated region
    $region14: #{base_transformer_cross_attn.1} parent=1 // pred_check
      _
    $region15: #{base_transformer_cross_attn.1} parent=1 // pred_check_branch
      %79 = sbr.rel (0) target = $region17
    $region16: #{base_transformer_cross_attn.1} parent=1 // pred_region
      _
    $region17: #{base_transformer_cross_attn.1} parent=1 // pred_fallthru
      _
    // Predicated region
    $region18: #{base_transformer_cross_attn.1} parent=1 // pred_check
      _
    $region19: #{base_transformer_cross_attn.1} parent=1 // pred_check_branch
      %81 = sbr.rel (0) target = $region21
    $region20: #{base_transformer_cross_attn.1} parent=1 // pred_region
      _
    $region21: #{base_transformer_cross_attn.1} parent=1 // pred_fallthru
      _
    // Predicated region
    $region22: #{base_transformer_cross_attn.1} parent=1 // pred_check
      _
    $region23: #{base_transformer_cross_attn.1} parent=1 // pred_check_branch
      %83 = sbr.rel (0) target = $region25
    $region24: #{base_transformer_cross_attn.1} parent=1 // pred_region
      %85 = vsyncadd [#allocation9], 0
      %s86 = sshll.u32 %s5, 4
      %s87 = int_to_ptr.hbm [resolvable:$true] %s86
      %s88 = sshll.u32 [#allocation8], 4
      %s89 = int_to_ptr.vmem [resolvable:$true] %s88
      %94 = dma.hbm_to_vmem [thread:$0]  %s87, 12288, %s89, [#allocation9], 384, 384, 24
    $region25: #{base_transformer_cross_attn.1} parent=1 // pred_fallthru
      _
    // Predicated region
    $region26: #{base_transformer_cross_attn.1} parent=1 // pred_check
      _
    $region27: #{base_transformer_cross_attn.1} parent=1 // pred_check_branch
      %96 = sbr.rel (0) target = $region29
    $region28: #{base_transformer_cross_attn.1} parent=1 // pred_region
      %98 = vsyncadd [#allocation9], 0
      %s99 = sshll.u32 %s6, 4
      %s100 = int_to_ptr.hbm [resolvable:$true] %s99
      %s101 = sshll.u32 [#allocation10], 4
      %s102 = int_to_ptr.vmem [resolvable:$true] %s101
      %107 = dma.hbm_to_vmem [thread:$0]  %s100, 4096, %s102, [#allocation9], 128, 128, 8
    $region29: #{base_transformer_cross_attn.1} parent=1 // pred_fallthru
      _
    // Predicated region
    $region30: #{base_transformer_cross_attn.1} parent=1 // pred_check
      _
    $region31: #{base_transformer_cross_attn.1} parent=1 // pred_check_branch
      %109 = sbr.rel (0) target = $region33
    $region32: #{base_transformer_cross_attn.1} parent=1 // pred_region
      _
    $region33: #{base_transformer_cross_attn.1} parent=1 // pred_fallthru
      _
    // Predicated region
    $region34: #{base_transformer_cross_attn.1} parent=1 // pred_check
      _
    $region35: #{base_transformer_cross_attn.1} parent=1 // pred_check_branch
      %111 = sbr.rel (0) target = $region37
    $region36: #{base_transformer_cross_attn.1} parent=1 // pred_region
      %113 = vsyncadd [#allocation12], 0
      %s115 = sshll.u32 %s8, 4
      %s116 = int_to_ptr.hbm [resolvable:$true] %s115
      %s117 = sshll.u32 [#allocation11], 4
      %s118 = int_to_ptr.vmem [resolvable:$true] %s117
      %120 = dma.hbm_to_vmem [thread:$0]  %s116, 32, %s118, [#allocation12]
    $region37: #{base_transformer_cross_attn.1} parent=1 // pred_fallthru
      _
    // Predicated region
    $region38: #{base_transformer_cross_attn.1} parent=1 // pred_check
      _
    $region39: #{base_transformer_cross_attn.1} parent=1 // pred_check_branch
      %122 = sbr.rel (0) target = $region41
    $region40: #{base_transformer_cross_attn.1} parent=1 // pred_region
      %124 = vsyncadd [#allocation12], 0
      %s126 = sshll.u32 %s9, 4
      %s127 = int_to_ptr.hbm [resolvable:$true] %s126
      %s128 = sshll.u32 [#allocation13], 4
      %s129 = int_to_ptr.vmem [resolvable:$true] %s128
      %131 = dma.hbm_to_vmem [thread:$0]  %s127, 32, %s129, [#allocation12]
    $region41: #{base_transformer_cross_attn.1} parent=1 // pred_fallthru
      _
    // Predicated region
    $region42: #{base_transformer_cross_attn.1} parent=1 // pred_check
      _
    $region43: #{base_transformer_cross_attn.1} parent=1 // pred_check_branch
      %133 = sbr.rel (0) target = $region45
    $region44: #{base_transformer_cross_attn.1} parent=1 // pred_region
      %135 = vsyncadd [#allocation15], 0
      %s136 = sshll.u32 %s10, 4
      %s137 = int_to_ptr.hbm [resolvable:$true] %s136
      %s138 = sshll.u32 [#allocation14], 4
      %s139 = int_to_ptr.vmem [resolvable:$true] %s138
      %144 = dma.hbm_to_vmem [thread:$0]  %s137, 4096, %s139, [#allocation15], 128, 128, 8
    $region45: #{base_transformer_cross_attn.1} parent=1 // pred_fallthru
      _
    // Predicated region
    $region46: #{base_transformer_cross_attn.1} parent=1 // pred_check
      _
    $region47: #{base_transformer_cross_attn.1} parent=1 // pred_check_branch
      %146 = sbr.rel (0) target = $region49
    $region48: #{base_transformer_cross_attn.1} parent=1 // pred_region
      %148 = vsyncadd [#allocation15], 0
      %s149 = sshll.u32 %s11, 4
      %s150 = int_to_ptr.hbm [resolvable:$true] %s149
      %s151 = sshll.u32 [#allocation16], 4
      %s152 = int_to_ptr.vmem [resolvable:$true] %s151
      %157 = dma.hbm_to_vmem [thread:$0]  %s150, 4096, %s152, [#allocation15], 128, 128, 8
    $region49: #{base_transformer_cross_attn.1} parent=1 // pred_fallthru
      _
    // Predicated region
    $region50: #{base_transformer_cross_attn.1} parent=1 // pred_check
      _
    $region51: #{base_transformer_cross_attn.1} parent=1 // pred_check_branch
      %159 = sbr.rel (0) target = $region53
    $region52: #{base_transformer_cross_attn.1} parent=1 // pred_region
      %161 = vsyncadd [#allocation18], 0
      %s162 = sshll.u32 %s12, 4
      %s163 = int_to_ptr.hbm [resolvable:$true] %s162
      %s164 = sshll.u32 [#allocation17], 4
      %s165 = int_to_ptr.vmem [resolvable:$true] %s164
      %170 = dma.hbm_to_vmem [thread:$0]  %s163, 4096, %s165, [#allocation18], 128, 128, 8
    $region53: #{base_transformer_cross_attn.1} parent=1 // pred_fallthru
      _
    // Predicated region
    $region54: #{base_transformer_cross_attn.1} parent=1 // pred_check
      _
    $region55: #{base_transformer_cross_attn.1} parent=1 // pred_check_branch
      %172 = sbr.rel (0) target = $region57
    $region56: #{base_transformer_cross_attn.1} parent=1 // pred_region
      %174 = vsyncadd [#allocation18], 0
      %s175 = sshll.u32 %s13, 4
      %s176 = int_to_ptr.hbm [resolvable:$true] %s175
      %s177 = sshll.u32 [#allocation19], 4
      %s178 = int_to_ptr.vmem [resolvable:$true] %s177
      %183 = dma.hbm_to_vmem [thread:$0]  %s176, 4096, %s178, [#allocation18], 128, 128, 8
    $region57: #{base_transformer_cross_attn.1} parent=1 // pred_fallthru
      _
    // Predicated region
    $region58: #{base_transformer_cross_attn.1} parent=1 // pred_check
      _
    $region59: #{base_transformer_cross_attn.1} parent=1 // pred_check_branch
      %185 = sbr.rel (0) target = $region61
    $region60: #{base_transformer_cross_attn.1} parent=1 // pred_region
      %187 = vsyncadd [#allocation21], 0
      %s189 = sshll.u32 %s14, 4
      %s190 = int_to_ptr.hbm [resolvable:$true] %s189
      %s191 = sshll.u32 [#allocation20], 4
      %s192 = int_to_ptr.vmem [resolvable:$true] %s191
      %194 = dma.hbm_to_vmem [thread:$0]  %s190, 32, %s192, [#allocation21]
    $region61: #{base_transformer_cross_attn.1} parent=1 // pred_fallthru
      _
    // Predicated region
    $region62: #{base_transformer_cross_attn.1} parent=1 // pred_check
      _
    $region63: #{base_transformer_cross_attn.1} parent=1 // pred_check_branch
      %196 = sbr.rel (0) target = $region65
    $region64: #{base_transformer_cross_attn.1} parent=1 // pred_region
      %198 = vsyncadd [#allocation21], 0
      %s200 = sshll.u32 %s15, 4
      %s201 = int_to_ptr.hbm [resolvable:$true] %s200
      %s202 = sshll.u32 [#allocation22], 4
      %s203 = int_to_ptr.vmem [resolvable:$true] %s202
      %205 = dma.hbm_to_vmem [thread:$0]  %s201, 32, %s203, [#allocation21]
    $region65: #{base_transformer_cross_attn.1} parent=1 // pred_fallthru
      _
    // Predicated region
    $region66: #{base_transformer_cross_attn.1} parent=1 // pred_check
      _
    $region67: #{base_transformer_cross_attn.1} parent=1 // pred_check_branch
      %207 = sbr.rel (0) target = $region69
    $region68: #{base_transformer_cross_attn.1} parent=1 // pred_region
      %209 = vsyncadd [#allocation24], 0
      %s211 = sshll.u32 %s16, 4
      %s212 = int_to_ptr.hbm [resolvable:$true] %s211
      %s213 = sshll.u32 [#allocation23], 4
      %s214 = int_to_ptr.vmem [resolvable:$true] %s213
      %216 = dma.hbm_to_vmem [thread:$0]  %s212, 32, %s214, [#allocation24]
    $region69: #{base_transformer_cross_attn.1} parent=1 // pred_fallthru
      _
    // Predicated region
    $region70: #{base_transformer_cross_attn.1} parent=1 // pred_check
      _
    $region71: #{base_transformer_cross_attn.1} parent=1 // pred_check_branch
      %218 = sbr.rel (0) target = $region73
    $region72: #{base_transformer_cross_attn.1} parent=1 // pred_region
      %220 = vsyncadd [#allocation24], 0
      %s221 = sshll.u32 %s17, 4
      %s222 = int_to_ptr.hbm [resolvable:$true] %s221
      %s223 = sshll.u32 [#allocation25], 4
      %s224 = int_to_ptr.vmem [resolvable:$true] %s223
      %229 = dma.hbm_to_vmem [thread:$0]  %s222, 16384, %s224, [#allocation24], 512, 512, 32
    $region73: #{base_transformer_cross_attn.1} parent=1 // pred_fallthru
      _
    // Predicated region
    $region74: #{base_transformer_cross_attn.1} parent=1 // pred_check
      _
    $region75: #{base_transformer_cross_attn.1} parent=1 // pred_check_branch
      %231 = sbr.rel (0) target = $region77
    $region76: #{base_transformer_cross_attn.1} parent=1 // pred_region
      _
    $region77: #{base_transformer_cross_attn.1} parent=1 // pred_fallthru
      _
    // Predicated region
    $region78: #{base_transformer_cross_attn.1} parent=1 // pred_check
      _
    $region79: #{base_transformer_cross_attn.1} parent=1 // pred_check_branch
      %233 = sbr.rel (0) target = $region81
    $region80: #{base_transformer_cross_attn.1} parent=1 // pred_region
      %235 = vsyncadd [#allocation27], 0
      %s236 = sshll.u32 %s19, 4
      %s237 = int_to_ptr.hbm [resolvable:$true] %s236
      %s238 = sshll.u32 [#allocation26], 4
      %s239 = int_to_ptr.vmem [resolvable:$true] %s238
      %244 = dma.hbm_to_vmem [thread:$0]  %s237, 16384, %s239, [#allocation27], 128, 128, 8
    $region81: #{base_transformer_cross_attn.1} parent=1 // pred_fallthru
      _
    // Predicated region
    $region82: #{base_transformer_cross_attn.1} parent=1 // pred_check
      _
    $region83: #{base_transformer_cross_attn.1} parent=1 // pred_check_branch
      %246 = sbr.rel (0) target = $region85
    $region84: #{base_transformer_cross_attn.1} parent=1 // pred_region
      %248 = vsyncadd [#allocation27], 0
      %s250 = sshll.u32 %s20, 4
      %s251 = int_to_ptr.hbm [resolvable:$true] %s250
      %s252 = sshll.u32 [#allocation28], 4
      %s253 = int_to_ptr.vmem [resolvable:$true] %s252
      %255 = dma.hbm_to_vmem [thread:$0]  %s251, 32, %s253, [#allocation27]
    $region85: #{base_transformer_cross_attn.1} parent=1 // pred_fallthru
      _
    // Predicated region
    $region86: #{base_transformer_cross_attn.1} parent=1 // pred_check
      _
    $region87: #{base_transformer_cross_attn.1} parent=1 // pred_check_branch
      %257 = sbr.rel (0) target = $region89
    $region88: #{base_transformer_cross_attn.1} parent=1 // pred_region
      _
    $region89: #{base_transformer_cross_attn.1} parent=1 // pred_fallthru
      _
    // Predicated region
    $region90: #{base_transformer_cross_attn.1} parent=1 // pred_check
      _
    $region91: #{base_transformer_cross_attn.1} parent=1 // pred_check_branch
      %259 = sbr.rel (0) target = $region93
    $region92: #{base_transformer_cross_attn.1} parent=1 // pred_region
      %261 = vsyncadd [#allocation30], 0
      %s263 = sshll.u32 %s22, 4
      %s264 = int_to_ptr.hbm [resolvable:$true] %s263
      %s265 = sshll.u32 [#allocation29], 4
      %s266 = int_to_ptr.vmem [resolvable:$true] %s265
      %268 = dma.hbm_to_vmem [thread:$0]  %s264, 16, %s266, [#allocation30]
    $region93: #{base_transformer_cross_attn.1} parent=1 // pred_fallthru
      _
    // Predicated region
    $region94: #{base_transformer_cross_attn.1} parent=1 // pred_check
      _
    $region95: #{base_transformer_cross_attn.1} parent=1 // pred_check_branch
      %270 = sbr.rel (0) target = $region97
    $region96: #{base_transformer_cross_attn.1} parent=1 // pred_region
      %272 = dma.done [#allocation3], 512
    $region97: #{base_transformer_cross_attn.1} parent=1 // pred_fallthru
      _
    // Predicated region
    $region98: #{base_transformer_cross_attn.1} parent=1 // pred_check
      _
    $region99: #{base_transformer_cross_attn.1} parent=1 // pred_check_branch
      %274 = sbr.rel (0) target = $region101
    $region100: #{base_transformer_cross_attn.1} parent=1 // pred_region
      %276 = dma.done [#allocation6], 512
    $region101: #{base_transformer_cross_attn.1} parent=1 // pred_fallthru
      _
    // Predicated region
    $region102: #{base_transformer_cross_attn.1} parent=1 // pred_check
      _
    $region103: #{base_transformer_cross_attn.1} parent=1 // pred_check_branch
      %278 = sbr.rel (0) target = $region105
    $region104: #{base_transformer_cross_attn.1} parent=1 // pred_region
      %280 = dma.done [#allocation6], 1024
    $region105: #{base_transformer_cross_attn.1} parent=1 // pred_fallthru
      _
    // Predicated region
    $region106: #{base_transformer_cross_attn.1} parent=1 // pred_check
      _
    $region107: #{base_transformer_cross_attn.1} parent=1 // pred_check_branch
      %282 = sbr.rel (0) target = $region109
    $region108: #{base_transformer_cross_attn.1} parent=1 // pred_region
      %284 = dma.done [#allocation9], 12288
    $region109: #{base_transformer_cross_attn.1} parent=1 // pred_fallthru
      _
    // Predicated region
    $region110: #{base_transformer_cross_attn.1} parent=1 // pred_check
      _
    $region111: #{base_transformer_cross_attn.1} parent=1 // pred_check_branch
      %286 = sbr.rel (0) target = $region113
    $region112: #{base_transformer_cross_attn.1} parent=1 // pred_region
      %288 = dma.done [#allocation9], 4096
    $region113: #{base_transformer_cross_attn.1} parent=1 // pred_fallthru
      _
    // Predicated region
    $region114: #{base_transformer_cross_attn.1} parent=1 // pred_check
      _
    $region115: #{base_transformer_cross_attn.1} parent=1 // pred_check_branch
      %290 = sbr.rel (0) target = $region117
    $region116: #{base_transformer_cross_attn.1} parent=1 // pred_region
      %292 = dma.done [#allocation12], 32
    $region117: #{base_transformer_cross_attn.1} parent=1 // pred_fallthru
      _
    // Predicated region
    $region118: #{base_transformer_cross_attn.1} parent=1 // pred_check
      _
    $region119: #{base_transformer_cross_attn.1} parent=1 // pred_check_branch
      %294 = sbr.rel (0) target = $region121
    $region120: #{base_transformer_cross_attn.1} parent=1 // pred_region
      %296 = dma.done [#allocation12], 32
    $region121: #{base_transformer_cross_attn.1} parent=1 // pred_fallthru
      _
    // Predicated region
    $region122: #{base_transformer_cross_attn.1} parent=1 // pred_check
      _
    $region123: #{base_transformer_cross_attn.1} parent=1 // pred_check_branch
      %298 = sbr.rel (0) target = $region125
    $region124: #{base_transformer_cross_attn.1} parent=1 // pred_region
      %300 = dma.done [#allocation15], 4096
    $region125: #{base_transformer_cross_attn.1} parent=1 // pred_fallthru
      _
    // Predicated region
    $region126: #{base_transformer_cross_attn.1} parent=1 // pred_check
      _
    $region127: #{base_transformer_cross_attn.1} parent=1 // pred_check_branch
      %302 = sbr.rel (0) target = $region129
    $region128: #{base_transformer_cross_attn.1} parent=1 // pred_region
      %304 = dma.done [#allocation15], 4096
    $region129: #{base_transformer_cross_attn.1} parent=1 // pred_fallthru
      _
    // Predicated region
    $region130: #{base_transformer_cross_attn.1} parent=1 // pred_check
      _
    $region131: #{base_transformer_cross_attn.1} parent=1 // pred_check_branch
      %306 = sbr.rel (0) target = $region133
    $region132: #{base_transformer_cross_attn.1} parent=1 // pred_region
      %308 = dma.done [#allocation18], 4096
    $region133: #{base_transformer_cross_attn.1} parent=1 // pred_fallthru
      _
    // Predicated region
    $region134: #{base_transformer_cross_attn.1} parent=1 // pred_check
      _
    $region135: #{base_transformer_cross_attn.1} parent=1 // pred_check_branch
      %310 = sbr.rel (0) target = $region137
    $region136: #{base_transformer_cross_attn.1} parent=1 // pred_region
      %312 = dma.done [#allocation18], 4096
    $region137: #{base_transformer_cross_attn.1} parent=1 // pred_fallthru
      _
    // Predicated region
    $region138: #{base_transformer_cross_attn.1} parent=1 // pred_check
      _
    $region139: #{base_transformer_cross_attn.1} parent=1 // pred_check_branch
      %314 = sbr.rel (0) target = $region141
    $region140: #{base_transformer_cross_attn.1} parent=1 // pred_region
      %316 = dma.done [#allocation21], 32
    $region141: #{base_transformer_cross_attn.1} parent=1 // pred_fallthru
      _
    // Predicated region
    $region142: #{base_transformer_cross_attn.1} parent=1 // pred_check
      _
    $region143: #{base_transformer_cross_attn.1} parent=1 // pred_check_branch
      %318 = sbr.rel (0) target = $region145
    $region144: #{base_transformer_cross_attn.1} parent=1 // pred_region
      %320 = dma.done [#allocation21], 32
    $region145: #{base_transformer_cross_attn.1} parent=1 // pred_fallthru
      _
    // Predicated region
    $region146: #{base_transformer_cross_attn.1} parent=1 // pred_check
      _
    $region147: #{base_transformer_cross_attn.1} parent=1 // pred_check_branch
      %322 = sbr.rel (0) target = $region149
    $region148: #{base_transformer_cross_attn.1} parent=1 // pred_region
      %324 = dma.done [#allocation24], 32
    $region149: #{base_transformer_cross_attn.1} parent=1 // pred_fallthru
      _
    // Predicated region
    $region150: #{base_transformer_cross_attn.1} parent=1 // pred_check
      _
    $region151: #{base_transformer_cross_attn.1} parent=1 // pred_check_branch
      %326 = sbr.rel (0) target = $region153
    $region152: #{base_transformer_cross_attn.1} parent=1 // pred_region
      %328 = dma.done [#allocation24], 16384
    $region153: #{base_transformer_cross_attn.1} parent=1 // pred_fallthru
      _
    // Predicated region
    $region154: #{base_transformer_cross_attn.1} parent=1 // pred_check
      _
    $region155: #{base_transformer_cross_attn.1} parent=1 // pred_check_branch
      %330 = sbr.rel (0) target = $region157
    $region156: #{base_transformer_cross_attn.1} parent=1 // pred_region
      %332 = dma.done [#allocation27], 16384
    $region157: #{base_transformer_cross_attn.1} parent=1 // pred_fallthru
      _
    // Predicated region
    $region158: #{base_transformer_cross_attn.1} parent=1 // pred_check
      _
    $region159: #{base_transformer_cross_attn.1} parent=1 // pred_check_branch
      %334 = sbr.rel (0) target = $region161
    $region160: #{base_transformer_cross_attn.1} parent=1 // pred_region
      %336 = dma.done [#allocation27], 32
    $region161: #{base_transformer_cross_attn.1} parent=1 // pred_fallthru
      _
    // Predicated region
    $region162: #{base_transformer_cross_attn.1} parent=1 // pred_check
      _
    $region163: #{base_transformer_cross_attn.1} parent=1 // pred_check_branch
      %338 = sbr.rel (0) target = $region165
    $region164: #{base_transformer_cross_attn.1} parent=1 // pred_region
      %340 = dma.done [#allocation30], 16
    $region165: #{base_transformer_cross_attn.1} parent=1 // pred_fallthru
      _
    %v342 = vld [vmem:[#allocation2] sm:$0xff]
    %v343 = vld [vmem:[#allocation2 + $0x8] sm:$0xff]
    %v344 = vld [vmem:[#allocation2 + $0x10] sm:$0xff]
    %v345 = vld [vmem:[#allocation2 + $0x18] sm:$0xff]
    %v346 = vld [vmem:[#allocation5] sm:$0xff]
    %v347 = vld [vmem:[#allocation5 + $0x8] sm:$0xff]
    %v348 = vld [vmem:[#allocation5 + $0x10] sm:$0xff]
    %v349 = vld [vmem:[#allocation5 + $0x18] sm:$0xff]
    %v350 = vld [vmem:[#allocation7] sm:$0xff]
    %v351 = vld [vmem:[#allocation7 + $0x8] sm:$0xff]
    %v352 = vld [vmem:[#allocation7 + $0x10] sm:$0xff]
    %v353 = vld [vmem:[#allocation7 + $0x18] sm:$0xff]
    %v354 = vld [vmem:[#allocation7 + $0x20] sm:$0xff]
    %v355 = vld [vmem:[#allocation7 + $0x28] sm:$0xff]
    %v356 = vld [vmem:[#allocation7 + $0x30] sm:$0xff]
    %v357 = vld [vmem:[#allocation7 + $0x38] sm:$0xff]
    %v358 = vld [vmem:[%s3] sm:$0x1]
    %v359 = vld [vmem:[%s4] sm:$0x1]
    %360 = vadd.xlane.f32.xlu0 %v342
    %v361 = vpop.xlane.xlu0 %360
    %362 = vadd.xlane.f32.xlu0 %v343
    %v363 = vpop.xlane.xlu0 %362
    %364 = vadd.xlane.f32.xlu0 %v344
    %v365 = vpop.xlane.xlu0 %364
    %366 = vadd.xlane.f32.xlu0 %v345
    %v367 = vpop.xlane.xlu0 %366
    %v368 = vrcp.pop 128.0
    %v369 = vmul.f32 128.0, %v368
    %v370 = vsub.f32 1.0, %v369
    %v371 = vmul.f32 %v368, %v370
    %v372 = vadd.f32 %v368, %v371
    %vm373 = vweird.f32 %v368
    %v374 = vsel %vm373, %v368, %v372
    %v375 = vmul.f32 %v361, %v374
    %v376 = vmul.f32 %v363, %v374
    %v377 = vmul.f32 %v365, %v374
    %v378 = vmul.f32 %v367, %v374
    %v379 = vsub.f32 %v342, %v375
    %v380 = vsub.f32 %v343, %v376
    %v381 = vsub.f32 %v344, %v377
    %v382 = vsub.f32 %v345, %v378
    %v383 = vmul.f32 %v379, %v379
    %v384 = vmul.f32 %v380, %v380
    %v385 = vmul.f32 %v381, %v381
    %v386 = vmul.f32 %v382, %v382
    %387 = vadd.xlane.f32.xlu0 %v383
    %v388 = vpop.xlane.xlu0 %387
    %389 = vadd.xlane.f32.xlu0 %v384
    %v390 = vpop.xlane.xlu0 %389
    %391 = vadd.xlane.f32.xlu0 %v385
    %v392 = vpop.xlane.xlu0 %391
    %393 = vadd.xlane.f32.xlu0 %v386
    %v394 = vpop.xlane.xlu0 %393
    %v395 = vmul.f32 %v388, %v374
    %v396 = vmul.f32 %v390, %v374
    %v397 = vmul.f32 %v392, %v374
    %v398 = vmul.f32 %v394, %v374
    %v399 = vadd.f32 %v395, 1e-05
    %v400 = vadd.f32 %v396, 1e-05
    %v401 = vadd.f32 %v397, 1e-05
    %v402 = vadd.f32 %v398, 1e-05
    %v403 = vrsqrt.pop %v399
    %v404 = vmul.f32 %v403, %v399
    %v405 = vmul.f32 %v404, %v403
    %v406 = vmul.f32 0.5, %v405
    %v407 = vsub.f32 1.5, %v406
    %v408 = vmul.f32 %v403, %v407
    %vm409 = vweird.f32 %v399
    %vm410 = vweird.f32 %v403
    %vm411 = vmor %vm409, %vm410
    %v412 = vsel %vm411, %v403, %v408
    %v413 = vrsqrt.pop %v400
    %v414 = vmul.f32 %v413, %v400
    %v415 = vmul.f32 %v414, %v413
    %v416 = vmul.f32 0.5, %v415
    %v417 = vsub.f32 1.5, %v416
    %v418 = vmul.f32 %v413, %v417
    %vm419 = vweird.f32 %v400
    %vm420 = vweird.f32 %v413
    %vm421 = vmor %vm419, %vm420
    %v422 = vsel %vm421, %v413, %v418
    %v423 = vrsqrt.pop %v401
    %v424 = vmul.f32 %v423, %v401
    %v425 = vmul.f32 %v424, %v423
    %v426 = vmul.f32 0.5, %v425
    %v427 = vsub.f32 1.5, %v426
    %v428 = vmul.f32 %v423, %v427
    %vm429 = vweird.f32 %v401
    %vm430 = vweird.f32 %v423
    %vm431 = vmor %vm429, %vm430
    %v432 = vsel %vm431, %v423, %v428
    %v433 = vrsqrt.pop %v402
    %v434 = vmul.f32 %v433, %v402
    %v435 = vmul.f32 %v434, %v433
    %v436 = vmul.f32 0.5, %v435
    %v437 = vsub.f32 1.5, %v436
    %v438 = vmul.f32 %v433, %v437
    %vm439 = vweird.f32 %v402
    %vm440 = vweird.f32 %v433
    %vm441 = vmor %vm439, %vm440
    %v442 = vsel %vm441, %v433, %v438
    %v443 = vmul.f32 %v379, %v412
    %v444 = vmul.f32 %v380, %v422
    %v445 = vmul.f32 %v381, %v432
    %v446 = vmul.f32 %v382, %v442
    %v447 = vperm.slane %v358, 0
    %v448 = vmul.f32 %v443, %v447
    %v449 = vmul.f32 %v444, %v447
    %v450 = vmul.f32 %v445, %v447
    %v451 = vmul.f32 %v446, %v447
    %v452 = vperm.slane %v359, 0
    %v453 = vadd.f32 %v448, %v452
    %v454 = vadd.f32 %v449, %v452
    %v455 = vadd.f32 %v450, %v452
    %v456 = vadd.f32 %v451, %v452
    %v457 = vpack.c.bf16 %v454, %v453
    %v458 = vpack.c.bf16 %v456, %v455
    %v459 = vld [vmem:[#allocation8] sm:$0xff]
    %v460 = vld [vmem:[#allocation8 + $0x8] sm:$0xff]
    %v461 = vld [vmem:[#allocation8 + $0x10] sm:$0xff]
    %v462 = vld [vmem:[#allocation8 + $0x18] sm:$0xff]
    %v463 = vld [vmem:[#allocation8 + $0x20] sm:$0xff]
    %v464 = vld [vmem:[#allocation8 + $0x28] sm:$0xff]
    %v465 = vld [vmem:[#allocation8 + $0x30] sm:$0xff]
    %v466 = vld [vmem:[#allocation8 + $0x38] sm:$0xff]
    %v467 = vld [vmem:[#allocation8 + $0x40] sm:$0xff]
    %v468 = vld [vmem:[#allocation8 + $0x48] sm:$0xff]
    %v469 = vld [vmem:[#allocation8 + $0x50] sm:$0xff]
    %v470 = vld [vmem:[#allocation8 + $0x58] sm:$0xff]
    %v471 = vld [vmem:[#allocation8 + $0x60] sm:$0xff]
    %v472 = vld [vmem:[#allocation8 + $0x68] sm:$0xff]
    %v473 = vld [vmem:[#allocation8 + $0x70] sm:$0xff]
    %v474 = vld [vmem:[#allocation8 + $0x78] sm:$0xff]
    %v475 = vld [vmem:[#allocation8 + $0x80] sm:$0xff]
    %v476 = vld [vmem:[#allocation8 + $0x88] sm:$0xff]
    %v477 = vld [vmem:[#allocation8 + $0x90] sm:$0xff]
    %v478 = vld [vmem:[#allocation8 + $0x98] sm:$0xff]
    %v479 = vld [vmem:[#allocation8 + $0xa0] sm:$0xff]
    %v480 = vld [vmem:[#allocation8 + $0xa8] sm:$0xff]
    %v481 = vld [vmem:[#allocation8 + $0xb0] sm:$0xff]
    %v482 = vld [vmem:[#allocation8 + $0xb8] sm:$0xff]
    %v483 = vld [vmem:[#allocation8 + $0xc0] sm:$0xff]
    %v484 = vld [vmem:[#allocation8 + $0xc8] sm:$0xff]
    %v485 = vld [vmem:[#allocation8 + $0xd0] sm:$0xff]
    %v486 = vld [vmem:[#allocation8 + $0xd8] sm:$0xff]
    %v487 = vld [vmem:[#allocation8 + $0xe0] sm:$0xff]
    %v488 = vld [vmem:[#allocation8 + $0xe8] sm:$0xff]
    %v489 = vld [vmem:[#allocation8 + $0xf0] sm:$0xff]
    %v490 = vld [vmem:[#allocation8 + $0xf8] sm:$0xff]
    %v491 = vld [vmem:[#allocation8 + $0x100] sm:$0xff]
    %v492 = vld [vmem:[#allocation8 + $0x108] sm:$0xff]
    %v493 = vld [vmem:[#allocation8 + $0x110] sm:$0xff]
    %v494 = vld [vmem:[#allocation8 + $0x118] sm:$0xff]
    %v495 = vld [vmem:[#allocation8 + $0x120] sm:$0xff]
    %v496 = vld [vmem:[#allocation8 + $0x128] sm:$0xff]
    %v497 = vld [vmem:[#allocation8 + $0x130] sm:$0xff]
    %v498 = vld [vmem:[#allocation8 + $0x138] sm:$0xff]
    %v499 = vld [vmem:[#allocation8 + $0x140] sm:$0xff]
    %v500 = vld [vmem:[#allocation8 + $0x148] sm:$0xff]
    %v501 = vld [vmem:[#allocation8 + $0x150] sm:$0xff]
    %v502 = vld [vmem:[#allocation8 + $0x158] sm:$0xff]
    %v503 = vld [vmem:[#allocation8 + $0x160] sm:$0xff]
    %v504 = vld [vmem:[#allocation8 + $0x168] sm:$0xff]
    %v505 = vld [vmem:[#allocation8 + $0x170] sm:$0xff]
    %v506 = vld [vmem:[#allocation8 + $0x178] sm:$0xff]
    %v507 = vpack.c.bf16 %v462, %v459
    %v508 = vpack.c.bf16 %v463, %v460
    %v509 = vpack.c.bf16 %v464, %v461
    %v510 = vpack.c.bf16 %v468, %v465
    %v511 = vpack.c.bf16 %v469, %v466
    %v512 = vpack.c.bf16 %v470, %v467
    %v513 = vpack.c.bf16 %v474, %v471
    %v514 = vpack.c.bf16 %v475, %v472
    %v515 = vpack.c.bf16 %v476, %v473
    %v516 = vpack.c.bf16 %v480, %v477
    %v517 = vpack.c.bf16 %v481, %v478
    %v518 = vpack.c.bf16 %v482, %v479
    %v519 = vpack.c.bf16 %v486, %v483
    %v520 = vpack.c.bf16 %v487, %v484
    %v521 = vpack.c.bf16 %v488, %v485
    %v522 = vpack.c.bf16 %v492, %v489
    %v523 = vpack.c.bf16 %v493, %v490
    %v524 = vpack.c.bf16 %v494, %v491
    %v525 = vpack.c.bf16 %v498, %v495
    %v526 = vpack.c.bf16 %v499, %v496
    %v527 = vpack.c.bf16 %v500, %v497
    %v528 = vpack.c.bf16 %v504, %v501
    %v529 = vpack.c.bf16 %v505, %v502
    %v530 = vpack.c.bf16 %v506, %v503
    %531 = vmatpush.bf16.msra.mxu0 %v528
    %532 = vmatpush.bf16.msra.mxu0 %v525
    %533 = vmatpush.bf16.msra.mxu0 %v522
    %534 = vmatpush.bf16.msra.mxu0 %v519
    %535 = vmatpush.bf16.msra.mxu0 %v516
    %536 = vmatpush.bf16.msra.mxu0 %v513
    %537 = vmatpush.bf16.msra.mxu0 %v510
    %538 = vmatpush.bf16.msra.mxu0 %v507
    %539 = vmatmul.bf16.gmra.mxu0 %v457
    %v540 = vpop.f32.mrf.mxu0
    %v541 = vadd.f32 0.0, %v540
    %v542 = vpop.f32.mrf.mxu0
    %v543 = vadd.f32 0.0, %v542
    %544 = vmatmul.bf16.gmra.mxu0 %v458
    %v545 = vpop.f32.mrf.mxu0
    %v546 = vadd.f32 0.0, %v545
    %v547 = vpop.f32.mrf.mxu0
    %v548 = vadd.f32 0.0, %v547
    %549 = vdwg.mxu0
    %550 = vmatpush.bf16.msra.mxu0 %v529
    %551 = vmatpush.bf16.msra.mxu0 %v526
    %552 = vmatpush.bf16.msra.mxu0 %v523
    %553 = vmatpush.bf16.msra.mxu0 %v520
    %554 = vmatpush.bf16.msra.mxu0 %v517
    %555 = vmatpush.bf16.msra.mxu0 %v514
    %556 = vmatpush.bf16.msra.mxu0 %v511
    %557 = vmatpush.bf16.msra.mxu0 %v508
    %558 = vmatmul.bf16.gmra.mxu0 %v457
    %v559 = vpop.f32.mrf.mxu0
    %v560 = vadd.f32 0.0, %v559
    %v561 = vpop.f32.mrf.mxu0
    %v562 = vadd.f32 0.0, %v561
    %563 = vmatmul.bf16.gmra.mxu0 %v458
    %v564 = vpop.f32.mrf.mxu0
    %v565 = vadd.f32 0.0, %v564
    %v566 = vpop.f32.mrf.mxu0
    %v567 = vadd.f32 0.0, %v566
    %568 = vdwg.mxu0
    %569 = vmatpush.bf16.msra.mxu0 %v530
    %570 = vmatpush.bf16.msra.mxu0 %v527
    %571 = vmatpush.bf16.msra.mxu0 %v524
    %572 = vmatpush.bf16.msra.mxu0 %v521
    %573 = vmatpush.bf16.msra.mxu0 %v518
    %574 = vmatpush.bf16.msra.mxu0 %v515
    %575 = vmatpush.bf16.msra.mxu0 %v512
    %576 = vmatpush.bf16.msra.mxu0 %v509
    %577 = vmatmul.bf16.gmra.mxu0 %v457
    %v578 = vpop.f32.mrf.mxu0
    %v579 = vadd.f32 0.0, %v578
    %v580 = vpop.f32.mrf.mxu0
    %v581 = vadd.f32 0.0, %v580
    %582 = vmatmul.bf16.gmra.mxu0 %v458
    %v583 = vpop.f32.mrf.mxu0
    %v584 = vadd.f32 0.0, %v583
    %v585 = vpop.f32.mrf.mxu0
    %v586 = vadd.f32 0.0, %v585
    %587 = vdwg.mxu0
    %v588 = vpack.c.bf16 %v560, %v541
    %v589 = vpack.c.bf16 %v579, %v579
    %v590 = vpack.c.bf16 %v562, %v543
    %v591 = vpack.c.bf16 %v581, %v581
    %v592 = vpack.c.bf16 %v565, %v546
    %v593 = vpack.c.bf16 %v584, %v584
    %v594 = vpack.c.bf16 %v567, %v548
    %v595 = vpack.c.bf16 %v586, %v586
    %v598 = vunpack.c.l.b16 %v588
    %v599 = vunpack.c.l.b16 %v590
    %v600 = vpack.c.b16 %v599, %v598
    %v601 = vunpack.c.h.b16 %v588
    %v602 = vunpack.c.h.b16 %v590
    %v603 = vpack.c.b16 %v602, %v601
    %vm604 = vcmask 261120
    %v606 = vsel %vm604, %v600, 0
    %v609 = vsel %vm604, %v603, 0
    %611 = vmatpush.bf16.xpose.msra.mxu0 0
    %612 = vmatpush.bf16.xpose.msra.mxu0 0
    %613 = vmatpush.bf16.xpose.msra.mxu0 0
    %614 = vmatpush.bf16.xpose.msra.mxu0 0
    %615 = vmatpush.bf16.xpose.msra.mxu0 0
    %616 = vmatpush.bf16.xpose.msra.mxu0 0
    %617 = vmatpush.bf16.xpose.msra.mxu0 0
    %618 = vmatpush.bf16.xpose.msra.mxu0 %v609
    %619 = vmatmul.bf16.gmra.mxu0 %v606
    %v620 = vpop.f32.mrf.mxu0
    %v621 = vadd.f32 0.0, %v620
    %v622 = vpop.f32.mrf.mxu0
    %v623 = vadd.f32 0.0, %v622
    %624 = vdwg.mxu0
    %v625 = vmul.f32 %v621, 0.17677669
    %v626 = vmul.f32 %v623, 0.17677669
    %v627 = vadd.f32 %v625, %v350
    %v628 = vadd.f32 %v626, %v351
    %vm629 = vcmask 130048
    %v630 = vsel %vm629, %v627, -inf
    %631 = vmax.xlane.f32.xlu0 %v630
    %v632 = vpop.xlane.xlu0 %631
    %v633 = vsel %vm629, %v628, -inf
    %634 = vmax.xlane.f32.xlu0 %v633
    %v635 = vpop.xlane.xlu0 %634
    %v636 = vsub.f32 %v627, %v632
    %v637 = vsub.f32 %v628, %v635
    %v638 = vmul.f32 %v636, 1.442695
    %v639 = vpow.pop %v638
    %v640 = vmul.f32 %v637, 1.442695
    %v641 = vpow.pop %v640
    %v642 = vsel %vm629, %v639, 0.0
    %643 = vadd.xlane.f32.xlu0 %v642
    %v644 = vpop.xlane.xlu0 %643
    %v645 = vsel %vm629, %v641, 0.0
    %646 = vadd.xlane.f32.xlu0 %v645
    %v647 = vpop.xlane.xlu0 %646
    %v648 = vrcp.pop %v644
    %v649 = vrcp.pop %v647
    %v650 = vmul.f32 %v639, %v648
    %v651 = vmul.f32 %v641, %v649
    %v652 = vpack.c.bf16 %v651, %v650
    %v655 = vunpack.c.l.b16 %v589
    %v656 = vunpack.c.l.b16 %v591
    %v657 = vpack.c.b16 %v656, %v655
    %v660 = vsel %vm629, %v652, 0
    %662 = vmatpush.bf16.msra.mxu0 0
    %663 = vmatpush.bf16.msra.mxu0 0
    %664 = vmatpush.bf16.msra.mxu0 0
    %665 = vmatpush.bf16.msra.mxu0 0
    %666 = vmatpush.bf16.msra.mxu0 0
    %667 = vmatpush.bf16.msra.mxu0 0
    %668 = vmatpush.bf16.msra.mxu0 0
    %669 = vmatpush.bf16.msra.mxu0 %v657
    %670 = vmatmul.bf16.gmra.mxu0 %v660
    %v671 = vpop.f32.mrf.mxu0
    %v672 = vadd.f32 0.0, %v671
    %v673 = vpop.f32.mrf.mxu0
    %v674 = vadd.f32 0.0, %v673
    %675 = vdwg.mxu0
    %676 = vrot.lane.b32.xlu0 %v600, 96
    %v677 = vpop.permute.xlu0 %676
    %678 = vrot.lane.b32.xlu0 %v603, 96
    %v679 = vpop.permute.xlu0 %678
    %v681 = vsel %vm604, %v677, 0
    %v684 = vsel %vm604, %v679, 0
    %686 = vmatpush.bf16.xpose.msra.mxu0 0
    %687 = vmatpush.bf16.xpose.msra.mxu0 0
    %688 = vmatpush.bf16.xpose.msra.mxu0 0
    %689 = vmatpush.bf16.xpose.msra.mxu0 0
    %690 = vmatpush.bf16.xpose.msra.mxu0 0
    %691 = vmatpush.bf16.xpose.msra.mxu0 0
    %692 = vmatpush.bf16.xpose.msra.mxu0 0
    %693 = vmatpush.bf16.xpose.msra.mxu0 %v684
    %694 = vmatmul.bf16.gmra.mxu0 %v681
    %v695 = vpop.f32.mrf.mxu0
    %v696 = vadd.f32 0.0, %v695
    %v697 = vpop.f32.mrf.mxu0
    %v698 = vadd.f32 0.0, %v697
    %699 = vdwg.mxu0
    %v700 = vmul.f32 %v696, 0.17677669
    %v701 = vmul.f32 %v698, 0.17677669
    %v702 = vadd.f32 %v700, %v352
    %v703 = vadd.f32 %v701, %v353
    %v704 = vsel %vm629, %v702, -inf
    %705 = vmax.xlane.f32.xlu0 %v704
    %v706 = vpop.xlane.xlu0 %705
    %v707 = vsel %vm629, %v703, -inf
    %708 = vmax.xlane.f32.xlu0 %v707
    %v709 = vpop.xlane.xlu0 %708
    %v710 = vsub.f32 %v702, %v706
    %v711 = vsub.f32 %v703, %v709
    %v712 = vmul.f32 %v710, 1.442695
    %v713 = vpow.pop %v712
    %v714 = vmul.f32 %v711, 1.442695
    %v715 = vpow.pop %v714
    %v716 = vsel %vm629, %v713, 0.0
    %717 = vadd.xlane.f32.xlu0 %v716
    %v718 = vpop.xlane.xlu0 %717
    %v719 = vsel %vm629, %v715, 0.0
    %720 = vadd.xlane.f32.xlu0 %v719
    %v721 = vpop.xlane.xlu0 %720
    %v722 = vrcp.pop %v718
    %v723 = vrcp.pop %v721
    %v724 = vmul.f32 %v713, %v722
    %v725 = vmul.f32 %v715, %v723
    %v726 = vpack.c.bf16 %v725, %v724
    %727 = vrot.lane.b32.xlu0 %v657, 96
    %v728 = vpop.permute.xlu0 %727
    %v731 = vsel %vm629, %v726, 0
    %733 = vmatpush.bf16.msra.mxu0 0
    %734 = vmatpush.bf16.msra.mxu0 0
    %735 = vmatpush.bf16.msra.mxu0 0
    %736 = vmatpush.bf16.msra.mxu0 0
    %737 = vmatpush.bf16.msra.mxu0 0
    %738 = vmatpush.bf16.msra.mxu0 0
    %739 = vmatpush.bf16.msra.mxu0 0
    %740 = vmatpush.bf16.msra.mxu0 %v728
    %741 = vmatmul.bf16.gmra.mxu0 %v731
    %v742 = vpop.f32.mrf.mxu0
    %v743 = vadd.f32 0.0, %v742
    %v744 = vpop.f32.mrf.mxu0
    %v745 = vadd.f32 0.0, %v744
    %746 = vdwg.mxu0
    %747 = vrot.lane.b32.xlu0 %v600, 64
    %v748 = vpop.permute.xlu0 %747
    %749 = vrot.lane.b32.xlu0 %v603, 64
    %v750 = vpop.permute.xlu0 %749
    %v752 = vsel %vm604, %v748, 0
    %v755 = vsel %vm604, %v750, 0
    %757 = vmatpush.bf16.xpose.msra.mxu0 0
    %758 = vmatpush.bf16.xpose.msra.mxu0 0
    %759 = vmatpush.bf16.xpose.msra.mxu0 0
    %760 = vmatpush.bf16.xpose.msra.mxu0 0
    %761 = vmatpush.bf16.xpose.msra.mxu0 0
    %762 = vmatpush.bf16.xpose.msra.mxu0 0
    %763 = vmatpush.bf16.xpose.msra.mxu0 0
    %764 = vmatpush.bf16.xpose.msra.mxu0 %v755
    %765 = vmatmul.bf16.gmra.mxu0 %v752
    %v766 = vpop.f32.mrf.mxu0
    %v767 = vadd.f32 0.0, %v766
    %v768 = vpop.f32.mrf.mxu0
    %v769 = vadd.f32 0.0, %v768
    %770 = vdwg.mxu0
    %v771 = vmul.f32 %v767, 0.17677669
    %v772 = vmul.f32 %v769, 0.17677669
    %v773 = vadd.f32 %v771, %v354
    %v774 = vadd.f32 %v772, %v355
    %v775 = vsel %vm629, %v773, -inf
    %776 = vmax.xlane.f32.xlu0 %v775
    %v777 = vpop.xlane.xlu0 %776
    %v778 = vsel %vm629, %v774, -inf
    %779 = vmax.xlane.f32.xlu0 %v778
    %v780 = vpop.xlane.xlu0 %779
    %v781 = vsub.f32 %v773, %v777
    %v782 = vsub.f32 %v774, %v780
    %v783 = vmul.f32 %v781, 1.442695
    %v784 = vpow.pop %v783
    %v785 = vmul.f32 %v782, 1.442695
    %v786 = vpow.pop %v785
    %v787 = vsel %vm629, %v784, 0.0
    %788 = vadd.xlane.f32.xlu0 %v787
    %v789 = vpop.xlane.xlu0 %788
    %v790 = vsel %vm629, %v786, 0.0
    %791 = vadd.xlane.f32.xlu0 %v790
    %v792 = vpop.xlane.xlu0 %791
    %v793 = vrcp.pop %v789
    %v794 = vrcp.pop %v792
    %v795 = vmul.f32 %v784, %v793
    %v796 = vmul.f32 %v786, %v794
    %v797 = vpack.c.bf16 %v796, %v795
    %798 = vrot.lane.b32.xlu0 %v657, 64
    %v799 = vpop.permute.xlu0 %798
    %v802 = vsel %vm629, %v797, 0
    %804 = vmatpush.bf16.msra.mxu0 0
    %805 = vmatpush.bf16.msra.mxu0 0
    %806 = vmatpush.bf16.msra.mxu0 0
    %807 = vmatpush.bf16.msra.mxu0 0
    %808 = vmatpush.bf16.msra.mxu0 0
    %809 = vmatpush.bf16.msra.mxu0 0
    %810 = vmatpush.bf16.msra.mxu0 0
    %811 = vmatpush.bf16.msra.mxu0 %v799
    %812 = vmatmul.bf16.gmra.mxu0 %v802
    %v813 = vpop.f32.mrf.mxu0
    %v814 = vadd.f32 0.0, %v813
    %v815 = vpop.f32.mrf.mxu0
    %v816 = vadd.f32 0.0, %v815
    %817 = vdwg.mxu0
    %818 = vrot.lane.b32.xlu0 %v600, 32
    %v819 = vpop.permute.xlu0 %818
    %820 = vrot.lane.b32.xlu0 %v603, 32
    %v821 = vpop.permute.xlu0 %820
    %v823 = vsel %vm604, %v819, 0
    %v826 = vsel %vm604, %v821, 0
    %828 = vmatpush.bf16.xpose.msra.mxu0 0
    %829 = vmatpush.bf16.xpose.msra.mxu0 0
    %830 = vmatpush.bf16.xpose.msra.mxu0 0
    %831 = vmatpush.bf16.xpose.msra.mxu0 0
    %832 = vmatpush.bf16.xpose.msra.mxu0 0
    %833 = vmatpush.bf16.xpose.msra.mxu0 0
    %834 = vmatpush.bf16.xpose.msra.mxu0 0
    %835 = vmatpush.bf16.xpose.msra.mxu0 %v826
    %836 = vmatmul.bf16.gmra.mxu0 %v823
    %v837 = vpop.f32.mrf.mxu0
    %v838 = vadd.f32 0.0, %v837
    %v839 = vpop.f32.mrf.mxu0
    %v840 = vadd.f32 0.0, %v839
    %841 = vdwg.mxu0
    %v842 = vmul.f32 %v838, 0.17677669
    %v843 = vmul.f32 %v840, 0.17677669
    %v844 = vadd.f32 %v842, %v356
    %v845 = vadd.f32 %v843, %v357
    %v846 = vsel %vm629, %v844, -inf
    %847 = vmax.xlane.f32.xlu0 %v846
    %v848 = vpop.xlane.xlu0 %847
    %v849 = vsel %vm629, %v845, -inf
    %850 = vmax.xlane.f32.xlu0 %v849
    %v851 = vpop.xlane.xlu0 %850
    %v852 = vsub.f32 %v844, %v848
    %v853 = vsub.f32 %v845, %v851
    %v854 = vmul.f32 %v852, 1.442695
    %v855 = vpow.pop %v854
    %v856 = vmul.f32 %v853, 1.442695
    %v857 = vpow.pop %v856
    %v858 = vsel %vm629, %v855, 0.0
    %859 = vadd.xlane.f32.xlu0 %v858
    %v860 = vpop.xlane.xlu0 %859
    %v861 = vsel %vm629, %v857, 0.0
    %862 = vadd.xlane.f32.xlu0 %v861
    %v863 = vpop.xlane.xlu0 %862
    %v864 = vrcp.pop %v860
    %v865 = vrcp.pop %v863
    %v866 = vmul.f32 %v855, %v864
    %v867 = vmul.f32 %v857, %v865
    %v868 = vpack.c.bf16 %v867, %v866
    %869 = vrot.lane.b32.xlu0 %v657, 32
    %v870 = vpop.permute.xlu0 %869
    %v873 = vsel %vm629, %v868, 0
    %875 = vmatpush.bf16.msra.mxu0 0
    %876 = vmatpush.bf16.msra.mxu0 0
    %877 = vmatpush.bf16.msra.mxu0 0
    %878 = vmatpush.bf16.msra.mxu0 0
    %879 = vmatpush.bf16.msra.mxu0 0
    %880 = vmatpush.bf16.msra.mxu0 0
    %881 = vmatpush.bf16.msra.mxu0 0
    %882 = vmatpush.bf16.msra.mxu0 %v870
    %883 = vmatmul.bf16.gmra.mxu0 %v873
    %v884 = vpop.f32.mrf.mxu0
    %v885 = vadd.f32 0.0, %v884
    %v886 = vpop.f32.mrf.mxu0
    %v887 = vadd.f32 0.0, %v886
    %888 = vdwg.mxu0
    %891 = vrot.lane.b32.xlu0 %v743, 32
    %v892 = vpop.permute.xlu0 %891
    %893 = vrot.lane.b32.xlu0 %v745, 32
    %v894 = vpop.permute.xlu0 %893
    %899 = vrot.lane.b32.xlu0 %v814, 64
    %v900 = vpop.permute.xlu0 %899
    %901 = vrot.lane.b32.xlu0 %v816, 64
    %v902 = vpop.permute.xlu0 %901
    %907 = vrot.lane.b32.xlu0 %v885, 96
    %v908 = vpop.permute.xlu0 %907
    %909 = vrot.lane.b32.xlu0 %v887, 96
    %v910 = vpop.permute.xlu0 %909
    %v913 = vsel %vm604, %v672, %v892
    %v914 = vsel %vm604, %v674, %v894
    %vm915 = vcmask 523264
    %v916 = vsel %vm915, %v913, %v900
    %v917 = vsel %vm915, %v914, %v902
    %vm918 = vcmask 785408
    %v919 = vsel %vm918, %v916, %v908
    %v920 = vsel %vm918, %v917, %v910
    %v923 = vunpack.c.l.b16 %v592
    %v924 = vunpack.c.l.b16 %v594
    %v925 = vpack.c.b16 %v924, %v923
    %v926 = vunpack.c.h.b16 %v592
    %v927 = vunpack.c.h.b16 %v594
    %v928 = vpack.c.b16 %v927, %v926
    %v930 = vsel %vm604, %v925, 0
    %v933 = vsel %vm604, %v928, 0
    %935 = vmatpush.bf16.xpose.msra.mxu0 0
    %936 = vmatpush.bf16.xpose.msra.mxu0 0
    %937 = vmatpush.bf16.xpose.msra.mxu0 0
    %938 = vmatpush.bf16.xpose.msra.mxu0 0
    %939 = vmatpush.bf16.xpose.msra.mxu0 0
    %940 = vmatpush.bf16.xpose.msra.mxu0 0
    %941 = vmatpush.bf16.xpose.msra.mxu0 0
    %942 = vmatpush.bf16.xpose.msra.mxu0 %v933
    %943 = vmatmul.bf16.gmra.mxu0 %v930
    %v944 = vpop.f32.mrf.mxu0
    %v945 = vadd.f32 0.0, %v944
    %v946 = vpop.f32.mrf.mxu0
    %v947 = vadd.f32 0.0, %v946
    %948 = vdwg.mxu0
    %v949 = vmul.f32 %v945, 0.17677669
    %v950 = vmul.f32 %v947, 0.17677669
    %v951 = vadd.f32 %v949, %v350
    %v952 = vadd.f32 %v950, %v351
    %v953 = vsel %vm629, %v951, -inf
    %954 = vmax.xlane.f32.xlu0 %v953
    %v955 = vpop.xlane.xlu0 %954
    %v956 = vsel %vm629, %v952, -inf
    %957 = vmax.xlane.f32.xlu0 %v956
    %v958 = vpop.xlane.xlu0 %957
    %v959 = vsub.f32 %v951, %v955
    %v960 = vsub.f32 %v952, %v958
    %v961 = vmul.f32 %v959, 1.442695
    %v962 = vpow.pop %v961
    %v963 = vmul.f32 %v960, 1.442695
    %v964 = vpow.pop %v963
    %v965 = vsel %vm629, %v962, 0.0
    %966 = vadd.xlane.f32.xlu0 %v965
    %v967 = vpop.xlane.xlu0 %966
    %v968 = vsel %vm629, %v964, 0.0
    %969 = vadd.xlane.f32.xlu0 %v968
    %v970 = vpop.xlane.xlu0 %969
    %v971 = vrcp.pop %v967
    %v972 = vrcp.pop %v970
    %v973 = vmul.f32 %v962, %v971
    %v974 = vmul.f32 %v964, %v972
    %v975 = vpack.c.bf16 %v974, %v973
    %v978 = vunpack.c.l.b16 %v593
    %v979 = vunpack.c.l.b16 %v595
    %v980 = vpack.c.b16 %v979, %v978
    %v983 = vsel %vm629, %v975, 0
    %985 = vmatpush.bf16.msra.mxu0 0
    %986 = vmatpush.bf16.msra.mxu0 0
    %987 = vmatpush.bf16.msra.mxu0 0
    %988 = vmatpush.bf16.msra.mxu0 0
    %989 = vmatpush.bf16.msra.mxu0 0
    %990 = vmatpush.bf16.msra.mxu0 0
    %991 = vmatpush.bf16.msra.mxu0 0
    %992 = vmatpush.bf16.msra.mxu0 %v980
    %993 = vmatmul.bf16.gmra.mxu0 %v983
    %v994 = vpop.f32.mrf.mxu0
    %v995 = vadd.f32 0.0, %v994
    %v996 = vpop.f32.mrf.mxu0
    %v997 = vadd.f32 0.0, %v996
    %998 = vdwg.mxu0
    %999 = vrot.lane.b32.xlu0 %v925, 96
    %v1000 = vpop.permute.xlu0 %999
    %1001 = vrot.lane.b32.xlu0 %v928, 96
    %v1002 = vpop.permute.xlu0 %1001
    %v1004 = vsel %vm604, %v1000, 0
    %v1007 = vsel %vm604, %v1002, 0
    %1009 = vmatpush.bf16.xpose.msra.mxu0 0
    %1010 = vmatpush.bf16.xpose.msra.mxu0 0
    %1011 = vmatpush.bf16.xpose.msra.mxu0 0
    %1012 = vmatpush.bf16.xpose.msra.mxu0 0
    %1013 = vmatpush.bf16.xpose.msra.mxu0 0
    %1014 = vmatpush.bf16.xpose.msra.mxu0 0
    %1015 = vmatpush.bf16.xpose.msra.mxu0 0
    %1016 = vmatpush.bf16.xpose.msra.mxu0 %v1007
    %1017 = vmatmul.bf16.gmra.mxu0 %v1004
    %v1018 = vpop.f32.mrf.mxu0
    %v1019 = vadd.f32 0.0, %v1018
    %v1020 = vpop.f32.mrf.mxu0
    %v1021 = vadd.f32 0.0, %v1020
    %1022 = vdwg.mxu0
    %v1023 = vmul.f32 %v1019, 0.17677669
    %v1024 = vmul.f32 %v1021, 0.17677669
    %v1025 = vadd.f32 %v1023, %v352
    %v1026 = vadd.f32 %v1024, %v353
    %v1027 = vsel %vm629, %v1025, -inf
    %1028 = vmax.xlane.f32.xlu0 %v1027
    %v1029 = vpop.xlane.xlu0 %1028
    %v1030 = vsel %vm629, %v1026, -inf
    %1031 = vmax.xlane.f32.xlu0 %v1030
    %v1032 = vpop.xlane.xlu0 %1031
    %v1033 = vsub.f32 %v1025, %v1029
    %v1034 = vsub.f32 %v1026, %v1032
    %v1035 = vmul.f32 %v1033, 1.442695
    %v1036 = vpow.pop %v1035
    %v1037 = vmul.f32 %v1034, 1.442695
    %v1038 = vpow.pop %v1037
    %v1039 = vsel %vm629, %v1036, 0.0
    %1040 = vadd.xlane.f32.xlu0 %v1039
    %v1041 = vpop.xlane.xlu0 %1040
    %v1042 = vsel %vm629, %v1038, 0.0
    %1043 = vadd.xlane.f32.xlu0 %v1042
    %v1044 = vpop.xlane.xlu0 %1043
    %v1045 = vrcp.pop %v1041
    %v1046 = vrcp.pop %v1044
    %v1047 = vmul.f32 %v1036, %v1045
    %v1048 = vmul.f32 %v1038, %v1046
    %v1049 = vpack.c.bf16 %v1048, %v1047
    %1050 = vrot.lane.b32.xlu0 %v980, 96
    %v1051 = vpop.permute.xlu0 %1050
    %v1054 = vsel %vm629, %v1049, 0
    %1056 = vmatpush.bf16.msra.mxu0 0
    %1057 = vmatpush.bf16.msra.mxu0 0
    %1058 = vmatpush.bf16.msra.mxu0 0
    %1059 = vmatpush.bf16.msra.mxu0 0
    %1060 = vmatpush.bf16.msra.mxu0 0
    %1061 = vmatpush.bf16.msra.mxu0 0
    %1062 = vmatpush.bf16.msra.mxu0 0
    %1063 = vmatpush.bf16.msra.mxu0 %v1051
    %1064 = vmatmul.bf16.gmra.mxu0 %v1054
    %v1065 = vpop.f32.mrf.mxu0
    %v1066 = vadd.f32 0.0, %v1065
    %v1067 = vpop.f32.mrf.mxu0
    %v1068 = vadd.f32 0.0, %v1067
    %1069 = vdwg.mxu0
    %1070 = vrot.lane.b32.xlu0 %v925, 64
    %v1071 = vpop.permute.xlu0 %1070
    %1072 = vrot.lane.b32.xlu0 %v928, 64
    %v1073 = vpop.permute.xlu0 %1072
    %v1075 = vsel %vm604, %v1071, 0
    %v1078 = vsel %vm604, %v1073, 0
    %1080 = vmatpush.bf16.xpose.msra.mxu0 0
    %1081 = vmatpush.bf16.xpose.msra.mxu0 0
    %1082 = vmatpush.bf16.xpose.msra.mxu0 0
    %1083 = vmatpush.bf16.xpose.msra.mxu0 0
    %1084 = vmatpush.bf16.xpose.msra.mxu0 0
    %1085 = vmatpush.bf16.xpose.msra.mxu0 0
    %1086 = vmatpush.bf16.xpose.msra.mxu0 0
    %1087 = vmatpush.bf16.xpose.msra.mxu0 %v1078
    %1088 = vmatmul.bf16.gmra.mxu0 %v1075
    %v1089 = vpop.f32.mrf.mxu0
    %v1090 = vadd.f32 0.0, %v1089
    %v1091 = vpop.f32.mrf.mxu0
    %v1092 = vadd.f32 0.0, %v1091
    %1093 = vdwg.mxu0
    %v1094 = vmul.f32 %v1090, 0.17677669
    %v1095 = vmul.f32 %v1092, 0.17677669
    %v1096 = vadd.f32 %v1094, %v354
    %v1097 = vadd.f32 %v1095, %v355
    %v1098 = vsel %vm629, %v1096, -inf
    %1099 = vmax.xlane.f32.xlu0 %v1098
    %v1100 = vpop.xlane.xlu0 %1099
    %v1101 = vsel %vm629, %v1097, -inf
    %1102 = vmax.xlane.f32.xlu0 %v1101
    %v1103 = vpop.xlane.xlu0 %1102
    %v1104 = vsub.f32 %v1096, %v1100
    %v1105 = vsub.f32 %v1097, %v1103
    %v1106 = vmul.f32 %v1104, 1.442695
    %v1107 = vpow.pop %v1106
    %v1108 = vmul.f32 %v1105, 1.442695
    %v1109 = vpow.pop %v1108
    %v1110 = vsel %vm629, %v1107, 0.0
    %1111 = vadd.xlane.f32.xlu0 %v1110
    %v1112 = vpop.xlane.xlu0 %1111
    %v1113 = vsel %vm629, %v1109, 0.0
    %1114 = vadd.xlane.f32.xlu0 %v1113
    %v1115 = vpop.xlane.xlu0 %1114
    %v1116 = vrcp.pop %v1112
    %v1117 = vrcp.pop %v1115
    %v1118 = vmul.f32 %v1107, %v1116
    %v1119 = vmul.f32 %v1109, %v1117
    %v1120 = vpack.c.bf16 %v1119, %v1118
    %1121 = vrot.lane.b32.xlu0 %v980, 64
    %v1122 = vpop.permute.xlu0 %1121
    %v1125 = vsel %vm629, %v1120, 0
    %1127 = vmatpush.bf16.msra.mxu0 0
    %1128 = vmatpush.bf16.msra.mxu0 0
    %1129 = vmatpush.bf16.msra.mxu0 0
    %1130 = vmatpush.bf16.msra.mxu0 0
    %1131 = vmatpush.bf16.msra.mxu0 0
    %1132 = vmatpush.bf16.msra.mxu0 0
    %1133 = vmatpush.bf16.msra.mxu0 0
    %1134 = vmatpush.bf16.msra.mxu0 %v1122
    %1135 = vmatmul.bf16.gmra.mxu0 %v1125
    %v1136 = vpop.f32.mrf.mxu0
    %v1137 = vadd.f32 0.0, %v1136
    %v1138 = vpop.f32.mrf.mxu0
    %v1139 = vadd.f32 0.0, %v1138
    %1140 = vdwg.mxu0
    %1141 = vrot.lane.b32.xlu0 %v925, 32
    %v1142 = vpop.permute.xlu0 %1141
    %1143 = vrot.lane.b32.xlu0 %v928, 32
    %v1144 = vpop.permute.xlu0 %1143
    %v1146 = vsel %vm604, %v1142, 0
    %v1149 = vsel %vm604, %v1144, 0
    %1151 = vmatpush.bf16.xpose.msra.mxu0 0
    %1152 = vmatpush.bf16.xpose.msra.mxu0 0
    %1153 = vmatpush.bf16.xpose.msra.mxu0 0
    %1154 = vmatpush.bf16.xpose.msra.mxu0 0
    %1155 = vmatpush.bf16.xpose.msra.mxu0 0
    %1156 = vmatpush.bf16.xpose.msra.mxu0 0
    %1157 = vmatpush.bf16.xpose.msra.mxu0 0
    %1158 = vmatpush.bf16.xpose.msra.mxu0 %v1149
    %1159 = vmatmul.bf16.gmra.mxu0 %v1146
    %v1160 = vpop.f32.mrf.mxu0
    %v1161 = vadd.f32 0.0, %v1160
    %v1162 = vpop.f32.mrf.mxu0
    %v1163 = vadd.f32 0.0, %v1162
    %1164 = vdwg.mxu0
    %v1165 = vmul.f32 %v1161, 0.17677669
    %v1166 = vmul.f32 %v1163, 0.17677669
    %v1167 = vadd.f32 %v1165, %v356
    %v1168 = vadd.f32 %v1166, %v357
    %v1169 = vsel %vm629, %v1167, -inf
    %1170 = vmax.xlane.f32.xlu0 %v1169
    %v1171 = vpop.xlane.xlu0 %1170
    %v1172 = vsel %vm629, %v1168, -inf
    %1173 = vmax.xlane.f32.xlu0 %v1172
    %v1174 = vpop.xlane.xlu0 %1173
    %v1175 = vsub.f32 %v1167, %v1171
    %v1176 = vsub.f32 %v1168, %v1174
    %v1177 = vmul.f32 %v1175, 1.442695
    %v1178 = vpow.pop %v1177
    %v1179 = vmul.f32 %v1176, 1.442695
    %v1180 = vpow.pop %v1179
    %v1181 = vsel %vm629, %v1178, 0.0
    %1182 = vadd.xlane.f32.xlu0 %v1181
    %v1183 = vpop.xlane.xlu0 %1182
    %v1184 = vsel %vm629, %v1180, 0.0
    %1185 = vadd.xlane.f32.xlu0 %v1184
    %v1186 = vpop.xlane.xlu0 %1185
    %v1187 = vrcp.pop %v1183
    %v1188 = vrcp.pop %v1186
    %v1189 = vmul.f32 %v1178, %v1187
    %v1190 = vmul.f32 %v1180, %v1188
    %v1191 = vpack.c.bf16 %v1190, %v1189
    %1192 = vrot.lane.b32.xlu0 %v980, 32
    %v1193 = vpop.permute.xlu0 %1192
    %v1196 = vsel %vm629, %v1191, 0
    %1198 = vmatpush.bf16.msra.mxu0 0
    %1199 = vmatpush.bf16.msra.mxu0 0
    %1200 = vmatpush.bf16.msra.mxu0 0
    %1201 = vmatpush.bf16.msra.mxu0 0
    %1202 = vmatpush.bf16.msra.mxu0 0
    %1203 = vmatpush.bf16.msra.mxu0 0
    %1204 = vmatpush.bf16.msra.mxu0 0
    %1205 = vmatpush.bf16.msra.mxu0 %v1193
    %1206 = vmatmul.bf16.gmra.mxu0 %v1196
    %v1207 = vpop.f32.mrf.mxu0
    %v1208 = vadd.f32 0.0, %v1207
    %v1209 = vpop.f32.mrf.mxu0
    %v1210 = vadd.f32 0.0, %v1209
    %1211 = vdwg.mxu0
    %1214 = vrot.lane.b32.xlu0 %v1066, 32
    %v1215 = vpop.permute.xlu0 %1214
    %1216 = vrot.lane.b32.xlu0 %v1068, 32
    %v1217 = vpop.permute.xlu0 %1216
    %1222 = vrot.lane.b32.xlu0 %v1137, 64
    %v1223 = vpop.permute.xlu0 %1222
    %1224 = vrot.lane.b32.xlu0 %v1139, 64
    %v1225 = vpop.permute.xlu0 %1224
    %1230 = vrot.lane.b32.xlu0 %v1208, 96
    %v1231 = vpop.permute.xlu0 %1230
    %1232 = vrot.lane.b32.xlu0 %v1210, 96
    %v1233 = vpop.permute.xlu0 %1232
    %v1236 = vsel %vm604, %v995, %v1215
    %v1237 = vsel %vm604, %v997, %v1217
    %v1238 = vsel %vm915, %v1236, %v1223
    %v1239 = vsel %vm915, %v1237, %v1225
    %v1240 = vsel %vm918, %v1238, %v1231
    %v1241 = vsel %vm918, %v1239, %v1233
    %v1242 = vpack.c.bf16 %v920, %v919
    %v1243 = vpack.c.bf16 %v1241, %v1240
    %v1244 = vld [vmem:[#allocation10] sm:$0xff]
    %v1245 = vld [vmem:[#allocation10 + $0x8] sm:$0xff]
    %v1246 = vld [vmem:[#allocation10 + $0x10] sm:$0xff]
    %v1247 = vld [vmem:[#allocation10 + $0x18] sm:$0xff]
    %v1248 = vld [vmem:[#allocation10 + $0x20] sm:$0xff]
    %v1249 = vld [vmem:[#allocation10 + $0x28] sm:$0xff]
    %v1250 = vld [vmem:[#allocation10 + $0x30] sm:$0xff]
    %v1251 = vld [vmem:[#allocation10 + $0x38] sm:$0xff]
    %v1252 = vld [vmem:[#allocation10 + $0x40] sm:$0xff]
    %v1253 = vld [vmem:[#allocation10 + $0x48] sm:$0xff]
    %v1254 = vld [vmem:[#allocation10 + $0x50] sm:$0xff]
    %v1255 = vld [vmem:[#allocation10 + $0x58] sm:$0xff]
    %v1256 = vld [vmem:[#allocation10 + $0x60] sm:$0xff]
    %v1257 = vld [vmem:[#allocation10 + $0x68] sm:$0xff]
    %v1258 = vld [vmem:[#allocation10 + $0x70] sm:$0xff]
    %v1259 = vld [vmem:[#allocation10 + $0x78] sm:$0xff]
    %v1260 = vpack.c.bf16 %v1245, %v1244
    %v1261 = vpack.c.bf16 %v1247, %v1246
    %v1262 = vpack.c.bf16 %v1249, %v1248
    %v1263 = vpack.c.bf16 %v1251, %v1250
    %v1264 = vpack.c.bf16 %v1253, %v1252
    %v1265 = vpack.c.bf16 %v1255, %v1254
    %v1266 = vpack.c.bf16 %v1257, %v1256
    %v1267 = vpack.c.bf16 %v1259, %v1258
    %v1268 = vld [vmem:[%s7] sm:$0x1]
    %v1269 = vperm.slane %v1268, 0
    %1270 = vmatpush.bf16.msra.mxu0 %v1267
    %1271 = vmatpush.bf16.msra.mxu0 %v1266
    %1272 = vmatpush.bf16.msra.mxu0 %v1265
    %1273 = vmatpush.bf16.msra.mxu0 %v1264
    %1274 = vmatpush.bf16.msra.mxu0 %v1263
    %1275 = vmatpush.bf16.msra.mxu0 %v1262
    %1276 = vmatpush.bf16.msra.mxu0 %v1261
    %1277 = vmatpush.bf16.msra.mxu0 %v1260
    %1278 = vmatmul.bf16.gmra.mxu0 %v1242
    %v1279 = vpop.f32.mrf.mxu0
    %v1280 = vadd.f32 %v1269, %v1279
    %v1281 = vpop.f32.mrf.mxu0
    %v1282 = vadd.f32 %v1269, %v1281
    %1283 = vmatmul.bf16.gmra.mxu0 %v1243
    %v1284 = vpop.f32.mrf.mxu0
    %v1285 = vadd.f32 %v1269, %v1284
    %v1286 = vpop.f32.mrf.mxu0
    %v1287 = vadd.f32 %v1269, %v1286
    %1288 = vdwg.mxu0
    %v1289 = vadd.f32 %v342, %v1280
    %v1290 = vadd.f32 %v343, %v1282
    %v1291 = vadd.f32 %v344, %v1285
    %v1292 = vadd.f32 %v345, %v1287
    %v1293 = vld [vmem:[#allocation11] sm:$0x1]
    %v1294 = vld [vmem:[#allocation13] sm:$0x1]
    %1295 = vadd.xlane.f32.xlu0 %v1289
    %v1296 = vpop.xlane.xlu0 %1295
    %1297 = vadd.xlane.f32.xlu0 %v1290
    %v1298 = vpop.xlane.xlu0 %1297
    %1299 = vadd.xlane.f32.xlu0 %v1291
    %v1300 = vpop.xlane.xlu0 %1299
    %1301 = vadd.xlane.f32.xlu0 %v1292
    %v1302 = vpop.xlane.xlu0 %1301
    %v1303 = vmul.f32 %v1296, %v374
    %v1304 = vmul.f32 %v1298, %v374
    %v1305 = vmul.f32 %v1300, %v374
    %v1306 = vmul.f32 %v1302, %v374
    %v1307 = vsub.f32 %v1289, %v1303
    %v1308 = vsub.f32 %v1290, %v1304
    %v1309 = vsub.f32 %v1291, %v1305
    %v1310 = vsub.f32 %v1292, %v1306
    %v1311 = vmul.f32 %v1307, %v1307
    %v1312 = vmul.f32 %v1308, %v1308
    %v1313 = vmul.f32 %v1309, %v1309
    %v1314 = vmul.f32 %v1310, %v1310
    %1315 = vadd.xlane.f32.xlu0 %v1311
    %v1316 = vpop.xlane.xlu0 %1315
    %1317 = vadd.xlane.f32.xlu0 %v1312
    %v1318 = vpop.xlane.xlu0 %1317
    %1319 = vadd.xlane.f32.xlu0 %v1313
    %v1320 = vpop.xlane.xlu0 %1319
    %1321 = vadd.xlane.f32.xlu0 %v1314
    %v1322 = vpop.xlane.xlu0 %1321
    %v1323 = vmul.f32 %v1316, %v374
    %v1324 = vmul.f32 %v1318, %v374
    %v1325 = vmul.f32 %v1320, %v374
    %v1326 = vmul.f32 %v1322, %v374
    %v1327 = vadd.f32 %v1323, 1e-05
    %v1328 = vadd.f32 %v1324, 1e-05
    %v1329 = vadd.f32 %v1325, 1e-05
    %v1330 = vadd.f32 %v1326, 1e-05
    %v1331 = vrsqrt.pop %v1327
    %v1332 = vmul.f32 %v1331, %v1327
    %v1333 = vmul.f32 %v1332, %v1331
    %v1334 = vmul.f32 0.5, %v1333
    %v1335 = vsub.f32 1.5, %v1334
    %v1336 = vmul.f32 %v1331, %v1335
    %vm1337 = vweird.f32 %v1327
    %vm1338 = vweird.f32 %v1331
    %vm1339 = vmor %vm1337, %vm1338
    %v1340 = vsel %vm1339, %v1331, %v1336
    %v1341 = vrsqrt.pop %v1328
    %v1342 = vmul.f32 %v1341, %v1328
    %v1343 = vmul.f32 %v1342, %v1341
    %v1344 = vmul.f32 0.5, %v1343
    %v1345 = vsub.f32 1.5, %v1344
    %v1346 = vmul.f32 %v1341, %v1345
    %vm1347 = vweird.f32 %v1328
    %vm1348 = vweird.f32 %v1341
    %vm1349 = vmor %vm1347, %vm1348
    %v1350 = vsel %vm1349, %v1341, %v1346
    %v1351 = vrsqrt.pop %v1329
    %v1352 = vmul.f32 %v1351, %v1329
    %v1353 = vmul.f32 %v1352, %v1351
    %v1354 = vmul.f32 0.5, %v1353
    %v1355 = vsub.f32 1.5, %v1354
    %v1356 = vmul.f32 %v1351, %v1355
    %vm1357 = vweird.f32 %v1329
    %vm1358 = vweird.f32 %v1351
    %vm1359 = vmor %vm1357, %vm1358
    %v1360 = vsel %vm1359, %v1351, %v1356
    %v1361 = vrsqrt.pop %v1330
    %v1362 = vmul.f32 %v1361, %v1330
    %v1363 = vmul.f32 %v1362, %v1361
    %v1364 = vmul.f32 0.5, %v1363
    %v1365 = vsub.f32 1.5, %v1364
    %v1366 = vmul.f32 %v1361, %v1365
    %vm1367 = vweird.f32 %v1330
    %vm1368 = vweird.f32 %v1361
    %vm1369 = vmor %vm1367, %vm1368
    %v1370 = vsel %vm1369, %v1361, %v1366
    %v1371 = vmul.f32 %v1307, %v1340
    %v1372 = vmul.f32 %v1308, %v1350
    %v1373 = vmul.f32 %v1309, %v1360
    %v1374 = vmul.f32 %v1310, %v1370
    %v1375 = vperm.slane %v1293, 0
    %v1376 = vmul.f32 %v1371, %v1375
    %v1377 = vmul.f32 %v1372, %v1375
    %v1378 = vmul.f32 %v1373, %v1375
    %v1379 = vmul.f32 %v1374, %v1375
    %v1380 = vperm.slane %v1294, 0
    %v1381 = vadd.f32 %v1376, %v1380
    %v1382 = vadd.f32 %v1377, %v1380
    %v1383 = vadd.f32 %v1378, %v1380
    %v1384 = vadd.f32 %v1379, %v1380
    %v1385 = vpack.c.bf16 %v1382, %v1381
    %v1386 = vpack.c.bf16 %v1384, %v1383
    %1387 = vadd.xlane.f32.xlu0 %v346
    %v1388 = vpop.xlane.xlu0 %1387
    %1389 = vadd.xlane.f32.xlu0 %v347
    %v1390 = vpop.xlane.xlu0 %1389
    %1391 = vadd.xlane.f32.xlu0 %v348
    %v1392 = vpop.xlane.xlu0 %1391
    %1393 = vadd.xlane.f32.xlu0 %v349
    %v1394 = vpop.xlane.xlu0 %1393
    %v1395 = vmul.f32 %v1388, %v374
    %v1396 = vmul.f32 %v1390, %v374
    %v1397 = vmul.f32 %v1392, %v374
    %v1398 = vmul.f32 %v1394, %v374
    %v1399 = vsub.f32 %v346, %v1395
    %v1400 = vsub.f32 %v347, %v1396
    %v1401 = vsub.f32 %v348, %v1397
    %v1402 = vsub.f32 %v349, %v1398
    %v1403 = vmul.f32 %v1399, %v1399
    %v1404 = vmul.f32 %v1400, %v1400
    %v1405 = vmul.f32 %v1401, %v1401
    %v1406 = vmul.f32 %v1402, %v1402
    %1407 = vadd.xlane.f32.xlu0 %v1403
    %v1408 = vpop.xlane.xlu0 %1407
    %1409 = vadd.xlane.f32.xlu0 %v1404
    %v1410 = vpop.xlane.xlu0 %1409
    %1411 = vadd.xlane.f32.xlu0 %v1405
    %v1412 = vpop.xlane.xlu0 %1411
    %1413 = vadd.xlane.f32.xlu0 %v1406
    %v1414 = vpop.xlane.xlu0 %1413
    %v1415 = vmul.f32 %v1408, %v374
    %v1416 = vmul.f32 %v1410, %v374
    %v1417 = vmul.f32 %v1412, %v374
    %v1418 = vmul.f32 %v1414, %v374
    %v1419 = vadd.f32 %v1415, 1e-05
    %v1420 = vadd.f32 %v1416, 1e-05
    %v1421 = vadd.f32 %v1417, 1e-05
    %v1422 = vadd.f32 %v1418, 1e-05
    %v1423 = vrsqrt.pop %v1419
    %v1424 = vmul.f32 %v1423, %v1419
    %v1425 = vmul.f32 %v1424, %v1423
    %v1426 = vmul.f32 0.5, %v1425
    %v1427 = vsub.f32 1.5, %v1426
    %v1428 = vmul.f32 %v1423, %v1427
    %vm1429 = vweird.f32 %v1419
    %vm1430 = vweird.f32 %v1423
    %vm1431 = vmor %vm1429, %vm1430
    %v1432 = vsel %vm1431, %v1423, %v1428
    %v1433 = vrsqrt.pop %v1420
    %v1434 = vmul.f32 %v1433, %v1420
    %v1435 = vmul.f32 %v1434, %v1433
    %v1436 = vmul.f32 0.5, %v1435
    %v1437 = vsub.f32 1.5, %v1436
    %v1438 = vmul.f32 %v1433, %v1437
    %vm1439 = vweird.f32 %v1420
    %vm1440 = vweird.f32 %v1433
    %vm1441 = vmor %vm1439, %vm1440
    %v1442 = vsel %vm1441, %v1433, %v1438
    %v1443 = vrsqrt.pop %v1421
    %v1444 = vmul.f32 %v1443, %v1421
    %v1445 = vmul.f32 %v1444, %v1443
    %v1446 = vmul.f32 0.5, %v1445
    %v1447 = vsub.f32 1.5, %v1446
    %v1448 = vmul.f32 %v1443, %v1447
    %vm1449 = vweird.f32 %v1421
    %vm1450 = vweird.f32 %v1443
    %vm1451 = vmor %vm1449, %vm1450
    %v1452 = vsel %vm1451, %v1443, %v1448
    %v1453 = vrsqrt.pop %v1422
    %v1454 = vmul.f32 %v1453, %v1422
    %v1455 = vmul.f32 %v1454, %v1453
    %v1456 = vmul.f32 0.5, %v1455
    %v1457 = vsub.f32 1.5, %v1456
    %v1458 = vmul.f32 %v1453, %v1457
    %vm1459 = vweird.f32 %v1422
    %vm1460 = vweird.f32 %v1453
    %vm1461 = vmor %vm1459, %vm1460
    %v1462 = vsel %vm1461, %v1453, %v1458
    %v1463 = vmul.f32 %v1399, %v1432
    %v1464 = vmul.f32 %v1400, %v1442
    %v1465 = vmul.f32 %v1401, %v1452
    %v1466 = vmul.f32 %v1402, %v1462
    %v1467 = vmul.f32 %v1463, %v1375
    %v1468 = vmul.f32 %v1464, %v1375
    %v1469 = vmul.f32 %v1465, %v1375
    %v1470 = vmul.f32 %v1466, %v1375
    %v1471 = vadd.f32 %v1467, %v1380
    %v1472 = vadd.f32 %v1468, %v1380
    %v1473 = vadd.f32 %v1469, %v1380
    %v1474 = vadd.f32 %v1470, %v1380
    %v1475 = vpack.c.bf16 %v1472, %v1471
    %v1476 = vpack.c.bf16 %v1474, %v1473
    %v1477 = vld [vmem:[#allocation14] sm:$0xff]
    %v1478 = vld [vmem:[#allocation14 + $0x8] sm:$0xff]
    %v1479 = vld [vmem:[#allocation14 + $0x10] sm:$0xff]
    %v1480 = vld [vmem:[#allocation14 + $0x18] sm:$0xff]
    %v1481 = vld [vmem:[#allocation14 + $0x20] sm:$0xff]
    %v1482 = vld [vmem:[#allocation14 + $0x28] sm:$0xff]
    %v1483 = vld [vmem:[#allocation14 + $0x30] sm:$0xff]
    %v1484 = vld [vmem:[#allocation14 + $0x38] sm:$0xff]
    %v1485 = vld [vmem:[#allocation14 + $0x40] sm:$0xff]
    %v1486 = vld [vmem:[#allocation14 + $0x48] sm:$0xff]
    %v1487 = vld [vmem:[#allocation14 + $0x50] sm:$0xff]
    %v1488 = vld [vmem:[#allocation14 + $0x58] sm:$0xff]
    %v1489 = vld [vmem:[#allocation14 + $0x60] sm:$0xff]
    %v1490 = vld [vmem:[#allocation14 + $0x68] sm:$0xff]
    %v1491 = vld [vmem:[#allocation14 + $0x70] sm:$0xff]
    %v1492 = vld [vmem:[#allocation14 + $0x78] sm:$0xff]
    %v1493 = vpack.c.bf16 %v1478, %v1477
    %v1494 = vpack.c.bf16 %v1480, %v1479
    %v1495 = vpack.c.bf16 %v1482, %v1481
    %v1496 = vpack.c.bf16 %v1484, %v1483
    %v1497 = vpack.c.bf16 %v1486, %v1485
    %v1498 = vpack.c.bf16 %v1488, %v1487
    %v1499 = vpack.c.bf16 %v1490, %v1489
    %v1500 = vpack.c.bf16 %v1492, %v1491
    %1501 = vmatpush.bf16.msra.mxu0 %v1500
    %1502 = vmatpush.bf16.msra.mxu0 %v1499
    %1503 = vmatpush.bf16.msra.mxu0 %v1498
    %1504 = vmatpush.bf16.msra.mxu0 %v1497
    %1505 = vmatpush.bf16.msra.mxu0 %v1496
    %1506 = vmatpush.bf16.msra.mxu0 %v1495
    %1507 = vmatpush.bf16.msra.mxu0 %v1494
    %1508 = vmatpush.bf16.msra.mxu0 %v1493
    %1509 = vmatmul.bf16.gmra.mxu0 %v1385
    %v1510 = vpop.f32.mrf.mxu0
    %v1511 = vadd.f32 0.0, %v1510
    %v1512 = vpop.f32.mrf.mxu0
    %v1513 = vadd.f32 0.0, %v1512
    %1514 = vmatmul.bf16.gmra.mxu0 %v1386
    %v1515 = vpop.f32.mrf.mxu0
    %v1516 = vadd.f32 0.0, %v1515
    %v1517 = vpop.f32.mrf.mxu0
    %v1518 = vadd.f32 0.0, %v1517
    %1519 = vdwg.mxu0
    %v1520 = vpack.c.bf16 %v1511, %v1511
    %v1521 = vpack.c.bf16 %v1513, %v1513
    %v1522 = vpack.c.bf16 %v1516, %v1516
    %v1523 = vpack.c.bf16 %v1518, %v1518
    %v1524 = vld [vmem:[#allocation16] sm:$0xff]
    %v1525 = vld [vmem:[#allocation16 + $0x8] sm:$0xff]
    %v1526 = vld [vmem:[#allocation16 + $0x10] sm:$0xff]
    %v1527 = vld [vmem:[#allocation16 + $0x18] sm:$0xff]
    %v1528 = vld [vmem:[#allocation16 + $0x20] sm:$0xff]
    %v1529 = vld [vmem:[#allocation16 + $0x28] sm:$0xff]
    %v1530 = vld [vmem:[#allocation16 + $0x30] sm:$0xff]
    %v1531 = vld [vmem:[#allocation16 + $0x38] sm:$0xff]
    %v1532 = vld [vmem:[#allocation16 + $0x40] sm:$0xff]
    %v1533 = vld [vmem:[#allocation16 + $0x48] sm:$0xff]
    %v1534 = vld [vmem:[#allocation16 + $0x50] sm:$0xff]
    %v1535 = vld [vmem:[#allocation16 + $0x58] sm:$0xff]
    %v1536 = vld [vmem:[#allocation16 + $0x60] sm:$0xff]
    %v1537 = vld [vmem:[#allocation16 + $0x68] sm:$0xff]
    %v1538 = vld [vmem:[#allocation16 + $0x70] sm:$0xff]
    %v1539 = vld [vmem:[#allocation16 + $0x78] sm:$0xff]
    %v1540 = vpack.c.bf16 %v1525, %v1524
    %v1541 = vpack.c.bf16 %v1527, %v1526
    %v1542 = vpack.c.bf16 %v1529, %v1528
    %v1543 = vpack.c.bf16 %v1531, %v1530
    %v1544 = vpack.c.bf16 %v1533, %v1532
    %v1545 = vpack.c.bf16 %v1535, %v1534
    %v1546 = vpack.c.bf16 %v1537, %v1536
    %v1547 = vpack.c.bf16 %v1539, %v1538
    %1548 = vmatpush.bf16.msra.mxu0 %v1547
    %1549 = vmatpush.bf16.msra.mxu0 %v1546
    %1550 = vmatpush.bf16.msra.mxu0 %v1545
    %1551 = vmatpush.bf16.msra.mxu0 %v1544
    %1552 = vmatpush.bf16.msra.mxu0 %v1543
    %1553 = vmatpush.bf16.msra.mxu0 %v1542
    %1554 = vmatpush.bf16.msra.mxu0 %v1541
    %1555 = vmatpush.bf16.msra.mxu0 %v1540
    %1556 = vmatmul.bf16.gmra.mxu0 %v1475
    %v1557 = vpop.f32.mrf.mxu0
    %v1558 = vadd.f32 0.0, %v1557
    %v1559 = vpop.f32.mrf.mxu0
    %v1560 = vadd.f32 0.0, %v1559
    %1561 = vmatmul.bf16.gmra.mxu0 %v1476
    %v1562 = vpop.f32.mrf.mxu0
    %v1563 = vadd.f32 0.0, %v1562
    %v1564 = vpop.f32.mrf.mxu0
    %v1565 = vadd.f32 0.0, %v1564
    %1566 = vdwg.mxu0
    %v1567 = vpack.c.bf16 %v1558, %v1558
    %v1568 = vpack.c.bf16 %v1560, %v1560
    %v1569 = vpack.c.bf16 %v1563, %v1563
    %v1570 = vpack.c.bf16 %v1565, %v1565
    %v1571 = vld [vmem:[#allocation17] sm:$0xff]
    %v1572 = vld [vmem:[#allocation17 + $0x8] sm:$0xff]
    %v1573 = vld [vmem:[#allocation17 + $0x10] sm:$0xff]
    %v1574 = vld [vmem:[#allocation17 + $0x18] sm:$0xff]
    %v1575 = vld [vmem:[#allocation17 + $0x20] sm:$0xff]
    %v1576 = vld [vmem:[#allocation17 + $0x28] sm:$0xff]
    %v1577 = vld [vmem:[#allocation17 + $0x30] sm:$0xff]
    %v1578 = vld [vmem:[#allocation17 + $0x38] sm:$0xff]
    %v1579 = vld [vmem:[#allocation17 + $0x40] sm:$0xff]
    %v1580 = vld [vmem:[#allocation17 + $0x48] sm:$0xff]
    %v1581 = vld [vmem:[#allocation17 + $0x50] sm:$0xff]
    %v1582 = vld [vmem:[#allocation17 + $0x58] sm:$0xff]
    %v1583 = vld [vmem:[#allocation17 + $0x60] sm:$0xff]
    %v1584 = vld [vmem:[#allocation17 + $0x68] sm:$0xff]
    %v1585 = vld [vmem:[#allocation17 + $0x70] sm:$0xff]
    %v1586 = vld [vmem:[#allocation17 + $0x78] sm:$0xff]
    %v1587 = vpack.c.bf16 %v1572, %v1571
    %v1588 = vpack.c.bf16 %v1574, %v1573
    %v1589 = vpack.c.bf16 %v1576, %v1575
    %v1590 = vpack.c.bf16 %v1578, %v1577
    %v1591 = vpack.c.bf16 %v1580, %v1579
    %v1592 = vpack.c.bf16 %v1582, %v1581
    %v1593 = vpack.c.bf16 %v1584, %v1583
    %v1594 = vpack.c.bf16 %v1586, %v1585
    %1595 = vmatpush.bf16.msra.mxu0 %v1594
    %1596 = vmatpush.bf16.msra.mxu0 %v1593
    %1597 = vmatpush.bf16.msra.mxu0 %v1592
    %1598 = vmatpush.bf16.msra.mxu0 %v1591
    %1599 = vmatpush.bf16.msra.mxu0 %v1590
    %1600 = vmatpush.bf16.msra.mxu0 %v1589
    %1601 = vmatpush.bf16.msra.mxu0 %v1588
    %1602 = vmatpush.bf16.msra.mxu0 %v1587
    %1603 = vmatmul.bf16.gmra.mxu0 %v1475
    %v1604 = vpop.f32.mrf.mxu0
    %v1605 = vadd.f32 0.0, %v1604
    %v1606 = vpop.f32.mrf.mxu0
    %v1607 = vadd.f32 0.0, %v1606
    %1608 = vmatmul.bf16.gmra.mxu0 %v1476
    %v1609 = vpop.f32.mrf.mxu0
    %v1610 = vadd.f32 0.0, %v1609
    %v1611 = vpop.f32.mrf.mxu0
    %v1612 = vadd.f32 0.0, %v1611
    %1613 = vdwg.mxu0
    %v1614 = vpack.c.bf16 %v1605, %v1605
    %v1615 = vpack.c.bf16 %v1607, %v1607
    %v1616 = vpack.c.bf16 %v1610, %v1610
    %v1617 = vpack.c.bf16 %v1612, %v1612
    %v1620 = vunpack.c.l.b16 %v1520
    %v1621 = vunpack.c.l.b16 %v1521
    %v1622 = vpack.c.b16 %v1621, %v1620
    %v1625 = vunpack.c.l.b16 %v1567
    %v1626 = vunpack.c.l.b16 %v1568
    %v1627 = vpack.c.b16 %v1626, %v1625
    %v1629 = vsel %vm604, %v1622, 0
    %v1632 = vsel %vm604, %v1627, 0
    %1634 = vmatpush.bf16.xpose.msra.mxu0 0
    %1635 = vmatpush.bf16.xpose.msra.mxu0 0
    %1636 = vmatpush.bf16.xpose.msra.mxu0 0
    %1637 = vmatpush.bf16.xpose.msra.mxu0 0
    %1638 = vmatpush.bf16.xpose.msra.mxu0 0
    %1639 = vmatpush.bf16.xpose.msra.mxu0 0
    %1640 = vmatpush.bf16.xpose.msra.mxu0 0
    %1641 = vmatpush.bf16.xpose.msra.mxu0 %v1632
    %1642 = vmatmul.bf16.gmra.mxu0 %v1629
    %v1643 = vpop.f32.mrf.mxu0
    %v1644 = vadd.f32 0.0, %v1643
    %v1645 = vpop.f32.mrf.mxu0
    %v1646 = vadd.f32 0.0, %v1645
    %1647 = vdwg.mxu0
    %v1648 = vmul.f32 %v1644, 0.17677669
    %v1649 = vmul.f32 %v1646, 0.17677669
    %v1650 = vadd.f32 %v1648, %v350
    %v1651 = vadd.f32 %v1649, %v351
    %v1652 = vsel %vm629, %v1650, -inf
    %1653 = vmax.xlane.f32.xlu0 %v1652
    %v1654 = vpop.xlane.xlu0 %1653
    %v1655 = vsel %vm629, %v1651, -inf
    %1656 = vmax.xlane.f32.xlu0 %v1655
    %v1657 = vpop.xlane.xlu0 %1656
    %v1658 = vsub.f32 %v1650, %v1654
    %v1659 = vsub.f32 %v1651, %v1657
    %v1660 = vmul.f32 %v1658, 1.442695
    %v1661 = vpow.pop %v1660
    %v1662 = vmul.f32 %v1659, 1.442695
    %v1663 = vpow.pop %v1662
    %v1664 = vsel %vm629, %v1661, 0.0
    %1665 = vadd.xlane.f32.xlu0 %v1664
    %v1666 = vpop.xlane.xlu0 %1665
    %v1667 = vsel %vm629, %v1663, 0.0
    %1668 = vadd.xlane.f32.xlu0 %v1667
    %v1669 = vpop.xlane.xlu0 %1668
    %v1670 = vrcp.pop %v1666
    %v1671 = vrcp.pop %v1669
    %v1672 = vmul.f32 %v1661, %v1670
    %v1673 = vmul.f32 %v1663, %v1671
    %v1674 = vpack.c.bf16 %v1673, %v1672
    %v1677 = vunpack.c.l.b16 %v1614
    %v1678 = vunpack.c.l.b16 %v1615
    %v1679 = vpack.c.b16 %v1678, %v1677
    %v1682 = vsel %vm629, %v1674, 0
    %1684 = vmatpush.bf16.msra.mxu0 0
    %1685 = vmatpush.bf16.msra.mxu0 0
    %1686 = vmatpush.bf16.msra.mxu0 0
    %1687 = vmatpush.bf16.msra.mxu0 0
    %1688 = vmatpush.bf16.msra.mxu0 0
    %1689 = vmatpush.bf16.msra.mxu0 0
    %1690 = vmatpush.bf16.msra.mxu0 0
    %1691 = vmatpush.bf16.msra.mxu0 %v1679
    %1692 = vmatmul.bf16.gmra.mxu0 %v1682
    %v1693 = vpop.f32.mrf.mxu0
    %v1694 = vadd.f32 0.0, %v1693
    %v1695 = vpop.f32.mrf.mxu0
    %v1696 = vadd.f32 0.0, %v1695
    %1697 = vdwg.mxu0
    %1698 = vrot.lane.b32.xlu0 %v1622, 96
    %v1699 = vpop.permute.xlu0 %1698
    %1700 = vrot.lane.b32.xlu0 %v1627, 96
    %v1701 = vpop.permute.xlu0 %1700
    %v1703 = vsel %vm604, %v1699, 0
    %v1706 = vsel %vm604, %v1701, 0
    %1708 = vmatpush.bf16.xpose.msra.mxu0 0
    %1709 = vmatpush.bf16.xpose.msra.mxu0 0
    %1710 = vmatpush.bf16.xpose.msra.mxu0 0
    %1711 = vmatpush.bf16.xpose.msra.mxu0 0
    %1712 = vmatpush.bf16.xpose.msra.mxu0 0
    %1713 = vmatpush.bf16.xpose.msra.mxu0 0
    %1714 = vmatpush.bf16.xpose.msra.mxu0 0
    %1715 = vmatpush.bf16.xpose.msra.mxu0 %v1706
    %1716 = vmatmul.bf16.gmra.mxu0 %v1703
    %v1717 = vpop.f32.mrf.mxu0
    %v1718 = vadd.f32 0.0, %v1717
    %v1719 = vpop.f32.mrf.mxu0
    %v1720 = vadd.f32 0.0, %v1719
    %1721 = vdwg.mxu0
    %v1722 = vmul.f32 %v1718, 0.17677669
    %v1723 = vmul.f32 %v1720, 0.17677669
    %v1724 = vadd.f32 %v1722, %v352
    %v1725 = vadd.f32 %v1723, %v353
    %v1726 = vsel %vm629, %v1724, -inf
    %1727 = vmax.xlane.f32.xlu0 %v1726
    %v1728 = vpop.xlane.xlu0 %1727
    %v1729 = vsel %vm629, %v1725, -inf
    %1730 = vmax.xlane.f32.xlu0 %v1729
    %v1731 = vpop.xlane.xlu0 %1730
    %v1732 = vsub.f32 %v1724, %v1728
    %v1733 = vsub.f32 %v1725, %v1731
    %v1734 = vmul.f32 %v1732, 1.442695
    %v1735 = vpow.pop %v1734
    %v1736 = vmul.f32 %v1733, 1.442695
    %v1737 = vpow.pop %v1736
    %v1738 = vsel %vm629, %v1735, 0.0
    %1739 = vadd.xlane.f32.xlu0 %v1738
    %v1740 = vpop.xlane.xlu0 %1739
    %v1741 = vsel %vm629, %v1737, 0.0
    %1742 = vadd.xlane.f32.xlu0 %v1741
    %v1743 = vpop.xlane.xlu0 %1742
    %v1744 = vrcp.pop %v1740
    %v1745 = vrcp.pop %v1743
    %v1746 = vmul.f32 %v1735, %v1744
    %v1747 = vmul.f32 %v1737, %v1745
    %v1748 = vpack.c.bf16 %v1747, %v1746
    %1749 = vrot.lane.b32.xlu0 %v1679, 96
    %v1750 = vpop.permute.xlu0 %1749
    %v1753 = vsel %vm629, %v1748, 0
    %1755 = vmatpush.bf16.msra.mxu0 0
    %1756 = vmatpush.bf16.msra.mxu0 0
    %1757 = vmatpush.bf16.msra.mxu0 0
    %1758 = vmatpush.bf16.msra.mxu0 0
    %1759 = vmatpush.bf16.msra.mxu0 0
    %1760 = vmatpush.bf16.msra.mxu0 0
    %1761 = vmatpush.bf16.msra.mxu0 0
    %1762 = vmatpush.bf16.msra.mxu0 %v1750
    %1763 = vmatmul.bf16.gmra.mxu0 %v1753
    %v1764 = vpop.f32.mrf.mxu0
    %v1765 = vadd.f32 0.0, %v1764
    %v1766 = vpop.f32.mrf.mxu0
    %v1767 = vadd.f32 0.0, %v1766
    %1768 = vdwg.mxu0
    %1769 = vrot.lane.b32.xlu0 %v1622, 64
    %v1770 = vpop.permute.xlu0 %1769
    %1771 = vrot.lane.b32.xlu0 %v1627, 64
    %v1772 = vpop.permute.xlu0 %1771
    %v1774 = vsel %vm604, %v1770, 0
    %v1777 = vsel %vm604, %v1772, 0
    %1779 = vmatpush.bf16.xpose.msra.mxu0 0
    %1780 = vmatpush.bf16.xpose.msra.mxu0 0
    %1781 = vmatpush.bf16.xpose.msra.mxu0 0
    %1782 = vmatpush.bf16.xpose.msra.mxu0 0
    %1783 = vmatpush.bf16.xpose.msra.mxu0 0
    %1784 = vmatpush.bf16.xpose.msra.mxu0 0
    %1785 = vmatpush.bf16.xpose.msra.mxu0 0
    %1786 = vmatpush.bf16.xpose.msra.mxu0 %v1777
    %1787 = vmatmul.bf16.gmra.mxu0 %v1774
    %v1788 = vpop.f32.mrf.mxu0
    %v1789 = vadd.f32 0.0, %v1788
    %v1790 = vpop.f32.mrf.mxu0
    %v1791 = vadd.f32 0.0, %v1790
    %1792 = vdwg.mxu0
    %v1793 = vmul.f32 %v1789, 0.17677669
    %v1794 = vmul.f32 %v1791, 0.17677669
    %v1795 = vadd.f32 %v1793, %v354
    %v1796 = vadd.f32 %v1794, %v355
    %v1797 = vsel %vm629, %v1795, -inf
    %1798 = vmax.xlane.f32.xlu0 %v1797
    %v1799 = vpop.xlane.xlu0 %1798
    %v1800 = vsel %vm629, %v1796, -inf
    %1801 = vmax.xlane.f32.xlu0 %v1800
    %v1802 = vpop.xlane.xlu0 %1801
    %v1803 = vsub.f32 %v1795, %v1799
    %v1804 = vsub.f32 %v1796, %v1802
    %v1805 = vmul.f32 %v1803, 1.442695
    %v1806 = vpow.pop %v1805
    %v1807 = vmul.f32 %v1804, 1.442695
    %v1808 = vpow.pop %v1807
    %v1809 = vsel %vm629, %v1806, 0.0
    %1810 = vadd.xlane.f32.xlu0 %v1809
    %v1811 = vpop.xlane.xlu0 %1810
    %v1812 = vsel %vm629, %v1808, 0.0
    %1813 = vadd.xlane.f32.xlu0 %v1812
    %v1814 = vpop.xlane.xlu0 %1813
    %v1815 = vrcp.pop %v1811
    %v1816 = vrcp.pop %v1814
    %v1817 = vmul.f32 %v1806, %v1815
    %v1818 = vmul.f32 %v1808, %v1816
    %v1819 = vpack.c.bf16 %v1818, %v1817
    %1820 = vrot.lane.b32.xlu0 %v1679, 64
    %v1821 = vpop.permute.xlu0 %1820
    %v1824 = vsel %vm629, %v1819, 0
    %1826 = vmatpush.bf16.msra.mxu0 0
    %1827 = vmatpush.bf16.msra.mxu0 0
    %1828 = vmatpush.bf16.msra.mxu0 0
    %1829 = vmatpush.bf16.msra.mxu0 0
    %1830 = vmatpush.bf16.msra.mxu0 0
    %1831 = vmatpush.bf16.msra.mxu0 0
    %1832 = vmatpush.bf16.msra.mxu0 0
    %1833 = vmatpush.bf16.msra.mxu0 %v1821
    %1834 = vmatmul.bf16.gmra.mxu0 %v1824
    %v1835 = vpop.f32.mrf.mxu0
    %v1836 = vadd.f32 0.0, %v1835
    %v1837 = vpop.f32.mrf.mxu0
    %v1838 = vadd.f32 0.0, %v1837
    %1839 = vdwg.mxu0
    %1840 = vrot.lane.b32.xlu0 %v1622, 32
    %v1841 = vpop.permute.xlu0 %1840
    %1842 = vrot.lane.b32.xlu0 %v1627, 32
    %v1843 = vpop.permute.xlu0 %1842
    %v1845 = vsel %vm604, %v1841, 0
    %v1848 = vsel %vm604, %v1843, 0
    %1850 = vmatpush.bf16.xpose.msra.mxu0 0
    %1851 = vmatpush.bf16.xpose.msra.mxu0 0
    %1852 = vmatpush.bf16.xpose.msra.mxu0 0
    %1853 = vmatpush.bf16.xpose.msra.mxu0 0
    %1854 = vmatpush.bf16.xpose.msra.mxu0 0
    %1855 = vmatpush.bf16.xpose.msra.mxu0 0
    %1856 = vmatpush.bf16.xpose.msra.mxu0 0
    %1857 = vmatpush.bf16.xpose.msra.mxu0 %v1848
    %1858 = vmatmul.bf16.gmra.mxu0 %v1845
    %v1859 = vpop.f32.mrf.mxu0
    %v1860 = vadd.f32 0.0, %v1859
    %v1861 = vpop.f32.mrf.mxu0
    %v1862 = vadd.f32 0.0, %v1861
    %1863 = vdwg.mxu0
    %v1864 = vmul.f32 %v1860, 0.17677669
    %v1865 = vmul.f32 %v1862, 0.17677669
    %v1866 = vadd.f32 %v1864, %v356
    %v1867 = vadd.f32 %v1865, %v357
    %v1868 = vsel %vm629, %v1866, -inf
    %1869 = vmax.xlane.f32.xlu0 %v1868
    %v1870 = vpop.xlane.xlu0 %1869
    %v1871 = vsel %vm629, %v1867, -inf
    %1872 = vmax.xlane.f32.xlu0 %v1871
    %v1873 = vpop.xlane.xlu0 %1872
    %v1874 = vsub.f32 %v1866, %v1870
    %v1875 = vsub.f32 %v1867, %v1873
    %v1876 = vmul.f32 %v1874, 1.442695
    %v1877 = vpow.pop %v1876
    %v1878 = vmul.f32 %v1875, 1.442695
    %v1879 = vpow.pop %v1878
    %v1880 = vsel %vm629, %v1877, 0.0
    %1881 = vadd.xlane.f32.xlu0 %v1880
    %v1882 = vpop.xlane.xlu0 %1881
    %v1883 = vsel %vm629, %v1879, 0.0
    %1884 = vadd.xlane.f32.xlu0 %v1883
    %v1885 = vpop.xlane.xlu0 %1884
    %v1886 = vrcp.pop %v1882
    %v1887 = vrcp.pop %v1885
    %v1888 = vmul.f32 %v1877, %v1886
    %v1889 = vmul.f32 %v1879, %v1887
    %v1890 = vpack.c.bf16 %v1889, %v1888
    %1891 = vrot.lane.b32.xlu0 %v1679, 32
    %v1892 = vpop.permute.xlu0 %1891
    %v1895 = vsel %vm629, %v1890, 0
    %1897 = vmatpush.bf16.msra.mxu0 0
    %1898 = vmatpush.bf16.msra.mxu0 0
    %1899 = vmatpush.bf16.msra.mxu0 0
    %1900 = vmatpush.bf16.msra.mxu0 0
    %1901 = vmatpush.bf16.msra.mxu0 0
    %1902 = vmatpush.bf16.msra.mxu0 0
    %1903 = vmatpush.bf16.msra.mxu0 0
    %1904 = vmatpush.bf16.msra.mxu0 %v1892
    %1905 = vmatmul.bf16.gmra.mxu0 %v1895
    %v1906 = vpop.f32.mrf.mxu0
    %v1907 = vadd.f32 0.0, %v1906
    %v1908 = vpop.f32.mrf.mxu0
    %v1909 = vadd.f32 0.0, %v1908
    %1910 = vdwg.mxu0
    %1913 = vrot.lane.b32.xlu0 %v1765, 32
    %v1914 = vpop.permute.xlu0 %1913
    %1915 = vrot.lane.b32.xlu0 %v1767, 32
    %v1916 = vpop.permute.xlu0 %1915
    %1921 = vrot.lane.b32.xlu0 %v1836, 64
    %v1922 = vpop.permute.xlu0 %1921
    %1923 = vrot.lane.b32.xlu0 %v1838, 64
    %v1924 = vpop.permute.xlu0 %1923
    %1929 = vrot.lane.b32.xlu0 %v1907, 96
    %v1930 = vpop.permute.xlu0 %1929
    %1931 = vrot.lane.b32.xlu0 %v1909, 96
    %v1932 = vpop.permute.xlu0 %1931
    %v1935 = vsel %vm604, %v1694, %v1914
    %v1936 = vsel %vm604, %v1696, %v1916
    %v1937 = vsel %vm915, %v1935, %v1922
    %v1938 = vsel %vm915, %v1936, %v1924
    %v1939 = vsel %vm918, %v1937, %v1930
    %v1940 = vsel %vm918, %v1938, %v1932
    %v1943 = vunpack.c.l.b16 %v1522
    %v1944 = vunpack.c.l.b16 %v1523
    %v1945 = vpack.c.b16 %v1944, %v1943
    %v1948 = vunpack.c.l.b16 %v1569
    %v1949 = vunpack.c.l.b16 %v1570
    %v1950 = vpack.c.b16 %v1949, %v1948
    %v1952 = vsel %vm604, %v1945, 0
    %v1955 = vsel %vm604, %v1950, 0
    %1957 = vmatpush.bf16.xpose.msra.mxu0 0
    %1958 = vmatpush.bf16.xpose.msra.mxu0 0
    %1959 = vmatpush.bf16.xpose.msra.mxu0 0
    %1960 = vmatpush.bf16.xpose.msra.mxu0 0
    %1961 = vmatpush.bf16.xpose.msra.mxu0 0
    %1962 = vmatpush.bf16.xpose.msra.mxu0 0
    %1963 = vmatpush.bf16.xpose.msra.mxu0 0
    %1964 = vmatpush.bf16.xpose.msra.mxu0 %v1955
    %1965 = vmatmul.bf16.gmra.mxu0 %v1952
    %v1966 = vpop.f32.mrf.mxu0
    %v1967 = vadd.f32 0.0, %v1966
    %v1968 = vpop.f32.mrf.mxu0
    %v1969 = vadd.f32 0.0, %v1968
    %1970 = vdwg.mxu0
    %v1971 = vmul.f32 %v1967, 0.17677669
    %v1972 = vmul.f32 %v1969, 0.17677669
    %v1973 = vadd.f32 %v1971, %v350
    %v1974 = vadd.f32 %v1972, %v351
    %v1975 = vsel %vm629, %v1973, -inf
    %1976 = vmax.xlane.f32.xlu0 %v1975
    %v1977 = vpop.xlane.xlu0 %1976
    %v1978 = vsel %vm629, %v1974, -inf
    %1979 = vmax.xlane.f32.xlu0 %v1978
    %v1980 = vpop.xlane.xlu0 %1979
    %v1981 = vsub.f32 %v1973, %v1977
    %v1982 = vsub.f32 %v1974, %v1980
    %v1983 = vmul.f32 %v1981, 1.442695
    %v1984 = vpow.pop %v1983
    %v1985 = vmul.f32 %v1982, 1.442695
    %v1986 = vpow.pop %v1985
    %v1987 = vsel %vm629, %v1984, 0.0
    %1988 = vadd.xlane.f32.xlu0 %v1987
    %v1989 = vpop.xlane.xlu0 %1988
    %v1990 = vsel %vm629, %v1986, 0.0
    %1991 = vadd.xlane.f32.xlu0 %v1990
    %v1992 = vpop.xlane.xlu0 %1991
    %v1993 = vrcp.pop %v1989
    %v1994 = vrcp.pop %v1992
    %v1995 = vmul.f32 %v1984, %v1993
    %v1996 = vmul.f32 %v1986, %v1994
    %v1997 = vpack.c.bf16 %v1996, %v1995
    %v2000 = vunpack.c.l.b16 %v1616
    %v2001 = vunpack.c.l.b16 %v1617
    %v2002 = vpack.c.b16 %v2001, %v2000
    %v2005 = vsel %vm629, %v1997, 0
    %2007 = vmatpush.bf16.msra.mxu0 0
    %2008 = vmatpush.bf16.msra.mxu0 0
    %2009 = vmatpush.bf16.msra.mxu0 0
    %2010 = vmatpush.bf16.msra.mxu0 0
    %2011 = vmatpush.bf16.msra.mxu0 0
    %2012 = vmatpush.bf16.msra.mxu0 0
    %2013 = vmatpush.bf16.msra.mxu0 0
    %2014 = vmatpush.bf16.msra.mxu0 %v2002
    %2015 = vmatmul.bf16.gmra.mxu0 %v2005
    %v2016 = vpop.f32.mrf.mxu0
    %v2017 = vadd.f32 0.0, %v2016
    %v2018 = vpop.f32.mrf.mxu0
    %v2019 = vadd.f32 0.0, %v2018
    %2020 = vdwg.mxu0
    %2021 = vrot.lane.b32.xlu0 %v1945, 96
    %v2022 = vpop.permute.xlu0 %2021
    %2023 = vrot.lane.b32.xlu0 %v1950, 96
    %v2024 = vpop.permute.xlu0 %2023
    %v2026 = vsel %vm604, %v2022, 0
    %v2029 = vsel %vm604, %v2024, 0
    %2031 = vmatpush.bf16.xpose.msra.mxu0 0
    %2032 = vmatpush.bf16.xpose.msra.mxu0 0
    %2033 = vmatpush.bf16.xpose.msra.mxu0 0
    %2034 = vmatpush.bf16.xpose.msra.mxu0 0
    %2035 = vmatpush.bf16.xpose.msra.mxu0 0
    %2036 = vmatpush.bf16.xpose.msra.mxu0 0
    %2037 = vmatpush.bf16.xpose.msra.mxu0 0
    %2038 = vmatpush.bf16.xpose.msra.mxu0 %v2029
    %2039 = vmatmul.bf16.gmra.mxu0 %v2026
    %v2040 = vpop.f32.mrf.mxu0
    %v2041 = vadd.f32 0.0, %v2040
    %v2042 = vpop.f32.mrf.mxu0
    %v2043 = vadd.f32 0.0, %v2042
    %2044 = vdwg.mxu0
    %v2045 = vmul.f32 %v2041, 0.17677669
    %v2046 = vmul.f32 %v2043, 0.17677669
    %v2047 = vadd.f32 %v2045, %v352
    %v2048 = vadd.f32 %v2046, %v353
    %v2049 = vsel %vm629, %v2047, -inf
    %2050 = vmax.xlane.f32.xlu0 %v2049
    %v2051 = vpop.xlane.xlu0 %2050
    %v2052 = vsel %vm629, %v2048, -inf
    %2053 = vmax.xlane.f32.xlu0 %v2052
    %v2054 = vpop.xlane.xlu0 %2053
    %v2055 = vsub.f32 %v2047, %v2051
    %v2056 = vsub.f32 %v2048, %v2054
    %v2057 = vmul.f32 %v2055, 1.442695
    %v2058 = vpow.pop %v2057
    %v2059 = vmul.f32 %v2056, 1.442695
    %v2060 = vpow.pop %v2059
    %v2061 = vsel %vm629, %v2058, 0.0
    %2062 = vadd.xlane.f32.xlu0 %v2061
    %v2063 = vpop.xlane.xlu0 %2062
    %v2064 = vsel %vm629, %v2060, 0.0
    %2065 = vadd.xlane.f32.xlu0 %v2064
    %v2066 = vpop.xlane.xlu0 %2065
    %v2067 = vrcp.pop %v2063
    %v2068 = vrcp.pop %v2066
    %v2069 = vmul.f32 %v2058, %v2067
    %v2070 = vmul.f32 %v2060, %v2068
    %v2071 = vpack.c.bf16 %v2070, %v2069
    %2072 = vrot.lane.b32.xlu0 %v2002, 96
    %v2073 = vpop.permute.xlu0 %2072
    %v2076 = vsel %vm629, %v2071, 0
    %2078 = vmatpush.bf16.msra.mxu0 0
    %2079 = vmatpush.bf16.msra.mxu0 0
    %2080 = vmatpush.bf16.msra.mxu0 0
    %2081 = vmatpush.bf16.msra.mxu0 0
    %2082 = vmatpush.bf16.msra.mxu0 0
    %2083 = vmatpush.bf16.msra.mxu0 0
    %2084 = vmatpush.bf16.msra.mxu0 0
    %2085 = vmatpush.bf16.msra.mxu0 %v2073
    %2086 = vmatmul.bf16.gmra.mxu0 %v2076
    %v2087 = vpop.f32.mrf.mxu0
    %v2088 = vadd.f32 0.0, %v2087
    %v2089 = vpop.f32.mrf.mxu0
    %v2090 = vadd.f32 0.0, %v2089
    %2091 = vdwg.mxu0
    %2092 = vrot.lane.b32.xlu0 %v1945, 64
    %v2093 = vpop.permute.xlu0 %2092
    %2094 = vrot.lane.b32.xlu0 %v1950, 64
    %v2095 = vpop.permute.xlu0 %2094
    %v2097 = vsel %vm604, %v2093, 0
    %v2100 = vsel %vm604, %v2095, 0
    %2102 = vmatpush.bf16.xpose.msra.mxu0 0
    %2103 = vmatpush.bf16.xpose.msra.mxu0 0
    %2104 = vmatpush.bf16.xpose.msra.mxu0 0
    %2105 = vmatpush.bf16.xpose.msra.mxu0 0
    %2106 = vmatpush.bf16.xpose.msra.mxu0 0
    %2107 = vmatpush.bf16.xpose.msra.mxu0 0
    %2108 = vmatpush.bf16.xpose.msra.mxu0 0
    %2109 = vmatpush.bf16.xpose.msra.mxu0 %v2100
    %2110 = vmatmul.bf16.gmra.mxu0 %v2097
    %v2111 = vpop.f32.mrf.mxu0
    %v2112 = vadd.f32 0.0, %v2111
    %v2113 = vpop.f32.mrf.mxu0
    %v2114 = vadd.f32 0.0, %v2113
    %2115 = vdwg.mxu0
    %v2116 = vmul.f32 %v2112, 0.17677669
    %v2117 = vmul.f32 %v2114, 0.17677669
    %v2118 = vadd.f32 %v2116, %v354
    %v2119 = vadd.f32 %v2117, %v355
    %v2120 = vsel %vm629, %v2118, -inf
    %2121 = vmax.xlane.f32.xlu0 %v2120
    %v2122 = vpop.xlane.xlu0 %2121
    %v2123 = vsel %vm629, %v2119, -inf
    %2124 = vmax.xlane.f32.xlu0 %v2123
    %v2125 = vpop.xlane.xlu0 %2124
    %v2126 = vsub.f32 %v2118, %v2122
    %v2127 = vsub.f32 %v2119, %v2125
    %v2128 = vmul.f32 %v2126, 1.442695
    %v2129 = vpow.pop %v2128
    %v2130 = vmul.f32 %v2127, 1.442695
    %v2131 = vpow.pop %v2130
    %v2132 = vsel %vm629, %v2129, 0.0
    %2133 = vadd.xlane.f32.xlu0 %v2132
    %v2134 = vpop.xlane.xlu0 %2133
    %v2135 = vsel %vm629, %v2131, 0.0
    %2136 = vadd.xlane.f32.xlu0 %v2135
    %v2137 = vpop.xlane.xlu0 %2136
    %v2138 = vrcp.pop %v2134
    %v2139 = vrcp.pop %v2137
    %v2140 = vmul.f32 %v2129, %v2138
    %v2141 = vmul.f32 %v2131, %v2139
    %v2142 = vpack.c.bf16 %v2141, %v2140
    %2143 = vrot.lane.b32.xlu0 %v2002, 64
    %v2144 = vpop.permute.xlu0 %2143
    %v2147 = vsel %vm629, %v2142, 0
    %2149 = vmatpush.bf16.msra.mxu0 0
    %2150 = vmatpush.bf16.msra.mxu0 0
    %2151 = vmatpush.bf16.msra.mxu0 0
    %2152 = vmatpush.bf16.msra.mxu0 0
    %2153 = vmatpush.bf16.msra.mxu0 0
    %2154 = vmatpush.bf16.msra.mxu0 0
    %2155 = vmatpush.bf16.msra.mxu0 0
    %2156 = vmatpush.bf16.msra.mxu0 %v2144
    %2157 = vmatmul.bf16.gmra.mxu0 %v2147
    %v2158 = vpop.f32.mrf.mxu0
    %v2159 = vadd.f32 0.0, %v2158
    %v2160 = vpop.f32.mrf.mxu0
    %v2161 = vadd.f32 0.0, %v2160
    %2162 = vdwg.mxu0
    %2163 = vrot.lane.b32.xlu0 %v1945, 32
    %v2164 = vpop.permute.xlu0 %2163
    %2165 = vrot.lane.b32.xlu0 %v1950, 32
    %v2166 = vpop.permute.xlu0 %2165
    %v2168 = vsel %vm604, %v2164, 0
    %v2171 = vsel %vm604, %v2166, 0
    %2173 = vmatpush.bf16.xpose.msra.mxu0 0
    %2174 = vmatpush.bf16.xpose.msra.mxu0 0
    %2175 = vmatpush.bf16.xpose.msra.mxu0 0
    %2176 = vmatpush.bf16.xpose.msra.mxu0 0
    %2177 = vmatpush.bf16.xpose.msra.mxu0 0
    %2178 = vmatpush.bf16.xpose.msra.mxu0 0
    %2179 = vmatpush.bf16.xpose.msra.mxu0 0
    %2180 = vmatpush.bf16.xpose.msra.mxu0 %v2171
    %2181 = vmatmul.bf16.gmra.mxu0 %v2168
    %v2182 = vpop.f32.mrf.mxu0
    %v2183 = vadd.f32 0.0, %v2182
    %v2184 = vpop.f32.mrf.mxu0
    %v2185 = vadd.f32 0.0, %v2184
    %2186 = vdwg.mxu0
    %v2187 = vmul.f32 %v2183, 0.17677669
    %v2188 = vmul.f32 %v2185, 0.17677669
    %v2189 = vadd.f32 %v2187, %v356
    %v2190 = vadd.f32 %v2188, %v357
    %v2191 = vsel %vm629, %v2189, -inf
    %2192 = vmax.xlane.f32.xlu0 %v2191
    %v2193 = vpop.xlane.xlu0 %2192
    %v2194 = vsel %vm629, %v2190, -inf
    %2195 = vmax.xlane.f32.xlu0 %v2194
    %v2196 = vpop.xlane.xlu0 %2195
    %v2197 = vsub.f32 %v2189, %v2193
    %v2198 = vsub.f32 %v2190, %v2196
    %v2199 = vmul.f32 %v2197, 1.442695
    %v2200 = vpow.pop %v2199
    %v2201 = vmul.f32 %v2198, 1.442695
    %v2202 = vpow.pop %v2201
    %v2203 = vsel %vm629, %v2200, 0.0
    %2204 = vadd.xlane.f32.xlu0 %v2203
    %v2205 = vpop.xlane.xlu0 %2204
    %v2206 = vsel %vm629, %v2202, 0.0
    %2207 = vadd.xlane.f32.xlu0 %v2206
    %v2208 = vpop.xlane.xlu0 %2207
    %v2209 = vrcp.pop %v2205
    %v2210 = vrcp.pop %v2208
    %v2211 = vmul.f32 %v2200, %v2209
    %v2212 = vmul.f32 %v2202, %v2210
    %v2213 = vpack.c.bf16 %v2212, %v2211
    %2214 = vrot.lane.b32.xlu0 %v2002, 32
    %v2215 = vpop.permute.xlu0 %2214
    %v2218 = vsel %vm629, %v2213, 0
    %2220 = vmatpush.bf16.msra.mxu0 0
    %2221 = vmatpush.bf16.msra.mxu0 0
    %2222 = vmatpush.bf16.msra.mxu0 0
    %2223 = vmatpush.bf16.msra.mxu0 0
    %2224 = vmatpush.bf16.msra.mxu0 0
    %2225 = vmatpush.bf16.msra.mxu0 0
    %2226 = vmatpush.bf16.msra.mxu0 0
    %2227 = vmatpush.bf16.msra.mxu0 %v2215
    %2228 = vmatmul.bf16.gmra.mxu0 %v2218
    %v2229 = vpop.f32.mrf.mxu0
    %v2230 = vadd.f32 0.0, %v2229
    %v2231 = vpop.f32.mrf.mxu0
    %v2232 = vadd.f32 0.0, %v2231
    %2233 = vdwg.mxu0
    %2236 = vrot.lane.b32.xlu0 %v2088, 32
    %v2237 = vpop.permute.xlu0 %2236
    %2238 = vrot.lane.b32.xlu0 %v2090, 32
    %v2239 = vpop.permute.xlu0 %2238
    %2244 = vrot.lane.b32.xlu0 %v2159, 64
    %v2245 = vpop.permute.xlu0 %2244
    %2246 = vrot.lane.b32.xlu0 %v2161, 64
    %v2247 = vpop.permute.xlu0 %2246
    %2252 = vrot.lane.b32.xlu0 %v2230, 96
    %v2253 = vpop.permute.xlu0 %2252
    %2254 = vrot.lane.b32.xlu0 %v2232, 96
    %v2255 = vpop.permute.xlu0 %2254
    %v2258 = vsel %vm604, %v2017, %v2237
    %v2259 = vsel %vm604, %v2019, %v2239
    %v2260 = vsel %vm915, %v2258, %v2245
    %v2261 = vsel %vm915, %v2259, %v2247
    %v2262 = vsel %vm918, %v2260, %v2253
    %v2263 = vsel %vm918, %v2261, %v2255
    %v2264 = vpack.c.bf16 %v1940, %v1939
    %v2265 = vpack.c.bf16 %v2263, %v2262
    %v2266 = vld [vmem:[#allocation19] sm:$0xff]
    %v2267 = vld [vmem:[#allocation19 + $0x8] sm:$0xff]
    %v2268 = vld [vmem:[#allocation19 + $0x10] sm:$0xff]
    %v2269 = vld [vmem:[#allocation19 + $0x18] sm:$0xff]
    %v2270 = vld [vmem:[#allocation19 + $0x20] sm:$0xff]
    %v2271 = vld [vmem:[#allocation19 + $0x28] sm:$0xff]
    %v2272 = vld [vmem:[#allocation19 + $0x30] sm:$0xff]
    %v2273 = vld [vmem:[#allocation19 + $0x38] sm:$0xff]
    %v2274 = vld [vmem:[#allocation19 + $0x40] sm:$0xff]
    %v2275 = vld [vmem:[#allocation19 + $0x48] sm:$0xff]
    %v2276 = vld [vmem:[#allocation19 + $0x50] sm:$0xff]
    %v2277 = vld [vmem:[#allocation19 + $0x58] sm:$0xff]
    %v2278 = vld [vmem:[#allocation19 + $0x60] sm:$0xff]
    %v2279 = vld [vmem:[#allocation19 + $0x68] sm:$0xff]
    %v2280 = vld [vmem:[#allocation19 + $0x70] sm:$0xff]
    %v2281 = vld [vmem:[#allocation19 + $0x78] sm:$0xff]
    %v2282 = vpack.c.bf16 %v2267, %v2266
    %v2283 = vpack.c.bf16 %v2269, %v2268
    %v2284 = vpack.c.bf16 %v2271, %v2270
    %v2285 = vpack.c.bf16 %v2273, %v2272
    %v2286 = vpack.c.bf16 %v2275, %v2274
    %v2287 = vpack.c.bf16 %v2277, %v2276
    %v2288 = vpack.c.bf16 %v2279, %v2278
    %v2289 = vpack.c.bf16 %v2281, %v2280
    %v2290 = vld [vmem:[#allocation20] sm:$0x1]
    %v2291 = vperm.slane %v2290, 0
    %2292 = vmatpush.bf16.msra.mxu0 %v2289
    %2293 = vmatpush.bf16.msra.mxu0 %v2288
    %2294 = vmatpush.bf16.msra.mxu0 %v2287
    %2295 = vmatpush.bf16.msra.mxu0 %v2286
    %2296 = vmatpush.bf16.msra.mxu0 %v2285
    %2297 = vmatpush.bf16.msra.mxu0 %v2284
    %2298 = vmatpush.bf16.msra.mxu0 %v2283
    %2299 = vmatpush.bf16.msra.mxu0 %v2282
    %2300 = vmatmul.bf16.gmra.mxu0 %v2264
    %v2301 = vpop.f32.mrf.mxu0
    %v2302 = vadd.f32 %v2291, %v2301
    %v2303 = vpop.f32.mrf.mxu0
    %v2304 = vadd.f32 %v2291, %v2303
    %2305 = vmatmul.bf16.gmra.mxu0 %v2265
    %v2306 = vpop.f32.mrf.mxu0
    %v2307 = vadd.f32 %v2291, %v2306
    %v2308 = vpop.f32.mrf.mxu0
    %v2309 = vadd.f32 %v2291, %v2308
    %2310 = vdwg.mxu0
    %v2311 = vadd.f32 %v1289, %v2302
    %v2312 = vadd.f32 %v1290, %v2304
    %v2313 = vadd.f32 %v1291, %v2307
    %v2314 = vadd.f32 %v1292, %v2309
    %v2315 = vld [vmem:[#allocation22] sm:$0x1]
    %v2316 = vld [vmem:[#allocation23] sm:$0x1]
    %2317 = vadd.xlane.f32.xlu0 %v2311
    %v2318 = vpop.xlane.xlu0 %2317
    %2319 = vadd.xlane.f32.xlu0 %v2312
    %v2320 = vpop.xlane.xlu0 %2319
    %2321 = vadd.xlane.f32.xlu0 %v2313
    %v2322 = vpop.xlane.xlu0 %2321
    %2323 = vadd.xlane.f32.xlu0 %v2314
    %v2324 = vpop.xlane.xlu0 %2323
    %v2325 = vmul.f32 %v2318, %v374
    %v2326 = vmul.f32 %v2320, %v374
    %v2327 = vmul.f32 %v2322, %v374
    %v2328 = vmul.f32 %v2324, %v374
    %v2329 = vsub.f32 %v2311, %v2325
    %v2330 = vsub.f32 %v2312, %v2326
    %v2331 = vsub.f32 %v2313, %v2327
    %v2332 = vsub.f32 %v2314, %v2328
    %v2333 = vmul.f32 %v2329, %v2329
    %v2334 = vmul.f32 %v2330, %v2330
    %v2335 = vmul.f32 %v2331, %v2331
    %v2336 = vmul.f32 %v2332, %v2332
    %2337 = vadd.xlane.f32.xlu0 %v2333
    %v2338 = vpop.xlane.xlu0 %2337
    %2339 = vadd.xlane.f32.xlu0 %v2334
    %v2340 = vpop.xlane.xlu0 %2339
    %2341 = vadd.xlane.f32.xlu0 %v2335
    %v2342 = vpop.xlane.xlu0 %2341
    %2343 = vadd.xlane.f32.xlu0 %v2336
    %v2344 = vpop.xlane.xlu0 %2343
    %v2345 = vmul.f32 %v2338, %v374
    %v2346 = vmul.f32 %v2340, %v374
    %v2347 = vmul.f32 %v2342, %v374
    %v2348 = vmul.f32 %v2344, %v374
    %v2349 = vadd.f32 %v2345, 1e-05
    %v2350 = vadd.f32 %v2346, 1e-05
    %v2351 = vadd.f32 %v2347, 1e-05
    %v2352 = vadd.f32 %v2348, 1e-05
    %v2353 = vrsqrt.pop %v2349
    %v2354 = vmul.f32 %v2353, %v2349
    %v2355 = vmul.f32 %v2354, %v2353
    %v2356 = vmul.f32 0.5, %v2355
    %v2357 = vsub.f32 1.5, %v2356
    %v2358 = vmul.f32 %v2353, %v2357
    %vm2359 = vweird.f32 %v2349
    %vm2360 = vweird.f32 %v2353
    %vm2361 = vmor %vm2359, %vm2360
    %v2362 = vsel %vm2361, %v2353, %v2358
    %v2363 = vrsqrt.pop %v2350
    %v2364 = vmul.f32 %v2363, %v2350
    %v2365 = vmul.f32 %v2364, %v2363
    %v2366 = vmul.f32 0.5, %v2365
    %v2367 = vsub.f32 1.5, %v2366
    %v2368 = vmul.f32 %v2363, %v2367
    %vm2369 = vweird.f32 %v2350
    %vm2370 = vweird.f32 %v2363
    %vm2371 = vmor %vm2369, %vm2370
    %v2372 = vsel %vm2371, %v2363, %v2368
    %v2373 = vrsqrt.pop %v2351
    %v2374 = vmul.f32 %v2373, %v2351
    %v2375 = vmul.f32 %v2374, %v2373
    %v2376 = vmul.f32 0.5, %v2375
    %v2377 = vsub.f32 1.5, %v2376
    %v2378 = vmul.f32 %v2373, %v2377
    %vm2379 = vweird.f32 %v2351
    %vm2380 = vweird.f32 %v2373
    %vm2381 = vmor %vm2379, %vm2380
    %v2382 = vsel %vm2381, %v2373, %v2378
    %v2383 = vrsqrt.pop %v2352
    %v2384 = vmul.f32 %v2383, %v2352
    %v2385 = vmul.f32 %v2384, %v2383
    %v2386 = vmul.f32 0.5, %v2385
    %v2387 = vsub.f32 1.5, %v2386
    %v2388 = vmul.f32 %v2383, %v2387
    %vm2389 = vweird.f32 %v2352
    %vm2390 = vweird.f32 %v2383
    %vm2391 = vmor %vm2389, %vm2390
    %v2392 = vsel %vm2391, %v2383, %v2388
    %v2393 = vmul.f32 %v2329, %v2362
    %v2394 = vmul.f32 %v2330, %v2372
    %v2395 = vmul.f32 %v2331, %v2382
    %v2396 = vmul.f32 %v2332, %v2392
    %v2397 = vperm.slane %v2315, 0
    %v2398 = vmul.f32 %v2393, %v2397
    %v2399 = vmul.f32 %v2394, %v2397
    %v2400 = vmul.f32 %v2395, %v2397
    %v2401 = vmul.f32 %v2396, %v2397
    %v2402 = vperm.slane %v2316, 0
    %v2403 = vadd.f32 %v2398, %v2402
    %v2404 = vadd.f32 %v2399, %v2402
    %v2405 = vadd.f32 %v2400, %v2402
    %v2406 = vadd.f32 %v2401, %v2402
    %v2407 = vpack.c.bf16 %v2404, %v2403
    %v2408 = vpack.c.bf16 %v2406, %v2405
    %v2409 = vld [vmem:[#allocation25] sm:$0xff]
    %v2410 = vld [vmem:[#allocation25 + $0x8] sm:$0xff]
    %v2411 = vld [vmem:[#allocation25 + $0x10] sm:$0xff]
    %v2412 = vld [vmem:[#allocation25 + $0x18] sm:$0xff]
    %v2413 = vld [vmem:[#allocation25 + $0x20] sm:$0xff]
    %v2414 = vld [vmem:[#allocation25 + $0x28] sm:$0xff]
    %v2415 = vld [vmem:[#allocation25 + $0x30] sm:$0xff]
    %v2416 = vld [vmem:[#allocation25 + $0x38] sm:$0xff]
    %v2417 = vld [vmem:[#allocation25 + $0x40] sm:$0xff]
    %v2418 = vld [vmem:[#allocation25 + $0x48] sm:$0xff]
    %v2419 = vld [vmem:[#allocation25 + $0x50] sm:$0xff]
    %v2420 = vld [vmem:[#allocation25 + $0x58] sm:$0xff]
    %v2421 = vld [vmem:[#allocation25 + $0x60] sm:$0xff]
    %v2422 = vld [vmem:[#allocation25 + $0x68] sm:$0xff]
    %v2423 = vld [vmem:[#allocation25 + $0x70] sm:$0xff]
    %v2424 = vld [vmem:[#allocation25 + $0x78] sm:$0xff]
    %v2425 = vld [vmem:[#allocation25 + $0x80] sm:$0xff]
    %v2426 = vld [vmem:[#allocation25 + $0x88] sm:$0xff]
    %v2427 = vld [vmem:[#allocation25 + $0x90] sm:$0xff]
    %v2428 = vld [vmem:[#allocation25 + $0x98] sm:$0xff]
    %v2429 = vld [vmem:[#allocation25 + $0xa0] sm:$0xff]
    %v2430 = vld [vmem:[#allocation25 + $0xa8] sm:$0xff]
    %v2431 = vld [vmem:[#allocation25 + $0xb0] sm:$0xff]
    %v2432 = vld [vmem:[#allocation25 + $0xb8] sm:$0xff]
    %v2433 = vld [vmem:[#allocation25 + $0xc0] sm:$0xff]
    %v2434 = vld [vmem:[#allocation25 + $0xc8] sm:$0xff]
    %v2435 = vld [vmem:[#allocation25 + $0xd0] sm:$0xff]
    %v2436 = vld [vmem:[#allocation25 + $0xd8] sm:$0xff]
    %v2437 = vld [vmem:[#allocation25 + $0xe0] sm:$0xff]
    %v2438 = vld [vmem:[#allocation25 + $0xe8] sm:$0xff]
    %v2439 = vld [vmem:[#allocation25 + $0xf0] sm:$0xff]
    %v2440 = vld [vmem:[#allocation25 + $0xf8] sm:$0xff]
    %v2441 = vld [vmem:[#allocation25 + $0x100] sm:$0xff]
    %v2442 = vld [vmem:[#allocation25 + $0x108] sm:$0xff]
    %v2443 = vld [vmem:[#allocation25 + $0x110] sm:$0xff]
    %v2444 = vld [vmem:[#allocation25 + $0x118] sm:$0xff]
    %v2445 = vld [vmem:[#allocation25 + $0x120] sm:$0xff]
    %v2446 = vld [vmem:[#allocation25 + $0x128] sm:$0xff]
    %v2447 = vld [vmem:[#allocation25 + $0x130] sm:$0xff]
    %v2448 = vld [vmem:[#allocation25 + $0x138] sm:$0xff]
    %v2449 = vld [vmem:[#allocation25 + $0x140] sm:$0xff]
    %v2450 = vld [vmem:[#allocation25 + $0x148] sm:$0xff]
    %v2451 = vld [vmem:[#allocation25 + $0x150] sm:$0xff]
    %v2452 = vld [vmem:[#allocation25 + $0x158] sm:$0xff]
    %v2453 = vld [vmem:[#allocation25 + $0x160] sm:$0xff]
    %v2454 = vld [vmem:[#allocation25 + $0x168] sm:$0xff]
    %v2455 = vld [vmem:[#allocation25 + $0x170] sm:$0xff]
    %v2456 = vld [vmem:[#allocation25 + $0x178] sm:$0xff]
    %v2457 = vld [vmem:[#allocation25 + $0x180] sm:$0xff]
    %v2458 = vld [vmem:[#allocation25 + $0x188] sm:$0xff]
    %v2459 = vld [vmem:[#allocation25 + $0x190] sm:$0xff]
    %v2460 = vld [vmem:[#allocation25 + $0x198] sm:$0xff]
    %v2461 = vld [vmem:[#allocation25 + $0x1a0] sm:$0xff]
    %v2462 = vld [vmem:[#allocation25 + $0x1a8] sm:$0xff]
    %v2463 = vld [vmem:[#allocation25 + $0x1b0] sm:$0xff]
    %v2464 = vld [vmem:[#allocation25 + $0x1b8] sm:$0xff]
    %v2465 = vld [vmem:[#allocation25 + $0x1c0] sm:$0xff]
    %v2466 = vld [vmem:[#allocation25 + $0x1c8] sm:$0xff]
    %v2467 = vld [vmem:[#allocation25 + $0x1d0] sm:$0xff]
    %v2468 = vld [vmem:[#allocation25 + $0x1d8] sm:$0xff]
    %v2469 = vld [vmem:[#allocation25 + $0x1e0] sm:$0xff]
    %v2470 = vld [vmem:[#allocation25 + $0x1e8] sm:$0xff]
    %v2471 = vld [vmem:[#allocation25 + $0x1f0] sm:$0xff]
    %v2472 = vld [vmem:[#allocation25 + $0x1f8] sm:$0xff]
    %v2473 = vpack.c.bf16 %v2413, %v2409
    %v2474 = vpack.c.bf16 %v2414, %v2410
    %v2475 = vpack.c.bf16 %v2415, %v2411
    %v2476 = vpack.c.bf16 %v2416, %v2412
    %v2477 = vpack.c.bf16 %v2421, %v2417
    %v2478 = vpack.c.bf16 %v2422, %v2418
    %v2479 = vpack.c.bf16 %v2423, %v2419
    %v2480 = vpack.c.bf16 %v2424, %v2420
    %v2481 = vpack.c.bf16 %v2429, %v2425
    %v2482 = vpack.c.bf16 %v2430, %v2426
    %v2483 = vpack.c.bf16 %v2431, %v2427
    %v2484 = vpack.c.bf16 %v2432, %v2428
    %v2485 = vpack.c.bf16 %v2437, %v2433
    %v2486 = vpack.c.bf16 %v2438, %v2434
    %v2487 = vpack.c.bf16 %v2439, %v2435
    %v2488 = vpack.c.bf16 %v2440, %v2436
    %v2489 = vpack.c.bf16 %v2445, %v2441
    %v2490 = vpack.c.bf16 %v2446, %v2442
    %v2491 = vpack.c.bf16 %v2447, %v2443
    %v2492 = vpack.c.bf16 %v2448, %v2444
    %v2493 = vpack.c.bf16 %v2453, %v2449
    %v2494 = vpack.c.bf16 %v2454, %v2450
    %v2495 = vpack.c.bf16 %v2455, %v2451
    %v2496 = vpack.c.bf16 %v2456, %v2452
    %v2497 = vpack.c.bf16 %v2461, %v2457
    %v2498 = vpack.c.bf16 %v2462, %v2458
    %v2499 = vpack.c.bf16 %v2463, %v2459
    %v2500 = vpack.c.bf16 %v2464, %v2460
    %v2501 = vpack.c.bf16 %v2469, %v2465
    %v2502 = vpack.c.bf16 %v2470, %v2466
    %v2503 = vpack.c.bf16 %v2471, %v2467
    %v2504 = vpack.c.bf16 %v2472, %v2468
    %v2505 = vld [vmem:[%s18] ss:$2 sm:$0xf]
    %v2507 = vperm.slane %v2505, 0
    %v2508 = vperm.slane %v2505, 1
    %v2509 = vperm.slane %v2505, 2
    %v2510 = vperm.slane %v2505, 3
    %2515 = vmatpush.bf16.msra.mxu0 %v2501
    %2516 = vmatpush.bf16.msra.mxu0 %v2497
    %2517 = vmatpush.bf16.msra.mxu0 %v2493
    %2518 = vmatpush.bf16.msra.mxu0 %v2489
    %2519 = vmatpush.bf16.msra.mxu0 %v2485
    %2520 = vmatpush.bf16.msra.mxu0 %v2481
    %2521 = vmatpush.bf16.msra.mxu0 %v2477
    %2522 = vmatpush.bf16.msra.mxu0 %v2473
    %2523 = vmatmul.bf16.gmra.mxu0 %v2407
    %v2524 = vpop.f32.mrf.mxu0
    %v2525 = vadd.f32 %v2507, %v2524
    %v2526 = vpop.f32.mrf.mxu0
    %v2527 = vadd.f32 %v2507, %v2526
    %2528 = vmatmul.bf16.gmra.mxu0 %v2408
    %v2529 = vpop.f32.mrf.mxu0
    %v2530 = vadd.f32 %v2507, %v2529
    %v2531 = vpop.f32.mrf.mxu0
    %v2532 = vadd.f32 %v2507, %v2531
    %2533 = vdwg.mxu0
    %2534 = vmatpush.bf16.msra.mxu0 %v2502
    %2535 = vmatpush.bf16.msra.mxu0 %v2498
    %2536 = vmatpush.bf16.msra.mxu0 %v2494
    %2537 = vmatpush.bf16.msra.mxu0 %v2490
    %2538 = vmatpush.bf16.msra.mxu0 %v2486
    %2539 = vmatpush.bf16.msra.mxu0 %v2482
    %2540 = vmatpush.bf16.msra.mxu0 %v2478
    %2541 = vmatpush.bf16.msra.mxu0 %v2474
    %2542 = vmatmul.bf16.gmra.mxu0 %v2407
    %v2543 = vpop.f32.mrf.mxu0
    %v2544 = vadd.f32 %v2508, %v2543
    %v2545 = vpop.f32.mrf.mxu0
    %v2546 = vadd.f32 %v2508, %v2545
    %2547 = vmatmul.bf16.gmra.mxu0 %v2408
    %v2548 = vpop.f32.mrf.mxu0
    %v2549 = vadd.f32 %v2508, %v2548
    %v2550 = vpop.f32.mrf.mxu0
    %v2551 = vadd.f32 %v2508, %v2550
    %2552 = vdwg.mxu0
    %2553 = vmatpush.bf16.msra.mxu0 %v2503
    %2554 = vmatpush.bf16.msra.mxu0 %v2499
    %2555 = vmatpush.bf16.msra.mxu0 %v2495
    %2556 = vmatpush.bf16.msra.mxu0 %v2491
    %2557 = vmatpush.bf16.msra.mxu0 %v2487
    %2558 = vmatpush.bf16.msra.mxu0 %v2483
    %2559 = vmatpush.bf16.msra.mxu0 %v2479
    %2560 = vmatpush.bf16.msra.mxu0 %v2475
    %2561 = vmatmul.bf16.gmra.mxu0 %v2407
    %v2562 = vpop.f32.mrf.mxu0
    %v2563 = vadd.f32 %v2509, %v2562
    %v2564 = vpop.f32.mrf.mxu0
    %v2565 = vadd.f32 %v2509, %v2564
    %2566 = vmatmul.bf16.gmra.mxu0 %v2408
    %v2567 = vpop.f32.mrf.mxu0
    %v2568 = vadd.f32 %v2509, %v2567
    %v2569 = vpop.f32.mrf.mxu0
    %v2570 = vadd.f32 %v2509, %v2569
    %2571 = vdwg.mxu0
    %2572 = vmatpush.bf16.msra.mxu0 %v2504
    %2573 = vmatpush.bf16.msra.mxu0 %v2500
    %2574 = vmatpush.bf16.msra.mxu0 %v2496
    %2575 = vmatpush.bf16.msra.mxu0 %v2492
    %2576 = vmatpush.bf16.msra.mxu0 %v2488
    %2577 = vmatpush.bf16.msra.mxu0 %v2484
    %2578 = vmatpush.bf16.msra.mxu0 %v2480
    %2579 = vmatpush.bf16.msra.mxu0 %v2476
    %2580 = vmatmul.bf16.gmra.mxu0 %v2407
    %v2581 = vpop.f32.mrf.mxu0
    %v2582 = vadd.f32 %v2510, %v2581
    %v2583 = vpop.f32.mrf.mxu0
    %v2584 = vadd.f32 %v2510, %v2583
    %2585 = vmatmul.bf16.gmra.mxu0 %v2408
    %v2586 = vpop.f32.mrf.mxu0
    %v2587 = vadd.f32 %v2510, %v2586
    %v2588 = vpop.f32.mrf.mxu0
    %v2589 = vadd.f32 %v2510, %v2588
    %2590 = vdwg.mxu0
    %v2591 = vmul.f32 %v2525, 0.5
    %v2592 = vmul.f32 %v2544, 0.5
    %v2593 = vmul.f32 %v2563, 0.5
    %v2594 = vmul.f32 %v2582, 0.5
    %v2595 = vmul.f32 %v2527, 0.5
    %v2596 = vmul.f32 %v2546, 0.5
    %v2597 = vmul.f32 %v2565, 0.5
    %v2598 = vmul.f32 %v2584, 0.5
    %v2599 = vmul.f32 %v2530, 0.5
    %v2600 = vmul.f32 %v2549, 0.5
    %v2601 = vmul.f32 %v2568, 0.5
    %v2602 = vmul.f32 %v2587, 0.5
    %v2603 = vmul.f32 %v2532, 0.5
    %v2604 = vmul.f32 %v2551, 0.5
    %v2605 = vmul.f32 %v2570, 0.5
    %v2606 = vmul.f32 %v2589, 0.5
    %v2607 = vmul.f32 %v2525, 0.044715
    %v2608 = vmul.f32 %v2544, 0.044715
    %v2609 = vmul.f32 %v2563, 0.044715
    %v2610 = vmul.f32 %v2582, 0.044715
    %v2611 = vmul.f32 %v2527, 0.044715
    %v2612 = vmul.f32 %v2546, 0.044715
    %v2613 = vmul.f32 %v2565, 0.044715
    %v2614 = vmul.f32 %v2584, 0.044715
    %v2615 = vmul.f32 %v2530, 0.044715
    %v2616 = vmul.f32 %v2549, 0.044715
    %v2617 = vmul.f32 %v2568, 0.044715
    %v2618 = vmul.f32 %v2587, 0.044715
    %v2619 = vmul.f32 %v2532, 0.044715
    %v2620 = vmul.f32 %v2551, 0.044715
    %v2621 = vmul.f32 %v2570, 0.044715
    %v2622 = vmul.f32 %v2589, 0.044715
    %v2623 = vmul.f32 %v2607, %v2525
    %v2624 = vmul.f32 %v2608, %v2544
    %v2625 = vmul.f32 %v2609, %v2563
    %v2626 = vmul.f32 %v2610, %v2582
    %v2627 = vmul.f32 %v2611, %v2527
    %v2628 = vmul.f32 %v2612, %v2546
    %v2629 = vmul.f32 %v2613, %v2565
    %v2630 = vmul.f32 %v2614, %v2584
    %v2631 = vmul.f32 %v2615, %v2530
    %v2632 = vmul.f32 %v2616, %v2549
    %v2633 = vmul.f32 %v2617, %v2568
    %v2634 = vmul.f32 %v2618, %v2587
    %v2635 = vmul.f32 %v2619, %v2532
    %v2636 = vmul.f32 %v2620, %v2551
    %v2637 = vmul.f32 %v2621, %v2570
    %v2638 = vmul.f32 %v2622, %v2589
    %v2639 = vmul.f32 %v2623, %v2525
    %v2640 = vmul.f32 %v2624, %v2544
    %v2641 = vmul.f32 %v2625, %v2563
    %v2642 = vmul.f32 %v2626, %v2582
    %v2643 = vmul.f32 %v2627, %v2527
    %v2644 = vmul.f32 %v2628, %v2546
    %v2645 = vmul.f32 %v2629, %v2565
    %v2646 = vmul.f32 %v2630, %v2584
    %v2647 = vmul.f32 %v2631, %v2530
    %v2648 = vmul.f32 %v2632, %v2549
    %v2649 = vmul.f32 %v2633, %v2568
    %v2650 = vmul.f32 %v2634, %v2587
    %v2651 = vmul.f32 %v2635, %v2532
    %v2652 = vmul.f32 %v2636, %v2551
    %v2653 = vmul.f32 %v2637, %v2570
    %v2654 = vmul.f32 %v2638, %v2589
    %v2655 = vadd.f32 %v2525, %v2639
    %v2656 = vadd.f32 %v2544, %v2640
    %v2657 = vadd.f32 %v2563, %v2641
    %v2658 = vadd.f32 %v2582, %v2642
    %v2659 = vadd.f32 %v2527, %v2643
    %v2660 = vadd.f32 %v2546, %v2644
    %v2661 = vadd.f32 %v2565, %v2645
    %v2662 = vadd.f32 %v2584, %v2646
    %v2663 = vadd.f32 %v2530, %v2647
    %v2664 = vadd.f32 %v2549, %v2648
    %v2665 = vadd.f32 %v2568, %v2649
    %v2666 = vadd.f32 %v2587, %v2650
    %v2667 = vadd.f32 %v2532, %v2651
    %v2668 = vadd.f32 %v2551, %v2652
    %v2669 = vadd.f32 %v2570, %v2653
    %v2670 = vadd.f32 %v2589, %v2654
    %v2671 = vmul.f32 %v2655, 0.7978846
    %v2672 = vmul.f32 %v2656, 0.7978846
    %v2673 = vmul.f32 %v2657, 0.7978846
    %v2674 = vmul.f32 %v2658, 0.7978846
    %v2675 = vmul.f32 %v2659, 0.7978846
    %v2676 = vmul.f32 %v2660, 0.7978846
    %v2677 = vmul.f32 %v2661, 0.7978846
    %v2678 = vmul.f32 %v2662, 0.7978846
    %v2679 = vmul.f32 %v2663, 0.7978846
    %v2680 = vmul.f32 %v2664, 0.7978846
    %v2681 = vmul.f32 %v2665, 0.7978846
    %v2682 = vmul.f32 %v2666, 0.7978846
    %v2683 = vmul.f32 %v2667, 0.7978846
    %v2684 = vmul.f32 %v2668, 0.7978846
    %v2685 = vmul.f32 %v2669, 0.7978846
    %v2686 = vmul.f32 %v2670, 0.7978846
    %v2687 = vtanh.pop %v2671
    %v2688 = vtanh.pop %v2672
    %v2689 = vtanh.pop %v2673
    %v2690 = vtanh.pop %v2674
    %v2691 = vtanh.pop %v2675
    %v2692 = vtanh.pop %v2676
    %v2693 = vtanh.pop %v2677
    %v2694 = vtanh.pop %v2678
    %v2695 = vtanh.pop %v2679
    %v2696 = vtanh.pop %v2680
    %v2697 = vtanh.pop %v2681
    %v2698 = vtanh.pop %v2682
    %v2699 = vtanh.pop %v2683
    %v2700 = vtanh.pop %v2684
    %v2701 = vtanh.pop %v2685
    %v2702 = vtanh.pop %v2686
    %v2703 = vadd.f32 %v2687, 1.0
    %v2704 = vadd.f32 %v2688, 1.0
    %v2705 = vadd.f32 %v2689, 1.0
    %v2706 = vadd.f32 %v2690, 1.0
    %v2707 = vadd.f32 %v2691, 1.0
    %v2708 = vadd.f32 %v2692, 1.0
    %v2709 = vadd.f32 %v2693, 1.0
    %v2710 = vadd.f32 %v2694, 1.0
    %v2711 = vadd.f32 %v2695, 1.0
    %v2712 = vadd.f32 %v2696, 1.0
    %v2713 = vadd.f32 %v2697, 1.0
    %v2714 = vadd.f32 %v2698, 1.0
    %v2715 = vadd.f32 %v2699, 1.0
    %v2716 = vadd.f32 %v2700, 1.0
    %v2717 = vadd.f32 %v2701, 1.0
    %v2718 = vadd.f32 %v2702, 1.0
    %v2719 = vmul.f32 %v2591, %v2703
    %v2720 = vmul.f32 %v2592, %v2704
    %v2721 = vmul.f32 %v2593, %v2705
    %v2722 = vmul.f32 %v2594, %v2706
    %v2723 = vmul.f32 %v2595, %v2707
    %v2724 = vmul.f32 %v2596, %v2708
    %v2725 = vmul.f32 %v2597, %v2709
    %v2726 = vmul.f32 %v2598, %v2710
    %v2727 = vmul.f32 %v2599, %v2711
    %v2728 = vmul.f32 %v2600, %v2712
    %v2729 = vmul.f32 %v2601, %v2713
    %v2730 = vmul.f32 %v2602, %v2714
    %v2731 = vmul.f32 %v2603, %v2715
    %v2732 = vmul.f32 %v2604, %v2716
    %v2733 = vmul.f32 %v2605, %v2717
    %v2734 = vmul.f32 %v2606, %v2718
    %v2735 = vpack.c.bf16 %v2723, %v2719
    %v2736 = vpack.c.bf16 %v2724, %v2720
    %v2737 = vpack.c.bf16 %v2725, %v2721
    %v2738 = vpack.c.bf16 %v2726, %v2722
    %v2739 = vpack.c.bf16 %v2731, %v2727
    %v2740 = vpack.c.bf16 %v2732, %v2728
    %v2741 = vpack.c.bf16 %v2733, %v2729
    %v2742 = vpack.c.bf16 %v2734, %v2730
    %v2743 = vld [vmem:[#allocation26] sm:$0xff]
    %v2744 = vld [vmem:[#allocation26 + $0x8] sm:$0xff]
    %v2745 = vld [vmem:[#allocation26 + $0x10] sm:$0xff]
    %v2746 = vld [vmem:[#allocation26 + $0x18] sm:$0xff]
    %v2747 = vld [vmem:[#allocation26 + $0x20] sm:$0xff]
    %v2748 = vld [vmem:[#allocation26 + $0x28] sm:$0xff]
    %v2749 = vld [vmem:[#allocation26 + $0x30] sm:$0xff]
    %v2750 = vld [vmem:[#allocation26 + $0x38] sm:$0xff]
    %v2751 = vld [vmem:[#allocation26 + $0x40] sm:$0xff]
    %v2752 = vld [vmem:[#allocation26 + $0x48] sm:$0xff]
    %v2753 = vld [vmem:[#allocation26 + $0x50] sm:$0xff]
    %v2754 = vld [vmem:[#allocation26 + $0x58] sm:$0xff]
    %v2755 = vld [vmem:[#allocation26 + $0x60] sm:$0xff]
    %v2756 = vld [vmem:[#allocation26 + $0x68] sm:$0xff]
    %v2757 = vld [vmem:[#allocation26 + $0x70] sm:$0xff]
    %v2758 = vld [vmem:[#allocation26 + $0x78] sm:$0xff]
    %v2759 = vld [vmem:[#allocation26 + $0x80] sm:$0xff]
    %v2760 = vld [vmem:[#allocation26 + $0x88] sm:$0xff]
    %v2761 = vld [vmem:[#allocation26 + $0x90] sm:$0xff]
    %v2762 = vld [vmem:[#allocation26 + $0x98] sm:$0xff]
    %v2763 = vld [vmem:[#allocation26 + $0xa0] sm:$0xff]
    %v2764 = vld [vmem:[#allocation26 + $0xa8] sm:$0xff]
    %v2765 = vld [vmem:[#allocation26 + $0xb0] sm:$0xff]
    %v2766 = vld [vmem:[#allocation26 + $0xb8] sm:$0xff]
    %v2767 = vld [vmem:[#allocation26 + $0xc0] sm:$0xff]
    %v2768 = vld [vmem:[#allocation26 + $0xc8] sm:$0xff]
    %v2769 = vld [vmem:[#allocation26 + $0xd0] sm:$0xff]
    %v2770 = vld [vmem:[#allocation26 + $0xd8] sm:$0xff]
    %v2771 = vld [vmem:[#allocation26 + $0xe0] sm:$0xff]
    %v2772 = vld [vmem:[#allocation26 + $0xe8] sm:$0xff]
    %v2773 = vld [vmem:[#allocation26 + $0xf0] sm:$0xff]
    %v2774 = vld [vmem:[#allocation26 + $0xf8] sm:$0xff]
    %v2775 = vld [vmem:[#allocation26 + $0x100] sm:$0xff]
    %v2776 = vld [vmem:[#allocation26 + $0x108] sm:$0xff]
    %v2777 = vld [vmem:[#allocation26 + $0x110] sm:$0xff]
    %v2778 = vld [vmem:[#allocation26 + $0x118] sm:$0xff]
    %v2779 = vld [vmem:[#allocation26 + $0x120] sm:$0xff]
    %v2780 = vld [vmem:[#allocation26 + $0x128] sm:$0xff]
    %v2781 = vld [vmem:[#allocation26 + $0x130] sm:$0xff]
    %v2782 = vld [vmem:[#allocation26 + $0x138] sm:$0xff]
    %v2783 = vld [vmem:[#allocation26 + $0x140] sm:$0xff]
    %v2784 = vld [vmem:[#allocation26 + $0x148] sm:$0xff]
    %v2785 = vld [vmem:[#allocation26 + $0x150] sm:$0xff]
    %v2786 = vld [vmem:[#allocation26 + $0x158] sm:$0xff]
    %v2787 = vld [vmem:[#allocation26 + $0x160] sm:$0xff]
    %v2788 = vld [vmem:[#allocation26 + $0x168] sm:$0xff]
    %v2789 = vld [vmem:[#allocation26 + $0x170] sm:$0xff]
    %v2790 = vld [vmem:[#allocation26 + $0x178] sm:$0xff]
    %v2791 = vld [vmem:[#allocation26 + $0x180] sm:$0xff]
    %v2792 = vld [vmem:[#allocation26 + $0x188] sm:$0xff]
    %v2793 = vld [vmem:[#allocation26 + $0x190] sm:$0xff]
    %v2794 = vld [vmem:[#allocation26 + $0x198] sm:$0xff]
    %v2795 = vld [vmem:[#allocation26 + $0x1a0] sm:$0xff]
    %v2796 = vld [vmem:[#allocation26 + $0x1a8] sm:$0xff]
    %v2797 = vld [vmem:[#allocation26 + $0x1b0] sm:$0xff]
    %v2798 = vld [vmem:[#allocation26 + $0x1b8] sm:$0xff]
    %v2799 = vld [vmem:[#allocation26 + $0x1c0] sm:$0xff]
    %v2800 = vld [vmem:[#allocation26 + $0x1c8] sm:$0xff]
    %v2801 = vld [vmem:[#allocation26 + $0x1d0] sm:$0xff]
    %v2802 = vld [vmem:[#allocation26 + $0x1d8] sm:$0xff]
    %v2803 = vld [vmem:[#allocation26 + $0x1e0] sm:$0xff]
    %v2804 = vld [vmem:[#allocation26 + $0x1e8] sm:$0xff]
    %v2805 = vld [vmem:[#allocation26 + $0x1f0] sm:$0xff]
    %v2806 = vld [vmem:[#allocation26 + $0x1f8] sm:$0xff]
    %v2807 = vpack.c.bf16 %v2744, %v2743
    %v2808 = vpack.c.bf16 %v2746, %v2745
    %v2809 = vpack.c.bf16 %v2748, %v2747
    %v2810 = vpack.c.bf16 %v2750, %v2749
    %v2811 = vpack.c.bf16 %v2752, %v2751
    %v2812 = vpack.c.bf16 %v2754, %v2753
    %v2813 = vpack.c.bf16 %v2756, %v2755
    %v2814 = vpack.c.bf16 %v2758, %v2757
    %v2815 = vpack.c.bf16 %v2760, %v2759
    %v2816 = vpack.c.bf16 %v2762, %v2761
    %v2817 = vpack.c.bf16 %v2764, %v2763
    %v2818 = vpack.c.bf16 %v2766, %v2765
    %v2819 = vpack.c.bf16 %v2768, %v2767
    %v2820 = vpack.c.bf16 %v2770, %v2769
    %v2821 = vpack.c.bf16 %v2772, %v2771
    %v2822 = vpack.c.bf16 %v2774, %v2773
    %v2823 = vpack.c.bf16 %v2776, %v2775
    %v2824 = vpack.c.bf16 %v2778, %v2777
    %v2825 = vpack.c.bf16 %v2780, %v2779
    %v2826 = vpack.c.bf16 %v2782, %v2781
    %v2827 = vpack.c.bf16 %v2784, %v2783
    %v2828 = vpack.c.bf16 %v2786, %v2785
    %v2829 = vpack.c.bf16 %v2788, %v2787
    %v2830 = vpack.c.bf16 %v2790, %v2789
    %v2831 = vpack.c.bf16 %v2792, %v2791
    %v2832 = vpack.c.bf16 %v2794, %v2793
    %v2833 = vpack.c.bf16 %v2796, %v2795
    %v2834 = vpack.c.bf16 %v2798, %v2797
    %v2835 = vpack.c.bf16 %v2800, %v2799
    %v2836 = vpack.c.bf16 %v2802, %v2801
    %v2837 = vpack.c.bf16 %v2804, %v2803
    %v2838 = vpack.c.bf16 %v2806, %v2805
    %v2839 = vld [vmem:[#allocation28] sm:$0x1]
    %v2840 = vperm.slane %v2839, 0
    %2841 = vmatpush.bf16.msra.mxu0 %v2814
    %2842 = vmatpush.bf16.msra.mxu0 %v2813
    %2843 = vmatpush.bf16.msra.mxu0 %v2812
    %2844 = vmatpush.bf16.msra.mxu0 %v2811
    %2845 = vmatpush.bf16.msra.mxu0 %v2810
    %2846 = vmatpush.bf16.msra.mxu0 %v2809
    %2847 = vmatpush.bf16.msra.mxu0 %v2808
    %2848 = vmatpush.bf16.msra.mxu0 %v2807
    %2849 = vmatmul.bf16.gmra.mxu0 %v2735
    %v2850 = vpop.f32.mrf.mxu0
    %v2851 = vadd.f32 %v2840, %v2850
    %v2852 = vpop.f32.mrf.mxu0
    %v2853 = vadd.f32 %v2840, %v2852
    %2854 = vmatmul.bf16.gmra.mxu0 %v2739
    %v2855 = vpop.f32.mrf.mxu0
    %v2856 = vadd.f32 %v2840, %v2855
    %v2857 = vpop.f32.mrf.mxu0
    %v2858 = vadd.f32 %v2840, %v2857
    %2859 = vdwg.mxu0
    %2860 = vmatpush.bf16.msra.mxu0 %v2822
    %2861 = vmatpush.bf16.msra.mxu0 %v2821
    %2862 = vmatpush.bf16.msra.mxu0 %v2820
    %2863 = vmatpush.bf16.msra.mxu0 %v2819
    %2864 = vmatpush.bf16.msra.mxu0 %v2818
    %2865 = vmatpush.bf16.msra.mxu0 %v2817
    %2866 = vmatpush.bf16.msra.mxu0 %v2816
    %2867 = vmatpush.bf16.msra.mxu0 %v2815
    %2868 = vmatmul.bf16.gmra.mxu0 %v2736
    %v2869 = vpop.f32.mrf.mxu0
    %v2870 = vadd.f32 %v2851, %v2869
    %v2871 = vpop.f32.mrf.mxu0
    %v2872 = vadd.f32 %v2853, %v2871
    %2873 = vmatmul.bf16.gmra.mxu0 %v2740
    %v2874 = vpop.f32.mrf.mxu0
    %v2875 = vadd.f32 %v2856, %v2874
    %v2876 = vpop.f32.mrf.mxu0
    %v2877 = vadd.f32 %v2858, %v2876
    %2878 = vdwg.mxu0
    %2879 = vmatpush.bf16.msra.mxu0 %v2830
    %2880 = vmatpush.bf16.msra.mxu0 %v2829
    %2881 = vmatpush.bf16.msra.mxu0 %v2828
    %2882 = vmatpush.bf16.msra.mxu0 %v2827
    %2883 = vmatpush.bf16.msra.mxu0 %v2826
    %2884 = vmatpush.bf16.msra.mxu0 %v2825
    %2885 = vmatpush.bf16.msra.mxu0 %v2824
    %2886 = vmatpush.bf16.msra.mxu0 %v2823
    %2887 = vmatmul.bf16.gmra.mxu0 %v2737
    %v2888 = vpop.f32.mrf.mxu0
    %v2889 = vadd.f32 %v2870, %v2888
    %v2890 = vpop.f32.mrf.mxu0
    %v2891 = vadd.f32 %v2872, %v2890
    %2892 = vmatmul.bf16.gmra.mxu0 %v2741
    %v2893 = vpop.f32.mrf.mxu0
    %v2894 = vadd.f32 %v2875, %v2893
    %v2895 = vpop.f32.mrf.mxu0
    %v2896 = vadd.f32 %v2877, %v2895
    %2897 = vdwg.mxu0
    %2898 = vmatpush.bf16.msra.mxu0 %v2838
    %2899 = vmatpush.bf16.msra.mxu0 %v2837
    %2900 = vmatpush.bf16.msra.mxu0 %v2836
    %2901 = vmatpush.bf16.msra.mxu0 %v2835
    %2902 = vmatpush.bf16.msra.mxu0 %v2834
    %2903 = vmatpush.bf16.msra.mxu0 %v2833
    %2904 = vmatpush.bf16.msra.mxu0 %v2832
    %2905 = vmatpush.bf16.msra.mxu0 %v2831
    %2906 = vmatmul.bf16.gmra.mxu0 %v2738
    %v2907 = vpop.f32.mrf.mxu0
    %v2908 = vadd.f32 %v2889, %v2907
    %v2909 = vpop.f32.mrf.mxu0
    %v2910 = vadd.f32 %v2891, %v2909
    %2911 = vmatmul.bf16.gmra.mxu0 %v2742
    %v2912 = vpop.f32.mrf.mxu0
    %v2913 = vadd.f32 %v2894, %v2912
    %v2914 = vpop.f32.mrf.mxu0
    %v2915 = vadd.f32 %v2896, %v2914
    %2916 = vdwg.mxu0
    %v2917 = vadd.f32 %v2311, %v2908
    %v2918 = vadd.f32 %v2312, %v2910
    %v2919 = vadd.f32 %v2313, %v2913
    %v2920 = vadd.f32 %v2314, %v2915
    %v2921 = vld [vmem:[%s3 + $0x1] sm:$0x1]
    %v2922 = vld [vmem:[%s4 + $0x1] sm:$0x1]
    %2923 = vadd.xlane.f32.xlu0 %v2917
    %v2924 = vpop.xlane.xlu0 %2923
    %2925 = vadd.xlane.f32.xlu0 %v2918
    %v2926 = vpop.xlane.xlu0 %2925
    %2927 = vadd.xlane.f32.xlu0 %v2919
    %v2928 = vpop.xlane.xlu0 %2927
    %2929 = vadd.xlane.f32.xlu0 %v2920
    %v2930 = vpop.xlane.xlu0 %2929
    %v2931 = vmul.f32 %v2924, %v374
    %v2932 = vmul.f32 %v2926, %v374
    %v2933 = vmul.f32 %v2928, %v374
    %v2934 = vmul.f32 %v2930, %v374
    %v2935 = vsub.f32 %v2917, %v2931
    %v2936 = vsub.f32 %v2918, %v2932
    %v2937 = vsub.f32 %v2919, %v2933
    %v2938 = vsub.f32 %v2920, %v2934
    %v2939 = vmul.f32 %v2935, %v2935
    %v2940 = vmul.f32 %v2936, %v2936
    %v2941 = vmul.f32 %v2937, %v2937
    %v2942 = vmul.f32 %v2938, %v2938
    %2943 = vadd.xlane.f32.xlu0 %v2939
    %v2944 = vpop.xlane.xlu0 %2943
    %2945 = vadd.xlane.f32.xlu0 %v2940
    %v2946 = vpop.xlane.xlu0 %2945
    %2947 = vadd.xlane.f32.xlu0 %v2941
    %v2948 = vpop.xlane.xlu0 %2947
    %2949 = vadd.xlane.f32.xlu0 %v2942
    %v2950 = vpop.xlane.xlu0 %2949
    %v2951 = vmul.f32 %v2944, %v374
    %v2952 = vmul.f32 %v2946, %v374
    %v2953 = vmul.f32 %v2948, %v374
    %v2954 = vmul.f32 %v2950, %v374
    %v2955 = vadd.f32 %v2951, 1e-05
    %v2956 = vadd.f32 %v2952, 1e-05
    %v2957 = vadd.f32 %v2953, 1e-05
    %v2958 = vadd.f32 %v2954, 1e-05
    %v2959 = vrsqrt.pop %v2955
    %v2960 = vmul.f32 %v2959, %v2955
    %v2961 = vmul.f32 %v2960, %v2959
    %v2962 = vmul.f32 0.5, %v2961
    %v2963 = vsub.f32 1.5, %v2962
    %v2964 = vmul.f32 %v2959, %v2963
    %vm2965 = vweird.f32 %v2955
    %vm2966 = vweird.f32 %v2959
    %vm2967 = vmor %vm2965, %vm2966
    %v2968 = vsel %vm2967, %v2959, %v2964
    %v2969 = vrsqrt.pop %v2956
    %v2970 = vmul.f32 %v2969, %v2956
    %v2971 = vmul.f32 %v2970, %v2969
    %v2972 = vmul.f32 0.5, %v2971
    %v2973 = vsub.f32 1.5, %v2972
    %v2974 = vmul.f32 %v2969, %v2973
    %vm2975 = vweird.f32 %v2956
    %vm2976 = vweird.f32 %v2969
    %vm2977 = vmor %vm2975, %vm2976
    %v2978 = vsel %vm2977, %v2969, %v2974
    %v2979 = vrsqrt.pop %v2957
    %v2980 = vmul.f32 %v2979, %v2957
    %v2981 = vmul.f32 %v2980, %v2979
    %v2982 = vmul.f32 0.5, %v2981
    %v2983 = vsub.f32 1.5, %v2982
    %v2984 = vmul.f32 %v2979, %v2983
    %vm2985 = vweird.f32 %v2957
    %vm2986 = vweird.f32 %v2979
    %vm2987 = vmor %vm2985, %vm2986
    %v2988 = vsel %vm2987, %v2979, %v2984
    %v2989 = vrsqrt.pop %v2958
    %v2990 = vmul.f32 %v2989, %v2958
    %v2991 = vmul.f32 %v2990, %v2989
    %v2992 = vmul.f32 0.5, %v2991
    %v2993 = vsub.f32 1.5, %v2992
    %v2994 = vmul.f32 %v2989, %v2993
    %vm2995 = vweird.f32 %v2958
    %vm2996 = vweird.f32 %v2989
    %vm2997 = vmor %vm2995, %vm2996
    %v2998 = vsel %vm2997, %v2989, %v2994
    %v2999 = vmul.f32 %v2935, %v2968
    %v3000 = vmul.f32 %v2936, %v2978
    %v3001 = vmul.f32 %v2937, %v2988
    %v3002 = vmul.f32 %v2938, %v2998
    %v3003 = vperm.slane %v2921, 0
    %v3004 = vmul.f32 %v2999, %v3003
    %v3005 = vmul.f32 %v3000, %v3003
    %v3006 = vmul.f32 %v3001, %v3003
    %v3007 = vmul.f32 %v3002, %v3003
    %v3008 = vperm.slane %v2922, 0
    %v3009 = vadd.f32 %v3004, %v3008
    %v3010 = vadd.f32 %v3005, %v3008
    %v3011 = vadd.f32 %v3006, %v3008
    %v3012 = vadd.f32 %v3007, %v3008
    %v3013 = vpack.c.bf16 %v3010, %v3009
    %v3014 = vpack.c.bf16 %v3012, %v3011
    %s3015 = scalar_lea.vmem [#allocation8], 384
    %v3016 = vld [vmem:[%s3015] sm:$0xff]
    %v3017 = vld [vmem:[%s3015 + $0x8] sm:$0xff]
    %v3018 = vld [vmem:[%s3015 + $0x10] sm:$0xff]
    %v3019 = vld [vmem:[%s3015 + $0x18] sm:$0xff]
    %v3020 = vld [vmem:[%s3015 + $0x20] sm:$0xff]
    %v3021 = vld [vmem:[%s3015 + $0x28] sm:$0xff]
    %v3022 = vld [vmem:[%s3015 + $0x30] sm:$0xff]
    %v3023 = vld [vmem:[%s3015 + $0x38] sm:$0xff]
    %v3024 = vld [vmem:[%s3015 + $0x40] sm:$0xff]
    %v3025 = vld [vmem:[%s3015 + $0x48] sm:$0xff]
    %v3026 = vld [vmem:[%s3015 + $0x50] sm:$0xff]
    %v3027 = vld [vmem:[%s3015 + $0x58] sm:$0xff]
    %v3028 = vld [vmem:[%s3015 + $0x60] sm:$0xff]
    %v3029 = vld [vmem:[%s3015 + $0x68] sm:$0xff]
    %v3030 = vld [vmem:[%s3015 + $0x70] sm:$0xff]
    %v3031 = vld [vmem:[%s3015 + $0x78] sm:$0xff]
    %v3032 = vld [vmem:[%s3015 + $0x80] sm:$0xff]
    %v3033 = vld [vmem:[%s3015 + $0x88] sm:$0xff]
    %v3034 = vld [vmem:[%s3015 + $0x90] sm:$0xff]
    %v3035 = vld [vmem:[%s3015 + $0x98] sm:$0xff]
    %v3036 = vld [vmem:[%s3015 + $0xa0] sm:$0xff]
    %v3037 = vld [vmem:[%s3015 + $0xa8] sm:$0xff]
    %v3038 = vld [vmem:[%s3015 + $0xb0] sm:$0xff]
    %v3039 = vld [vmem:[%s3015 + $0xb8] sm:$0xff]
    %v3040 = vld [vmem:[%s3015 + $0xc0] sm:$0xff]
    %v3041 = vld [vmem:[%s3015 + $0xc8] sm:$0xff]
    %v3042 = vld [vmem:[%s3015 + $0xd0] sm:$0xff]
    %v3043 = vld [vmem:[%s3015 + $0xd8] sm:$0xff]
    %v3044 = vld [vmem:[%s3015 + $0xe0] sm:$0xff]
    %v3045 = vld [vmem:[%s3015 + $0xe8] sm:$0xff]
    %v3046 = vld [vmem:[%s3015 + $0xf0] sm:$0xff]
    %v3047 = vld [vmem:[%s3015 + $0xf8] sm:$0xff]
    %v3048 = vld [vmem:[%s3015 + $0x100] sm:$0xff]
    %v3049 = vld [vmem:[%s3015 + $0x108] sm:$0xff]
    %v3050 = vld [vmem:[%s3015 + $0x110] sm:$0xff]
    %v3051 = vld [vmem:[%s3015 + $0x118] sm:$0xff]
    %v3052 = vld [vmem:[%s3015 + $0x120] sm:$0xff]
    %v3053 = vld [vmem:[%s3015 + $0x128] sm:$0xff]
    %v3054 = vld [vmem:[%s3015 + $0x130] sm:$0xff]
    %v3055 = vld [vmem:[%s3015 + $0x138] sm:$0xff]
    %v3056 = vld [vmem:[%s3015 + $0x140] sm:$0xff]
    %v3057 = vld [vmem:[%s3015 + $0x148] sm:$0xff]
    %v3058 = vld [vmem:[%s3015 + $0x150] sm:$0xff]
    %v3059 = vld [vmem:[%s3015 + $0x158] sm:$0xff]
    %v3060 = vld [vmem:[%s3015 + $0x160] sm:$0xff]
    %v3061 = vld [vmem:[%s3015 + $0x168] sm:$0xff]
    %v3062 = vld [vmem:[%s3015 + $0x170] sm:$0xff]
    %v3063 = vld [vmem:[%s3015 + $0x178] sm:$0xff]
    %v3064 = vpack.c.bf16 %v3019, %v3016
    %v3065 = vpack.c.bf16 %v3020, %v3017
    %v3066 = vpack.c.bf16 %v3021, %v3018
    %v3067 = vpack.c.bf16 %v3025, %v3022
    %v3068 = vpack.c.bf16 %v3026, %v3023
    %v3069 = vpack.c.bf16 %v3027, %v3024
    %v3070 = vpack.c.bf16 %v3031, %v3028
    %v3071 = vpack.c.bf16 %v3032, %v3029
    %v3072 = vpack.c.bf16 %v3033, %v3030
    %v3073 = vpack.c.bf16 %v3037, %v3034
    %v3074 = vpack.c.bf16 %v3038, %v3035
    %v3075 = vpack.c.bf16 %v3039, %v3036
    %v3076 = vpack.c.bf16 %v3043, %v3040
    %v3077 = vpack.c.bf16 %v3044, %v3041
    %v3078 = vpack.c.bf16 %v3045, %v3042
    %v3079 = vpack.c.bf16 %v3049, %v3046
    %v3080 = vpack.c.bf16 %v3050, %v3047
    %v3081 = vpack.c.bf16 %v3051, %v3048
    %v3082 = vpack.c.bf16 %v3055, %v3052
    %v3083 = vpack.c.bf16 %v3056, %v3053
    %v3084 = vpack.c.bf16 %v3057, %v3054
    %v3085 = vpack.c.bf16 %v3061, %v3058
    %v3086 = vpack.c.bf16 %v3062, %v3059
    %v3087 = vpack.c.bf16 %v3063, %v3060
    %3088 = vmatpush.bf16.msra.mxu0 %v3085
    %3089 = vmatpush.bf16.msra.mxu0 %v3082
    %3090 = vmatpush.bf16.msra.mxu0 %v3079
    %3091 = vmatpush.bf16.msra.mxu0 %v3076
    %3092 = vmatpush.bf16.msra.mxu0 %v3073
    %3093 = vmatpush.bf16.msra.mxu0 %v3070
    %3094 = vmatpush.bf16.msra.mxu0 %v3067
    %3095 = vmatpush.bf16.msra.mxu0 %v3064
    %3096 = vmatmul.bf16.gmra.mxu0 %v3013
    %v3097 = vpop.f32.mrf.mxu0
    %v3098 = vadd.f32 0.0, %v3097
    %v3099 = vpop.f32.mrf.mxu0
    %v3100 = vadd.f32 0.0, %v3099
    %3101 = vmatmul.bf16.gmra.mxu0 %v3014
    %v3102 = vpop.f32.mrf.mxu0
    %v3103 = vadd.f32 0.0, %v3102
    %v3104 = vpop.f32.mrf.mxu0
    %v3105 = vadd.f32 0.0, %v3104
    %3106 = vdwg.mxu0
    %3107 = vmatpush.bf16.msra.mxu0 %v3086
    %3108 = vmatpush.bf16.msra.mxu0 %v3083
    %3109 = vmatpush.bf16.msra.mxu0 %v3080
    %3110 = vmatpush.bf16.msra.mxu0 %v3077
    %3111 = vmatpush.bf16.msra.mxu0 %v3074
    %3112 = vmatpush.bf16.msra.mxu0 %v3071
    %3113 = vmatpush.bf16.msra.mxu0 %v3068
    %3114 = vmatpush.bf16.msra.mxu0 %v3065
    %3115 = vmatmul.bf16.gmra.mxu0 %v3013
    %v3116 = vpop.f32.mrf.mxu0
    %v3117 = vadd.f32 0.0, %v3116
    %v3118 = vpop.f32.mrf.mxu0
    %v3119 = vadd.f32 0.0, %v3118
    %3120 = vmatmul.bf16.gmra.mxu0 %v3014
    %v3121 = vpop.f32.mrf.mxu0
    %v3122 = vadd.f32 0.0, %v3121
    %v3123 = vpop.f32.mrf.mxu0
    %v3124 = vadd.f32 0.0, %v3123
    %3125 = vdwg.mxu0
    %3126 = vmatpush.bf16.msra.mxu0 %v3087
    %3127 = vmatpush.bf16.msra.mxu0 %v3084
    %3128 = vmatpush.bf16.msra.mxu0 %v3081
    %3129 = vmatpush.bf16.msra.mxu0 %v3078
    %3130 = vmatpush.bf16.msra.mxu0 %v3075
    %3131 = vmatpush.bf16.msra.mxu0 %v3072
    %3132 = vmatpush.bf16.msra.mxu0 %v3069
    %3133 = vmatpush.bf16.msra.mxu0 %v3066
    %3134 = vmatmul.bf16.gmra.mxu0 %v3013
    %v3135 = vpop.f32.mrf.mxu0
    %v3136 = vadd.f32 0.0, %v3135
    %v3137 = vpop.f32.mrf.mxu0
    %v3138 = vadd.f32 0.0, %v3137
    %3139 = vmatmul.bf16.gmra.mxu0 %v3014
    %v3140 = vpop.f32.mrf.mxu0
    %v3141 = vadd.f32 0.0, %v3140
    %v3142 = vpop.f32.mrf.mxu0
    %v3143 = vadd.f32 0.0, %v3142
    %3144 = vdwg.mxu0
    %v3145 = vpack.c.bf16 %v3117, %v3098
    %v3146 = vpack.c.bf16 %v3136, %v3136
    %v3147 = vpack.c.bf16 %v3119, %v3100
    %v3148 = vpack.c.bf16 %v3138, %v3138
    %v3149 = vpack.c.bf16 %v3122, %v3103
    %v3150 = vpack.c.bf16 %v3141, %v3141
    %v3151 = vpack.c.bf16 %v3124, %v3105
    %v3152 = vpack.c.bf16 %v3143, %v3143
    %v3155 = vunpack.c.l.b16 %v3145
    %v3156 = vunpack.c.l.b16 %v3147
    %v3157 = vpack.c.b16 %v3156, %v3155
    %v3158 = vunpack.c.h.b16 %v3145
    %v3159 = vunpack.c.h.b16 %v3147
    %v3160 = vpack.c.b16 %v3159, %v3158
    %v3162 = vsel %vm604, %v3157, 0
    %v3165 = vsel %vm604, %v3160, 0
    %3167 = vmatpush.bf16.xpose.msra.mxu0 0
    %3168 = vmatpush.bf16.xpose.msra.mxu0 0
    %3169 = vmatpush.bf16.xpose.msra.mxu0 0
    %3170 = vmatpush.bf16.xpose.msra.mxu0 0
    %3171 = vmatpush.bf16.xpose.msra.mxu0 0
    %3172 = vmatpush.bf16.xpose.msra.mxu0 0
    %3173 = vmatpush.bf16.xpose.msra.mxu0 0
    %3174 = vmatpush.bf16.xpose.msra.mxu0 %v3165
    %3175 = vmatmul.bf16.gmra.mxu0 %v3162
    %v3176 = vpop.f32.mrf.mxu0
    %v3177 = vadd.f32 0.0, %v3176
    %v3178 = vpop.f32.mrf.mxu0
    %v3179 = vadd.f32 0.0, %v3178
    %3180 = vdwg.mxu0
    %v3181 = vmul.f32 %v3177, 0.17677669
    %v3182 = vmul.f32 %v3179, 0.17677669
    %v3183 = vadd.f32 %v3181, %v350
    %v3184 = vadd.f32 %v3182, %v351
    %v3185 = vsel %vm629, %v3183, -inf
    %3186 = vmax.xlane.f32.xlu0 %v3185
    %v3187 = vpop.xlane.xlu0 %3186
    %v3188 = vsel %vm629, %v3184, -inf
    %3189 = vmax.xlane.f32.xlu0 %v3188
    %v3190 = vpop.xlane.xlu0 %3189
    %v3191 = vsub.f32 %v3183, %v3187
    %v3192 = vsub.f32 %v3184, %v3190
    %v3193 = vmul.f32 %v3191, 1.442695
    %v3194 = vpow.pop %v3193
    %v3195 = vmul.f32 %v3192, 1.442695
    %v3196 = vpow.pop %v3195
    %v3197 = vsel %vm629, %v3194, 0.0
    %3198 = vadd.xlane.f32.xlu0 %v3197
    %v3199 = vpop.xlane.xlu0 %3198
    %v3200 = vsel %vm629, %v3196, 0.0
    %3201 = vadd.xlane.f32.xlu0 %v3200
    %v3202 = vpop.xlane.xlu0 %3201
    %v3203 = vrcp.pop %v3199
    %v3204 = vrcp.pop %v3202
    %v3205 = vmul.f32 %v3194, %v3203
    %v3206 = vmul.f32 %v3196, %v3204
    %v3207 = vpack.c.bf16 %v3206, %v3205
    %v3210 = vunpack.c.l.b16 %v3146
    %v3211 = vunpack.c.l.b16 %v3148
    %v3212 = vpack.c.b16 %v3211, %v3210
    %v3215 = vsel %vm629, %v3207, 0
    %3217 = vmatpush.bf16.msra.mxu0 0
    %3218 = vmatpush.bf16.msra.mxu0 0
    %3219 = vmatpush.bf16.msra.mxu0 0
    %3220 = vmatpush.bf16.msra.mxu0 0
    %3221 = vmatpush.bf16.msra.mxu0 0
    %3222 = vmatpush.bf16.msra.mxu0 0
    %3223 = vmatpush.bf16.msra.mxu0 0
    %3224 = vmatpush.bf16.msra.mxu0 %v3212
    %3225 = vmatmul.bf16.gmra.mxu0 %v3215
    %v3226 = vpop.f32.mrf.mxu0
    %v3227 = vadd.f32 0.0, %v3226
    %v3228 = vpop.f32.mrf.mxu0
    %v3229 = vadd.f32 0.0, %v3228
    %3230 = vdwg.mxu0
    %3231 = vrot.lane.b32.xlu0 %v3157, 96
    %v3232 = vpop.permute.xlu0 %3231
    %3233 = vrot.lane.b32.xlu0 %v3160, 96
    %v3234 = vpop.permute.xlu0 %3233
    %v3236 = vsel %vm604, %v3232, 0
    %v3239 = vsel %vm604, %v3234, 0
    %3241 = vmatpush.bf16.xpose.msra.mxu0 0
    %3242 = vmatpush.bf16.xpose.msra.mxu0 0
    %3243 = vmatpush.bf16.xpose.msra.mxu0 0
    %3244 = vmatpush.bf16.xpose.msra.mxu0 0
    %3245 = vmatpush.bf16.xpose.msra.mxu0 0
    %3246 = vmatpush.bf16.xpose.msra.mxu0 0
    %3247 = vmatpush.bf16.xpose.msra.mxu0 0
    %3248 = vmatpush.bf16.xpose.msra.mxu0 %v3239
    %3249 = vmatmul.bf16.gmra.mxu0 %v3236
    %v3250 = vpop.f32.mrf.mxu0
    %v3251 = vadd.f32 0.0, %v3250
    %v3252 = vpop.f32.mrf.mxu0
    %v3253 = vadd.f32 0.0, %v3252
    %3254 = vdwg.mxu0
    %v3255 = vmul.f32 %v3251, 0.17677669
    %v3256 = vmul.f32 %v3253, 0.17677669
    %v3257 = vadd.f32 %v3255, %v352
    %v3258 = vadd.f32 %v3256, %v353
    %v3259 = vsel %vm629, %v3257, -inf
    %3260 = vmax.xlane.f32.xlu0 %v3259
    %v3261 = vpop.xlane.xlu0 %3260
    %v3262 = vsel %vm629, %v3258, -inf
    %3263 = vmax.xlane.f32.xlu0 %v3262
    %v3264 = vpop.xlane.xlu0 %3263
    %v3265 = vsub.f32 %v3257, %v3261
    %v3266 = vsub.f32 %v3258, %v3264
    %v3267 = vmul.f32 %v3265, 1.442695
    %v3268 = vpow.pop %v3267
    %v3269 = vmul.f32 %v3266, 1.442695
    %v3270 = vpow.pop %v3269
    %v3271 = vsel %vm629, %v3268, 0.0
    %3272 = vadd.xlane.f32.xlu0 %v3271
    %v3273 = vpop.xlane.xlu0 %3272
    %v3274 = vsel %vm629, %v3270, 0.0
    %3275 = vadd.xlane.f32.xlu0 %v3274
    %v3276 = vpop.xlane.xlu0 %3275
    %v3277 = vrcp.pop %v3273
    %v3278 = vrcp.pop %v3276
    %v3279 = vmul.f32 %v3268, %v3277
    %v3280 = vmul.f32 %v3270, %v3278
    %v3281 = vpack.c.bf16 %v3280, %v3279
    %3282 = vrot.lane.b32.xlu0 %v3212, 96
    %v3283 = vpop.permute.xlu0 %3282
    %v3286 = vsel %vm629, %v3281, 0
    %3288 = vmatpush.bf16.msra.mxu0 0
    %3289 = vmatpush.bf16.msra.mxu0 0
    %3290 = vmatpush.bf16.msra.mxu0 0
    %3291 = vmatpush.bf16.msra.mxu0 0
    %3292 = vmatpush.bf16.msra.mxu0 0
    %3293 = vmatpush.bf16.msra.mxu0 0
    %3294 = vmatpush.bf16.msra.mxu0 0
    %3295 = vmatpush.bf16.msra.mxu0 %v3283
    %3296 = vmatmul.bf16.gmra.mxu0 %v3286
    %v3297 = vpop.f32.mrf.mxu0
    %v3298 = vadd.f32 0.0, %v3297
    %v3299 = vpop.f32.mrf.mxu0
    %v3300 = vadd.f32 0.0, %v3299
    %3301 = vdwg.mxu0
    %3302 = vrot.lane.b32.xlu0 %v3157, 64
    %v3303 = vpop.permute.xlu0 %3302
    %3304 = vrot.lane.b32.xlu0 %v3160, 64
    %v3305 = vpop.permute.xlu0 %3304
    %v3307 = vsel %vm604, %v3303, 0
    %v3310 = vsel %vm604, %v3305, 0
    %3312 = vmatpush.bf16.xpose.msra.mxu0 0
    %3313 = vmatpush.bf16.xpose.msra.mxu0 0
    %3314 = vmatpush.bf16.xpose.msra.mxu0 0
    %3315 = vmatpush.bf16.xpose.msra.mxu0 0
    %3316 = vmatpush.bf16.xpose.msra.mxu0 0
    %3317 = vmatpush.bf16.xpose.msra.mxu0 0
    %3318 = vmatpush.bf16.xpose.msra.mxu0 0
    %3319 = vmatpush.bf16.xpose.msra.mxu0 %v3310
    %3320 = vmatmul.bf16.gmra.mxu0 %v3307
    %v3321 = vpop.f32.mrf.mxu0
    %v3322 = vadd.f32 0.0, %v3321
    %v3323 = vpop.f32.mrf.mxu0
    %v3324 = vadd.f32 0.0, %v3323
    %3325 = vdwg.mxu0
    %v3326 = vmul.f32 %v3322, 0.17677669
    %v3327 = vmul.f32 %v3324, 0.17677669
    %v3328 = vadd.f32 %v3326, %v354
    %v3329 = vadd.f32 %v3327, %v355
    %v3330 = vsel %vm629, %v3328, -inf
    %3331 = vmax.xlane.f32.xlu0 %v3330
    %v3332 = vpop.xlane.xlu0 %3331
    %v3333 = vsel %vm629, %v3329, -inf
    %3334 = vmax.xlane.f32.xlu0 %v3333
    %v3335 = vpop.xlane.xlu0 %3334
    %v3336 = vsub.f32 %v3328, %v3332
    %v3337 = vsub.f32 %v3329, %v3335
    %v3338 = vmul.f32 %v3336, 1.442695
    %v3339 = vpow.pop %v3338
    %v3340 = vmul.f32 %v3337, 1.442695
    %v3341 = vpow.pop %v3340
    %v3342 = vsel %vm629, %v3339, 0.0
    %3343 = vadd.xlane.f32.xlu0 %v3342
    %v3344 = vpop.xlane.xlu0 %3343
    %v3345 = vsel %vm629, %v3341, 0.0
    %3346 = vadd.xlane.f32.xlu0 %v3345
    %v3347 = vpop.xlane.xlu0 %3346
    %v3348 = vrcp.pop %v3344
    %v3349 = vrcp.pop %v3347
    %v3350 = vmul.f32 %v3339, %v3348
    %v3351 = vmul.f32 %v3341, %v3349
    %v3352 = vpack.c.bf16 %v3351, %v3350
    %3353 = vrot.lane.b32.xlu0 %v3212, 64
    %v3354 = vpop.permute.xlu0 %3353
    %v3357 = vsel %vm629, %v3352, 0
    %3359 = vmatpush.bf16.msra.mxu0 0
    %3360 = vmatpush.bf16.msra.mxu0 0
    %3361 = vmatpush.bf16.msra.mxu0 0
    %3362 = vmatpush.bf16.msra.mxu0 0
    %3363 = vmatpush.bf16.msra.mxu0 0
    %3364 = vmatpush.bf16.msra.mxu0 0
    %3365 = vmatpush.bf16.msra.mxu0 0
    %3366 = vmatpush.bf16.msra.mxu0 %v3354
    %3367 = vmatmul.bf16.gmra.mxu0 %v3357
    %v3368 = vpop.f32.mrf.mxu0
    %v3369 = vadd.f32 0.0, %v3368
    %v3370 = vpop.f32.mrf.mxu0
    %v3371 = vadd.f32 0.0, %v3370
    %3372 = vdwg.mxu0
    %3373 = vrot.lane.b32.xlu0 %v3157, 32
    %v3374 = vpop.permute.xlu0 %3373
    %3375 = vrot.lane.b32.xlu0 %v3160, 32
    %v3376 = vpop.permute.xlu0 %3375
    %v3378 = vsel %vm604, %v3374, 0
    %v3381 = vsel %vm604, %v3376, 0
    %3383 = vmatpush.bf16.xpose.msra.mxu0 0
    %3384 = vmatpush.bf16.xpose.msra.mxu0 0
    %3385 = vmatpush.bf16.xpose.msra.mxu0 0
    %3386 = vmatpush.bf16.xpose.msra.mxu0 0
    %3387 = vmatpush.bf16.xpose.msra.mxu0 0
    %3388 = vmatpush.bf16.xpose.msra.mxu0 0
    %3389 = vmatpush.bf16.xpose.msra.mxu0 0
    %3390 = vmatpush.bf16.xpose.msra.mxu0 %v3381
    %3391 = vmatmul.bf16.gmra.mxu0 %v3378
    %v3392 = vpop.f32.mrf.mxu0
    %v3393 = vadd.f32 0.0, %v3392
    %v3394 = vpop.f32.mrf.mxu0
    %v3395 = vadd.f32 0.0, %v3394
    %3396 = vdwg.mxu0
    %v3397 = vmul.f32 %v3393, 0.17677669
    %v3398 = vmul.f32 %v3395, 0.17677669
    %v3399 = vadd.f32 %v3397, %v356
    %v3400 = vadd.f32 %v3398, %v357
    %v3401 = vsel %vm629, %v3399, -inf
    %3402 = vmax.xlane.f32.xlu0 %v3401
    %v3403 = vpop.xlane.xlu0 %3402
    %v3404 = vsel %vm629, %v3400, -inf
    %3405 = vmax.xlane.f32.xlu0 %v3404
    %v3406 = vpop.xlane.xlu0 %3405
    %v3407 = vsub.f32 %v3399, %v3403
    %v3408 = vsub.f32 %v3400, %v3406
    %v3409 = vmul.f32 %v3407, 1.442695
    %v3410 = vpow.pop %v3409
    %v3411 = vmul.f32 %v3408, 1.442695
    %v3412 = vpow.pop %v3411
    %v3413 = vsel %vm629, %v3410, 0.0
    %3414 = vadd.xlane.f32.xlu0 %v3413
    %v3415 = vpop.xlane.xlu0 %3414
    %v3416 = vsel %vm629, %v3412, 0.0
    %3417 = vadd.xlane.f32.xlu0 %v3416
    %v3418 = vpop.xlane.xlu0 %3417
    %v3419 = vrcp.pop %v3415
    %v3420 = vrcp.pop %v3418
    %v3421 = vmul.f32 %v3410, %v3419
    %v3422 = vmul.f32 %v3412, %v3420
    %v3423 = vpack.c.bf16 %v3422, %v3421
    %3424 = vrot.lane.b32.xlu0 %v3212, 32
    %v3425 = vpop.permute.xlu0 %3424
    %v3428 = vsel %vm629, %v3423, 0
    %3430 = vmatpush.bf16.msra.mxu0 0
    %3431 = vmatpush.bf16.msra.mxu0 0
    %3432 = vmatpush.bf16.msra.mxu0 0
    %3433 = vmatpush.bf16.msra.mxu0 0
    %3434 = vmatpush.bf16.msra.mxu0 0
    %3435 = vmatpush.bf16.msra.mxu0 0
    %3436 = vmatpush.bf16.msra.mxu0 0
    %3437 = vmatpush.bf16.msra.mxu0 %v3425
    %3438 = vmatmul.bf16.gmra.mxu0 %v3428
    %v3439 = vpop.f32.mrf.mxu0
    %v3440 = vadd.f32 0.0, %v3439
    %v3441 = vpop.f32.mrf.mxu0
    %v3442 = vadd.f32 0.0, %v3441
    %3443 = vdwg.mxu0
    %3446 = vrot.lane.b32.xlu0 %v3298, 32
    %v3447 = vpop.permute.xlu0 %3446
    %3448 = vrot.lane.b32.xlu0 %v3300, 32
    %v3449 = vpop.permute.xlu0 %3448
    %3454 = vrot.lane.b32.xlu0 %v3369, 64
    %v3455 = vpop.permute.xlu0 %3454
    %3456 = vrot.lane.b32.xlu0 %v3371, 64
    %v3457 = vpop.permute.xlu0 %3456
    %3462 = vrot.lane.b32.xlu0 %v3440, 96
    %v3463 = vpop.permute.xlu0 %3462
    %3464 = vrot.lane.b32.xlu0 %v3442, 96
    %v3465 = vpop.permute.xlu0 %3464
    %v3468 = vsel %vm604, %v3227, %v3447
    %v3469 = vsel %vm604, %v3229, %v3449
    %v3470 = vsel %vm915, %v3468, %v3455
    %v3471 = vsel %vm915, %v3469, %v3457
    %v3472 = vsel %vm918, %v3470, %v3463
    %v3473 = vsel %vm918, %v3471, %v3465
    %v3476 = vunpack.c.l.b16 %v3149
    %v3477 = vunpack.c.l.b16 %v3151
    %v3478 = vpack.c.b16 %v3477, %v3476
    %v3479 = vunpack.c.h.b16 %v3149
    %v3480 = vunpack.c.h.b16 %v3151
    %v3481 = vpack.c.b16 %v3480, %v3479
    %v3483 = vsel %vm604, %v3478, 0
    %v3486 = vsel %vm604, %v3481, 0
    %3488 = vmatpush.bf16.xpose.msra.mxu0 0
    %3489 = vmatpush.bf16.xpose.msra.mxu0 0
    %3490 = vmatpush.bf16.xpose.msra.mxu0 0
    %3491 = vmatpush.bf16.xpose.msra.mxu0 0
    %3492 = vmatpush.bf16.xpose.msra.mxu0 0
    %3493 = vmatpush.bf16.xpose.msra.mxu0 0
    %3494 = vmatpush.bf16.xpose.msra.mxu0 0
    %3495 = vmatpush.bf16.xpose.msra.mxu0 %v3486
    %3496 = vmatmul.bf16.gmra.mxu0 %v3483
    %v3497 = vpop.f32.mrf.mxu0
    %v3498 = vadd.f32 0.0, %v3497
    %v3499 = vpop.f32.mrf.mxu0
    %v3500 = vadd.f32 0.0, %v3499
    %3501 = vdwg.mxu0
    %v3502 = vmul.f32 %v3498, 0.17677669
    %v3503 = vmul.f32 %v3500, 0.17677669
    %v3504 = vadd.f32 %v3502, %v350
    %v3505 = vadd.f32 %v3503, %v351
    %v3506 = vsel %vm629, %v3504, -inf
    %3507 = vmax.xlane.f32.xlu0 %v3506
    %v3508 = vpop.xlane.xlu0 %3507
    %v3509 = vsel %vm629, %v3505, -inf
    %3510 = vmax.xlane.f32.xlu0 %v3509
    %v3511 = vpop.xlane.xlu0 %3510
    %v3512 = vsub.f32 %v3504, %v3508
    %v3513 = vsub.f32 %v3505, %v3511
    %v3514 = vmul.f32 %v3512, 1.442695
    %v3515 = vpow.pop %v3514
    %v3516 = vmul.f32 %v3513, 1.442695
    %v3517 = vpow.pop %v3516
    %v3518 = vsel %vm629, %v3515, 0.0
    %3519 = vadd.xlane.f32.xlu0 %v3518
    %v3520 = vpop.xlane.xlu0 %3519
    %v3521 = vsel %vm629, %v3517, 0.0
    %3522 = vadd.xlane.f32.xlu0 %v3521
    %v3523 = vpop.xlane.xlu0 %3522
    %v3524 = vrcp.pop %v3520
    %v3525 = vrcp.pop %v3523
    %v3526 = vmul.f32 %v3515, %v3524
    %v3527 = vmul.f32 %v3517, %v3525
    %v3528 = vpack.c.bf16 %v3527, %v3526
    %v3531 = vunpack.c.l.b16 %v3150
    %v3532 = vunpack.c.l.b16 %v3152
    %v3533 = vpack.c.b16 %v3532, %v3531
    %v3536 = vsel %vm629, %v3528, 0
    %3538 = vmatpush.bf16.msra.mxu0 0
    %3539 = vmatpush.bf16.msra.mxu0 0
    %3540 = vmatpush.bf16.msra.mxu0 0
    %3541 = vmatpush.bf16.msra.mxu0 0
    %3542 = vmatpush.bf16.msra.mxu0 0
    %3543 = vmatpush.bf16.msra.mxu0 0
    %3544 = vmatpush.bf16.msra.mxu0 0
    %3545 = vmatpush.bf16.msra.mxu0 %v3533
    %3546 = vmatmul.bf16.gmra.mxu0 %v3536
    %v3547 = vpop.f32.mrf.mxu0
    %v3548 = vadd.f32 0.0, %v3547
    %v3549 = vpop.f32.mrf.mxu0
    %v3550 = vadd.f32 0.0, %v3549
    %3551 = vdwg.mxu0
    %3552 = vrot.lane.b32.xlu0 %v3478, 96
    %v3553 = vpop.permute.xlu0 %3552
    %3554 = vrot.lane.b32.xlu0 %v3481, 96
    %v3555 = vpop.permute.xlu0 %3554
    %v3557 = vsel %vm604, %v3553, 0
    %v3560 = vsel %vm604, %v3555, 0
    %3562 = vmatpush.bf16.xpose.msra.mxu0 0
    %3563 = vmatpush.bf16.xpose.msra.mxu0 0
    %3564 = vmatpush.bf16.xpose.msra.mxu0 0
    %3565 = vmatpush.bf16.xpose.msra.mxu0 0
    %3566 = vmatpush.bf16.xpose.msra.mxu0 0
    %3567 = vmatpush.bf16.xpose.msra.mxu0 0
    %3568 = vmatpush.bf16.xpose.msra.mxu0 0
    %3569 = vmatpush.bf16.xpose.msra.mxu0 %v3560
    %3570 = vmatmul.bf16.gmra.mxu0 %v3557
    %v3571 = vpop.f32.mrf.mxu0
    %v3572 = vadd.f32 0.0, %v3571
    %v3573 = vpop.f32.mrf.mxu0
    %v3574 = vadd.f32 0.0, %v3573
    %3575 = vdwg.mxu0
    %v3576 = vmul.f32 %v3572, 0.17677669
    %v3577 = vmul.f32 %v3574, 0.17677669
    %v3578 = vadd.f32 %v3576, %v352
    %v3579 = vadd.f32 %v3577, %v353
    %v3580 = vsel %vm629, %v3578, -inf
    %3581 = vmax.xlane.f32.xlu0 %v3580
    %v3582 = vpop.xlane.xlu0 %3581
    %v3583 = vsel %vm629, %v3579, -inf
    %3584 = vmax.xlane.f32.xlu0 %v3583
    %v3585 = vpop.xlane.xlu0 %3584
    %v3586 = vsub.f32 %v3578, %v3582
    %v3587 = vsub.f32 %v3579, %v3585
    %v3588 = vmul.f32 %v3586, 1.442695
    %v3589 = vpow.pop %v3588
    %v3590 = vmul.f32 %v3587, 1.442695
    %v3591 = vpow.pop %v3590
    %v3592 = vsel %vm629, %v3589, 0.0
    %3593 = vadd.xlane.f32.xlu0 %v3592
    %v3594 = vpop.xlane.xlu0 %3593
    %v3595 = vsel %vm629, %v3591, 0.0
    %3596 = vadd.xlane.f32.xlu0 %v3595
    %v3597 = vpop.xlane.xlu0 %3596
    %v3598 = vrcp.pop %v3594
    %v3599 = vrcp.pop %v3597
    %v3600 = vmul.f32 %v3589, %v3598
    %v3601 = vmul.f32 %v3591, %v3599
    %v3602 = vpack.c.bf16 %v3601, %v3600
    %3603 = vrot.lane.b32.xlu0 %v3533, 96
    %v3604 = vpop.permute.xlu0 %3603
    %v3607 = vsel %vm629, %v3602, 0
    %3609 = vmatpush.bf16.msra.mxu0 0
    %3610 = vmatpush.bf16.msra.mxu0 0
    %3611 = vmatpush.bf16.msra.mxu0 0
    %3612 = vmatpush.bf16.msra.mxu0 0
    %3613 = vmatpush.bf16.msra.mxu0 0
    %3614 = vmatpush.bf16.msra.mxu0 0
    %3615 = vmatpush.bf16.msra.mxu0 0
    %3616 = vmatpush.bf16.msra.mxu0 %v3604
    %3617 = vmatmul.bf16.gmra.mxu0 %v3607
    %v3618 = vpop.f32.mrf.mxu0
    %v3619 = vadd.f32 0.0, %v3618
    %v3620 = vpop.f32.mrf.mxu0
    %v3621 = vadd.f32 0.0, %v3620
    %3622 = vdwg.mxu0
    %3623 = vrot.lane.b32.xlu0 %v3478, 64
    %v3624 = vpop.permute.xlu0 %3623
    %3625 = vrot.lane.b32.xlu0 %v3481, 64
    %v3626 = vpop.permute.xlu0 %3625
    %v3628 = vsel %vm604, %v3624, 0
    %v3631 = vsel %vm604, %v3626, 0
    %3633 = vmatpush.bf16.xpose.msra.mxu0 0
    %3634 = vmatpush.bf16.xpose.msra.mxu0 0
    %3635 = vmatpush.bf16.xpose.msra.mxu0 0
    %3636 = vmatpush.bf16.xpose.msra.mxu0 0
    %3637 = vmatpush.bf16.xpose.msra.mxu0 0
    %3638 = vmatpush.bf16.xpose.msra.mxu0 0
    %3639 = vmatpush.bf16.xpose.msra.mxu0 0
    %3640 = vmatpush.bf16.xpose.msra.mxu0 %v3631
    %3641 = vmatmul.bf16.gmra.mxu0 %v3628
    %v3642 = vpop.f32.mrf.mxu0
    %v3643 = vadd.f32 0.0, %v3642
    %v3644 = vpop.f32.mrf.mxu0
    %v3645 = vadd.f32 0.0, %v3644
    %3646 = vdwg.mxu0
    %v3647 = vmul.f32 %v3643, 0.17677669
    %v3648 = vmul.f32 %v3645, 0.17677669
    %v3649 = vadd.f32 %v3647, %v354
    %v3650 = vadd.f32 %v3648, %v355
    %v3651 = vsel %vm629, %v3649, -inf
    %3652 = vmax.xlane.f32.xlu0 %v3651
    %v3653 = vpop.xlane.xlu0 %3652
    %v3654 = vsel %vm629, %v3650, -inf
    %3655 = vmax.xlane.f32.xlu0 %v3654
    %v3656 = vpop.xlane.xlu0 %3655
    %v3657 = vsub.f32 %v3649, %v3653
    %v3658 = vsub.f32 %v3650, %v3656
    %v3659 = vmul.f32 %v3657, 1.442695
    %v3660 = vpow.pop %v3659
    %v3661 = vmul.f32 %v3658, 1.442695
    %v3662 = vpow.pop %v3661
    %v3663 = vsel %vm629, %v3660, 0.0
    %3664 = vadd.xlane.f32.xlu0 %v3663
    %v3665 = vpop.xlane.xlu0 %3664
    %v3666 = vsel %vm629, %v3662, 0.0
    %3667 = vadd.xlane.f32.xlu0 %v3666
    %v3668 = vpop.xlane.xlu0 %3667
    %v3669 = vrcp.pop %v3665
    %v3670 = vrcp.pop %v3668
    %v3671 = vmul.f32 %v3660, %v3669
    %v3672 = vmul.f32 %v3662, %v3670
    %v3673 = vpack.c.bf16 %v3672, %v3671
    %3674 = vrot.lane.b32.xlu0 %v3533, 64
    %v3675 = vpop.permute.xlu0 %3674
    %v3678 = vsel %vm629, %v3673, 0
    %3680 = vmatpush.bf16.msra.mxu0 0
    %3681 = vmatpush.bf16.msra.mxu0 0
    %3682 = vmatpush.bf16.msra.mxu0 0
    %3683 = vmatpush.bf16.msra.mxu0 0
    %3684 = vmatpush.bf16.msra.mxu0 0
    %3685 = vmatpush.bf16.msra.mxu0 0
    %3686 = vmatpush.bf16.msra.mxu0 0
    %3687 = vmatpush.bf16.msra.mxu0 %v3675
    %3688 = vmatmul.bf16.gmra.mxu0 %v3678
    %v3689 = vpop.f32.mrf.mxu0
    %v3690 = vadd.f32 0.0, %v3689
    %v3691 = vpop.f32.mrf.mxu0
    %v3692 = vadd.f32 0.0, %v3691
    %3693 = vdwg.mxu0
    %3694 = vrot.lane.b32.xlu0 %v3478, 32
    %v3695 = vpop.permute.xlu0 %3694
    %3696 = vrot.lane.b32.xlu0 %v3481, 32
    %v3697 = vpop.permute.xlu0 %3696
    %v3699 = vsel %vm604, %v3695, 0
    %v3702 = vsel %vm604, %v3697, 0
    %3704 = vmatpush.bf16.xpose.msra.mxu0 0
    %3705 = vmatpush.bf16.xpose.msra.mxu0 0
    %3706 = vmatpush.bf16.xpose.msra.mxu0 0
    %3707 = vmatpush.bf16.xpose.msra.mxu0 0
    %3708 = vmatpush.bf16.xpose.msra.mxu0 0
    %3709 = vmatpush.bf16.xpose.msra.mxu0 0
    %3710 = vmatpush.bf16.xpose.msra.mxu0 0
    %3711 = vmatpush.bf16.xpose.msra.mxu0 %v3702
    %3712 = vmatmul.bf16.gmra.mxu0 %v3699
    %v3713 = vpop.f32.mrf.mxu0
    %v3714 = vadd.f32 0.0, %v3713
    %v3715 = vpop.f32.mrf.mxu0
    %v3716 = vadd.f32 0.0, %v3715
    %3717 = vdwg.mxu0
    %v3718 = vmul.f32 %v3714, 0.17677669
    %v3719 = vmul.f32 %v3716, 0.17677669
    %v3720 = vadd.f32 %v3718, %v356
    %v3721 = vadd.f32 %v3719, %v357
    %v3722 = vsel %vm629, %v3720, -inf
    %3723 = vmax.xlane.f32.xlu0 %v3722
    %v3724 = vpop.xlane.xlu0 %3723
    %v3725 = vsel %vm629, %v3721, -inf
    %3726 = vmax.xlane.f32.xlu0 %v3725
    %v3727 = vpop.xlane.xlu0 %3726
    %v3728 = vsub.f32 %v3720, %v3724
    %v3729 = vsub.f32 %v3721, %v3727
    %v3730 = vmul.f32 %v3728, 1.442695
    %v3731 = vpow.pop %v3730
    %v3732 = vmul.f32 %v3729, 1.442695
    %v3733 = vpow.pop %v3732
    %v3734 = vsel %vm629, %v3731, 0.0
    %3735 = vadd.xlane.f32.xlu0 %v3734
    %v3736 = vpop.xlane.xlu0 %3735
    %v3737 = vsel %vm629, %v3733, 0.0
    %3738 = vadd.xlane.f32.xlu0 %v3737
    %v3739 = vpop.xlane.xlu0 %3738
    %v3740 = vrcp.pop %v3736
    %v3741 = vrcp.pop %v3739
    %v3742 = vmul.f32 %v3731, %v3740
    %v3743 = vmul.f32 %v3733, %v3741
    %v3744 = vpack.c.bf16 %v3743, %v3742
    %3745 = vrot.lane.b32.xlu0 %v3533, 32
    %v3746 = vpop.permute.xlu0 %3745
    %v3749 = vsel %vm629, %v3744, 0
    %3751 = vmatpush.bf16.msra.mxu0 0
    %3752 = vmatpush.bf16.msra.mxu0 0
    %3753 = vmatpush.bf16.msra.mxu0 0
    %3754 = vmatpush.bf16.msra.mxu0 0
    %3755 = vmatpush.bf16.msra.mxu0 0
    %3756 = vmatpush.bf16.msra.mxu0 0
    %3757 = vmatpush.bf16.msra.mxu0 0
    %3758 = vmatpush.bf16.msra.mxu0 %v3746
    %3759 = vmatmul.bf16.gmra.mxu0 %v3749
    %v3760 = vpop.f32.mrf.mxu0
    %v3761 = vadd.f32 0.0, %v3760
    %v3762 = vpop.f32.mrf.mxu0
    %v3763 = vadd.f32 0.0, %v3762
    %3764 = vdwg.mxu0
    %3767 = vrot.lane.b32.xlu0 %v3619, 32
    %v3768 = vpop.permute.xlu0 %3767
    %3769 = vrot.lane.b32.xlu0 %v3621, 32
    %v3770 = vpop.permute.xlu0 %3769
    %3775 = vrot.lane.b32.xlu0 %v3690, 64
    %v3776 = vpop.permute.xlu0 %3775
    %3777 = vrot.lane.b32.xlu0 %v3692, 64
    %v3778 = vpop.permute.xlu0 %3777
    %3783 = vrot.lane.b32.xlu0 %v3761, 96
    %v3784 = vpop.permute.xlu0 %3783
    %3785 = vrot.lane.b32.xlu0 %v3763, 96
    %v3786 = vpop.permute.xlu0 %3785
    %v3789 = vsel %vm604, %v3548, %v3768
    %v3790 = vsel %vm604, %v3550, %v3770
    %v3791 = vsel %vm915, %v3789, %v3776
    %v3792 = vsel %vm915, %v3790, %v3778
    %v3793 = vsel %vm918, %v3791, %v3784
    %v3794 = vsel %vm918, %v3792, %v3786
    %v3795 = vpack.c.bf16 %v3473, %v3472
    %v3796 = vpack.c.bf16 %v3794, %v3793
    %s3797 = scalar_lea.vmem [#allocation10], 128
    %v3798 = vld [vmem:[%s3797] sm:$0xff]
    %v3799 = vld [vmem:[%s3797 + $0x8] sm:$0xff]
    %v3800 = vld [vmem:[%s3797 + $0x10] sm:$0xff]
    %v3801 = vld [vmem:[%s3797 + $0x18] sm:$0xff]
    %v3802 = vld [vmem:[%s3797 + $0x20] sm:$0xff]
    %v3803 = vld [vmem:[%s3797 + $0x28] sm:$0xff]
    %v3804 = vld [vmem:[%s3797 + $0x30] sm:$0xff]
    %v3805 = vld [vmem:[%s3797 + $0x38] sm:$0xff]
    %v3806 = vld [vmem:[%s3797 + $0x40] sm:$0xff]
    %v3807 = vld [vmem:[%s3797 + $0x48] sm:$0xff]
    %v3808 = vld [vmem:[%s3797 + $0x50] sm:$0xff]
    %v3809 = vld [vmem:[%s3797 + $0x58] sm:$0xff]
    %v3810 = vld [vmem:[%s3797 + $0x60] sm:$0xff]
    %v3811 = vld [vmem:[%s3797 + $0x68] sm:$0xff]
    %v3812 = vld [vmem:[%s3797 + $0x70] sm:$0xff]
    %v3813 = vld [vmem:[%s3797 + $0x78] sm:$0xff]
    %v3814 = vpack.c.bf16 %v3799, %v3798
    %v3815 = vpack.c.bf16 %v3801, %v3800
    %v3816 = vpack.c.bf16 %v3803, %v3802
    %v3817 = vpack.c.bf16 %v3805, %v3804
    %v3818 = vpack.c.bf16 %v3807, %v3806
    %v3819 = vpack.c.bf16 %v3809, %v3808
    %v3820 = vpack.c.bf16 %v3811, %v3810
    %v3821 = vpack.c.bf16 %v3813, %v3812
    %v3822 = vld [vmem:[%s7 + $0x1] sm:$0x1]
    %v3823 = vperm.slane %v3822, 0
    %3824 = vmatpush.bf16.msra.mxu0 %v3821
    %3825 = vmatpush.bf16.msra.mxu0 %v3820
    %3826 = vmatpush.bf16.msra.mxu0 %v3819
    %3827 = vmatpush.bf16.msra.mxu0 %v3818
    %3828 = vmatpush.bf16.msra.mxu0 %v3817
    %3829 = vmatpush.bf16.msra.mxu0 %v3816
    %3830 = vmatpush.bf16.msra.mxu0 %v3815
    %3831 = vmatpush.bf16.msra.mxu0 %v3814
    %3832 = vmatmul.bf16.gmra.mxu0 %v3795
    %v3833 = vpop.f32.mrf.mxu0
    %v3834 = vadd.f32 %v3823, %v3833
    %v3835 = vpop.f32.mrf.mxu0
    %v3836 = vadd.f32 %v3823, %v3835
    %3837 = vmatmul.bf16.gmra.mxu0 %v3796
    %v3838 = vpop.f32.mrf.mxu0
    %v3839 = vadd.f32 %v3823, %v3838
    %v3840 = vpop.f32.mrf.mxu0
    %v3841 = vadd.f32 %v3823, %v3840
    %3842 = vdwg.mxu0
    %v3843 = vadd.f32 %v2917, %v3834
    %v3844 = vadd.f32 %v2918, %v3836
    %v3845 = vadd.f32 %v2919, %v3839
    %v3846 = vadd.f32 %v2920, %v3841
    %v3847 = vld [vmem:[#allocation11 + $0x1] sm:$0x1]
    %v3848 = vld [vmem:[#allocation13 + $0x1] sm:$0x1]
    %3849 = vadd.xlane.f32.xlu0 %v3843
    %v3850 = vpop.xlane.xlu0 %3849
    %3851 = vadd.xlane.f32.xlu0 %v3844
    %v3852 = vpop.xlane.xlu0 %3851
    %3853 = vadd.xlane.f32.xlu0 %v3845
    %v3854 = vpop.xlane.xlu0 %3853
    %3855 = vadd.xlane.f32.xlu0 %v3846
    %v3856 = vpop.xlane.xlu0 %3855
    %v3857 = vmul.f32 %v3850, %v374
    %v3858 = vmul.f32 %v3852, %v374
    %v3859 = vmul.f32 %v3854, %v374
    %v3860 = vmul.f32 %v3856, %v374
    %v3861 = vsub.f32 %v3843, %v3857
    %v3862 = vsub.f32 %v3844, %v3858
    %v3863 = vsub.f32 %v3845, %v3859
    %v3864 = vsub.f32 %v3846, %v3860
    %v3865 = vmul.f32 %v3861, %v3861
    %v3866 = vmul.f32 %v3862, %v3862
    %v3867 = vmul.f32 %v3863, %v3863
    %v3868 = vmul.f32 %v3864, %v3864
    %3869 = vadd.xlane.f32.xlu0 %v3865
    %v3870 = vpop.xlane.xlu0 %3869
    %3871 = vadd.xlane.f32.xlu0 %v3866
    %v3872 = vpop.xlane.xlu0 %3871
    %3873 = vadd.xlane.f32.xlu0 %v3867
    %v3874 = vpop.xlane.xlu0 %3873
    %3875 = vadd.xlane.f32.xlu0 %v3868
    %v3876 = vpop.xlane.xlu0 %3875
    %v3877 = vmul.f32 %v3870, %v374
    %v3878 = vmul.f32 %v3872, %v374
    %v3879 = vmul.f32 %v3874, %v374
    %v3880 = vmul.f32 %v3876, %v374
    %v3881 = vadd.f32 %v3877, 1e-05
    %v3882 = vadd.f32 %v3878, 1e-05
    %v3883 = vadd.f32 %v3879, 1e-05
    %v3884 = vadd.f32 %v3880, 1e-05
    %v3885 = vrsqrt.pop %v3881
    %v3886 = vmul.f32 %v3885, %v3881
    %v3887 = vmul.f32 %v3886, %v3885
    %v3888 = vmul.f32 0.5, %v3887
    %v3889 = vsub.f32 1.5, %v3888
    %v3890 = vmul.f32 %v3885, %v3889
    %vm3891 = vweird.f32 %v3881
    %vm3892 = vweird.f32 %v3885
    %vm3893 = vmor %vm3891, %vm3892
    %v3894 = vsel %vm3893, %v3885, %v3890
    %v3895 = vrsqrt.pop %v3882
    %v3896 = vmul.f32 %v3895, %v3882
    %v3897 = vmul.f32 %v3896, %v3895
    %v3898 = vmul.f32 0.5, %v3897
    %v3899 = vsub.f32 1.5, %v3898
    %v3900 = vmul.f32 %v3895, %v3899
    %vm3901 = vweird.f32 %v3882
    %vm3902 = vweird.f32 %v3895
    %vm3903 = vmor %vm3901, %vm3902
    %v3904 = vsel %vm3903, %v3895, %v3900
    %v3905 = vrsqrt.pop %v3883
    %v3906 = vmul.f32 %v3905, %v3883
    %v3907 = vmul.f32 %v3906, %v3905
    %v3908 = vmul.f32 0.5, %v3907
    %v3909 = vsub.f32 1.5, %v3908
    %v3910 = vmul.f32 %v3905, %v3909
    %vm3911 = vweird.f32 %v3883
    %vm3912 = vweird.f32 %v3905
    %vm3913 = vmor %vm3911, %vm3912
    %v3914 = vsel %vm3913, %v3905, %v3910
    %v3915 = vrsqrt.pop %v3884
    %v3916 = vmul.f32 %v3915, %v3884
    %v3917 = vmul.f32 %v3916, %v3915
    %v3918 = vmul.f32 0.5, %v3917
    %v3919 = vsub.f32 1.5, %v3918
    %v3920 = vmul.f32 %v3915, %v3919
    %vm3921 = vweird.f32 %v3884
    %vm3922 = vweird.f32 %v3915
    %vm3923 = vmor %vm3921, %vm3922
    %v3924 = vsel %vm3923, %v3915, %v3920
    %v3925 = vmul.f32 %v3861, %v3894
    %v3926 = vmul.f32 %v3862, %v3904
    %v3927 = vmul.f32 %v3863, %v3914
    %v3928 = vmul.f32 %v3864, %v3924
    %v3929 = vperm.slane %v3847, 0
    %v3930 = vmul.f32 %v3925, %v3929
    %v3931 = vmul.f32 %v3926, %v3929
    %v3932 = vmul.f32 %v3927, %v3929
    %v3933 = vmul.f32 %v3928, %v3929
    %v3934 = vperm.slane %v3848, 0
    %v3935 = vadd.f32 %v3930, %v3934
    %v3936 = vadd.f32 %v3931, %v3934
    %v3937 = vadd.f32 %v3932, %v3934
    %v3938 = vadd.f32 %v3933, %v3934
    %v3939 = vpack.c.bf16 %v3936, %v3935
    %v3940 = vpack.c.bf16 %v3938, %v3937
    %v3941 = vmul.f32 %v1463, %v3929
    %v3942 = vmul.f32 %v1464, %v3929
    %v3943 = vmul.f32 %v1465, %v3929
    %v3944 = vmul.f32 %v1466, %v3929
    %v3945 = vadd.f32 %v3941, %v3934
    %v3946 = vadd.f32 %v3942, %v3934
    %v3947 = vadd.f32 %v3943, %v3934
    %v3948 = vadd.f32 %v3944, %v3934
    %v3949 = vpack.c.bf16 %v3946, %v3945
    %v3950 = vpack.c.bf16 %v3948, %v3947
    %s3951 = scalar_lea.vmem [#allocation14], 128
    %v3952 = vld [vmem:[%s3951] sm:$0xff]
    %v3953 = vld [vmem:[%s3951 + $0x8] sm:$0xff]
    %v3954 = vld [vmem:[%s3951 + $0x10] sm:$0xff]
    %v3955 = vld [vmem:[%s3951 + $0x18] sm:$0xff]
    %v3956 = vld [vmem:[%s3951 + $0x20] sm:$0xff]
    %v3957 = vld [vmem:[%s3951 + $0x28] sm:$0xff]
    %v3958 = vld [vmem:[%s3951 + $0x30] sm:$0xff]
    %v3959 = vld [vmem:[%s3951 + $0x38] sm:$0xff]
    %v3960 = vld [vmem:[%s3951 + $0x40] sm:$0xff]
    %v3961 = vld [vmem:[%s3951 + $0x48] sm:$0xff]
    %v3962 = vld [vmem:[%s3951 + $0x50] sm:$0xff]
    %v3963 = vld [vmem:[%s3951 + $0x58] sm:$0xff]
    %v3964 = vld [vmem:[%s3951 + $0x60] sm:$0xff]
    %v3965 = vld [vmem:[%s3951 + $0x68] sm:$0xff]
    %v3966 = vld [vmem:[%s3951 + $0x70] sm:$0xff]
    %v3967 = vld [vmem:[%s3951 + $0x78] sm:$0xff]
    %v3968 = vpack.c.bf16 %v3953, %v3952
    %v3969 = vpack.c.bf16 %v3955, %v3954
    %v3970 = vpack.c.bf16 %v3957, %v3956
    %v3971 = vpack.c.bf16 %v3959, %v3958
    %v3972 = vpack.c.bf16 %v3961, %v3960
    %v3973 = vpack.c.bf16 %v3963, %v3962
    %v3974 = vpack.c.bf16 %v3965, %v3964
    %v3975 = vpack.c.bf16 %v3967, %v3966
    %3976 = vmatpush.bf16.msra.mxu0 %v3975
    %3977 = vmatpush.bf16.msra.mxu0 %v3974
    %3978 = vmatpush.bf16.msra.mxu0 %v3973
    %3979 = vmatpush.bf16.msra.mxu0 %v3972
    %3980 = vmatpush.bf16.msra.mxu0 %v3971
    %3981 = vmatpush.bf16.msra.mxu0 %v3970
    %3982 = vmatpush.bf16.msra.mxu0 %v3969
    %3983 = vmatpush.bf16.msra.mxu0 %v3968
    %3984 = vmatmul.bf16.gmra.mxu0 %v3939
    %v3985 = vpop.f32.mrf.mxu0
    %v3986 = vadd.f32 0.0, %v3985
    %v3987 = vpop.f32.mrf.mxu0
    %v3988 = vadd.f32 0.0, %v3987
    %3989 = vmatmul.bf16.gmra.mxu0 %v3940
    %v3990 = vpop.f32.mrf.mxu0
    %v3991 = vadd.f32 0.0, %v3990
    %v3992 = vpop.f32.mrf.mxu0
    %v3993 = vadd.f32 0.0, %v3992
    %3994 = vdwg.mxu0
    %v3995 = vpack.c.bf16 %v3986, %v3986
    %v3996 = vpack.c.bf16 %v3988, %v3988
    %v3997 = vpack.c.bf16 %v3991, %v3991
    %v3998 = vpack.c.bf16 %v3993, %v3993
    %s3999 = scalar_lea.vmem [#allocation16], 128
    %v4000 = vld [vmem:[%s3999] sm:$0xff]
    %v4001 = vld [vmem:[%s3999 + $0x8] sm:$0xff]
    %v4002 = vld [vmem:[%s3999 + $0x10] sm:$0xff]
    %v4003 = vld [vmem:[%s3999 + $0x18] sm:$0xff]
    %v4004 = vld [vmem:[%s3999 + $0x20] sm:$0xff]
    %v4005 = vld [vmem:[%s3999 + $0x28] sm:$0xff]
    %v4006 = vld [vmem:[%s3999 + $0x30] sm:$0xff]
    %v4007 = vld [vmem:[%s3999 + $0x38] sm:$0xff]
    %v4008 = vld [vmem:[%s3999 + $0x40] sm:$0xff]
    %v4009 = vld [vmem:[%s3999 + $0x48] sm:$0xff]
    %v4010 = vld [vmem:[%s3999 + $0x50] sm:$0xff]
    %v4011 = vld [vmem:[%s3999 + $0x58] sm:$0xff]
    %v4012 = vld [vmem:[%s3999 + $0x60] sm:$0xff]
    %v4013 = vld [vmem:[%s3999 + $0x68] sm:$0xff]
    %v4014 = vld [vmem:[%s3999 + $0x70] sm:$0xff]
    %v4015 = vld [vmem:[%s3999 + $0x78] sm:$0xff]
    %v4016 = vpack.c.bf16 %v4001, %v4000
    %v4017 = vpack.c.bf16 %v4003, %v4002
    %v4018 = vpack.c.bf16 %v4005, %v4004
    %v4019 = vpack.c.bf16 %v4007, %v4006
    %v4020 = vpack.c.bf16 %v4009, %v4008
    %v4021 = vpack.c.bf16 %v4011, %v4010
    %v4022 = vpack.c.bf16 %v4013, %v4012
    %v4023 = vpack.c.bf16 %v4015, %v4014
    %4024 = vmatpush.bf16.msra.mxu0 %v4023
    %4025 = vmatpush.bf16.msra.mxu0 %v4022
    %4026 = vmatpush.bf16.msra.mxu0 %v4021
    %4027 = vmatpush.bf16.msra.mxu0 %v4020
    %4028 = vmatpush.bf16.msra.mxu0 %v4019
    %4029 = vmatpush.bf16.msra.mxu0 %v4018
    %4030 = vmatpush.bf16.msra.mxu0 %v4017
    %4031 = vmatpush.bf16.msra.mxu0 %v4016
    %4032 = vmatmul.bf16.gmra.mxu0 %v3949
    %v4033 = vpop.f32.mrf.mxu0
    %v4034 = vadd.f32 0.0, %v4033
    %v4035 = vpop.f32.mrf.mxu0
    %v4036 = vadd.f32 0.0, %v4035
    %4037 = vmatmul.bf16.gmra.mxu0 %v3950
    %v4038 = vpop.f32.mrf.mxu0
    %v4039 = vadd.f32 0.0, %v4038
    %v4040 = vpop.f32.mrf.mxu0
    %v4041 = vadd.f32 0.0, %v4040
    %4042 = vdwg.mxu0
    %v4043 = vpack.c.bf16 %v4034, %v4034
    %v4044 = vpack.c.bf16 %v4036, %v4036
    %v4045 = vpack.c.bf16 %v4039, %v4039
    %v4046 = vpack.c.bf16 %v4041, %v4041
    %s4047 = scalar_lea.vmem [#allocation17], 128
    %v4048 = vld [vmem:[%s4047] sm:$0xff]
    %v4049 = vld [vmem:[%s4047 + $0x8] sm:$0xff]
    %v4050 = vld [vmem:[%s4047 + $0x10] sm:$0xff]
    %v4051 = vld [vmem:[%s4047 + $0x18] sm:$0xff]
    %v4052 = vld [vmem:[%s4047 + $0x20] sm:$0xff]
    %v4053 = vld [vmem:[%s4047 + $0x28] sm:$0xff]
    %v4054 = vld [vmem:[%s4047 + $0x30] sm:$0xff]
    %v4055 = vld [vmem:[%s4047 + $0x38] sm:$0xff]
    %v4056 = vld [vmem:[%s4047 + $0x40] sm:$0xff]
    %v4057 = vld [vmem:[%s4047 + $0x48] sm:$0xff]
    %v4058 = vld [vmem:[%s4047 + $0x50] sm:$0xff]
    %v4059 = vld [vmem:[%s4047 + $0x58] sm:$0xff]
    %v4060 = vld [vmem:[%s4047 + $0x60] sm:$0xff]
    %v4061 = vld [vmem:[%s4047 + $0x68] sm:$0xff]
    %v4062 = vld [vmem:[%s4047 + $0x70] sm:$0xff]
    %v4063 = vld [vmem:[%s4047 + $0x78] sm:$0xff]
    %v4064 = vpack.c.bf16 %v4049, %v4048
    %v4065 = vpack.c.bf16 %v4051, %v4050
    %v4066 = vpack.c.bf16 %v4053, %v4052
    %v4067 = vpack.c.bf16 %v4055, %v4054
    %v4068 = vpack.c.bf16 %v4057, %v4056
    %v4069 = vpack.c.bf16 %v4059, %v4058
    %v4070 = vpack.c.bf16 %v4061, %v4060
    %v4071 = vpack.c.bf16 %v4063, %v4062
    %4072 = vmatpush.bf16.msra.mxu0 %v4071
    %4073 = vmatpush.bf16.msra.mxu0 %v4070
    %4074 = vmatpush.bf16.msra.mxu0 %v4069
    %4075 = vmatpush.bf16.msra.mxu0 %v4068
    %4076 = vmatpush.bf16.msra.mxu0 %v4067
    %4077 = vmatpush.bf16.msra.mxu0 %v4066
    %4078 = vmatpush.bf16.msra.mxu0 %v4065
    %4079 = vmatpush.bf16.msra.mxu0 %v4064
    %4080 = vmatmul.bf16.gmra.mxu0 %v3949
    %v4081 = vpop.f32.mrf.mxu0
    %v4082 = vadd.f32 0.0, %v4081
    %v4083 = vpop.f32.mrf.mxu0
    %v4084 = vadd.f32 0.0, %v4083
    %4085 = vmatmul.bf16.gmra.mxu0 %v3950
    %v4086 = vpop.f32.mrf.mxu0
    %v4087 = vadd.f32 0.0, %v4086
    %v4088 = vpop.f32.mrf.mxu0
    %v4089 = vadd.f32 0.0, %v4088
    %4090 = vdwg.mxu0
    %v4091 = vpack.c.bf16 %v4082, %v4082
    %v4092 = vpack.c.bf16 %v4084, %v4084
    %v4093 = vpack.c.bf16 %v4087, %v4087
    %v4094 = vpack.c.bf16 %v4089, %v4089
    %v4097 = vunpack.c.l.b16 %v3995
    %v4098 = vunpack.c.l.b16 %v3996
    %v4099 = vpack.c.b16 %v4098, %v4097
    %v4102 = vunpack.c.l.b16 %v4043
    %v4103 = vunpack.c.l.b16 %v4044
    %v4104 = vpack.c.b16 %v4103, %v4102
    %v4106 = vsel %vm604, %v4099, 0
    %v4109 = vsel %vm604, %v4104, 0
    %4111 = vmatpush.bf16.xpose.msra.mxu0 0
    %4112 = vmatpush.bf16.xpose.msra.mxu0 0
    %4113 = vmatpush.bf16.xpose.msra.mxu0 0
    %4114 = vmatpush.bf16.xpose.msra.mxu0 0
    %4115 = vmatpush.bf16.xpose.msra.mxu0 0
    %4116 = vmatpush.bf16.xpose.msra.mxu0 0
    %4117 = vmatpush.bf16.xpose.msra.mxu0 0
    %4118 = vmatpush.bf16.xpose.msra.mxu0 %v4109
    %4119 = vmatmul.bf16.gmra.mxu0 %v4106
    %v4120 = vpop.f32.mrf.mxu0
    %v4121 = vadd.f32 0.0, %v4120
    %v4122 = vpop.f32.mrf.mxu0
    %v4123 = vadd.f32 0.0, %v4122
    %4124 = vdwg.mxu0
    %v4125 = vmul.f32 %v4121, 0.17677669
    %v4126 = vmul.f32 %v4123, 0.17677669
    %v4127 = vadd.f32 %v4125, %v350
    %v4128 = vadd.f32 %v4126, %v351
    %v4129 = vsel %vm629, %v4127, -inf
    %4130 = vmax.xlane.f32.xlu0 %v4129
    %v4131 = vpop.xlane.xlu0 %4130
    %v4132 = vsel %vm629, %v4128, -inf
    %4133 = vmax.xlane.f32.xlu0 %v4132
    %v4134 = vpop.xlane.xlu0 %4133
    %v4135 = vsub.f32 %v4127, %v4131
    %v4136 = vsub.f32 %v4128, %v4134
    %v4137 = vmul.f32 %v4135, 1.442695
    %v4138 = vpow.pop %v4137
    %v4139 = vmul.f32 %v4136, 1.442695
    %v4140 = vpow.pop %v4139
    %v4141 = vsel %vm629, %v4138, 0.0
    %4142 = vadd.xlane.f32.xlu0 %v4141
    %v4143 = vpop.xlane.xlu0 %4142
    %v4144 = vsel %vm629, %v4140, 0.0
    %4145 = vadd.xlane.f32.xlu0 %v4144
    %v4146 = vpop.xlane.xlu0 %4145
    %v4147 = vrcp.pop %v4143
    %v4148 = vrcp.pop %v4146
    %v4149 = vmul.f32 %v4138, %v4147
    %v4150 = vmul.f32 %v4140, %v4148
    %v4151 = vpack.c.bf16 %v4150, %v4149
    %v4154 = vunpack.c.l.b16 %v4091
    %v4155 = vunpack.c.l.b16 %v4092
    %v4156 = vpack.c.b16 %v4155, %v4154
    %v4159 = vsel %vm629, %v4151, 0
    %4161 = vmatpush.bf16.msra.mxu0 0
    %4162 = vmatpush.bf16.msra.mxu0 0
    %4163 = vmatpush.bf16.msra.mxu0 0
    %4164 = vmatpush.bf16.msra.mxu0 0
    %4165 = vmatpush.bf16.msra.mxu0 0
    %4166 = vmatpush.bf16.msra.mxu0 0
    %4167 = vmatpush.bf16.msra.mxu0 0
    %4168 = vmatpush.bf16.msra.mxu0 %v4156
    %4169 = vmatmul.bf16.gmra.mxu0 %v4159
    %v4170 = vpop.f32.mrf.mxu0
    %v4171 = vadd.f32 0.0, %v4170
    %v4172 = vpop.f32.mrf.mxu0
    %v4173 = vadd.f32 0.0, %v4172
    %4174 = vdwg.mxu0
    %4175 = vrot.lane.b32.xlu0 %v4099, 96
    %v4176 = vpop.permute.xlu0 %4175
    %4177 = vrot.lane.b32.xlu0 %v4104, 96
    %v4178 = vpop.permute.xlu0 %4177
    %v4180 = vsel %vm604, %v4176, 0
    %v4183 = vsel %vm604, %v4178, 0
    %4185 = vmatpush.bf16.xpose.msra.mxu0 0
    %4186 = vmatpush.bf16.xpose.msra.mxu0 0
    %4187 = vmatpush.bf16.xpose.msra.mxu0 0
    %4188 = vmatpush.bf16.xpose.msra.mxu0 0
    %4189 = vmatpush.bf16.xpose.msra.mxu0 0
    %4190 = vmatpush.bf16.xpose.msra.mxu0 0
    %4191 = vmatpush.bf16.xpose.msra.mxu0 0
    %4192 = vmatpush.bf16.xpose.msra.mxu0 %v4183
    %4193 = vmatmul.bf16.gmra.mxu0 %v4180
    %v4194 = vpop.f32.mrf.mxu0
    %v4195 = vadd.f32 0.0, %v4194
    %v4196 = vpop.f32.mrf.mxu0
    %v4197 = vadd.f32 0.0, %v4196
    %4198 = vdwg.mxu0
    %v4199 = vmul.f32 %v4195, 0.17677669
    %v4200 = vmul.f32 %v4197, 0.17677669
    %v4201 = vadd.f32 %v4199, %v352
    %v4202 = vadd.f32 %v4200, %v353
    %v4203 = vsel %vm629, %v4201, -inf
    %4204 = vmax.xlane.f32.xlu0 %v4203
    %v4205 = vpop.xlane.xlu0 %4204
    %v4206 = vsel %vm629, %v4202, -inf
    %4207 = vmax.xlane.f32.xlu0 %v4206
    %v4208 = vpop.xlane.xlu0 %4207
    %v4209 = vsub.f32 %v4201, %v4205
    %v4210 = vsub.f32 %v4202, %v4208
    %v4211 = vmul.f32 %v4209, 1.442695
    %v4212 = vpow.pop %v4211
    %v4213 = vmul.f32 %v4210, 1.442695
    %v4214 = vpow.pop %v4213
    %v4215 = vsel %vm629, %v4212, 0.0
    %4216 = vadd.xlane.f32.xlu0 %v4215
    %v4217 = vpop.xlane.xlu0 %4216
    %v4218 = vsel %vm629, %v4214, 0.0
    %4219 = vadd.xlane.f32.xlu0 %v4218
    %v4220 = vpop.xlane.xlu0 %4219
    %v4221 = vrcp.pop %v4217
    %v4222 = vrcp.pop %v4220
    %v4223 = vmul.f32 %v4212, %v4221
    %v4224 = vmul.f32 %v4214, %v4222
    %v4225 = vpack.c.bf16 %v4224, %v4223
    %4226 = vrot.lane.b32.xlu0 %v4156, 96
    %v4227 = vpop.permute.xlu0 %4226
    %v4230 = vsel %vm629, %v4225, 0
    %4232 = vmatpush.bf16.msra.mxu0 0
    %4233 = vmatpush.bf16.msra.mxu0 0
    %4234 = vmatpush.bf16.msra.mxu0 0
    %4235 = vmatpush.bf16.msra.mxu0 0
    %4236 = vmatpush.bf16.msra.mxu0 0
    %4237 = vmatpush.bf16.msra.mxu0 0
    %4238 = vmatpush.bf16.msra.mxu0 0
    %4239 = vmatpush.bf16.msra.mxu0 %v4227
    %4240 = vmatmul.bf16.gmra.mxu0 %v4230
    %v4241 = vpop.f32.mrf.mxu0
    %v4242 = vadd.f32 0.0, %v4241
    %v4243 = vpop.f32.mrf.mxu0
    %v4244 = vadd.f32 0.0, %v4243
    %4245 = vdwg.mxu0
    %4246 = vrot.lane.b32.xlu0 %v4099, 64
    %v4247 = vpop.permute.xlu0 %4246
    %4248 = vrot.lane.b32.xlu0 %v4104, 64
    %v4249 = vpop.permute.xlu0 %4248
    %v4251 = vsel %vm604, %v4247, 0
    %v4254 = vsel %vm604, %v4249, 0
    %4256 = vmatpush.bf16.xpose.msra.mxu0 0
    %4257 = vmatpush.bf16.xpose.msra.mxu0 0
    %4258 = vmatpush.bf16.xpose.msra.mxu0 0
    %4259 = vmatpush.bf16.xpose.msra.mxu0 0
    %4260 = vmatpush.bf16.xpose.msra.mxu0 0
    %4261 = vmatpush.bf16.xpose.msra.mxu0 0
    %4262 = vmatpush.bf16.xpose.msra.mxu0 0
    %4263 = vmatpush.bf16.xpose.msra.mxu0 %v4254
    %4264 = vmatmul.bf16.gmra.mxu0 %v4251
    %v4265 = vpop.f32.mrf.mxu0
    %v4266 = vadd.f32 0.0, %v4265
    %v4267 = vpop.f32.mrf.mxu0
    %v4268 = vadd.f32 0.0, %v4267
    %4269 = vdwg.mxu0
    %v4270 = vmul.f32 %v4266, 0.17677669
    %v4271 = vmul.f32 %v4268, 0.17677669
    %v4272 = vadd.f32 %v4270, %v354
    %v4273 = vadd.f32 %v4271, %v355
    %v4274 = vsel %vm629, %v4272, -inf
    %4275 = vmax.xlane.f32.xlu0 %v4274
    %v4276 = vpop.xlane.xlu0 %4275
    %v4277 = vsel %vm629, %v4273, -inf
    %4278 = vmax.xlane.f32.xlu0 %v4277
    %v4279 = vpop.xlane.xlu0 %4278
    %v4280 = vsub.f32 %v4272, %v4276
    %v4281 = vsub.f32 %v4273, %v4279
    %v4282 = vmul.f32 %v4280, 1.442695
    %v4283 = vpow.pop %v4282
    %v4284 = vmul.f32 %v4281, 1.442695
    %v4285 = vpow.pop %v4284
    %v4286 = vsel %vm629, %v4283, 0.0
    %4287 = vadd.xlane.f32.xlu0 %v4286
    %v4288 = vpop.xlane.xlu0 %4287
    %v4289 = vsel %vm629, %v4285, 0.0
    %4290 = vadd.xlane.f32.xlu0 %v4289
    %v4291 = vpop.xlane.xlu0 %4290
    %v4292 = vrcp.pop %v4288
    %v4293 = vrcp.pop %v4291
    %v4294 = vmul.f32 %v4283, %v4292
    %v4295 = vmul.f32 %v4285, %v4293
    %v4296 = vpack.c.bf16 %v4295, %v4294
    %4297 = vrot.lane.b32.xlu0 %v4156, 64
    %v4298 = vpop.permute.xlu0 %4297
    %v4301 = vsel %vm629, %v4296, 0
    %4303 = vmatpush.bf16.msra.mxu0 0
    %4304 = vmatpush.bf16.msra.mxu0 0
    %4305 = vmatpush.bf16.msra.mxu0 0
    %4306 = vmatpush.bf16.msra.mxu0 0
    %4307 = vmatpush.bf16.msra.mxu0 0
    %4308 = vmatpush.bf16.msra.mxu0 0
    %4309 = vmatpush.bf16.msra.mxu0 0
    %4310 = vmatpush.bf16.msra.mxu0 %v4298
    %4311 = vmatmul.bf16.gmra.mxu0 %v4301
    %v4312 = vpop.f32.mrf.mxu0
    %v4313 = vadd.f32 0.0, %v4312
    %v4314 = vpop.f32.mrf.mxu0
    %v4315 = vadd.f32 0.0, %v4314
    %4316 = vdwg.mxu0
    %4317 = vrot.lane.b32.xlu0 %v4099, 32
    %v4318 = vpop.permute.xlu0 %4317
    %4319 = vrot.lane.b32.xlu0 %v4104, 32
    %v4320 = vpop.permute.xlu0 %4319
    %v4322 = vsel %vm604, %v4318, 0
    %v4325 = vsel %vm604, %v4320, 0
    %4327 = vmatpush.bf16.xpose.msra.mxu0 0
    %4328 = vmatpush.bf16.xpose.msra.mxu0 0
    %4329 = vmatpush.bf16.xpose.msra.mxu0 0
    %4330 = vmatpush.bf16.xpose.msra.mxu0 0
    %4331 = vmatpush.bf16.xpose.msra.mxu0 0
    %4332 = vmatpush.bf16.xpose.msra.mxu0 0
    %4333 = vmatpush.bf16.xpose.msra.mxu0 0
    %4334 = vmatpush.bf16.xpose.msra.mxu0 %v4325
    %4335 = vmatmul.bf16.gmra.mxu0 %v4322
    %v4336 = vpop.f32.mrf.mxu0
    %v4337 = vadd.f32 0.0, %v4336
    %v4338 = vpop.f32.mrf.mxu0
    %v4339 = vadd.f32 0.0, %v4338
    %4340 = vdwg.mxu0
    %v4341 = vmul.f32 %v4337, 0.17677669
    %v4342 = vmul.f32 %v4339, 0.17677669
    %v4343 = vadd.f32 %v4341, %v356
    %v4344 = vadd.f32 %v4342, %v357
    %v4345 = vsel %vm629, %v4343, -inf
    %4346 = vmax.xlane.f32.xlu0 %v4345
    %v4347 = vpop.xlane.xlu0 %4346
    %v4348 = vsel %vm629, %v4344, -inf
    %4349 = vmax.xlane.f32.xlu0 %v4348
    %v4350 = vpop.xlane.xlu0 %4349
    %v4351 = vsub.f32 %v4343, %v4347
    %v4352 = vsub.f32 %v4344, %v4350
    %v4353 = vmul.f32 %v4351, 1.442695
    %v4354 = vpow.pop %v4353
    %v4355 = vmul.f32 %v4352, 1.442695
    %v4356 = vpow.pop %v4355
    %v4357 = vsel %vm629, %v4354, 0.0
    %4358 = vadd.xlane.f32.xlu0 %v4357
    %v4359 = vpop.xlane.xlu0 %4358
    %v4360 = vsel %vm629, %v4356, 0.0
    %4361 = vadd.xlane.f32.xlu0 %v4360
    %v4362 = vpop.xlane.xlu0 %4361
    %v4363 = vrcp.pop %v4359
    %v4364 = vrcp.pop %v4362
    %v4365 = vmul.f32 %v4354, %v4363
    %v4366 = vmul.f32 %v4356, %v4364
    %v4367 = vpack.c.bf16 %v4366, %v4365
    %4368 = vrot.lane.b32.xlu0 %v4156, 32
    %v4369 = vpop.permute.xlu0 %4368
    %v4372 = vsel %vm629, %v4367, 0
    %4374 = vmatpush.bf16.msra.mxu0 0
    %4375 = vmatpush.bf16.msra.mxu0 0
    %4376 = vmatpush.bf16.msra.mxu0 0
    %4377 = vmatpush.bf16.msra.mxu0 0
    %4378 = vmatpush.bf16.msra.mxu0 0
    %4379 = vmatpush.bf16.msra.mxu0 0
    %4380 = vmatpush.bf16.msra.mxu0 0
    %4381 = vmatpush.bf16.msra.mxu0 %v4369
    %4382 = vmatmul.bf16.gmra.mxu0 %v4372
    %v4383 = vpop.f32.mrf.mxu0
    %v4384 = vadd.f32 0.0, %v4383
    %v4385 = vpop.f32.mrf.mxu0
    %v4386 = vadd.f32 0.0, %v4385
    %4387 = vdwg.mxu0
    %4390 = vrot.lane.b32.xlu0 %v4242, 32
    %v4391 = vpop.permute.xlu0 %4390
    %4392 = vrot.lane.b32.xlu0 %v4244, 32
    %v4393 = vpop.permute.xlu0 %4392
    %4398 = vrot.lane.b32.xlu0 %v4313, 64
    %v4399 = vpop.permute.xlu0 %4398
    %4400 = vrot.lane.b32.xlu0 %v4315, 64
    %v4401 = vpop.permute.xlu0 %4400
    %4406 = vrot.lane.b32.xlu0 %v4384, 96
    %v4407 = vpop.permute.xlu0 %4406
    %4408 = vrot.lane.b32.xlu0 %v4386, 96
    %v4409 = vpop.permute.xlu0 %4408
    %v4412 = vsel %vm604, %v4171, %v4391
    %v4413 = vsel %vm604, %v4173, %v4393
    %v4414 = vsel %vm915, %v4412, %v4399
    %v4415 = vsel %vm915, %v4413, %v4401
    %v4416 = vsel %vm918, %v4414, %v4407
    %v4417 = vsel %vm918, %v4415, %v4409
    %v4420 = vunpack.c.l.b16 %v3997
    %v4421 = vunpack.c.l.b16 %v3998
    %v4422 = vpack.c.b16 %v4421, %v4420
    %v4425 = vunpack.c.l.b16 %v4045
    %v4426 = vunpack.c.l.b16 %v4046
    %v4427 = vpack.c.b16 %v4426, %v4425
    %v4429 = vsel %vm604, %v4422, 0
    %v4432 = vsel %vm604, %v4427, 0
    %4434 = vmatpush.bf16.xpose.msra.mxu0 0
    %4435 = vmatpush.bf16.xpose.msra.mxu0 0
    %4436 = vmatpush.bf16.xpose.msra.mxu0 0
    %4437 = vmatpush.bf16.xpose.msra.mxu0 0
    %4438 = vmatpush.bf16.xpose.msra.mxu0 0
    %4439 = vmatpush.bf16.xpose.msra.mxu0 0
    %4440 = vmatpush.bf16.xpose.msra.mxu0 0
    %4441 = vmatpush.bf16.xpose.msra.mxu0 %v4432
    %4442 = vmatmul.bf16.gmra.mxu0 %v4429
    %v4443 = vpop.f32.mrf.mxu0
    %v4444 = vadd.f32 0.0, %v4443
    %v4445 = vpop.f32.mrf.mxu0
    %v4446 = vadd.f32 0.0, %v4445
    %4447 = vdwg.mxu0
    %v4448 = vmul.f32 %v4444, 0.17677669
    %v4449 = vmul.f32 %v4446, 0.17677669
    %v4450 = vadd.f32 %v4448, %v350
    %v4451 = vadd.f32 %v4449, %v351
    %v4452 = vsel %vm629, %v4450, -inf
    %4453 = vmax.xlane.f32.xlu0 %v4452
    %v4454 = vpop.xlane.xlu0 %4453
    %v4455 = vsel %vm629, %v4451, -inf
    %4456 = vmax.xlane.f32.xlu0 %v4455
    %v4457 = vpop.xlane.xlu0 %4456
    %v4458 = vsub.f32 %v4450, %v4454
    %v4459 = vsub.f32 %v4451, %v4457
    %v4460 = vmul.f32 %v4458, 1.442695
    %v4461 = vpow.pop %v4460
    %v4462 = vmul.f32 %v4459, 1.442695
    %v4463 = vpow.pop %v4462
    %v4464 = vsel %vm629, %v4461, 0.0
    %4465 = vadd.xlane.f32.xlu0 %v4464
    %v4466 = vpop.xlane.xlu0 %4465
    %v4467 = vsel %vm629, %v4463, 0.0
    %4468 = vadd.xlane.f32.xlu0 %v4467
    %v4469 = vpop.xlane.xlu0 %4468
    %v4470 = vrcp.pop %v4466
    %v4471 = vrcp.pop %v4469
    %v4472 = vmul.f32 %v4461, %v4470
    %v4473 = vmul.f32 %v4463, %v4471
    %v4474 = vpack.c.bf16 %v4473, %v4472
    %v4477 = vunpack.c.l.b16 %v4093
    %v4478 = vunpack.c.l.b16 %v4094
    %v4479 = vpack.c.b16 %v4478, %v4477
    %v4482 = vsel %vm629, %v4474, 0
    %4484 = vmatpush.bf16.msra.mxu0 0
    %4485 = vmatpush.bf16.msra.mxu0 0
    %4486 = vmatpush.bf16.msra.mxu0 0
    %4487 = vmatpush.bf16.msra.mxu0 0
    %4488 = vmatpush.bf16.msra.mxu0 0
    %4489 = vmatpush.bf16.msra.mxu0 0
    %4490 = vmatpush.bf16.msra.mxu0 0
    %4491 = vmatpush.bf16.msra.mxu0 %v4479
    %4492 = vmatmul.bf16.gmra.mxu0 %v4482
    %v4493 = vpop.f32.mrf.mxu0
    %v4494 = vadd.f32 0.0, %v4493
    %v4495 = vpop.f32.mrf.mxu0
    %v4496 = vadd.f32 0.0, %v4495
    %4497 = vdwg.mxu0
    %4498 = vrot.lane.b32.xlu0 %v4422, 96
    %v4499 = vpop.permute.xlu0 %4498
    %4500 = vrot.lane.b32.xlu0 %v4427, 96
    %v4501 = vpop.permute.xlu0 %4500
    %v4503 = vsel %vm604, %v4499, 0
    %v4506 = vsel %vm604, %v4501, 0
    %4508 = vmatpush.bf16.xpose.msra.mxu0 0
    %4509 = vmatpush.bf16.xpose.msra.mxu0 0
    %4510 = vmatpush.bf16.xpose.msra.mxu0 0
    %4511 = vmatpush.bf16.xpose.msra.mxu0 0
    %4512 = vmatpush.bf16.xpose.msra.mxu0 0
    %4513 = vmatpush.bf16.xpose.msra.mxu0 0
    %4514 = vmatpush.bf16.xpose.msra.mxu0 0
    %4515 = vmatpush.bf16.xpose.msra.mxu0 %v4506
    %4516 = vmatmul.bf16.gmra.mxu0 %v4503
    %v4517 = vpop.f32.mrf.mxu0
    %v4518 = vadd.f32 0.0, %v4517
    %v4519 = vpop.f32.mrf.mxu0
    %v4520 = vadd.f32 0.0, %v4519
    %4521 = vdwg.mxu0
    %v4522 = vmul.f32 %v4518, 0.17677669
    %v4523 = vmul.f32 %v4520, 0.17677669
    %v4524 = vadd.f32 %v4522, %v352
    %v4525 = vadd.f32 %v4523, %v353
    %v4526 = vsel %vm629, %v4524, -inf
    %4527 = vmax.xlane.f32.xlu0 %v4526
    %v4528 = vpop.xlane.xlu0 %4527
    %v4529 = vsel %vm629, %v4525, -inf
    %4530 = vmax.xlane.f32.xlu0 %v4529
    %v4531 = vpop.xlane.xlu0 %4530
    %v4532 = vsub.f32 %v4524, %v4528
    %v4533 = vsub.f32 %v4525, %v4531
    %v4534 = vmul.f32 %v4532, 1.442695
    %v4535 = vpow.pop %v4534
    %v4536 = vmul.f32 %v4533, 1.442695
    %v4537 = vpow.pop %v4536
    %v4538 = vsel %vm629, %v4535, 0.0
    %4539 = vadd.xlane.f32.xlu0 %v4538
    %v4540 = vpop.xlane.xlu0 %4539
    %v4541 = vsel %vm629, %v4537, 0.0
    %4542 = vadd.xlane.f32.xlu0 %v4541
    %v4543 = vpop.xlane.xlu0 %4542
    %v4544 = vrcp.pop %v4540
    %v4545 = vrcp.pop %v4543
    %v4546 = vmul.f32 %v4535, %v4544
    %v4547 = vmul.f32 %v4537, %v4545
    %v4548 = vpack.c.bf16 %v4547, %v4546
    %4549 = vrot.lane.b32.xlu0 %v4479, 96
    %v4550 = vpop.permute.xlu0 %4549
    %v4553 = vsel %vm629, %v4548, 0
    %4555 = vmatpush.bf16.msra.mxu0 0
    %4556 = vmatpush.bf16.msra.mxu0 0
    %4557 = vmatpush.bf16.msra.mxu0 0
    %4558 = vmatpush.bf16.msra.mxu0 0
    %4559 = vmatpush.bf16.msra.mxu0 0
    %4560 = vmatpush.bf16.msra.mxu0 0
    %4561 = vmatpush.bf16.msra.mxu0 0
    %4562 = vmatpush.bf16.msra.mxu0 %v4550
    %4563 = vmatmul.bf16.gmra.mxu0 %v4553
    %v4564 = vpop.f32.mrf.mxu0
    %v4565 = vadd.f32 0.0, %v4564
    %v4566 = vpop.f32.mrf.mxu0
    %v4567 = vadd.f32 0.0, %v4566
    %4568 = vdwg.mxu0
    %4569 = vrot.lane.b32.xlu0 %v4422, 64
    %v4570 = vpop.permute.xlu0 %4569
    %4571 = vrot.lane.b32.xlu0 %v4427, 64
    %v4572 = vpop.permute.xlu0 %4571
    %v4574 = vsel %vm604, %v4570, 0
    %v4577 = vsel %vm604, %v4572, 0
    %4579 = vmatpush.bf16.xpose.msra.mxu0 0
    %4580 = vmatpush.bf16.xpose.msra.mxu0 0
    %4581 = vmatpush.bf16.xpose.msra.mxu0 0
    %4582 = vmatpush.bf16.xpose.msra.mxu0 0
    %4583 = vmatpush.bf16.xpose.msra.mxu0 0
    %4584 = vmatpush.bf16.xpose.msra.mxu0 0
    %4585 = vmatpush.bf16.xpose.msra.mxu0 0
    %4586 = vmatpush.bf16.xpose.msra.mxu0 %v4577
    %4587 = vmatmul.bf16.gmra.mxu0 %v4574
    %v4588 = vpop.f32.mrf.mxu0
    %v4589 = vadd.f32 0.0, %v4588
    %v4590 = vpop.f32.mrf.mxu0
    %v4591 = vadd.f32 0.0, %v4590
    %4592 = vdwg.mxu0
    %v4593 = vmul.f32 %v4589, 0.17677669
    %v4594 = vmul.f32 %v4591, 0.17677669
    %v4595 = vadd.f32 %v4593, %v354
    %v4596 = vadd.f32 %v4594, %v355
    %v4597 = vsel %vm629, %v4595, -inf
    %4598 = vmax.xlane.f32.xlu0 %v4597
    %v4599 = vpop.xlane.xlu0 %4598
    %v4600 = vsel %vm629, %v4596, -inf
    %4601 = vmax.xlane.f32.xlu0 %v4600
    %v4602 = vpop.xlane.xlu0 %4601
    %v4603 = vsub.f32 %v4595, %v4599
    %v4604 = vsub.f32 %v4596, %v4602
    %v4605 = vmul.f32 %v4603, 1.442695
    %v4606 = vpow.pop %v4605
    %v4607 = vmul.f32 %v4604, 1.442695
    %v4608 = vpow.pop %v4607
    %v4609 = vsel %vm629, %v4606, 0.0
    %4610 = vadd.xlane.f32.xlu0 %v4609
    %v4611 = vpop.xlane.xlu0 %4610
    %v4612 = vsel %vm629, %v4608, 0.0
    %4613 = vadd.xlane.f32.xlu0 %v4612
    %v4614 = vpop.xlane.xlu0 %4613
    %v4615 = vrcp.pop %v4611
    %v4616 = vrcp.pop %v4614
    %v4617 = vmul.f32 %v4606, %v4615
    %v4618 = vmul.f32 %v4608, %v4616
    %v4619 = vpack.c.bf16 %v4618, %v4617
    %4620 = vrot.lane.b32.xlu0 %v4479, 64
    %v4621 = vpop.permute.xlu0 %4620
    %v4624 = vsel %vm629, %v4619, 0
    %4626 = vmatpush.bf16.msra.mxu0 0
    %4627 = vmatpush.bf16.msra.mxu0 0
    %4628 = vmatpush.bf16.msra.mxu0 0
    %4629 = vmatpush.bf16.msra.mxu0 0
    %4630 = vmatpush.bf16.msra.mxu0 0
    %4631 = vmatpush.bf16.msra.mxu0 0
    %4632 = vmatpush.bf16.msra.mxu0 0
    %4633 = vmatpush.bf16.msra.mxu0 %v4621
    %4634 = vmatmul.bf16.gmra.mxu0 %v4624
    %v4635 = vpop.f32.mrf.mxu0
    %v4636 = vadd.f32 0.0, %v4635
    %v4637 = vpop.f32.mrf.mxu0
    %v4638 = vadd.f32 0.0, %v4637
    %4639 = vdwg.mxu0
    %4640 = vrot.lane.b32.xlu0 %v4422, 32
    %v4641 = vpop.permute.xlu0 %4640
    %4642 = vrot.lane.b32.xlu0 %v4427, 32
    %v4643 = vpop.permute.xlu0 %4642
    %v4645 = vsel %vm604, %v4641, 0
    %v4648 = vsel %vm604, %v4643, 0
    %4650 = vmatpush.bf16.xpose.msra.mxu0 0
    %4651 = vmatpush.bf16.xpose.msra.mxu0 0
    %4652 = vmatpush.bf16.xpose.msra.mxu0 0
    %4653 = vmatpush.bf16.xpose.msra.mxu0 0
    %4654 = vmatpush.bf16.xpose.msra.mxu0 0
    %4655 = vmatpush.bf16.xpose.msra.mxu0 0
    %4656 = vmatpush.bf16.xpose.msra.mxu0 0
    %4657 = vmatpush.bf16.xpose.msra.mxu0 %v4648
    %4658 = vmatmul.bf16.gmra.mxu0 %v4645
    %v4659 = vpop.f32.mrf.mxu0
    %v4660 = vadd.f32 0.0, %v4659
    %v4661 = vpop.f32.mrf.mxu0
    %v4662 = vadd.f32 0.0, %v4661
    %4663 = vdwg.mxu0
    %v4664 = vmul.f32 %v4660, 0.17677669
    %v4665 = vmul.f32 %v4662, 0.17677669
    %v4666 = vadd.f32 %v4664, %v356
    %v4667 = vadd.f32 %v4665, %v357
    %v4668 = vsel %vm629, %v4666, -inf
    %4669 = vmax.xlane.f32.xlu0 %v4668
    %v4670 = vpop.xlane.xlu0 %4669
    %v4671 = vsel %vm629, %v4667, -inf
    %4672 = vmax.xlane.f32.xlu0 %v4671
    %v4673 = vpop.xlane.xlu0 %4672
    %v4674 = vsub.f32 %v4666, %v4670
    %v4675 = vsub.f32 %v4667, %v4673
    %v4676 = vmul.f32 %v4674, 1.442695
    %v4677 = vpow.pop %v4676
    %v4678 = vmul.f32 %v4675, 1.442695
    %v4679 = vpow.pop %v4678
    %v4680 = vsel %vm629, %v4677, 0.0
    %4681 = vadd.xlane.f32.xlu0 %v4680
    %v4682 = vpop.xlane.xlu0 %4681
    %v4683 = vsel %vm629, %v4679, 0.0
    %4684 = vadd.xlane.f32.xlu0 %v4683
    %v4685 = vpop.xlane.xlu0 %4684
    %v4686 = vrcp.pop %v4682
    %v4687 = vrcp.pop %v4685
    %v4688 = vmul.f32 %v4677, %v4686
    %v4689 = vmul.f32 %v4679, %v4687
    %v4690 = vpack.c.bf16 %v4689, %v4688
    %4691 = vrot.lane.b32.xlu0 %v4479, 32
    %v4692 = vpop.permute.xlu0 %4691
    %v4695 = vsel %vm629, %v4690, 0
    %4697 = vmatpush.bf16.msra.mxu0 0
    %4698 = vmatpush.bf16.msra.mxu0 0
    %4699 = vmatpush.bf16.msra.mxu0 0
    %4700 = vmatpush.bf16.msra.mxu0 0
    %4701 = vmatpush.bf16.msra.mxu0 0
    %4702 = vmatpush.bf16.msra.mxu0 0
    %4703 = vmatpush.bf16.msra.mxu0 0
    %4704 = vmatpush.bf16.msra.mxu0 %v4692
    %4705 = vmatmul.bf16.gmra.mxu0 %v4695
    %v4706 = vpop.f32.mrf.mxu0
    %v4707 = vadd.f32 0.0, %v4706
    %v4708 = vpop.f32.mrf.mxu0
    %v4709 = vadd.f32 0.0, %v4708
    %4710 = vdwg.mxu0
    %4713 = vrot.lane.b32.xlu0 %v4565, 32
    %v4714 = vpop.permute.xlu0 %4713
    %4715 = vrot.lane.b32.xlu0 %v4567, 32
    %v4716 = vpop.permute.xlu0 %4715
    %4721 = vrot.lane.b32.xlu0 %v4636, 64
    %v4722 = vpop.permute.xlu0 %4721
    %4723 = vrot.lane.b32.xlu0 %v4638, 64
    %v4724 = vpop.permute.xlu0 %4723
    %4729 = vrot.lane.b32.xlu0 %v4707, 96
    %v4730 = vpop.permute.xlu0 %4729
    %4731 = vrot.lane.b32.xlu0 %v4709, 96
    %v4732 = vpop.permute.xlu0 %4731
    %v4735 = vsel %vm604, %v4494, %v4714
    %v4736 = vsel %vm604, %v4496, %v4716
    %v4737 = vsel %vm915, %v4735, %v4722
    %v4738 = vsel %vm915, %v4736, %v4724
    %v4739 = vsel %vm918, %v4737, %v4730
    %v4740 = vsel %vm918, %v4738, %v4732
    %v4741 = vpack.c.bf16 %v4417, %v4416
    %v4742 = vpack.c.bf16 %v4740, %v4739
    %s4743 = scalar_lea.vmem [#allocation19], 128
    %v4744 = vld [vmem:[%s4743] sm:$0xff]
    %v4745 = vld [vmem:[%s4743 + $0x8] sm:$0xff]
    %v4746 = vld [vmem:[%s4743 + $0x10] sm:$0xff]
    %v4747 = vld [vmem:[%s4743 + $0x18] sm:$0xff]
    %v4748 = vld [vmem:[%s4743 + $0x20] sm:$0xff]
    %v4749 = vld [vmem:[%s4743 + $0x28] sm:$0xff]
    %v4750 = vld [vmem:[%s4743 + $0x30] sm:$0xff]
    %v4751 = vld [vmem:[%s4743 + $0x38] sm:$0xff]
    %v4752 = vld [vmem:[%s4743 + $0x40] sm:$0xff]
    %v4753 = vld [vmem:[%s4743 + $0x48] sm:$0xff]
    %v4754 = vld [vmem:[%s4743 + $0x50] sm:$0xff]
    %v4755 = vld [vmem:[%s4743 + $0x58] sm:$0xff]
    %v4756 = vld [vmem:[%s4743 + $0x60] sm:$0xff]
    %v4757 = vld [vmem:[%s4743 + $0x68] sm:$0xff]
    %v4758 = vld [vmem:[%s4743 + $0x70] sm:$0xff]
    %v4759 = vld [vmem:[%s4743 + $0x78] sm:$0xff]
    %v4760 = vpack.c.bf16 %v4745, %v4744
    %v4761 = vpack.c.bf16 %v4747, %v4746
    %v4762 = vpack.c.bf16 %v4749, %v4748
    %v4763 = vpack.c.bf16 %v4751, %v4750
    %v4764 = vpack.c.bf16 %v4753, %v4752
    %v4765 = vpack.c.bf16 %v4755, %v4754
    %v4766 = vpack.c.bf16 %v4757, %v4756
    %v4767 = vpack.c.bf16 %v4759, %v4758
    %v4768 = vld [vmem:[#allocation20 + $0x1] sm:$0x1]
    %v4769 = vperm.slane %v4768, 0
    %4770 = vmatpush.bf16.msra.mxu0 %v4767
    %4771 = vmatpush.bf16.msra.mxu0 %v4766
    %4772 = vmatpush.bf16.msra.mxu0 %v4765
    %4773 = vmatpush.bf16.msra.mxu0 %v4764
    %4774 = vmatpush.bf16.msra.mxu0 %v4763
    %4775 = vmatpush.bf16.msra.mxu0 %v4762
    %4776 = vmatpush.bf16.msra.mxu0 %v4761
    %4777 = vmatpush.bf16.msra.mxu0 %v4760
    %4778 = vmatmul.bf16.gmra.mxu0 %v4741
    %v4779 = vpop.f32.mrf.mxu0
    %v4780 = vadd.f32 %v4769, %v4779
    %v4781 = vpop.f32.mrf.mxu0
    %v4782 = vadd.f32 %v4769, %v4781
    %4783 = vmatmul.bf16.gmra.mxu0 %v4742
    %v4784 = vpop.f32.mrf.mxu0
    %v4785 = vadd.f32 %v4769, %v4784
    %v4786 = vpop.f32.mrf.mxu0
    %v4787 = vadd.f32 %v4769, %v4786
    %4788 = vdwg.mxu0
    %v4789 = vadd.f32 %v3843, %v4780
    %v4790 = vadd.f32 %v3844, %v4782
    %v4791 = vadd.f32 %v3845, %v4785
    %v4792 = vadd.f32 %v3846, %v4787
    %v4793 = vld [vmem:[#allocation22 + $0x1] sm:$0x1]
    %v4794 = vld [vmem:[#allocation23 + $0x1] sm:$0x1]
    %4795 = vadd.xlane.f32.xlu0 %v4789
    %v4796 = vpop.xlane.xlu0 %4795
    %4797 = vadd.xlane.f32.xlu0 %v4790
    %v4798 = vpop.xlane.xlu0 %4797
    %4799 = vadd.xlane.f32.xlu0 %v4791
    %v4800 = vpop.xlane.xlu0 %4799
    %4801 = vadd.xlane.f32.xlu0 %v4792
    %v4802 = vpop.xlane.xlu0 %4801
    %v4803 = vmul.f32 %v4796, %v374
    %v4804 = vmul.f32 %v4798, %v374
    %v4805 = vmul.f32 %v4800, %v374
    %v4806 = vmul.f32 %v4802, %v374
    %v4807 = vsub.f32 %v4789, %v4803
    %v4808 = vsub.f32 %v4790, %v4804
    %v4809 = vsub.f32 %v4791, %v4805
    %v4810 = vsub.f32 %v4792, %v4806
    %v4811 = vmul.f32 %v4807, %v4807
    %v4812 = vmul.f32 %v4808, %v4808
    %v4813 = vmul.f32 %v4809, %v4809
    %v4814 = vmul.f32 %v4810, %v4810
    %4815 = vadd.xlane.f32.xlu0 %v4811
    %v4816 = vpop.xlane.xlu0 %4815
    %4817 = vadd.xlane.f32.xlu0 %v4812
    %v4818 = vpop.xlane.xlu0 %4817
    %4819 = vadd.xlane.f32.xlu0 %v4813
    %v4820 = vpop.xlane.xlu0 %4819
    %4821 = vadd.xlane.f32.xlu0 %v4814
    %v4822 = vpop.xlane.xlu0 %4821
    %v4823 = vmul.f32 %v4816, %v374
    %v4824 = vmul.f32 %v4818, %v374
    %v4825 = vmul.f32 %v4820, %v374
    %v4826 = vmul.f32 %v4822, %v374
    %v4827 = vadd.f32 %v4823, 1e-05
    %v4828 = vadd.f32 %v4824, 1e-05
    %v4829 = vadd.f32 %v4825, 1e-05
    %v4830 = vadd.f32 %v4826, 1e-05
    %v4831 = vrsqrt.pop %v4827
    %v4832 = vmul.f32 %v4831, %v4827
    %v4833 = vmul.f32 %v4832, %v4831
    %v4834 = vmul.f32 0.5, %v4833
    %v4835 = vsub.f32 1.5, %v4834
    %v4836 = vmul.f32 %v4831, %v4835
    %vm4837 = vweird.f32 %v4827
    %vm4838 = vweird.f32 %v4831
    %vm4839 = vmor %vm4837, %vm4838
    %v4840 = vsel %vm4839, %v4831, %v4836
    %v4841 = vrsqrt.pop %v4828
    %v4842 = vmul.f32 %v4841, %v4828
    %v4843 = vmul.f32 %v4842, %v4841
    %v4844 = vmul.f32 0.5, %v4843
    %v4845 = vsub.f32 1.5, %v4844
    %v4846 = vmul.f32 %v4841, %v4845
    %vm4847 = vweird.f32 %v4828
    %vm4848 = vweird.f32 %v4841
    %vm4849 = vmor %vm4847, %vm4848
    %v4850 = vsel %vm4849, %v4841, %v4846
    %v4851 = vrsqrt.pop %v4829
    %v4852 = vmul.f32 %v4851, %v4829
    %v4853 = vmul.f32 %v4852, %v4851
    %v4854 = vmul.f32 0.5, %v4853
    %v4855 = vsub.f32 1.5, %v4854
    %v4856 = vmul.f32 %v4851, %v4855
    %vm4857 = vweird.f32 %v4829
    %vm4858 = vweird.f32 %v4851
    %vm4859 = vmor %vm4857, %vm4858
    %v4860 = vsel %vm4859, %v4851, %v4856
    %v4861 = vrsqrt.pop %v4830
    %v4862 = vmul.f32 %v4861, %v4830
    %v4863 = vmul.f32 %v4862, %v4861
    %v4864 = vmul.f32 0.5, %v4863
    %v4865 = vsub.f32 1.5, %v4864
    %v4866 = vmul.f32 %v4861, %v4865
    %vm4867 = vweird.f32 %v4830
    %vm4868 = vweird.f32 %v4861
    %vm4869 = vmor %vm4867, %vm4868
    %v4870 = vsel %vm4869, %v4861, %v4866
    %v4871 = vmul.f32 %v4807, %v4840
    %v4872 = vmul.f32 %v4808, %v4850
    %v4873 = vmul.f32 %v4809, %v4860
    %v4874 = vmul.f32 %v4810, %v4870
    %v4875 = vperm.slane %v4793, 0
    %v4876 = vmul.f32 %v4871, %v4875
    %v4877 = vmul.f32 %v4872, %v4875
    %v4878 = vmul.f32 %v4873, %v4875
    %v4879 = vmul.f32 %v4874, %v4875
    %v4880 = vperm.slane %v4794, 0
    %v4881 = vadd.f32 %v4876, %v4880
    %v4882 = vadd.f32 %v4877, %v4880
    %v4883 = vadd.f32 %v4878, %v4880
    %v4884 = vadd.f32 %v4879, %v4880
    %v4885 = vpack.c.bf16 %v4882, %v4881
    %v4886 = vpack.c.bf16 %v4884, %v4883
    %s4887 = scalar_lea.vmem [#allocation25], 512
    %v4888 = vld [vmem:[%s4887] sm:$0xff]
    %v4889 = vld [vmem:[%s4887 + $0x8] sm:$0xff]
    %v4890 = vld [vmem:[%s4887 + $0x10] sm:$0xff]
    %v4891 = vld [vmem:[%s4887 + $0x18] sm:$0xff]
    %v4892 = vld [vmem:[%s4887 + $0x20] sm:$0xff]
    %v4893 = vld [vmem:[%s4887 + $0x28] sm:$0xff]
    %v4894 = vld [vmem:[%s4887 + $0x30] sm:$0xff]
    %v4895 = vld [vmem:[%s4887 + $0x38] sm:$0xff]
    %v4896 = vld [vmem:[%s4887 + $0x40] sm:$0xff]
    %v4897 = vld [vmem:[%s4887 + $0x48] sm:$0xff]
    %v4898 = vld [vmem:[%s4887 + $0x50] sm:$0xff]
    %v4899 = vld [vmem:[%s4887 + $0x58] sm:$0xff]
    %v4900 = vld [vmem:[%s4887 + $0x60] sm:$0xff]
    %v4901 = vld [vmem:[%s4887 + $0x68] sm:$0xff]
    %v4902 = vld [vmem:[%s4887 + $0x70] sm:$0xff]
    %v4903 = vld [vmem:[%s4887 + $0x78] sm:$0xff]
    %v4904 = vld [vmem:[%s4887 + $0x80] sm:$0xff]
    %v4905 = vld [vmem:[%s4887 + $0x88] sm:$0xff]
    %v4906 = vld [vmem:[%s4887 + $0x90] sm:$0xff]
    %v4907 = vld [vmem:[%s4887 + $0x98] sm:$0xff]
    %v4908 = vld [vmem:[%s4887 + $0xa0] sm:$0xff]
    %v4909 = vld [vmem:[%s4887 + $0xa8] sm:$0xff]
    %v4910 = vld [vmem:[%s4887 + $0xb0] sm:$0xff]
    %v4911 = vld [vmem:[%s4887 + $0xb8] sm:$0xff]
    %v4912 = vld [vmem:[%s4887 + $0xc0] sm:$0xff]
    %v4913 = vld [vmem:[%s4887 + $0xc8] sm:$0xff]
    %v4914 = vld [vmem:[%s4887 + $0xd0] sm:$0xff]
    %v4915 = vld [vmem:[%s4887 + $0xd8] sm:$0xff]
    %v4916 = vld [vmem:[%s4887 + $0xe0] sm:$0xff]
    %v4917 = vld [vmem:[%s4887 + $0xe8] sm:$0xff]
    %v4918 = vld [vmem:[%s4887 + $0xf0] sm:$0xff]
    %v4919 = vld [vmem:[%s4887 + $0xf8] sm:$0xff]
    %v4920 = vld [vmem:[%s4887 + $0x100] sm:$0xff]
    %v4921 = vld [vmem:[%s4887 + $0x108] sm:$0xff]
    %v4922 = vld [vmem:[%s4887 + $0x110] sm:$0xff]
    %v4923 = vld [vmem:[%s4887 + $0x118] sm:$0xff]
    %v4924 = vld [vmem:[%s4887 + $0x120] sm:$0xff]
    %v4925 = vld [vmem:[%s4887 + $0x128] sm:$0xff]
    %v4926 = vld [vmem:[%s4887 + $0x130] sm:$0xff]
    %v4927 = vld [vmem:[%s4887 + $0x138] sm:$0xff]
    %v4928 = vld [vmem:[%s4887 + $0x140] sm:$0xff]
    %v4929 = vld [vmem:[%s4887 + $0x148] sm:$0xff]
    %v4930 = vld [vmem:[%s4887 + $0x150] sm:$0xff]
    %v4931 = vld [vmem:[%s4887 + $0x158] sm:$0xff]
    %v4932 = vld [vmem:[%s4887 + $0x160] sm:$0xff]
    %v4933 = vld [vmem:[%s4887 + $0x168] sm:$0xff]
    %v4934 = vld [vmem:[%s4887 + $0x170] sm:$0xff]
    %v4935 = vld [vmem:[%s4887 + $0x178] sm:$0xff]
    %v4936 = vld [vmem:[%s4887 + $0x180] sm:$0xff]
    %v4937 = vld [vmem:[%s4887 + $0x188] sm:$0xff]
    %v4938 = vld [vmem:[%s4887 + $0x190] sm:$0xff]
    %v4939 = vld [vmem:[%s4887 + $0x198] sm:$0xff]
    %v4940 = vld [vmem:[%s4887 + $0x1a0] sm:$0xff]
    %v4941 = vld [vmem:[%s4887 + $0x1a8] sm:$0xff]
    %v4942 = vld [vmem:[%s4887 + $0x1b0] sm:$0xff]
    %v4943 = vld [vmem:[%s4887 + $0x1b8] sm:$0xff]
    %v4944 = vld [vmem:[%s4887 + $0x1c0] sm:$0xff]
    %v4945 = vld [vmem:[%s4887 + $0x1c8] sm:$0xff]
    %v4946 = vld [vmem:[%s4887 + $0x1d0] sm:$0xff]
    %v4947 = vld [vmem:[%s4887 + $0x1d8] sm:$0xff]
    %v4948 = vld [vmem:[%s4887 + $0x1e0] sm:$0xff]
    %v4949 = vld [vmem:[%s4887 + $0x1e8] sm:$0xff]
    %v4950 = vld [vmem:[%s4887 + $0x1f0] sm:$0xff]
    %v4951 = vld [vmem:[%s4887 + $0x1f8] sm:$0xff]
    %v4952 = vpack.c.bf16 %v4892, %v4888
    %v4953 = vpack.c.bf16 %v4893, %v4889
    %v4954 = vpack.c.bf16 %v4894, %v4890
    %v4955 = vpack.c.bf16 %v4895, %v4891
    %v4956 = vpack.c.bf16 %v4900, %v4896
    %v4957 = vpack.c.bf16 %v4901, %v4897
    %v4958 = vpack.c.bf16 %v4902, %v4898
    %v4959 = vpack.c.bf16 %v4903, %v4899
    %v4960 = vpack.c.bf16 %v4908, %v4904
    %v4961 = vpack.c.bf16 %v4909, %v4905
    %v4962 = vpack.c.bf16 %v4910, %v4906
    %v4963 = vpack.c.bf16 %v4911, %v4907
    %v4964 = vpack.c.bf16 %v4916, %v4912
    %v4965 = vpack.c.bf16 %v4917, %v4913
    %v4966 = vpack.c.bf16 %v4918, %v4914
    %v4967 = vpack.c.bf16 %v4919, %v4915
    %v4968 = vpack.c.bf16 %v4924, %v4920
    %v4969 = vpack.c.bf16 %v4925, %v4921
    %v4970 = vpack.c.bf16 %v4926, %v4922
    %v4971 = vpack.c.bf16 %v4927, %v4923
    %v4972 = vpack.c.bf16 %v4932, %v4928
    %v4973 = vpack.c.bf16 %v4933, %v4929
    %v4974 = vpack.c.bf16 %v4934, %v4930
    %v4975 = vpack.c.bf16 %v4935, %v4931
    %v4976 = vpack.c.bf16 %v4940, %v4936
    %v4977 = vpack.c.bf16 %v4941, %v4937
    %v4978 = vpack.c.bf16 %v4942, %v4938
    %v4979 = vpack.c.bf16 %v4943, %v4939
    %v4980 = vpack.c.bf16 %v4948, %v4944
    %v4981 = vpack.c.bf16 %v4949, %v4945
    %v4982 = vpack.c.bf16 %v4950, %v4946
    %v4983 = vpack.c.bf16 %v4951, %v4947
    %s4984 = scalar_lea.vmem %s18, 1
    %v4985 = vld [vmem:[%s4984] ss:$2 sm:$0xf]
    %v4987 = vperm.slane %v4985, 0
    %v4988 = vperm.slane %v4985, 1
    %v4989 = vperm.slane %v4985, 2
    %v4990 = vperm.slane %v4985, 3
    %4995 = vmatpush.bf16.msra.mxu0 %v4980
    %4996 = vmatpush.bf16.msra.mxu0 %v4976
    %4997 = vmatpush.bf16.msra.mxu0 %v4972
    %4998 = vmatpush.bf16.msra.mxu0 %v4968
    %4999 = vmatpush.bf16.msra.mxu0 %v4964
    %5000 = vmatpush.bf16.msra.mxu0 %v4960
    %5001 = vmatpush.bf16.msra.mxu0 %v4956
    %5002 = vmatpush.bf16.msra.mxu0 %v4952
    %5003 = vmatmul.bf16.gmra.mxu0 %v4885
    %v5004 = vpop.f32.mrf.mxu0
    %v5005 = vadd.f32 %v4987, %v5004
    %v5006 = vpop.f32.mrf.mxu0
    %v5007 = vadd.f32 %v4987, %v5006
    %5008 = vmatmul.bf16.gmra.mxu0 %v4886
    %v5009 = vpop.f32.mrf.mxu0
    %v5010 = vadd.f32 %v4987, %v5009
    %v5011 = vpop.f32.mrf.mxu0
    %v5012 = vadd.f32 %v4987, %v5011
    %5013 = vdwg.mxu0
    %5014 = vmatpush.bf16.msra.mxu0 %v4981
    %5015 = vmatpush.bf16.msra.mxu0 %v4977
    %5016 = vmatpush.bf16.msra.mxu0 %v4973
    %5017 = vmatpush.bf16.msra.mxu0 %v4969
    %5018 = vmatpush.bf16.msra.mxu0 %v4965
    %5019 = vmatpush.bf16.msra.mxu0 %v4961
    %5020 = vmatpush.bf16.msra.mxu0 %v4957
    %5021 = vmatpush.bf16.msra.mxu0 %v4953
    %5022 = vmatmul.bf16.gmra.mxu0 %v4885
    %v5023 = vpop.f32.mrf.mxu0
    %v5024 = vadd.f32 %v4988, %v5023
    %v5025 = vpop.f32.mrf.mxu0
    %v5026 = vadd.f32 %v4988, %v5025
    %5027 = vmatmul.bf16.gmra.mxu0 %v4886
    %v5028 = vpop.f32.mrf.mxu0
    %v5029 = vadd.f32 %v4988, %v5028
    %v5030 = vpop.f32.mrf.mxu0
    %v5031 = vadd.f32 %v4988, %v5030
    %5032 = vdwg.mxu0
    %5033 = vmatpush.bf16.msra.mxu0 %v4982
    %5034 = vmatpush.bf16.msra.mxu0 %v4978
    %5035 = vmatpush.bf16.msra.mxu0 %v4974
    %5036 = vmatpush.bf16.msra.mxu0 %v4970
    %5037 = vmatpush.bf16.msra.mxu0 %v4966
    %5038 = vmatpush.bf16.msra.mxu0 %v4962
    %5039 = vmatpush.bf16.msra.mxu0 %v4958
    %5040 = vmatpush.bf16.msra.mxu0 %v4954
    %5041 = vmatmul.bf16.gmra.mxu0 %v4885
    %v5042 = vpop.f32.mrf.mxu0
    %v5043 = vadd.f32 %v4989, %v5042
    %v5044 = vpop.f32.mrf.mxu0
    %v5045 = vadd.f32 %v4989, %v5044
    %5046 = vmatmul.bf16.gmra.mxu0 %v4886
    %v5047 = vpop.f32.mrf.mxu0
    %v5048 = vadd.f32 %v4989, %v5047
    %v5049 = vpop.f32.mrf.mxu0
    %v5050 = vadd.f32 %v4989, %v5049
    %5051 = vdwg.mxu0
    %5052 = vmatpush.bf16.msra.mxu0 %v4983
    %5053 = vmatpush.bf16.msra.mxu0 %v4979
    %5054 = vmatpush.bf16.msra.mxu0 %v4975
    %5055 = vmatpush.bf16.msra.mxu0 %v4971
    %5056 = vmatpush.bf16.msra.mxu0 %v4967
    %5057 = vmatpush.bf16.msra.mxu0 %v4963
    %5058 = vmatpush.bf16.msra.mxu0 %v4959
    %5059 = vmatpush.bf16.msra.mxu0 %v4955
    %5060 = vmatmul.bf16.gmra.mxu0 %v4885
    %v5061 = vpop.f32.mrf.mxu0
    %v5062 = vadd.f32 %v4990, %v5061
    %v5063 = vpop.f32.mrf.mxu0
    %v5064 = vadd.f32 %v4990, %v5063
    %5065 = vmatmul.bf16.gmra.mxu0 %v4886
    %v5066 = vpop.f32.mrf.mxu0
    %v5067 = vadd.f32 %v4990, %v5066
    %v5068 = vpop.f32.mrf.mxu0
    %v5069 = vadd.f32 %v4990, %v5068
    %5070 = vdwg.mxu0
    %v5071 = vmul.f32 %v5005, 0.5
    %v5072 = vmul.f32 %v5024, 0.5
    %v5073 = vmul.f32 %v5043, 0.5
    %v5074 = vmul.f32 %v5062, 0.5
    %v5075 = vmul.f32 %v5007, 0.5
    %v5076 = vmul.f32 %v5026, 0.5
    %v5077 = vmul.f32 %v5045, 0.5
    %v5078 = vmul.f32 %v5064, 0.5
    %v5079 = vmul.f32 %v5010, 0.5
    %v5080 = vmul.f32 %v5029, 0.5
    %v5081 = vmul.f32 %v5048, 0.5
    %v5082 = vmul.f32 %v5067, 0.5
    %v5083 = vmul.f32 %v5012, 0.5
    %v5084 = vmul.f32 %v5031, 0.5
    %v5085 = vmul.f32 %v5050, 0.5
    %v5086 = vmul.f32 %v5069, 0.5
    %v5087 = vmul.f32 %v5005, 0.044715
    %v5088 = vmul.f32 %v5024, 0.044715
    %v5089 = vmul.f32 %v5043, 0.044715
    %v5090 = vmul.f32 %v5062, 0.044715
    %v5091 = vmul.f32 %v5007, 0.044715
    %v5092 = vmul.f32 %v5026, 0.044715
    %v5093 = vmul.f32 %v5045, 0.044715
    %v5094 = vmul.f32 %v5064, 0.044715
    %v5095 = vmul.f32 %v5010, 0.044715
    %v5096 = vmul.f32 %v5029, 0.044715
    %v5097 = vmul.f32 %v5048, 0.044715
    %v5098 = vmul.f32 %v5067, 0.044715
    %v5099 = vmul.f32 %v5012, 0.044715
    %v5100 = vmul.f32 %v5031, 0.044715
    %v5101 = vmul.f32 %v5050, 0.044715
    %v5102 = vmul.f32 %v5069, 0.044715
    %v5103 = vmul.f32 %v5087, %v5005
    %v5104 = vmul.f32 %v5088, %v5024
    %v5105 = vmul.f32 %v5089, %v5043
    %v5106 = vmul.f32 %v5090, %v5062
    %v5107 = vmul.f32 %v5091, %v5007
    %v5108 = vmul.f32 %v5092, %v5026
    %v5109 = vmul.f32 %v5093, %v5045
    %v5110 = vmul.f32 %v5094, %v5064
    %v5111 = vmul.f32 %v5095, %v5010
    %v5112 = vmul.f32 %v5096, %v5029
    %v5113 = vmul.f32 %v5097, %v5048
    %v5114 = vmul.f32 %v5098, %v5067
    %v5115 = vmul.f32 %v5099, %v5012
    %v5116 = vmul.f32 %v5100, %v5031
    %v5117 = vmul.f32 %v5101, %v5050
    %v5118 = vmul.f32 %v5102, %v5069
    %v5119 = vmul.f32 %v5103, %v5005
    %v5120 = vmul.f32 %v5104, %v5024
    %v5121 = vmul.f32 %v5105, %v5043
    %v5122 = vmul.f32 %v5106, %v5062
    %v5123 = vmul.f32 %v5107, %v5007
    %v5124 = vmul.f32 %v5108, %v5026
    %v5125 = vmul.f32 %v5109, %v5045
    %v5126 = vmul.f32 %v5110, %v5064
    %v5127 = vmul.f32 %v5111, %v5010
    %v5128 = vmul.f32 %v5112, %v5029
    %v5129 = vmul.f32 %v5113, %v5048
    %v5130 = vmul.f32 %v5114, %v5067
    %v5131 = vmul.f32 %v5115, %v5012
    %v5132 = vmul.f32 %v5116, %v5031
    %v5133 = vmul.f32 %v5117, %v5050
    %v5134 = vmul.f32 %v5118, %v5069
    %v5135 = vadd.f32 %v5005, %v5119
    %v5136 = vadd.f32 %v5024, %v5120
    %v5137 = vadd.f32 %v5043, %v5121
    %v5138 = vadd.f32 %v5062, %v5122
    %v5139 = vadd.f32 %v5007, %v5123
    %v5140 = vadd.f32 %v5026, %v5124
    %v5141 = vadd.f32 %v5045, %v5125
    %v5142 = vadd.f32 %v5064, %v5126
    %v5143 = vadd.f32 %v5010, %v5127
    %v5144 = vadd.f32 %v5029, %v5128
    %v5145 = vadd.f32 %v5048, %v5129
    %v5146 = vadd.f32 %v5067, %v5130
    %v5147 = vadd.f32 %v5012, %v5131
    %v5148 = vadd.f32 %v5031, %v5132
    %v5149 = vadd.f32 %v5050, %v5133
    %v5150 = vadd.f32 %v5069, %v5134
    %v5151 = vmul.f32 %v5135, 0.7978846
    %v5152 = vmul.f32 %v5136, 0.7978846
    %v5153 = vmul.f32 %v5137, 0.7978846
    %v5154 = vmul.f32 %v5138, 0.7978846
    %v5155 = vmul.f32 %v5139, 0.7978846
    %v5156 = vmul.f32 %v5140, 0.7978846
    %v5157 = vmul.f32 %v5141, 0.7978846
    %v5158 = vmul.f32 %v5142, 0.7978846
    %v5159 = vmul.f32 %v5143, 0.7978846
    %v5160 = vmul.f32 %v5144, 0.7978846
    %v5161 = vmul.f32 %v5145, 0.7978846
    %v5162 = vmul.f32 %v5146, 0.7978846
    %v5163 = vmul.f32 %v5147, 0.7978846
    %v5164 = vmul.f32 %v5148, 0.7978846
    %v5165 = vmul.f32 %v5149, 0.7978846
    %v5166 = vmul.f32 %v5150, 0.7978846
    %v5167 = vtanh.pop %v5151
    %v5168 = vtanh.pop %v5152
    %v5169 = vtanh.pop %v5153
    %v5170 = vtanh.pop %v5154
    %v5171 = vtanh.pop %v5155
    %v5172 = vtanh.pop %v5156
    %v5173 = vtanh.pop %v5157
    %v5174 = vtanh.pop %v5158
    %v5175 = vtanh.pop %v5159
    %v5176 = vtanh.pop %v5160
    %v5177 = vtanh.pop %v5161
    %v5178 = vtanh.pop %v5162
    %v5179 = vtanh.pop %v5163
    %v5180 = vtanh.pop %v5164
    %v5181 = vtanh.pop %v5165
    %v5182 = vtanh.pop %v5166
    %v5183 = vadd.f32 %v5167, 1.0
    %v5184 = vadd.f32 %v5168, 1.0
    %v5185 = vadd.f32 %v5169, 1.0
    %v5186 = vadd.f32 %v5170, 1.0
    %v5187 = vadd.f32 %v5171, 1.0
    %v5188 = vadd.f32 %v5172, 1.0
    %v5189 = vadd.f32 %v5173, 1.0
    %v5190 = vadd.f32 %v5174, 1.0
    %v5191 = vadd.f32 %v5175, 1.0
    %v5192 = vadd.f32 %v5176, 1.0
    %v5193 = vadd.f32 %v5177, 1.0
    %v5194 = vadd.f32 %v5178, 1.0
    %v5195 = vadd.f32 %v5179, 1.0
    %v5196 = vadd.f32 %v5180, 1.0
    %v5197 = vadd.f32 %v5181, 1.0
    %v5198 = vadd.f32 %v5182, 1.0
    %v5199 = vmul.f32 %v5071, %v5183
    %v5200 = vmul.f32 %v5072, %v5184
    %v5201 = vmul.f32 %v5073, %v5185
    %v5202 = vmul.f32 %v5074, %v5186
    %v5203 = vmul.f32 %v5075, %v5187
    %v5204 = vmul.f32 %v5076, %v5188
    %v5205 = vmul.f32 %v5077, %v5189
    %v5206 = vmul.f32 %v5078, %v5190
    %v5207 = vmul.f32 %v5079, %v5191
    %v5208 = vmul.f32 %v5080, %v5192
    %v5209 = vmul.f32 %v5081, %v5193
    %v5210 = vmul.f32 %v5082, %v5194
    %v5211 = vmul.f32 %v5083, %v5195
    %v5212 = vmul.f32 %v5084, %v5196
    %v5213 = vmul.f32 %v5085, %v5197
    %v5214 = vmul.f32 %v5086, %v5198
    %v5215 = vpack.c.bf16 %v5203, %v5199
    %v5216 = vpack.c.bf16 %v5204, %v5200
    %v5217 = vpack.c.bf16 %v5205, %v5201
    %v5218 = vpack.c.bf16 %v5206, %v5202
    %v5219 = vpack.c.bf16 %v5211, %v5207
    %v5220 = vpack.c.bf16 %v5212, %v5208
    %v5221 = vpack.c.bf16 %v5213, %v5209
    %v5222 = vpack.c.bf16 %v5214, %v5210
    %s5223 = scalar_lea.vmem [#allocation26], 512
    %v5224 = vld [vmem:[%s5223] sm:$0xff]
    %v5225 = vld [vmem:[%s5223 + $0x8] sm:$0xff]
    %v5226 = vld [vmem:[%s5223 + $0x10] sm:$0xff]
    %v5227 = vld [vmem:[%s5223 + $0x18] sm:$0xff]
    %v5228 = vld [vmem:[%s5223 + $0x20] sm:$0xff]
    %v5229 = vld [vmem:[%s5223 + $0x28] sm:$0xff]
    %v5230 = vld [vmem:[%s5223 + $0x30] sm:$0xff]
    %v5231 = vld [vmem:[%s5223 + $0x38] sm:$0xff]
    %v5232 = vld [vmem:[%s5223 + $0x40] sm:$0xff]
    %v5233 = vld [vmem:[%s5223 + $0x48] sm:$0xff]
    %v5234 = vld [vmem:[%s5223 + $0x50] sm:$0xff]
    %v5235 = vld [vmem:[%s5223 + $0x58] sm:$0xff]
    %v5236 = vld [vmem:[%s5223 + $0x60] sm:$0xff]
    %v5237 = vld [vmem:[%s5223 + $0x68] sm:$0xff]
    %v5238 = vld [vmem:[%s5223 + $0x70] sm:$0xff]
    %v5239 = vld [vmem:[%s5223 + $0x78] sm:$0xff]
    %v5240 = vld [vmem:[%s5223 + $0x80] sm:$0xff]
    %v5241 = vld [vmem:[%s5223 + $0x88] sm:$0xff]
    %v5242 = vld [vmem:[%s5223 + $0x90] sm:$0xff]
    %v5243 = vld [vmem:[%s5223 + $0x98] sm:$0xff]
    %v5244 = vld [vmem:[%s5223 + $0xa0] sm:$0xff]
    %v5245 = vld [vmem:[%s5223 + $0xa8] sm:$0xff]
    %v5246 = vld [vmem:[%s5223 + $0xb0] sm:$0xff]
    %v5247 = vld [vmem:[%s5223 + $0xb8] sm:$0xff]
    %v5248 = vld [vmem:[%s5223 + $0xc0] sm:$0xff]
    %v5249 = vld [vmem:[%s5223 + $0xc8] sm:$0xff]
    %v5250 = vld [vmem:[%s5223 + $0xd0] sm:$0xff]
    %v5251 = vld [vmem:[%s5223 + $0xd8] sm:$0xff]
    %v5252 = vld [vmem:[%s5223 + $0xe0] sm:$0xff]
    %v5253 = vld [vmem:[%s5223 + $0xe8] sm:$0xff]
    %v5254 = vld [vmem:[%s5223 + $0xf0] sm:$0xff]
    %v5255 = vld [vmem:[%s5223 + $0xf8] sm:$0xff]
    %v5256 = vld [vmem:[%s5223 + $0x100] sm:$0xff]
    %v5257 = vld [vmem:[%s5223 + $0x108] sm:$0xff]
    %v5258 = vld [vmem:[%s5223 + $0x110] sm:$0xff]
    %v5259 = vld [vmem:[%s5223 + $0x118] sm:$0xff]
    %v5260 = vld [vmem:[%s5223 + $0x120] sm:$0xff]
    %v5261 = vld [vmem:[%s5223 + $0x128] sm:$0xff]
    %v5262 = vld [vmem:[%s5223 + $0x130] sm:$0xff]
    %v5263 = vld [vmem:[%s5223 + $0x138] sm:$0xff]
    %v5264 = vld [vmem:[%s5223 + $0x140] sm:$0xff]
    %v5265 = vld [vmem:[%s5223 + $0x148] sm:$0xff]
    %v5266 = vld [vmem:[%s5223 + $0x150] sm:$0xff]
    %v5267 = vld [vmem:[%s5223 + $0x158] sm:$0xff]
    %v5268 = vld [vmem:[%s5223 + $0x160] sm:$0xff]
    %v5269 = vld [vmem:[%s5223 + $0x168] sm:$0xff]
    %v5270 = vld [vmem:[%s5223 + $0x170] sm:$0xff]
    %v5271 = vld [vmem:[%s5223 + $0x178] sm:$0xff]
    %v5272 = vld [vmem:[%s5223 + $0x180] sm:$0xff]
    %v5273 = vld [vmem:[%s5223 + $0x188] sm:$0xff]
    %v5274 = vld [vmem:[%s5223 + $0x190] sm:$0xff]
    %v5275 = vld [vmem:[%s5223 + $0x198] sm:$0xff]
    %v5276 = vld [vmem:[%s5223 + $0x1a0] sm:$0xff]
    %v5277 = vld [vmem:[%s5223 + $0x1a8] sm:$0xff]
    %v5278 = vld [vmem:[%s5223 + $0x1b0] sm:$0xff]
    %v5279 = vld [vmem:[%s5223 + $0x1b8] sm:$0xff]
    %v5280 = vld [vmem:[%s5223 + $0x1c0] sm:$0xff]
    %v5281 = vld [vmem:[%s5223 + $0x1c8] sm:$0xff]
    %v5282 = vld [vmem:[%s5223 + $0x1d0] sm:$0xff]
    %v5283 = vld [vmem:[%s5223 + $0x1d8] sm:$0xff]
    %v5284 = vld [vmem:[%s5223 + $0x1e0] sm:$0xff]
    %v5285 = vld [vmem:[%s5223 + $0x1e8] sm:$0xff]
    %v5286 = vld [vmem:[%s5223 + $0x1f0] sm:$0xff]
    %v5287 = vld [vmem:[%s5223 + $0x1f8] sm:$0xff]
    %v5288 = vpack.c.bf16 %v5225, %v5224
    %v5289 = vpack.c.bf16 %v5227, %v5226
    %v5290 = vpack.c.bf16 %v5229, %v5228
    %v5291 = vpack.c.bf16 %v5231, %v5230
    %v5292 = vpack.c.bf16 %v5233, %v5232
    %v5293 = vpack.c.bf16 %v5235, %v5234
    %v5294 = vpack.c.bf16 %v5237, %v5236
    %v5295 = vpack.c.bf16 %v5239, %v5238
    %v5296 = vpack.c.bf16 %v5241, %v5240
    %v5297 = vpack.c.bf16 %v5243, %v5242
    %v5298 = vpack.c.bf16 %v5245, %v5244
    %v5299 = vpack.c.bf16 %v5247, %v5246
    %v5300 = vpack.c.bf16 %v5249, %v5248
    %v5301 = vpack.c.bf16 %v5251, %v5250
    %v5302 = vpack.c.bf16 %v5253, %v5252
    %v5303 = vpack.c.bf16 %v5255, %v5254
    %v5304 = vpack.c.bf16 %v5257, %v5256
    %v5305 = vpack.c.bf16 %v5259, %v5258
    %v5306 = vpack.c.bf16 %v5261, %v5260
    %v5307 = vpack.c.bf16 %v5263, %v5262
    %v5308 = vpack.c.bf16 %v5265, %v5264
    %v5309 = vpack.c.bf16 %v5267, %v5266
    %v5310 = vpack.c.bf16 %v5269, %v5268
    %v5311 = vpack.c.bf16 %v5271, %v5270
    %v5312 = vpack.c.bf16 %v5273, %v5272
    %v5313 = vpack.c.bf16 %v5275, %v5274
    %v5314 = vpack.c.bf16 %v5277, %v5276
    %v5315 = vpack.c.bf16 %v5279, %v5278
    %v5316 = vpack.c.bf16 %v5281, %v5280
    %v5317 = vpack.c.bf16 %v5283, %v5282
    %v5318 = vpack.c.bf16 %v5285, %v5284
    %v5319 = vpack.c.bf16 %v5287, %v5286
    %v5320 = vld [vmem:[#allocation28 + $0x1] sm:$0x1]
    %v5321 = vperm.slane %v5320, 0
    %5322 = vmatpush.bf16.msra.mxu0 %v5295
    %5323 = vmatpush.bf16.msra.mxu0 %v5294
    %5324 = vmatpush.bf16.msra.mxu0 %v5293
    %5325 = vmatpush.bf16.msra.mxu0 %v5292
    %5326 = vmatpush.bf16.msra.mxu0 %v5291
    %5327 = vmatpush.bf16.msra.mxu0 %v5290
    %5328 = vmatpush.bf16.msra.mxu0 %v5289
    %5329 = vmatpush.bf16.msra.mxu0 %v5288
    %5330 = vmatmul.bf16.gmra.mxu0 %v5215
    %v5331 = vpop.f32.mrf.mxu0
    %v5332 = vadd.f32 %v5321, %v5331
    %v5333 = vpop.f32.mrf.mxu0
    %v5334 = vadd.f32 %v5321, %v5333
    %5335 = vmatmul.bf16.gmra.mxu0 %v5219
    %v5336 = vpop.f32.mrf.mxu0
    %v5337 = vadd.f32 %v5321, %v5336
    %v5338 = vpop.f32.mrf.mxu0
    %v5339 = vadd.f32 %v5321, %v5338
    %5340 = vdwg.mxu0
    %5341 = vmatpush.bf16.msra.mxu0 %v5303
    %5342 = vmatpush.bf16.msra.mxu0 %v5302
    %5343 = vmatpush.bf16.msra.mxu0 %v5301
    %5344 = vmatpush.bf16.msra.mxu0 %v5300
    %5345 = vmatpush.bf16.msra.mxu0 %v5299
    %5346 = vmatpush.bf16.msra.mxu0 %v5298
    %5347 = vmatpush.bf16.msra.mxu0 %v5297
    %5348 = vmatpush.bf16.msra.mxu0 %v5296
    %5349 = vmatmul.bf16.gmra.mxu0 %v5216
    %v5350 = vpop.f32.mrf.mxu0
    %v5351 = vadd.f32 %v5332, %v5350
    %v5352 = vpop.f32.mrf.mxu0
    %v5353 = vadd.f32 %v5334, %v5352
    %5354 = vmatmul.bf16.gmra.mxu0 %v5220
    %v5355 = vpop.f32.mrf.mxu0
    %v5356 = vadd.f32 %v5337, %v5355
    %v5357 = vpop.f32.mrf.mxu0
    %v5358 = vadd.f32 %v5339, %v5357
    %5359 = vdwg.mxu0
    %5360 = vmatpush.bf16.msra.mxu0 %v5311
    %5361 = vmatpush.bf16.msra.mxu0 %v5310
    %5362 = vmatpush.bf16.msra.mxu0 %v5309
    %5363 = vmatpush.bf16.msra.mxu0 %v5308
    %5364 = vmatpush.bf16.msra.mxu0 %v5307
    %5365 = vmatpush.bf16.msra.mxu0 %v5306
    %5366 = vmatpush.bf16.msra.mxu0 %v5305
    %5367 = vmatpush.bf16.msra.mxu0 %v5304
    %5368 = vmatmul.bf16.gmra.mxu0 %v5217
    %v5369 = vpop.f32.mrf.mxu0
    %v5370 = vadd.f32 %v5351, %v5369
    %v5371 = vpop.f32.mrf.mxu0
    %v5372 = vadd.f32 %v5353, %v5371
    %5373 = vmatmul.bf16.gmra.mxu0 %v5221
    %v5374 = vpop.f32.mrf.mxu0
    %v5375 = vadd.f32 %v5356, %v5374
    %v5376 = vpop.f32.mrf.mxu0
    %v5377 = vadd.f32 %v5358, %v5376
    %5378 = vdwg.mxu0
    %5379 = vmatpush.bf16.msra.mxu0 %v5319
    %5380 = vmatpush.bf16.msra.mxu0 %v5318
    %5381 = vmatpush.bf16.msra.mxu0 %v5317
    %5382 = vmatpush.bf16.msra.mxu0 %v5316
    %5383 = vmatpush.bf16.msra.mxu0 %v5315
    %5384 = vmatpush.bf16.msra.mxu0 %v5314
    %5385 = vmatpush.bf16.msra.mxu0 %v5313
    %5386 = vmatpush.bf16.msra.mxu0 %v5312
    %5387 = vmatmul.bf16.gmra.mxu0 %v5218
    %v5388 = vpop.f32.mrf.mxu0
    %v5389 = vadd.f32 %v5370, %v5388
    %v5390 = vpop.f32.mrf.mxu0
    %v5391 = vadd.f32 %v5372, %v5390
    %5392 = vmatmul.bf16.gmra.mxu0 %v5222
    %v5393 = vpop.f32.mrf.mxu0
    %v5394 = vadd.f32 %v5375, %v5393
    %v5395 = vpop.f32.mrf.mxu0
    %v5396 = vadd.f32 %v5377, %v5395
    %5397 = vdwg.mxu0
    %v5398 = vadd.f32 %v4789, %v5389
    %v5399 = vadd.f32 %v4790, %v5391
    %v5400 = vadd.f32 %v4791, %v5394
    %v5401 = vadd.f32 %v4792, %v5396
    %v5402 = vld [vmem:[%s21] sm:$0x1]
    %v5403 = vld [vmem:[#allocation29] sm:$0x1]
    %5404 = vadd.xlane.f32.xlu0 %v5398
    %v5405 = vpop.xlane.xlu0 %5404
    %5406 = vadd.xlane.f32.xlu0 %v5399
    %v5407 = vpop.xlane.xlu0 %5406
    %5408 = vadd.xlane.f32.xlu0 %v5400
    %v5409 = vpop.xlane.xlu0 %5408
    %5410 = vadd.xlane.f32.xlu0 %v5401
    %v5411 = vpop.xlane.xlu0 %5410
    %v5412 = vmul.f32 %v5405, %v374
    %v5413 = vmul.f32 %v5407, %v374
    %v5414 = vmul.f32 %v5409, %v374
    %v5415 = vmul.f32 %v5411, %v374
    %v5416 = vsub.f32 %v5398, %v5412
    %v5417 = vsub.f32 %v5399, %v5413
    %v5418 = vsub.f32 %v5400, %v5414
    %v5419 = vsub.f32 %v5401, %v5415
    %v5420 = vmul.f32 %v5416, %v5416
    %v5421 = vmul.f32 %v5417, %v5417
    %v5422 = vmul.f32 %v5418, %v5418
    %v5423 = vmul.f32 %v5419, %v5419
    %5424 = vadd.xlane.f32.xlu0 %v5420
    %v5425 = vpop.xlane.xlu0 %5424
    %5426 = vadd.xlane.f32.xlu0 %v5421
    %v5427 = vpop.xlane.xlu0 %5426
    %5428 = vadd.xlane.f32.xlu0 %v5422
    %v5429 = vpop.xlane.xlu0 %5428
    %5430 = vadd.xlane.f32.xlu0 %v5423
    %v5431 = vpop.xlane.xlu0 %5430
    %v5432 = vmul.f32 %v5425, %v374
    %v5433 = vmul.f32 %v5427, %v374
    %v5434 = vmul.f32 %v5429, %v374
    %v5435 = vmul.f32 %v5431, %v374
    %v5436 = vadd.f32 %v5432, 1e-05
    %v5437 = vadd.f32 %v5433, 1e-05
    %v5438 = vadd.f32 %v5434, 1e-05
    %v5439 = vadd.f32 %v5435, 1e-05
    %v5440 = vrsqrt.pop %v5436
    %v5441 = vmul.f32 %v5440, %v5436
    %v5442 = vmul.f32 %v5441, %v5440
    %v5443 = vmul.f32 0.5, %v5442
    %v5444 = vsub.f32 1.5, %v5443
    %v5445 = vmul.f32 %v5440, %v5444
    %vm5446 = vweird.f32 %v5436
    %vm5447 = vweird.f32 %v5440
    %vm5448 = vmor %vm5446, %vm5447
    %v5449 = vsel %vm5448, %v5440, %v5445
    %v5450 = vrsqrt.pop %v5437
    %v5451 = vmul.f32 %v5450, %v5437
    %v5452 = vmul.f32 %v5451, %v5450
    %v5453 = vmul.f32 0.5, %v5452
    %v5454 = vsub.f32 1.5, %v5453
    %v5455 = vmul.f32 %v5450, %v5454
    %vm5456 = vweird.f32 %v5437
    %vm5457 = vweird.f32 %v5450
    %vm5458 = vmor %vm5456, %vm5457
    %v5459 = vsel %vm5458, %v5450, %v5455
    %v5460 = vrsqrt.pop %v5438
    %v5461 = vmul.f32 %v5460, %v5438
    %v5462 = vmul.f32 %v5461, %v5460
    %v5463 = vmul.f32 0.5, %v5462
    %v5464 = vsub.f32 1.5, %v5463
    %v5465 = vmul.f32 %v5460, %v5464
    %vm5466 = vweird.f32 %v5438
    %vm5467 = vweird.f32 %v5460
    %vm5468 = vmor %vm5466, %vm5467
    %v5469 = vsel %vm5468, %v5460, %v5465
    %v5470 = vrsqrt.pop %v5439
    %v5471 = vmul.f32 %v5470, %v5439
    %v5472 = vmul.f32 %v5471, %v5470
    %v5473 = vmul.f32 0.5, %v5472
    %v5474 = vsub.f32 1.5, %v5473
    %v5475 = vmul.f32 %v5470, %v5474
    %vm5476 = vweird.f32 %v5439
    %vm5477 = vweird.f32 %v5470
    %vm5478 = vmor %vm5476, %vm5477
    %v5479 = vsel %vm5478, %v5470, %v5475
    %v5480 = vmul.f32 %v5416, %v5449
    %v5481 = vmul.f32 %v5417, %v5459
    %v5482 = vmul.f32 %v5418, %v5469
    %v5483 = vmul.f32 %v5419, %v5479
    %v5485 = vperm.slane %v5402, 0
    %v5487 = vmul.f32 %v5480, %v5485
    %v5488 = vmul.f32 %v5481, %v5485
    %v5489 = vmul.f32 %v5482, %v5485
    %v5490 = vmul.f32 %v5483, %v5485
    %v5492 = vperm.slane %v5403, 0
    %v5494 = vadd.f32 %v5487, %v5492
    %v5495 = vadd.f32 %v5488, %v5492
    %v5496 = vadd.f32 %v5489, %v5492
    %v5497 = vadd.f32 %v5490, %v5492
    %5498 = vst [vmem:[#allocation31] sm:$0xff] %v5494
    %5499 = vst [vmem:[#allocation31 + $0x8] sm:$0xff] %v5495
    %5500 = vst [vmem:[#allocation31 + $0x10] sm:$0xff] %v5496
    %5501 = vst [vmem:[#allocation31 + $0x18] sm:$0xff] %v5497
    // Predicated region
    $region166: #{base_transformer_cross_attn.1} parent=1 // pred_check
      _
    $region167: #{base_transformer_cross_attn.1} parent=1 // pred_check_branch
      %5503 = sbr.rel (0) target = $region169
    $region168: #{base_transformer_cross_attn.1} parent=1 // pred_region
      %5505 = vsyncadd [#allocation4], 0
      %s5506 = sshll.u32 [#allocation31], 4
      %s5507 = int_to_ptr.vmem [resolvable:$true] %s5506
      %s5508 = sshll.u32 %s23, 4
      %s5509 = int_to_ptr.hbm [resolvable:$true] %s5508
      %5514 = dma.vmem_to_hbm [thread:$0]  %s5507, 512, %s5509, [#allocation4], 128, 128, 8
    $region169: #{base_transformer_cross_attn.1} parent=1 // pred_fallthru
      _
    // Predicated region
    $region170: #{base_transformer_cross_attn.1} parent=1 // pred_check
      _
    $region171: #{base_transformer_cross_attn.1} parent=1 // pred_check_branch
      %5516 = sbr.rel (0) target = $region173
    $region172: #{base_transformer_cross_attn.1} parent=1 // pred_region
      %5518 = dma.done [#allocation4], 512
    $region173: #{base_transformer_cross_attn.1} parent=1 // pred_fallthru
      _
    %5519 = vsyncpa [#allocation3], 1
    %5520 = vsyncpa [#allocation6], 1
    %5521 = vsyncpa [#allocation9], 1
    %5522 = vsyncpa [#allocation12], 1
    %5523 = vsyncpa [#allocation15], 1
    %5524 = vsyncpa [#allocation18], 1
    %5525 = vsyncpa [#allocation21], 1
    %5526 = vsyncpa [#allocation24], 1
    %5527 = vsyncpa [#allocation27], 1
    %5528 = vsyncpa [#allocation30], 1
    %5529 = vsyncpa [#allocation4], 1

</llo_original>
